<compile_context>
chip_gen: v7x
topology: tpu7x:2x2x1
jax: 0.10.0
libtpu: 0.0.40
codegen_flags: <defaults>
</compile_context>

<pallas_src>
import functools

import jax
import jax.numpy as jnp
import numpy as np
from jax.experimental import pallas as pl
from jax.experimental.pallas import tpu as pltpu


# ----------------------------------------------------------------------------
# Fused kernel: full forward for one batch element, entirely in VMEM.
# ----------------------------------------------------------------------------
def _fused_kernel(x_ref, w1_ref, w2_ref, cw_ref, tw_ref, o_ref,
                  mm_ref, y_ref, pad_ref, *, C, H, W, KH, KW, C1, C2):
    """
    x_ref  : (1, C, H, K)        input activations (one batch element)
    w1_ref : (1, C, K, W)        matmul_w      (resident across grid)
    w2_ref : (W, W)              nested_matmul_w (resident across grid)
    cw_ref : (C1*C*KH*KW,)       conv2d weight, flat, SMEM scalars
    tw_ref : (C2*C1*KH*KW,)      conv_transpose weight (pre-swapped/flipped), SMEM
    o_ref  : (1, C2, H, W)       output
    mm_ref : (C*H, W)  VMEM      stacked x @ matmul_w
    y_ref  : (C*H, W)  VMEM      nested matmul output (conv input)
    pad_ref: (C1*Hp, Wp) VMEM    zero-padded conv2d output (2-D, row-stacked)
    """
    H1, W1 = H - KH + 1, W - KW + 1            # conv2d output spatial size
    Hp = H1 + 2 * (KH - 1)                     # padded rows per channel plane

    # ---- matmul chain on the MXU --------------------------------------------
    # per-channel x @ matmul_w, stacked so the nested matmul runs once with
    # M = C*H rows instead of C separate 8-row dots.
    for c in range(C):
        mm_ref[c * H:(c + 1) * H, :] = jnp.dot(
            x_ref[0, c], w1_ref[0, c], preferred_element_type=jnp.float32)
    y_ref[...] = jnp.dot(mm_ref[...], w2_ref[...],
                         preferred_element_type=jnp.float32)

    # ---- F.conv2d (stride 1, VALID): VPU scalar-broadcast --------------------
    # Shifted slab depends only on (ic, ki, kj): hoist it, keep oc innermost.
    acc1 = [jnp.zeros((H1, W1), jnp.float32) for _ in range(C1)]
    for ic in range(C):
        for ki in range(KH):
            for kj in range(KW):
                slab = y_ref[ic * H + ki: ic * H + ki + H1, kj: kj + W1]
                for oc in range(C1):
                    wv = cw_ref[((oc * C + ic) * KH + ki) * KW + kj]
                    acc1[oc] = acc1[oc] + slab * wv

    # ---- zero-pad by (KH-1, KW-1) inside VMEM (no HBM round trip) ------------
    pad_ref[...] = jnp.zeros_like(pad_ref)
    for oc in range(C1):
        r0 = oc * Hp + (KH - 1)
        pad_ref[r0: r0 + H1, KW - 1: KW - 1 + W1] = acc1[oc]

    # ---- F.conv_transpose2d == VALID conv with swapped/flipped weights -------
    acc2 = [jnp.zeros((H, W), jnp.float32) for _ in range(C2)]
    for ic in range(C1):
        for ki in range(KH):
            for kj in range(KW):
                slab = pad_ref[ic * Hp + ki: ic * Hp + ki + H, kj: kj + W]
                for oc in range(C2):
                    wv = tw_ref[((oc * C1 + ic) * KH + ki) * KW + kj]
                    acc2[oc] = acc2[oc] + slab * wv

    # Lane-dense (8, 256) tile stores.
    for oc in range(C2):
        o_ref[0, oc] = acc2[oc]


def fused_forward(x, w1, w2, conv_w_flat, w_eq_flat, *, C1, C2, KH, KW):
    B, C, H, K = x.shape
    W = w1.shape[-1]
    assert w1.shape == (1, C, K, W) and w2.shape == (W, W)
    H1, W1 = H - KH + 1, W - KW + 1
    Hp, Wp = H1 + 2 * (KH - 1), W1 + 2 * (KW - 1)

    flops = B * (2 * C * H * K * W                       # x @ matmul_w
                 + 2 * (C * H) * W * W                   # nested matmul
                 + 2 * C1 * C * KH * KW * H1 * W1        # conv2d
                 + 2 * C2 * C1 * KH * KW * H * W)        # conv_transpose2d
    bytes_accessed = 4 * (x.size + w1.size + w2.size
                          + conv_w_flat.size + w_eq_flat.size
                          + B * C2 * H * W)

    kernel = functools.partial(_fused_kernel, C=C, H=H, W=W,
                               KH=KH, KW=KW, C1=C1, C2=C2)
    return pl.pallas_call(
        kernel,
        out_shape=jax.ShapeDtypeStruct((B, C2, H, W), jnp.float32),
        grid_spec=pltpu.PrefetchScalarGridSpec(
            num_scalar_prefetch=0,
            grid=(B,),
            in_specs=[
                pl.BlockSpec((1, C, H, K), lambda b: (b, 0, 0, 0)),
                pl.BlockSpec((1, C, K, W), lambda b: (0, 0, 0, 0)),   # resident
                pl.BlockSpec((W, W), lambda b: (0, 0)),               # resident
                pl.BlockSpec(memory_space=pltpu.MemorySpace.SMEM),    # conv_w
                pl.BlockSpec(memory_space=pltpu.MemorySpace.SMEM),    # conv_tr_w (eq.)
            ],
            out_specs=pl.BlockSpec((1, C2, H, W), lambda b: (b, 0, 0, 0)),
            scratch_shapes=[
                pltpu.VMEM((C * H, W), jnp.float32),      # stacked x @ matmul_w
                pltpu.VMEM((C * H, W), jnp.float32),      # nested matmul output
                pltpu.VMEM((C1 * Hp, Wp), jnp.float32),   # padded conv2d output
            ],
        ),
        compiler_params=pltpu.CompilerParams(
            dimension_semantics=("parallel",)),           # B axis -> both TCs on v7x
        cost_estimate=pl.CostEstimate(flops=flops, transcendentals=0,
                                      bytes_accessed=bytes_accessed),
    )(x, w1, w2, conv_w_flat, w_eq_flat)


# ----------------------------------------------------------------------------
# FunctionalModel forward (weight preprocessing in the wrapper, once per call)
# ----------------------------------------------------------------------------
def functional_model_forward(x, params):
    x = x.astype(jnp.float32)                             # input_.to(torch.float32)
    w1 = params["matmul_w"].astype(jnp.float32)
    w2 = params["nested_matmul_w"].astype(jnp.float32)
    conv_w = params["conv_w"].astype(jnp.float32)
    w_tr = params["conv_tr_w"].astype(jnp.float32)
    C1, _, KH, KW = conv_w.shape
    C2 = w_tr.shape[1]
    # conv_transpose2d(stride=1, pad=0) == VALID conv with swapped I/O + flipped taps.
    w_eq = jnp.transpose(w_tr, (1, 0, 2, 3))[:, :, ::-1, ::-1]
    return fused_forward(x, w1, w2, conv_w.reshape(-1), w_eq.reshape(-1),
                         C1=C1, C2=C2, KH=KH, KW=KW)


# ----------------------------------------------------------------------------
# Independent float64 NumPy reference (conv_transpose in scatter-add form, so
# it does NOT reuse the kernel's swap/flip equivalence).
# ----------------------------------------------------------------------------
def reference_forward_np(x, params):
    x = np.asarray(x, np.float64)
    w1 = np.asarray(params["matmul_w"], np.float64)[0]       # (C, K, W)
    w2 = np.asarray(params["nested_matmul_w"], np.float64)   # (W, W)
    cw = np.asarray(params["conv_w"], np.float64)             # (C1, C, KH, KW)
    tw = np.asarray(params["conv_tr_w"], np.float64)          # (C1, C2, KH, KW)

    y = np.einsum("bchk,ckw->bchw", x, w1)
    y = np.einsum("bchw,wv->bchv", y, w2)

    B, C, H, W = y.shape
    C1, _, KH, KW = cw.shape
    H1, W1 = H - KH + 1, W - KW + 1
    z = np.zeros((B, C1, H1, W1))
    for oc in range(C1):
        for ic in range(C):
            for ki in range(KH):
                for kj in range(KW):
                    z[:, oc] += cw[oc, ic, ki, kj] * y[:, ic, ki:ki + H1, kj:kj + W1]

    C2 = tw.shape[1]
    o = np.zeros((B, C2, H1 + KH - 1, W1 + KW - 1))
    for ic in range(C1):
        for oc in range(C2):
            for ki in range(KH):
                for kj in range(KW):
                    o[:, oc, ki:ki + H1, kj:kj + W1] += tw[ic, oc, ki, kj] * z[:, ic]
    return o


if __name__ == "__main__":
    key = jax.random.PRNGKey(0)
    k_in, k_tr = jax.random.split(key)

    # Shapes implied by the module: last dim 256 (matmul_w), 3 conv-in channels.
    B, C, H, K = 2, 3, 8, 256
    # Integer-valued input in {-1, 0, 1}: with the ones weights the whole
    # matmul chain is then exact under full-f32 AND single-pass-bf16 MXU modes,
    # so the float64 reference comparison is precision-mode agnostic.
    x = jax.random.randint(k_in, (B, C, H, K), -1, 2).astype(jnp.float32)

    params = {
        "matmul_w": jnp.ones((1, 3, 256, 256), jnp.float32),      # torch.ones
        "nested_matmul_w": jnp.ones((256, 256), jnp.float32),     # MatMulModel default
        "conv_w": jnp.ones((5, 3, 3, 3), jnp.float32),            # torch.ones
        "conv_tr_w": jax.random.uniform(k_tr, (5, 4, 3, 3),       # torch.rand
                                        dtype=jnp.float32),
    }

    fwd = jax.jit(functional_model_forward)
    out = jax.block_until_ready(fwd(x, params))
    assert out.shape == (B, 4, H, 256), out.shape

    ref = reference_forward_np(np.asarray(x),
                               {k: np.asarray(v) for k, v in params.items()})
    scale = float(np.max(np.abs(ref)))
    np.testing.assert_allclose(np.asarray(out, np.float64), ref,
                               rtol=1e-5, atol=1e-5 * scale + 1e-6)
    print("KERNEL_OK")
</pallas_src>

<mosaic_0001>
module attributes {stable_mosaic.version = 11 : i64} {
  func.func @_fused_kernel(%arg0: i32, %arg1: memref<1x3x8x256xf32, #tpu.memory_space<vmem>>, %arg2: memref<1x3x256x256xf32, #tpu.memory_space<vmem>>, %arg3: memref<256x256xf32, #tpu.memory_space<vmem>>, %arg4: memref<135xf32, #tpu.memory_space<smem>>, %arg5: memref<180xf32, #tpu.memory_space<smem>>, %arg6: memref<1x4x8x256xf32, #tpu.memory_space<vmem>>, %arg7: memref<24x256xf32, #tpu.memory_space<vmem>>, %arg8: memref<24x256xf32, #tpu.memory_space<vmem>>, %arg9: memref<50x258xf32, #tpu.memory_space<vmem>>) attributes {dimension_semantics = [#tpu.dimension_semantics<parallel>], iteration_bounds = array<i64: 2>, scalar_prefetch = 0 : i64, scratch_operands = 3 : i64, tpu.core_type = #tpu.core_type<tc>, window_params = [{transform_indices = @transform_0, window_bounds = array<i64: 1, 3, 8, 256>}, {pipeline_mode = #tpu.pipeline_mode<synchronous>, transform_indices = @transform_1, window_bounds = array<i64: 1, 3, 256, 256>}, {pipeline_mode = #tpu.pipeline_mode<synchronous>, transform_indices = @transform_2, window_bounds = array<i64: 256, 256>}, {transform_indices = @transform_3, window_bounds = array<i64: 135>}, {transform_indices = @transform_4, window_bounds = array<i64: 180>}, {transform_indices = @transform_5, window_bounds = array<i64: 1, 4, 8, 256>}]} {
    %c0 = arith.constant 0 : index
    %c0_0 = arith.constant 0 : index
    %c0_1 = arith.constant 0 : index
    %c0_2 = arith.constant 0 : index
    %0 = vector.load %arg1[%c0, %c0_0, %c0_1, %c0_2] : memref<1x3x8x256xf32, #tpu.memory_space<vmem>>, vector<1x1x8x256xf32>
    %1 = vector.shape_cast %0 : vector<1x1x8x256xf32> to vector<8x256xf32>
    %c0_3 = arith.constant 0 : index
    %c0_4 = arith.constant 0 : index
    %c0_5 = arith.constant 0 : index
    %c0_6 = arith.constant 0 : index
    %2 = vector.load %arg2[%c0_3, %c0_4, %c0_5, %c0_6] : memref<1x3x256x256xf32, #tpu.memory_space<vmem>>, vector<1x1x256x256xf32>
    %3 = vector.shape_cast %2 : vector<1x1x256x256xf32> to vector<256x256xf32>
    %cst = arith.constant dense<0.000000e+00> : vector<8x256xf32>
    %4 = tpu.matmul %1, %3, %cst {dimension_numbers = #tpu.dot_dimension_numbers<[1], [0], [0], [1], [0, 0, 1, 1], [], []>} : vector<8x256xf32>, vector<256x256xf32>, vector<8x256xf32> -> vector<8x256xf32>
    %c0_7 = arith.constant 0 : index
    %c0_8 = arith.constant 0 : index
    %5 = vector.load %arg7[%c0_7, %c0_8] : memref<24x256xf32, #tpu.memory_space<vmem>>, vector<8x256xf32>
    tpu.vector_store %arg7[%c0_7, %c0_8], %4 {strides = array<i32>} : memref<24x256xf32, #tpu.memory_space<vmem>>, vector<8x256xf32>,
    %c0_9 = arith.constant 0 : index
    %c1 = arith.constant 1 : index
    %c0_10 = arith.constant 0 : index
    %c0_11 = arith.constant 0 : index
    %6 = vector.load %arg1[%c0_9, %c1, %c0_10, %c0_11] : memref<1x3x8x256xf32, #tpu.memory_space<vmem>>, vector<1x1x8x256xf32>
    %7 = vector.shape_cast %6 : vector<1x1x8x256xf32> to vector<8x256xf32>
    %c0_12 = arith.constant 0 : index
    %c1_13 = arith.constant 1 : index
    %c0_14 = arith.constant 0 : index
    %c0_15 = arith.constant 0 : index
    %8 = vector.load %arg2[%c0_12, %c1_13, %c0_14, %c0_15] : memref<1x3x256x256xf32, #tpu.memory_space<vmem>>, vector<1x1x256x256xf32>
    %9 = vector.shape_cast %8 : vector<1x1x256x256xf32> to vector<256x256xf32>
    %cst_16 = arith.constant dense<0.000000e+00> : vector<8x256xf32>
    %10 = tpu.matmul %7, %9, %cst_16 {dimension_numbers = #tpu.dot_dimension_numbers<[1], [0], [0], [1], [0, 0, 1, 1], [], []>} : vector<8x256xf32>, vector<256x256xf32>, vector<8x256xf32> -> vector<8x256xf32>
    %c8 = arith.constant 8 : index
    %c0_17 = arith.constant 0 : index
    %11 = vector.load %arg7[%c8, %c0_17] : memref<24x256xf32, #tpu.memory_space<vmem>>, vector<8x256xf32>
    tpu.vector_store %arg7[%c8, %c0_17], %10 {strides = array<i32>} : memref<24x256xf32, #tpu.memory_space<vmem>>, vector<8x256xf32>,
    %c0_18 = arith.constant 0 : index
    %c2 = arith.constant 2 : index
    %c0_19 = arith.constant 0 : index
    %c0_20 = arith.constant 0 : index
    %12 = vector.load %arg1[%c0_18, %c2, %c0_19, %c0_20] : memref<1x3x8x256xf32, #tpu.memory_space<vmem>>, vector<1x1x8x256xf32>
    %13 = vector.shape_cast %12 : vector<1x1x8x256xf32> to vector<8x256xf32>
    %c0_21 = arith.constant 0 : index
    %c2_22 = arith.constant 2 : index
    %c0_23 = arith.constant 0 : index
    %c0_24 = arith.constant 0 : index
    %14 = vector.load %arg2[%c0_21, %c2_22, %c0_23, %c0_24] : memref<1x3x256x256xf32, #tpu.memory_space<vmem>>, vector<1x1x256x256xf32>
    %15 = vector.shape_cast %14 : vector<1x1x256x256xf32> to vector<256x256xf32>
    %cst_25 = arith.constant dense<0.000000e+00> : vector<8x256xf32>
    %16 = tpu.matmul %13, %15, %cst_25 {dimension_numbers = #tpu.dot_dimension_numbers<[1], [0], [0], [1], [0, 0, 1, 1], [], []>} : vector<8x256xf32>, vector<256x256xf32>, vector<8x256xf32> -> vector<8x256xf32>
    %c16 = arith.constant 16 : index
    %c0_26 = arith.constant 0 : index
    %17 = vector.load %arg7[%c16, %c0_26] : memref<24x256xf32, #tpu.memory_space<vmem>>, vector<8x256xf32>
    tpu.vector_store %arg7[%c16, %c0_26], %16 {strides = array<i32>} : memref<24x256xf32, #tpu.memory_space<vmem>>, vector<8x256xf32>,
    %c0_27 = arith.constant 0 : index
    %c0_28 = arith.constant 0 : index
    %18 = vector.load %arg7[%c0_27, %c0_28] : memref<24x256xf32, #tpu.memory_space<vmem>>, vector<24x256xf32>
    %c0_29 = arith.constant 0 : index
    %c0_30 = arith.constant 0 : index
    %19 = vector.load %arg3[%c0_29, %c0_30] : memref<256x256xf32, #tpu.memory_space<vmem>>, vector<256x256xf32>
    %cst_31 = arith.constant dense<0.000000e+00> : vector<24x256xf32>
    %20 = tpu.matmul %18, %19, %cst_31 {dimension_numbers = #tpu.dot_dimension_numbers<[1], [0], [0], [1], [0, 0, 1, 1], [], []>} : vector<24x256xf32>, vector<256x256xf32>, vector<24x256xf32> -> vector<24x256xf32>
    %c0_32 = arith.constant 0 : index
    %c0_33 = arith.constant 0 : index
    %21 = vector.load %arg8[%c0_32, %c0_33] : memref<24x256xf32, #tpu.memory_space<vmem>>, vector<24x256xf32>
    tpu.vector_store %arg8[%c0_32, %c0_33], %20 {strides = array<i32>} : memref<24x256xf32, #tpu.memory_space<vmem>>, vector<24x256xf32>,
    %cst_34 = arith.constant 0.000000e+00 : f32
    %22 = vector.broadcast %cst_34 : f32 to vector<6x254xf32>
    %cst_35 = arith.constant 0.000000e+00 : f32
    %23 = vector.broadcast %cst_35 : f32 to vector<6x254xf32>
    %cst_36 = arith.constant 0.000000e+00 : f32
    %24 = vector.broadcast %cst_36 : f32 to vector<6x254xf32>
    %cst_37 = arith.constant 0.000000e+00 : f32
    %25 = vector.broadcast %cst_37 : f32 to vector<6x254xf32>
    %cst_38 = arith.constant 0.000000e+00 : f32
    %26 = vector.broadcast %cst_38 : f32 to vector<6x254xf32>
    %c0_39 = arith.constant 0 : index
    %c0_40 = arith.constant 0 : index
    %27 = vector.load %arg8[%c0_39, %c0_40] : memref<24x256xf32, #tpu.memory_space<vmem>>, vector<6x254xf32>
    %c0_41 = arith.constant 0 : index
    %28 = memref.load %arg4[%c0_41] : memref<135xf32, #tpu.memory_space<smem>>
    %29 = vector.broadcast %28 : f32 to vector<6x254xf32>
    %30 = arith.mulf %27, %29 : vector<6x254xf32>
    %31 = arith.addf %22, %30 : vector<6x254xf32>
    %c27 = arith.constant 27 : index
    %32 = memref.load %arg4[%c27] : memref<135xf32, #tpu.memory_space<smem>>
    %33 = vector.broadcast %32 : f32 to vector<6x254xf32>
    %34 = arith.mulf %27, %33 : vector<6x254xf32>
    %35 = arith.addf %23, %34 : vector<6x254xf32>
    %c54 = arith.constant 54 : index
    %36 = memref.load %arg4[%c54] : memref<135xf32, #tpu.memory_space<smem>>
    %37 = vector.broadcast %36 : f32 to vector<6x254xf32>
    %38 = arith.mulf %27, %37 : vector<6x254xf32>
    %39 = arith.addf %24, %38 : vector<6x254xf32>
    %c81 = arith.constant 81 : index
    %40 = memref.load %arg4[%c81] : memref<135xf32, #tpu.memory_space<smem>>
    %41 = vector.broadcast %40 : f32 to vector<6x254xf32>
    %42 = arith.mulf %27, %41 : vector<6x254xf32>
    %43 = arith.addf %25, %42 : vector<6x254xf32>
    %c108 = arith.constant 108 : index
    %44 = memref.load %arg4[%c108] : memref<135xf32, #tpu.memory_space<smem>>
    %45 = vector.broadcast %44 : f32 to vector<6x254xf32>
    %46 = arith.mulf %27, %45 : vector<6x254xf32>
    %47 = arith.addf %26, %46 : vector<6x254xf32>
    %c0_42 = arith.constant 0 : index
    %c1_43 = arith.constant 1 : index
    %48 = vector.load %arg8[%c0_42, %c1_43] : memref<24x256xf32, #tpu.memory_space<vmem>>, vector<6x254xf32>
    %c1_44 = arith.constant 1 : index
    %49 = memref.load %arg4[%c1_44] : memref<135xf32, #tpu.memory_space<smem>>
    %50 = vector.broadcast %49 : f32 to vector<6x254xf32>
    %51 = arith.mulf %48, %50 : vector<6x254xf32>
    %52 = arith.addf %31, %51 : vector<6x254xf32>
    %c28 = arith.constant 28 : index
    %53 = memref.load %arg4[%c28] : memref<135xf32, #tpu.memory_space<smem>>
    %54 = vector.broadcast %53 : f32 to vector<6x254xf32>
    %55 = arith.mulf %48, %54 : vector<6x254xf32>
    %56 = arith.addf %35, %55 : vector<6x254xf32>
    %c55 = arith.constant 55 : index
    %57 = memref.load %arg4[%c55] : memref<135xf32, #tpu.memory_space<smem>>
    %58 = vector.broadcast %57 : f32 to vector<6x254xf32>
    %59 = arith.mulf %48, %58 : vector<6x254xf32>
    %60 = arith.addf %39, %59 : vector<6x254xf32>
    %c82 = arith.constant 82 : index
    %61 = memref.load %arg4[%c82] : memref<135xf32, #tpu.memory_space<smem>>
    %62 = vector.broadcast %61 : f32 to vector<6x254xf32>
    %63 = arith.mulf %48, %62 : vector<6x254xf32>
    %64 = arith.addf %43, %63 : vector<6x254xf32>
    %c109 = arith.constant 109 : index
    %65 = memref.load %arg4[%c109] : memref<135xf32, #tpu.memory_space<smem>>
    %66 = vector.broadcast %65 : f32 to vector<6x254xf32>
    %67 = arith.mulf %48, %66 : vector<6x254xf32>
    %68 = arith.addf %47, %67 : vector<6x254xf32>
    %c0_45 = arith.constant 0 : index
    %c2_46 = arith.constant 2 : index
    %69 = vector.load %arg8[%c0_45, %c2_46] : memref<24x256xf32, #tpu.memory_space<vmem>>, vector<6x254xf32>
    %c2_47 = arith.constant 2 : index
    %70 = memref.load %arg4[%c2_47] : memref<135xf32, #tpu.memory_space<smem>>
    %71 = vector.broadcast %70 : f32 to vector<6x254xf32>
    %72 = arith.mulf %69, %71 : vector<6x254xf32>
    %73 = arith.addf %52, %72 : vector<6x254xf32>
    %c29 = arith.constant 29 : index
    %74 = memref.load %arg4[%c29] : memref<135xf32, #tpu.memory_space<smem>>
    %75 = vector.broadcast %74 : f32 to vector<6x254xf32>
    %76 = arith.mulf %69, %75 : vector<6x254xf32>
    %77 = arith.addf %56, %76 : vector<6x254xf32>
    %c56 = arith.constant 56 : index
    %78 = memref.load %arg4[%c56] : memref<135xf32, #tpu.memory_space<smem>>
    %79 = vector.broadcast %78 : f32 to vector<6x254xf32>
    %80 = arith.mulf %69, %79 : vector<6x254xf32>
    %81 = arith.addf %60, %80 : vector<6x254xf32>
    %c83 = arith.constant 83 : index
    %82 = memref.load %arg4[%c83] : memref<135xf32, #tpu.memory_space<smem>>
    %83 = vector.broadcast %82 : f32 to vector<6x254xf32>
    %84 = arith.mulf %69, %83 : vector<6x254xf32>
    %85 = arith.addf %64, %84 : vector<6x254xf32>
    %c110 = arith.constant 110 : index
    %86 = memref.load %arg4[%c110] : memref<135xf32, #tpu.memory_space<smem>>
    %87 = vector.broadcast %86 : f32 to vector<6x254xf32>
    %88 = arith.mulf %69, %87 : vector<6x254xf32>
    %89 = arith.addf %68, %88 : vector<6x254xf32>
    %c1_48 = arith.constant 1 : index
    %c0_49 = arith.constant 0 : index
    %90 = vector.load %arg8[%c1_48, %c0_49] : memref<24x256xf32, #tpu.memory_space<vmem>>, vector<6x254xf32>
    %c3 = arith.constant 3 : index
    %91 = memref.load %arg4[%c3] : memref<135xf32, #tpu.memory_space<smem>>
    %92 = vector.broadcast %91 : f32 to vector<6x254xf32>
    %93 = arith.mulf %90, %92 : vector<6x254xf32>
    %94 = arith.addf %73, %93 : vector<6x254xf32>
    %c30 = arith.constant 30 : index
    %95 = memref.load %arg4[%c30] : memref<135xf32, #tpu.memory_space<smem>>
    %96 = vector.broadcast %95 : f32 to vector<6x254xf32>
    %97 = arith.mulf %90, %96 : vector<6x254xf32>
    %98 = arith.addf %77, %97 : vector<6x254xf32>
    %c57 = arith.constant 57 : index
    %99 = memref.load %arg4[%c57] : memref<135xf32, #tpu.memory_space<smem>>
    %100 = vector.broadcast %99 : f32 to vector<6x254xf32>
    %101 = arith.mulf %90, %100 : vector<6x254xf32>
    %102 = arith.addf %81, %101 : vector<6x254xf32>
    %c84 = arith.constant 84 : index
    %103 = memref.load %arg4[%c84] : memref<135xf32, #tpu.memory_space<smem>>
    %104 = vector.broadcast %103 : f32 to vector<6x254xf32>
    %105 = arith.mulf %90, %104 : vector<6x254xf32>
    %106 = arith.addf %85, %105 : vector<6x254xf32>
    %c111 = arith.constant 111 : index
    %107 = memref.load %arg4[%c111] : memref<135xf32, #tpu.memory_space<smem>>
    %108 = vector.broadcast %107 : f32 to vector<6x254xf32>
    %109 = arith.mulf %90, %108 : vector<6x254xf32>
    %110 = arith.addf %89, %109 : vector<6x254xf32>
    %c1_50 = arith.constant 1 : index
    %c1_51 = arith.constant 1 : index
    %111 = vector.load %arg8[%c1_50, %c1_51] : memref<24x256xf32, #tpu.memory_space<vmem>>, vector<6x254xf32>
    %c4 = arith.constant 4 : index
    %112 = memref.load %arg4[%c4] : memref<135xf32, #tpu.memory_space<smem>>
    %113 = vector.broadcast %112 : f32 to vector<6x254xf32>
    %114 = arith.mulf %111, %113 : vector<6x254xf32>
    %115 = arith.addf %94, %114 : vector<6x254xf32>
    %c31 = arith.constant 31 : index
    %116 = memref.load %arg4[%c31] : memref<135xf32, #tpu.memory_space<smem>>
    %117 = vector.broadcast %116 : f32 to vector<6x254xf32>
    %118 = arith.mulf %111, %117 : vector<6x254xf32>
    %119 = arith.addf %98, %118 : vector<6x254xf32>
    %c58 = arith.constant 58 : index
    %120 = memref.load %arg4[%c58] : memref<135xf32, #tpu.memory_space<smem>>
    %121 = vector.broadcast %120 : f32 to vector<6x254xf32>
    %122 = arith.mulf %111, %121 : vector<6x254xf32>
    %123 = arith.addf %102, %122 : vector<6x254xf32>
    %c85 = arith.constant 85 : index
    %124 = memref.load %arg4[%c85] : memref<135xf32, #tpu.memory_space<smem>>
    %125 = vector.broadcast %124 : f32 to vector<6x254xf32>
    %126 = arith.mulf %111, %125 : vector<6x254xf32>
    %127 = arith.addf %106, %126 : vector<6x254xf32>
    %c112 = arith.constant 112 : index
    %128 = memref.load %arg4[%c112] : memref<135xf32, #tpu.memory_space<smem>>
    %129 = vector.broadcast %128 : f32 to vector<6x254xf32>
    %130 = arith.mulf %111, %129 : vector<6x254xf32>
    %131 = arith.addf %110, %130 : vector<6x254xf32>
    %c1_52 = arith.constant 1 : index
    %c2_53 = arith.constant 2 : index
    %132 = vector.load %arg8[%c1_52, %c2_53] : memref<24x256xf32, #tpu.memory_space<vmem>>, vector<6x254xf32>
    %c5 = arith.constant 5 : index
    %133 = memref.load %arg4[%c5] : memref<135xf32, #tpu.memory_space<smem>>
    %134 = vector.broadcast %133 : f32 to vector<6x254xf32>
    %135 = arith.mulf %132, %134 : vector<6x254xf32>
    %136 = arith.addf %115, %135 : vector<6x254xf32>
    %c32 = arith.constant 32 : index
    %137 = memref.load %arg4[%c32] : memref<135xf32, #tpu.memory_space<smem>>
    %138 = vector.broadcast %137 : f32 to vector<6x254xf32>
    %139 = arith.mulf %132, %138 : vector<6x254xf32>
    %140 = arith.addf %119, %139 : vector<6x254xf32>
    %c59 = arith.constant 59 : index
    %141 = memref.load %arg4[%c59] : memref<135xf32, #tpu.memory_space<smem>>
    %142 = vector.broadcast %141 : f32 to vector<6x254xf32>
    %143 = arith.mulf %132, %142 : vector<6x254xf32>
    %144 = arith.addf %123, %143 : vector<6x254xf32>
    %c86 = arith.constant 86 : index
    %145 = memref.load %arg4[%c86] : memref<135xf32, #tpu.memory_space<smem>>
    %146 = vector.broadcast %145 : f32 to vector<6x254xf32>
    %147 = arith.mulf %132, %146 : vector<6x254xf32>
    %148 = arith.addf %127, %147 : vector<6x254xf32>
    %c113 = arith.constant 113 : index
    %149 = memref.load %arg4[%c113] : memref<135xf32, #tpu.memory_space<smem>>
    %150 = vector.broadcast %149 : f32 to vector<6x254xf32>
    %151 = arith.mulf %132, %150 : vector<6x254xf32>
    %152 = arith.addf %131, %151 : vector<6x254xf32>
    %c2_54 = arith.constant 2 : index
    %c0_55 = arith.constant 0 : index
    %153 = vector.load %arg8[%c2_54, %c0_55] : memref<24x256xf32, #tpu.memory_space<vmem>>, vector<6x254xf32>
    %c6 = arith.constant 6 : index
    %154 = memref.load %arg4[%c6] : memref<135xf32, #tpu.memory_space<smem>>
    %155 = vector.broadcast %154 : f32 to vector<6x254xf32>
    %156 = arith.mulf %153, %155 : vector<6x254xf32>
    %157 = arith.addf %136, %156 : vector<6x254xf32>
    %c33 = arith.constant 33 : index
    %158 = memref.load %arg4[%c33] : memref<135xf32, #tpu.memory_space<smem>>
    %159 = vector.broadcast %158 : f32 to vector<6x254xf32>
    %160 = arith.mulf %153, %159 : vector<6x254xf32>
    %161 = arith.addf %140, %160 : vector<6x254xf32>
    %c60 = arith.constant 60 : index
    %162 = memref.load %arg4[%c60] : memref<135xf32, #tpu.memory_space<smem>>
    %163 = vector.broadcast %162 : f32 to vector<6x254xf32>
    %164 = arith.mulf %153, %163 : vector<6x254xf32>
    %165 = arith.addf %144, %164 : vector<6x254xf32>
    %c87 = arith.constant 87 : index
    %166 = memref.load %arg4[%c87] : memref<135xf32, #tpu.memory_space<smem>>
    %167 = vector.broadcast %166 : f32 to vector<6x254xf32>
    %168 = arith.mulf %153, %167 : vector<6x254xf32>
    %169 = arith.addf %148, %168 : vector<6x254xf32>
    %c114 = arith.constant 114 : index
    %170 = memref.load %arg4[%c114] : memref<135xf32, #tpu.memory_space<smem>>
    %171 = vector.broadcast %170 : f32 to vector<6x254xf32>
    %172 = arith.mulf %153, %171 : vector<6x254xf32>
    %173 = arith.addf %152, %172 : vector<6x254xf32>
    %c2_56 = arith.constant 2 : index
    %c1_57 = arith.constant 1 : index
    %174 = vector.load %arg8[%c2_56, %c1_57] : memref<24x256xf32, #tpu.memory_space<vmem>>, vector<6x254xf32>
    %c7 = arith.constant 7 : index
    %175 = memref.load %arg4[%c7] : memref<135xf32, #tpu.memory_space<smem>>
    %176 = vector.broadcast %175 : f32 to vector<6x254xf32>
    %177 = arith.mulf %174, %176 : vector<6x254xf32>
    %178 = arith.addf %157, %177 : vector<6x254xf32>
    %c34 = arith.constant 34 : index
    %179 = memref.load %arg4[%c34] : memref<135xf32, #tpu.memory_space<smem>>
    %180 = vector.broadcast %179 : f32 to vector<6x254xf32>
    %181 = arith.mulf %174, %180 : vector<6x254xf32>
    %182 = arith.addf %161, %181 : vector<6x254xf32>
    %c61 = arith.constant 61 : index
    %183 = memref.load %arg4[%c61] : memref<135xf32, #tpu.memory_space<smem>>
    %184 = vector.broadcast %183 : f32 to vector<6x254xf32>
    %185 = arith.mulf %174, %184 : vector<6x254xf32>
    %186 = arith.addf %165, %185 : vector<6x254xf32>
    %c88 = arith.constant 88 : index
    %187 = memref.load %arg4[%c88] : memref<135xf32, #tpu.memory_space<smem>>
    %188 = vector.broadcast %187 : f32 to vector<6x254xf32>
    %189 = arith.mulf %174, %188 : vector<6x254xf32>
    %190 = arith.addf %169, %189 : vector<6x254xf32>
    %c115 = arith.constant 115 : index
    %191 = memref.load %arg4[%c115] : memref<135xf32, #tpu.memory_space<smem>>
    %192 = vector.broadcast %191 : f32 to vector<6x254xf32>
    %193 = arith.mulf %174, %192 : vector<6x254xf32>
    %194 = arith.addf %173, %193 : vector<6x254xf32>
    %c2_58 = arith.constant 2 : index
    %c2_59 = arith.constant 2 : index
    %195 = vector.load %arg8[%c2_58, %c2_59] : memref<24x256xf32, #tpu.memory_space<vmem>>, vector<6x254xf32>
    %c8_60 = arith.constant 8 : index
    %196 = memref.load %arg4[%c8_60] : memref<135xf32, #tpu.memory_space<smem>>
    %197 = vector.broadcast %196 : f32 to vector<6x254xf32>
    %198 = arith.mulf %195, %197 : vector<6x254xf32>
    %199 = arith.addf %178, %198 : vector<6x254xf32>
    %c35 = arith.constant 35 : index
    %200 = memref.load %arg4[%c35] : memref<135xf32, #tpu.memory_space<smem>>
    %201 = vector.broadcast %200 : f32 to vector<6x254xf32>
    %202 = arith.mulf %195, %201 : vector<6x254xf32>
    %203 = arith.addf %182, %202 : vector<6x254xf32>
    %c62 = arith.constant 62 : index
    %204 = memref.load %arg4[%c62] : memref<135xf32, #tpu.memory_space<smem>>
    %205 = vector.broadcast %204 : f32 to vector<6x254xf32>
    %206 = arith.mulf %195, %205 : vector<6x254xf32>
    %207 = arith.addf %186, %206 : vector<6x254xf32>
    %c89 = arith.constant 89 : index
    %208 = memref.load %arg4[%c89] : memref<135xf32, #tpu.memory_space<smem>>
    %209 = vector.broadcast %208 : f32 to vector<6x254xf32>
    %210 = arith.mulf %195, %209 : vector<6x254xf32>
    %211 = arith.addf %190, %210 : vector<6x254xf32>
    %c116 = arith.constant 116 : index
    %212 = memref.load %arg4[%c116] : memref<135xf32, #tpu.memory_space<smem>>
    %213 = vector.broadcast %212 : f32 to vector<6x254xf32>
    %214 = arith.mulf %195, %213 : vector<6x254xf32>
    %215 = arith.addf %194, %214 : vector<6x254xf32>
    %c8_61 = arith.constant 8 : index
    %c0_62 = arith.constant 0 : index
    %216 = vector.load %arg8[%c8_61, %c0_62] : memref<24x256xf32, #tpu.memory_space<vmem>>, vector<6x254xf32>
    %c9 = arith.constant 9 : index
    %217 = memref.load %arg4[%c9] : memref<135xf32, #tpu.memory_space<smem>>
    %218 = vector.broadcast %217 : f32 to vector<6x254xf32>
    %219 = arith.mulf %216, %218 : vector<6x254xf32>
    %220 = arith.addf %199, %219 : vector<6x254xf32>
    %c36 = arith.constant 36 : index
    %221 = memref.load %arg4[%c36] : memref<135xf32, #tpu.memory_space<smem>>
    %222 = vector.broadcast %221 : f32 to vector<6x254xf32>
    %223 = arith.mulf %216, %222 : vector<6x254xf32>
    %224 = arith.addf %203, %223 : vector<6x254xf32>
    %c63 = arith.constant 63 : index
    %225 = memref.load %arg4[%c63] : memref<135xf32, #tpu.memory_space<smem>>
    %226 = vector.broadcast %225 : f32 to vector<6x254xf32>
    %227 = arith.mulf %216, %226 : vector<6x254xf32>
    %228 = arith.addf %207, %227 : vector<6x254xf32>
    %c90 = arith.constant 90 : index
    %229 = memref.load %arg4[%c90] : memref<135xf32, #tpu.memory_space<smem>>
    %230 = vector.broadcast %229 : f32 to vector<6x254xf32>
    %231 = arith.mulf %216, %230 : vector<6x254xf32>
    %232 = arith.addf %211, %231 : vector<6x254xf32>
    %c117 = arith.constant 117 : index
    %233 = memref.load %arg4[%c117] : memref<135xf32, #tpu.memory_space<smem>>
    %234 = vector.broadcast %233 : f32 to vector<6x254xf32>
    %235 = arith.mulf %216, %234 : vector<6x254xf32>
    %236 = arith.addf %215, %235 : vector<6x254xf32>
    %c8_63 = arith.constant 8 : index
    %c1_64 = arith.constant 1 : index
    %237 = vector.load %arg8[%c8_63, %c1_64] : memref<24x256xf32, #tpu.memory_space<vmem>>, vector<6x254xf32>
    %c10 = arith.constant 10 : index
    %238 = memref.load %arg4[%c10] : memref<135xf32, #tpu.memory_space<smem>>
    %239 = vector.broadcast %238 : f32 to vector<6x254xf32>
    %240 = arith.mulf %237, %239 : vector<6x254xf32>
    %241 = arith.addf %220, %240 : vector<6x254xf32>
    %c37 = arith.constant 37 : index
    %242 = memref.load %arg4[%c37] : memref<135xf32, #tpu.memory_space<smem>>
    %243 = vector.broadcast %242 : f32 to vector<6x254xf32>
    %244 = arith.mulf %237, %243 : vector<6x254xf32>
    %245 = arith.addf %224, %244 : vector<6x254xf32>
    %c64 = arith.constant 64 : index
    %246 = memref.load %arg4[%c64] : memref<135xf32, #tpu.memory_space<smem>>
    %247 = vector.broadcast %246 : f32 to vector<6x254xf32>
    %248 = arith.mulf %237, %247 : vector<6x254xf32>
    %249 = arith.addf %228, %248 : vector<6x254xf32>
    %c91 = arith.constant 91 : index
    %250 = memref.load %arg4[%c91] : memref<135xf32, #tpu.memory_space<smem>>
    %251 = vector.broadcast %250 : f32 to vector<6x254xf32>
    %252 = arith.mulf %237, %251 : vector<6x254xf32>
    %253 = arith.addf %232, %252 : vector<6x254xf32>
    %c118 = arith.constant 118 : index
    %254 = memref.load %arg4[%c118] : memref<135xf32, #tpu.memory_space<smem>>
    %255 = vector.broadcast %254 : f32 to vector<6x254xf32>
    %256 = arith.mulf %237, %255 : vector<6x254xf32>
    %257 = arith.addf %236, %256 : vector<6x254xf32>
    %c8_65 = arith.constant 8 : index
    %c2_66 = arith.constant 2 : index
    %258 = vector.load %arg8[%c8_65, %c2_66] : memref<24x256xf32, #tpu.memory_space<vmem>>, vector<6x254xf32>
    %c11 = arith.constant 11 : index
    %259 = memref.load %arg4[%c11] : memref<135xf32, #tpu.memory_space<smem>>
    %260 = vector.broadcast %259 : f32 to vector<6x254xf32>
    %261 = arith.mulf %258, %260 : vector<6x254xf32>
    %262 = arith.addf %241, %261 : vector<6x254xf32>
    %c38 = arith.constant 38 : index
    %263 = memref.load %arg4[%c38] : memref<135xf32, #tpu.memory_space<smem>>
    %264 = vector.broadcast %263 : f32 to vector<6x254xf32>
    %265 = arith.mulf %258, %264 : vector<6x254xf32>
    %266 = arith.addf %245, %265 : vector<6x254xf32>
    %c65 = arith.constant 65 : index
    %267 = memref.load %arg4[%c65] : memref<135xf32, #tpu.memory_space<smem>>
    %268 = vector.broadcast %267 : f32 to vector<6x254xf32>
    %269 = arith.mulf %258, %268 : vector<6x254xf32>
    %270 = arith.addf %249, %269 : vector<6x254xf32>
    %c92 = arith.constant 92 : index
    %271 = memref.load %arg4[%c92] : memref<135xf32, #tpu.memory_space<smem>>
    %272 = vector.broadcast %271 : f32 to vector<6x254xf32>
    %273 = arith.mulf %258, %272 : vector<6x254xf32>
    %274 = arith.addf %253, %273 : vector<6x254xf32>
    %c119 = arith.constant 119 : index
    %275 = memref.load %arg4[%c119] : memref<135xf32, #tpu.memory_space<smem>>
    %276 = vector.broadcast %275 : f32 to vector<6x254xf32>
    %277 = arith.mulf %258, %276 : vector<6x254xf32>
    %278 = arith.addf %257, %277 : vector<6x254xf32>
    %c9_67 = arith.constant 9 : index
    %c0_68 = arith.constant 0 : index
    %279 = vector.load %arg8[%c9_67, %c0_68] : memref<24x256xf32, #tpu.memory_space<vmem>>, vector<6x254xf32>
    %c12 = arith.constant 12 : index
    %280 = memref.load %arg4[%c12] : memref<135xf32, #tpu.memory_space<smem>>
    %281 = vector.broadcast %280 : f32 to vector<6x254xf32>
    %282 = arith.mulf %279, %281 : vector<6x254xf32>
    %283 = arith.addf %262, %282 : vector<6x254xf32>
    %c39 = arith.constant 39 : index
    %284 = memref.load %arg4[%c39] : memref<135xf32, #tpu.memory_space<smem>>
    %285 = vector.broadcast %284 : f32 to vector<6x254xf32>
    %286 = arith.mulf %279, %285 : vector<6x254xf32>
    %287 = arith.addf %266, %286 : vector<6x254xf32>
    %c66 = arith.constant 66 : index
    %288 = memref.load %arg4[%c66] : memref<135xf32, #tpu.memory_space<smem>>
    %289 = vector.broadcast %288 : f32 to vector<6x254xf32>
    %290 = arith.mulf %279, %289 : vector<6x254xf32>
    %291 = arith.addf %270, %290 : vector<6x254xf32>
    %c93 = arith.constant 93 : index
    %292 = memref.load %arg4[%c93] : memref<135xf32, #tpu.memory_space<smem>>
    %293 = vector.broadcast %292 : f32 to vector<6x254xf32>
    %294 = arith.mulf %279, %293 : vector<6x254xf32>
    %295 = arith.addf %274, %294 : vector<6x254xf32>
    %c120 = arith.constant 120 : index
    %296 = memref.load %arg4[%c120] : memref<135xf32, #tpu.memory_space<smem>>
    %297 = vector.broadcast %296 : f32 to vector<6x254xf32>
    %298 = arith.mulf %279, %297 : vector<6x254xf32>
    %299 = arith.addf %278, %298 : vector<6x254xf32>
    %c9_69 = arith.constant 9 : index
    %c1_70 = arith.constant 1 : index
    %300 = vector.load %arg8[%c9_69, %c1_70] : memref<24x256xf32, #tpu.memory_space<vmem>>, vector<6x254xf32>
    %c13 = arith.constant 13 : index
    %301 = memref.load %arg4[%c13] : memref<135xf32, #tpu.memory_space<smem>>
    %302 = vector.broadcast %301 : f32 to vector<6x254xf32>
    %303 = arith.mulf %300, %302 : vector<6x254xf32>
    %304 = arith.addf %283, %303 : vector<6x254xf32>
    %c40 = arith.constant 40 : index
    %305 = memref.load %arg4[%c40] : memref<135xf32, #tpu.memory_space<smem>>
    %306 = vector.broadcast %305 : f32 to vector<6x254xf32>
    %307 = arith.mulf %300, %306 : vector<6x254xf32>
    %308 = arith.addf %287, %307 : vector<6x254xf32>
    %c67 = arith.constant 67 : index
    %309 = memref.load %arg4[%c67] : memref<135xf32, #tpu.memory_space<smem>>
    %310 = vector.broadcast %309 : f32 to vector<6x254xf32>
    %311 = arith.mulf %300, %310 : vector<6x254xf32>
    %312 = arith.addf %291, %311 : vector<6x254xf32>
    %c94 = arith.constant 94 : index
    %313 = memref.load %arg4[%c94] : memref<135xf32, #tpu.memory_space<smem>>
    %314 = vector.broadcast %313 : f32 to vector<6x254xf32>
    %315 = arith.mulf %300, %314 : vector<6x254xf32>
    %316 = arith.addf %295, %315 : vector<6x254xf32>
    %c121 = arith.constant 121 : index
    %317 = memref.load %arg4[%c121] : memref<135xf32, #tpu.memory_space<smem>>
    %318 = vector.broadcast %317 : f32 to vector<6x254xf32>
    %319 = arith.mulf %300, %318 : vector<6x254xf32>
    %320 = arith.addf %299, %319 : vector<6x254xf32>
    %c9_71 = arith.constant 9 : index
    %c2_72 = arith.constant 2 : index
    %321 = vector.load %arg8[%c9_71, %c2_72] : memref<24x256xf32, #tpu.memory_space<vmem>>, vector<6x254xf32>
    %c14 = arith.constant 14 : index
    %322 = memref.load %arg4[%c14] : memref<135xf32, #tpu.memory_space<smem>>
    %323 = vector.broadcast %322 : f32 to vector<6x254xf32>
    %324 = arith.mulf %321, %323 : vector<6x254xf32>
    %325 = arith.addf %304, %324 : vector<6x254xf32>
    %c41 = arith.constant 41 : index
    %326 = memref.load %arg4[%c41] : memref<135xf32, #tpu.memory_space<smem>>
    %327 = vector.broadcast %326 : f32 to vector<6x254xf32>
    %328 = arith.mulf %321, %327 : vector<6x254xf32>
    %329 = arith.addf %308, %328 : vector<6x254xf32>
    %c68 = arith.constant 68 : index
    %330 = memref.load %arg4[%c68] : memref<135xf32, #tpu.memory_space<smem>>
    %331 = vector.broadcast %330 : f32 to vector<6x254xf32>
    %332 = arith.mulf %321, %331 : vector<6x254xf32>
    %333 = arith.addf %312, %332 : vector<6x254xf32>
    %c95 = arith.constant 95 : index
    %334 = memref.load %arg4[%c95] : memref<135xf32, #tpu.memory_space<smem>>
    %335 = vector.broadcast %334 : f32 to vector<6x254xf32>
    %336 = arith.mulf %321, %335 : vector<6x254xf32>
    %337 = arith.addf %316, %336 : vector<6x254xf32>
    %c122 = arith.constant 122 : index
    %338 = memref.load %arg4[%c122] : memref<135xf32, #tpu.memory_space<smem>>
    %339 = vector.broadcast %338 : f32 to vector<6x254xf32>
    %340 = arith.mulf %321, %339 : vector<6x254xf32>
    %341 = arith.addf %320, %340 : vector<6x254xf32>
    %c10_73 = arith.constant 10 : index
    %c0_74 = arith.constant 0 : index
    %342 = vector.load %arg8[%c10_73, %c0_74] : memref<24x256xf32, #tpu.memory_space<vmem>>, vector<6x254xf32>
    %c15 = arith.constant 15 : index
    %343 = memref.load %arg4[%c15] : memref<135xf32, #tpu.memory_space<smem>>
    %344 = vector.broadcast %343 : f32 to vector<6x254xf32>
    %345 = arith.mulf %342, %344 : vector<6x254xf32>
    %346 = arith.addf %325, %345 : vector<6x254xf32>
    %c42 = arith.constant 42 : index
    %347 = memref.load %arg4[%c42] : memref<135xf32, #tpu.memory_space<smem>>
    %348 = vector.broadcast %347 : f32 to vector<6x254xf32>
    %349 = arith.mulf %342, %348 : vector<6x254xf32>
    %350 = arith.addf %329, %349 : vector<6x254xf32>
    %c69 = arith.constant 69 : index
    %351 = memref.load %arg4[%c69] : memref<135xf32, #tpu.memory_space<smem>>
    %352 = vector.broadcast %351 : f32 to vector<6x254xf32>
    %353 = arith.mulf %342, %352 : vector<6x254xf32>
    %354 = arith.addf %333, %353 : vector<6x254xf32>
    %c96 = arith.constant 96 : index
    %355 = memref.load %arg4[%c96] : memref<135xf32, #tpu.memory_space<smem>>
    %356 = vector.broadcast %355 : f32 to vector<6x254xf32>
    %357 = arith.mulf %342, %356 : vector<6x254xf32>
    %358 = arith.addf %337, %357 : vector<6x254xf32>
    %c123 = arith.constant 123 : index
    %359 = memref.load %arg4[%c123] : memref<135xf32, #tpu.memory_space<smem>>
    %360 = vector.broadcast %359 : f32 to vector<6x254xf32>
    %361 = arith.mulf %342, %360 : vector<6x254xf32>
    %362 = arith.addf %341, %361 : vector<6x254xf32>
    %c10_75 = arith.constant 10 : index
    %c1_76 = arith.constant 1 : index
    %363 = vector.load %arg8[%c10_75, %c1_76] : memref<24x256xf32, #tpu.memory_space<vmem>>, vector<6x254xf32>
    %c16_77 = arith.constant 16 : index
    %364 = memref.load %arg4[%c16_77] : memref<135xf32, #tpu.memory_space<smem>>
    %365 = vector.broadcast %364 : f32 to vector<6x254xf32>
    %366 = arith.mulf %363, %365 : vector<6x254xf32>
    %367 = arith.addf %346, %366 : vector<6x254xf32>
    %c43 = arith.constant 43 : index
    %368 = memref.load %arg4[%c43] : memref<135xf32, #tpu.memory_space<smem>>
    %369 = vector.broadcast %368 : f32 to vector<6x254xf32>
    %370 = arith.mulf %363, %369 : vector<6x254xf32>
    %371 = arith.addf %350, %370 : vector<6x254xf32>
    %c70 = arith.constant 70 : index
    %372 = memref.load %arg4[%c70] : memref<135xf32, #tpu.memory_space<smem>>
    %373 = vector.broadcast %372 : f32 to vector<6x254xf32>
    %374 = arith.mulf %363, %373 : vector<6x254xf32>
    %375 = arith.addf %354, %374 : vector<6x254xf32>
    %c97 = arith.constant 97 : index
    %376 = memref.load %arg4[%c97] : memref<135xf32, #tpu.memory_space<smem>>
    %377 = vector.broadcast %376 : f32 to vector<6x254xf32>
    %378 = arith.mulf %363, %377 : vector<6x254xf32>
    %379 = arith.addf %358, %378 : vector<6x254xf32>
    %c124 = arith.constant 124 : index
    %380 = memref.load %arg4[%c124] : memref<135xf32, #tpu.memory_space<smem>>
    %381 = vector.broadcast %380 : f32 to vector<6x254xf32>
    %382 = arith.mulf %363, %381 : vector<6x254xf32>
    %383 = arith.addf %362, %382 : vector<6x254xf32>
    %c10_78 = arith.constant 10 : index
    %c2_79 = arith.constant 2 : index
    %384 = vector.load %arg8[%c10_78, %c2_79] : memref<24x256xf32, #tpu.memory_space<vmem>>, vector<6x254xf32>
    %c17 = arith.constant 17 : index
    %385 = memref.load %arg4[%c17] : memref<135xf32, #tpu.memory_space<smem>>
    %386 = vector.broadcast %385 : f32 to vector<6x254xf32>
    %387 = arith.mulf %384, %386 : vector<6x254xf32>
    %388 = arith.addf %367, %387 : vector<6x254xf32>
    %c44 = arith.constant 44 : index
    %389 = memref.load %arg4[%c44] : memref<135xf32, #tpu.memory_space<smem>>
    %390 = vector.broadcast %389 : f32 to vector<6x254xf32>
    %391 = arith.mulf %384, %390 : vector<6x254xf32>
    %392 = arith.addf %371, %391 : vector<6x254xf32>
    %c71 = arith.constant 71 : index
    %393 = memref.load %arg4[%c71] : memref<135xf32, #tpu.memory_space<smem>>
    %394 = vector.broadcast %393 : f32 to vector<6x254xf32>
    %395 = arith.mulf %384, %394 : vector<6x254xf32>
    %396 = arith.addf %375, %395 : vector<6x254xf32>
    %c98 = arith.constant 98 : index
    %397 = memref.load %arg4[%c98] : memref<135xf32, #tpu.memory_space<smem>>
    %398 = vector.broadcast %397 : f32 to vector<6x254xf32>
    %399 = arith.mulf %384, %398 : vector<6x254xf32>
    %400 = arith.addf %379, %399 : vector<6x254xf32>
    %c125 = arith.constant 125 : index
    %401 = memref.load %arg4[%c125] : memref<135xf32, #tpu.memory_space<smem>>
    %402 = vector.broadcast %401 : f32 to vector<6x254xf32>
    %403 = arith.mulf %384, %402 : vector<6x254xf32>
    %404 = arith.addf %383, %403 : vector<6x254xf32>
    %c16_80 = arith.constant 16 : index
    %c0_81 = arith.constant 0 : index
    %405 = vector.load %arg8[%c16_80, %c0_81] : memref<24x256xf32, #tpu.memory_space<vmem>>, vector<6x254xf32>
    %c18 = arith.constant 18 : index
    %406 = memref.load %arg4[%c18] : memref<135xf32, #tpu.memory_space<smem>>
    %407 = vector.broadcast %406 : f32 to vector<6x254xf32>
    %408 = arith.mulf %405, %407 : vector<6x254xf32>
    %409 = arith.addf %388, %408 : vector<6x254xf32>
    %c45 = arith.constant 45 : index
    %410 = memref.load %arg4[%c45] : memref<135xf32, #tpu.memory_space<smem>>
    %411 = vector.broadcast %410 : f32 to vector<6x254xf32>
    %412 = arith.mulf %405, %411 : vector<6x254xf32>
    %413 = arith.addf %392, %412 : vector<6x254xf32>
    %c72 = arith.constant 72 : index
    %414 = memref.load %arg4[%c72] : memref<135xf32, #tpu.memory_space<smem>>
    %415 = vector.broadcast %414 : f32 to vector<6x254xf32>
    %416 = arith.mulf %405, %415 : vector<6x254xf32>
    %417 = arith.addf %396, %416 : vector<6x254xf32>
    %c99 = arith.constant 99 : index
    %418 = memref.load %arg4[%c99] : memref<135xf32, #tpu.memory_space<smem>>
    %419 = vector.broadcast %418 : f32 to vector<6x254xf32>
    %420 = arith.mulf %405, %419 : vector<6x254xf32>
    %421 = arith.addf %400, %420 : vector<6x254xf32>
    %c126 = arith.constant 126 : index
    %422 = memref.load %arg4[%c126] : memref<135xf32, #tpu.memory_space<smem>>
    %423 = vector.broadcast %422 : f32 to vector<6x254xf32>
    %424 = arith.mulf %405, %423 : vector<6x254xf32>
    %425 = arith.addf %404, %424 : vector<6x254xf32>
    %c16_82 = arith.constant 16 : index
    %c1_83 = arith.constant 1 : index
    %426 = vector.load %arg8[%c16_82, %c1_83] : memref<24x256xf32, #tpu.memory_space<vmem>>, vector<6x254xf32>
    %c19 = arith.constant 19 : index
    %427 = memref.load %arg4[%c19] : memref<135xf32, #tpu.memory_space<smem>>
    %428 = vector.broadcast %427 : f32 to vector<6x254xf32>
    %429 = arith.mulf %426, %428 : vector<6x254xf32>
    %430 = arith.addf %409, %429 : vector<6x254xf32>
    %c46 = arith.constant 46 : index
    %431 = memref.load %arg4[%c46] : memref<135xf32, #tpu.memory_space<smem>>
    %432 = vector.broadcast %431 : f32 to vector<6x254xf32>
    %433 = arith.mulf %426, %432 : vector<6x254xf32>
    %434 = arith.addf %413, %433 : vector<6x254xf32>
    %c73 = arith.constant 73 : index
    %435 = memref.load %arg4[%c73] : memref<135xf32, #tpu.memory_space<smem>>
    %436 = vector.broadcast %435 : f32 to vector<6x254xf32>
    %437 = arith.mulf %426, %436 : vector<6x254xf32>
    %438 = arith.addf %417, %437 : vector<6x254xf32>
    %c100 = arith.constant 100 : index
    %439 = memref.load %arg4[%c100] : memref<135xf32, #tpu.memory_space<smem>>
    %440 = vector.broadcast %439 : f32 to vector<6x254xf32>
    %441 = arith.mulf %426, %440 : vector<6x254xf32>
    %442 = arith.addf %421, %441 : vector<6x254xf32>
    %c127 = arith.constant 127 : index
    %443 = memref.load %arg4[%c127] : memref<135xf32, #tpu.memory_space<smem>>
    %444 = vector.broadcast %443 : f32 to vector<6x254xf32>
    %445 = arith.mulf %426, %444 : vector<6x254xf32>
    %446 = arith.addf %425, %445 : vector<6x254xf32>
    %c16_84 = arith.constant 16 : index
    %c2_85 = arith.constant 2 : index
    %447 = vector.load %arg8[%c16_84, %c2_85] : memref<24x256xf32, #tpu.memory_space<vmem>>, vector<6x254xf32>
    %c20 = arith.constant 20 : index
    %448 = memref.load %arg4[%c20] : memref<135xf32, #tpu.memory_space<smem>>
    %449 = vector.broadcast %448 : f32 to vector<6x254xf32>
    %450 = arith.mulf %447, %449 : vector<6x254xf32>
    %451 = arith.addf %430, %450 : vector<6x254xf32>
    %c47 = arith.constant 47 : index
    %452 = memref.load %arg4[%c47] : memref<135xf32, #tpu.memory_space<smem>>
    %453 = vector.broadcast %452 : f32 to vector<6x254xf32>
    %454 = arith.mulf %447, %453 : vector<6x254xf32>
    %455 = arith.addf %434, %454 : vector<6x254xf32>
    %c74 = arith.constant 74 : index
    %456 = memref.load %arg4[%c74] : memref<135xf32, #tpu.memory_space<smem>>
    %457 = vector.broadcast %456 : f32 to vector<6x254xf32>
    %458 = arith.mulf %447, %457 : vector<6x254xf32>
    %459 = arith.addf %438, %458 : vector<6x254xf32>
    %c101 = arith.constant 101 : index
    %460 = memref.load %arg4[%c101] : memref<135xf32, #tpu.memory_space<smem>>
    %461 = vector.broadcast %460 : f32 to vector<6x254xf32>
    %462 = arith.mulf %447, %461 : vector<6x254xf32>
    %463 = arith.addf %442, %462 : vector<6x254xf32>
    %c128 = arith.constant 128 : index
    %464 = memref.load %arg4[%c128] : memref<135xf32, #tpu.memory_space<smem>>
    %465 = vector.broadcast %464 : f32 to vector<6x254xf32>
    %466 = arith.mulf %447, %465 : vector<6x254xf32>
    %467 = arith.addf %446, %466 : vector<6x254xf32>
    %c17_86 = arith.constant 17 : index
    %c0_87 = arith.constant 0 : index
    %468 = vector.load %arg8[%c17_86, %c0_87] : memref<24x256xf32, #tpu.memory_space<vmem>>, vector<6x254xf32>
    %c21 = arith.constant 21 : index
    %469 = memref.load %arg4[%c21] : memref<135xf32, #tpu.memory_space<smem>>
    %470 = vector.broadcast %469 : f32 to vector<6x254xf32>
    %471 = arith.mulf %468, %470 : vector<6x254xf32>
    %472 = arith.addf %451, %471 : vector<6x254xf32>
    %c48 = arith.constant 48 : index
    %473 = memref.load %arg4[%c48] : memref<135xf32, #tpu.memory_space<smem>>
    %474 = vector.broadcast %473 : f32 to vector<6x254xf32>
    %475 = arith.mulf %468, %474 : vector<6x254xf32>
    %476 = arith.addf %455, %475 : vector<6x254xf32>
    %c75 = arith.constant 75 : index
    %477 = memref.load %arg4[%c75] : memref<135xf32, #tpu.memory_space<smem>>
    %478 = vector.broadcast %477 : f32 to vector<6x254xf32>
    %479 = arith.mulf %468, %478 : vector<6x254xf32>
    %480 = arith.addf %459, %479 : vector<6x254xf32>
    %c102 = arith.constant 102 : index
    %481 = memref.load %arg4[%c102] : memref<135xf32, #tpu.memory_space<smem>>
    %482 = vector.broadcast %481 : f32 to vector<6x254xf32>
    %483 = arith.mulf %468, %482 : vector<6x254xf32>
    %484 = arith.addf %463, %483 : vector<6x254xf32>
    %c129 = arith.constant 129 : index
    %485 = memref.load %arg4[%c129] : memref<135xf32, #tpu.memory_space<smem>>
    %486 = vector.broadcast %485 : f32 to vector<6x254xf32>
    %487 = arith.mulf %468, %486 : vector<6x254xf32>
    %488 = arith.addf %467, %487 : vector<6x254xf32>
    %c17_88 = arith.constant 17 : index
    %c1_89 = arith.constant 1 : index
    %489 = vector.load %arg8[%c17_88, %c1_89] : memref<24x256xf32, #tpu.memory_space<vmem>>, vector<6x254xf32>
    %c22 = arith.constant 22 : index
    %490 = memref.load %arg4[%c22] : memref<135xf32, #tpu.memory_space<smem>>
    %491 = vector.broadcast %490 : f32 to vector<6x254xf32>
    %492 = arith.mulf %489, %491 : vector<6x254xf32>
    %493 = arith.addf %472, %492 : vector<6x254xf32>
    %c49 = arith.constant 49 : index
    %494 = memref.load %arg4[%c49] : memref<135xf32, #tpu.memory_space<smem>>
    %495 = vector.broadcast %494 : f32 to vector<6x254xf32>
    %496 = arith.mulf %489, %495 : vector<6x254xf32>
    %497 = arith.addf %476, %496 : vector<6x254xf32>
    %c76 = arith.constant 76 : index
    %498 = memref.load %arg4[%c76] : memref<135xf32, #tpu.memory_space<smem>>
    %499 = vector.broadcast %498 : f32 to vector<6x254xf32>
    %500 = arith.mulf %489, %499 : vector<6x254xf32>
    %501 = arith.addf %480, %500 : vector<6x254xf32>
    %c103 = arith.constant 103 : index
    %502 = memref.load %arg4[%c103] : memref<135xf32, #tpu.memory_space<smem>>
    %503 = vector.broadcast %502 : f32 to vector<6x254xf32>
    %504 = arith.mulf %489, %503 : vector<6x254xf32>
    %505 = arith.addf %484, %504 : vector<6x254xf32>
    %c130 = arith.constant 130 : index
    %506 = memref.load %arg4[%c130] : memref<135xf32, #tpu.memory_space<smem>>
    %507 = vector.broadcast %506 : f32 to vector<6x254xf32>
    %508 = arith.mulf %489, %507 : vector<6x254xf32>
    %509 = arith.addf %488, %508 : vector<6x254xf32>
    %c17_90 = arith.constant 17 : index
    %c2_91 = arith.constant 2 : index
    %510 = vector.load %arg8[%c17_90, %c2_91] : memref<24x256xf32, #tpu.memory_space<vmem>>, vector<6x254xf32>
    %c23 = arith.constant 23 : index
    %511 = memref.load %arg4[%c23] : memref<135xf32, #tpu.memory_space<smem>>
    %512 = vector.broadcast %511 : f32 to vector<6x254xf32>
    %513 = arith.mulf %510, %512 : vector<6x254xf32>
    %514 = arith.addf %493, %513 : vector<6x254xf32>
    %c50 = arith.constant 50 : index
    %515 = memref.load %arg4[%c50] : memref<135xf32, #tpu.memory_space<smem>>
    %516 = vector.broadcast %515 : f32 to vector<6x254xf32>
    %517 = arith.mulf %510, %516 : vector<6x254xf32>
    %518 = arith.addf %497, %517 : vector<6x254xf32>
    %c77 = arith.constant 77 : index
    %519 = memref.load %arg4[%c77] : memref<135xf32, #tpu.memory_space<smem>>
    %520 = vector.broadcast %519 : f32 to vector<6x254xf32>
    %521 = arith.mulf %510, %520 : vector<6x254xf32>
    %522 = arith.addf %501, %521 : vector<6x254xf32>
    %c104 = arith.constant 104 : index
    %523 = memref.load %arg4[%c104] : memref<135xf32, #tpu.memory_space<smem>>
    %524 = vector.broadcast %523 : f32 to vector<6x254xf32>
    %525 = arith.mulf %510, %524 : vector<6x254xf32>
    %526 = arith.addf %505, %525 : vector<6x254xf32>
    %c131 = arith.constant 131 : index
    %527 = memref.load %arg4[%c131] : memref<135xf32, #tpu.memory_space<smem>>
    %528 = vector.broadcast %527 : f32 to vector<6x254xf32>
    %529 = arith.mulf %510, %528 : vector<6x254xf32>
    %530 = arith.addf %509, %529 : vector<6x254xf32>
    %c18_92 = arith.constant 18 : index
    %c0_93 = arith.constant 0 : index
    %531 = vector.load %arg8[%c18_92, %c0_93] : memref<24x256xf32, #tpu.memory_space<vmem>>, vector<6x254xf32>
    %c24 = arith.constant 24 : index
    %532 = memref.load %arg4[%c24] : memref<135xf32, #tpu.memory_space<smem>>
    %533 = vector.broadcast %532 : f32 to vector<6x254xf32>
    %534 = arith.mulf %531, %533 : vector<6x254xf32>
    %535 = arith.addf %514, %534 : vector<6x254xf32>
    %c51 = arith.constant 51 : index
    %536 = memref.load %arg4[%c51] : memref<135xf32, #tpu.memory_space<smem>>
    %537 = vector.broadcast %536 : f32 to vector<6x254xf32>
    %538 = arith.mulf %531, %537 : vector<6x254xf32>
    %539 = arith.addf %518, %538 : vector<6x254xf32>
    %c78 = arith.constant 78 : index
    %540 = memref.load %arg4[%c78] : memref<135xf32, #tpu.memory_space<smem>>
    %541 = vector.broadcast %540 : f32 to vector<6x254xf32>
    %542 = arith.mulf %531, %541 : vector<6x254xf32>
    %543 = arith.addf %522, %542 : vector<6x254xf32>
    %c105 = arith.constant 105 : index
    %544 = memref.load %arg4[%c105] : memref<135xf32, #tpu.memory_space<smem>>
    %545 = vector.broadcast %544 : f32 to vector<6x254xf32>
    %546 = arith.mulf %531, %545 : vector<6x254xf32>
    %547 = arith.addf %526, %546 : vector<6x254xf32>
    %c132 = arith.constant 132 : index
    %548 = memref.load %arg4[%c132] : memref<135xf32, #tpu.memory_space<smem>>
    %549 = vector.broadcast %548 : f32 to vector<6x254xf32>
    %550 = arith.mulf %531, %549 : vector<6x254xf32>
    %551 = arith.addf %530, %550 : vector<6x254xf32>
    %c18_94 = arith.constant 18 : index
    %c1_95 = arith.constant 1 : index
    %552 = vector.load %arg8[%c18_94, %c1_95] : memref<24x256xf32, #tpu.memory_space<vmem>>, vector<6x254xf32>
    %c25 = arith.constant 25 : index
    %553 = memref.load %arg4[%c25] : memref<135xf32, #tpu.memory_space<smem>>
    %554 = vector.broadcast %553 : f32 to vector<6x254xf32>
    %555 = arith.mulf %552, %554 : vector<6x254xf32>
    %556 = arith.addf %535, %555 : vector<6x254xf32>
    %c52 = arith.constant 52 : index
    %557 = memref.load %arg4[%c52] : memref<135xf32, #tpu.memory_space<smem>>
    %558 = vector.broadcast %557 : f32 to vector<6x254xf32>
    %559 = arith.mulf %552, %558 : vector<6x254xf32>
    %560 = arith.addf %539, %559 : vector<6x254xf32>
    %c79 = arith.constant 79 : index
    %561 = memref.load %arg4[%c79] : memref<135xf32, #tpu.memory_space<smem>>
    %562 = vector.broadcast %561 : f32 to vector<6x254xf32>
    %563 = arith.mulf %552, %562 : vector<6x254xf32>
    %564 = arith.addf %543, %563 : vector<6x254xf32>
    %c106 = arith.constant 106 : index
    %565 = memref.load %arg4[%c106] : memref<135xf32, #tpu.memory_space<smem>>
    %566 = vector.broadcast %565 : f32 to vector<6x254xf32>
    %567 = arith.mulf %552, %566 : vector<6x254xf32>
    %568 = arith.addf %547, %567 : vector<6x254xf32>
    %c133 = arith.constant 133 : index
    %569 = memref.load %arg4[%c133] : memref<135xf32, #tpu.memory_space<smem>>
    %570 = vector.broadcast %569 : f32 to vector<6x254xf32>
    %571 = arith.mulf %552, %570 : vector<6x254xf32>
    %572 = arith.addf %551, %571 : vector<6x254xf32>
    %c18_96 = arith.constant 18 : index
    %c2_97 = arith.constant 2 : index
    %573 = vector.load %arg8[%c18_96, %c2_97] : memref<24x256xf32, #tpu.memory_space<vmem>>, vector<6x254xf32>
    %c26 = arith.constant 26 : index
    %574 = memref.load %arg4[%c26] : memref<135xf32, #tpu.memory_space<smem>>
    %575 = vector.broadcast %574 : f32 to vector<6x254xf32>
    %576 = arith.mulf %573, %575 : vector<6x254xf32>
    %577 = arith.addf %556, %576 : vector<6x254xf32>
    %c53 = arith.constant 53 : index
    %578 = memref.load %arg4[%c53] : memref<135xf32, #tpu.memory_space<smem>>
    %579 = vector.broadcast %578 : f32 to vector<6x254xf32>
    %580 = arith.mulf %573, %579 : vector<6x254xf32>
    %581 = arith.addf %560, %580 : vector<6x254xf32>
    %c80 = arith.constant 80 : index
    %582 = memref.load %arg4[%c80] : memref<135xf32, #tpu.memory_space<smem>>
    %583 = vector.broadcast %582 : f32 to vector<6x254xf32>
    %584 = arith.mulf %573, %583 : vector<6x254xf32>
    %585 = arith.addf %564, %584 : vector<6x254xf32>
    %c107 = arith.constant 107 : index
    %586 = memref.load %arg4[%c107] : memref<135xf32, #tpu.memory_space<smem>>
    %587 = vector.broadcast %586 : f32 to vector<6x254xf32>
    %588 = arith.mulf %573, %587 : vector<6x254xf32>
    %589 = arith.addf %568, %588 : vector<6x254xf32>
    %c134 = arith.constant 134 : index
    %590 = memref.load %arg4[%c134] : memref<135xf32, #tpu.memory_space<smem>>
    %591 = vector.broadcast %590 : f32 to vector<6x254xf32>
    %592 = arith.mulf %573, %591 : vector<6x254xf32>
    %593 = arith.addf %572, %592 : vector<6x254xf32>
    %cst_98 = arith.constant 0.000000e+00 : f32
    %594 = vector.broadcast %cst_98 : f32 to vector<50x258xf32>
    %c0_99 = arith.constant 0 : index
    %c0_100 = arith.constant 0 : index
    %595 = vector.load %arg9[%c0_99, %c0_100] : memref<50x258xf32, #tpu.memory_space<vmem>>, vector<50x258xf32>
    tpu.vector_store %arg9[%c0_99, %c0_100], %594 {strides = array<i32>} : memref<50x258xf32, #tpu.memory_space<vmem>>, vector<50x258xf32>,
    %c2_101 = arith.constant 2 : index
    %c2_102 = arith.constant 2 : index
    %596 = vector.load %arg9[%c2_101, %c2_102] : memref<50x258xf32, #tpu.memory_space<vmem>>, vector<6x254xf32>
    tpu.vector_store %arg9[%c2_101, %c2_102], %577 {strides = array<i32>} : memref<50x258xf32, #tpu.memory_space<vmem>>, vector<6x254xf32>,
    %c12_103 = arith.constant 12 : index
    %c2_104 = arith.constant 2 : index
    %597 = vector.load %arg9[%c12_103, %c2_104] : memref<50x258xf32, #tpu.memory_space<vmem>>, vector<6x254xf32>
    tpu.vector_store %arg9[%c12_103, %c2_104], %581 {strides = array<i32>} : memref<50x258xf32, #tpu.memory_space<vmem>>, vector<6x254xf32>,
    %c22_105 = arith.constant 22 : index
    %c2_106 = arith.constant 2 : index
    %598 = vector.load %arg9[%c22_105, %c2_106] : memref<50x258xf32, #tpu.memory_space<vmem>>, vector<6x254xf32>
    tpu.vector_store %arg9[%c22_105, %c2_106], %585 {strides = array<i32>} : memref<50x258xf32, #tpu.memory_space<vmem>>, vector<6x254xf32>,
    %c32_107 = arith.constant 32 : index
    %c2_108 = arith.constant 2 : index
    %599 = vector.load %arg9[%c32_107, %c2_108] : memref<50x258xf32, #tpu.memory_space<vmem>>, vector<6x254xf32>
    tpu.vector_store %arg9[%c32_107, %c2_108], %589 {strides = array<i32>} : memref<50x258xf32, #tpu.memory_space<vmem>>, vector<6x254xf32>,
    %c42_109 = arith.constant 42 : index
    %c2_110 = arith.constant 2 : index
    %600 = vector.load %arg9[%c42_109, %c2_110] : memref<50x258xf32, #tpu.memory_space<vmem>>, vector<6x254xf32>
    tpu.vector_store %arg9[%c42_109, %c2_110], %593 {strides = array<i32>} : memref<50x258xf32, #tpu.memory_space<vmem>>, vector<6x254xf32>,
    %cst_111 = arith.constant 0.000000e+00 : f32
    %601 = vector.broadcast %cst_111 : f32 to vector<8x256xf32>
    %cst_112 = arith.constant 0.000000e+00 : f32
    %602 = vector.broadcast %cst_112 : f32 to vector<8x256xf32>
    %cst_113 = arith.constant 0.000000e+00 : f32
    %603 = vector.broadcast %cst_113 : f32 to vector<8x256xf32>
    %cst_114 = arith.constant 0.000000e+00 : f32
    %604 = vector.broadcast %cst_114 : f32 to vector<8x256xf32>
    %c0_115 = arith.constant 0 : index
    %c0_116 = arith.constant 0 : index
    %605 = vector.load %arg9[%c0_115, %c0_116] : memref<50x258xf32, #tpu.memory_space<vmem>>, vector<8x256xf32>
    %c0_117 = arith.constant 0 : index
    %606 = memref.load %arg5[%c0_117] : memref<180xf32, #tpu.memory_space<smem>>
    %607 = vector.broadcast %606 : f32 to vector<8x256xf32>
    %608 = arith.mulf %605, %607 : vector<8x256xf32>
    %609 = arith.addf %601, %608 : vector<8x256xf32>
    %c45_118 = arith.constant 45 : index
    %610 = memref.load %arg5[%c45_118] : memref<180xf32, #tpu.memory_space<smem>>
    %611 = vector.broadcast %610 : f32 to vector<8x256xf32>
    %612 = arith.mulf %605, %611 : vector<8x256xf32>
    %613 = arith.addf %602, %612 : vector<8x256xf32>
    %c90_119 = arith.constant 90 : index
    %614 = memref.load %arg5[%c90_119] : memref<180xf32, #tpu.memory_space<smem>>
    %615 = vector.broadcast %614 : f32 to vector<8x256xf32>
    %616 = arith.mulf %605, %615 : vector<8x256xf32>
    %617 = arith.addf %603, %616 : vector<8x256xf32>
    %c135 = arith.constant 135 : index
    %618 = memref.load %arg5[%c135] : memref<180xf32, #tpu.memory_space<smem>>
    %619 = vector.broadcast %618 : f32 to vector<8x256xf32>
    %620 = arith.mulf %605, %619 : vector<8x256xf32>
    %621 = arith.addf %604, %620 : vector<8x256xf32>
    %c0_120 = arith.constant 0 : index
    %c1_121 = arith.constant 1 : index
    %622 = vector.load %arg9[%c0_120, %c1_121] : memref<50x258xf32, #tpu.memory_space<vmem>>, vector<8x256xf32>
    %c1_122 = arith.constant 1 : index
    %623 = memref.load %arg5[%c1_122] : memref<180xf32, #tpu.memory_space<smem>>
    %624 = vector.broadcast %623 : f32 to vector<8x256xf32>
    %625 = arith.mulf %622, %624 : vector<8x256xf32>
    %626 = arith.addf %609, %625 : vector<8x256xf32>
    %c46_123 = arith.constant 46 : index
    %627 = memref.load %arg5[%c46_123] : memref<180xf32, #tpu.memory_space<smem>>
    %628 = vector.broadcast %627 : f32 to vector<8x256xf32>
    %629 = arith.mulf %622, %628 : vector<8x256xf32>
    %630 = arith.addf %613, %629 : vector<8x256xf32>
    %c91_124 = arith.constant 91 : index
    %631 = memref.load %arg5[%c91_124] : memref<180xf32, #tpu.memory_space<smem>>
    %632 = vector.broadcast %631 : f32 to vector<8x256xf32>
    %633 = arith.mulf %622, %632 : vector<8x256xf32>
    %634 = arith.addf %617, %633 : vector<8x256xf32>
    %c136 = arith.constant 136 : index
    %635 = memref.load %arg5[%c136] : memref<180xf32, #tpu.memory_space<smem>>
    %636 = vector.broadcast %635 : f32 to vector<8x256xf32>
    %637 = arith.mulf %622, %636 : vector<8x256xf32>
    %638 = arith.addf %621, %637 : vector<8x256xf32>
    %c0_125 = arith.constant 0 : index
    %c2_126 = arith.constant 2 : index
    %639 = vector.load %arg9[%c0_125, %c2_126] : memref<50x258xf32, #tpu.memory_space<vmem>>, vector<8x256xf32>
    %c2_127 = arith.constant 2 : index
    %640 = memref.load %arg5[%c2_127] : memref<180xf32, #tpu.memory_space<smem>>
    %641 = vector.broadcast %640 : f32 to vector<8x256xf32>
    %642 = arith.mulf %639, %641 : vector<8x256xf32>
    %643 = arith.addf %626, %642 : vector<8x256xf32>
    %c47_128 = arith.constant 47 : index
    %644 = memref.load %arg5[%c47_128] : memref<180xf32, #tpu.memory_space<smem>>
    %645 = vector.broadcast %644 : f32 to vector<8x256xf32>
    %646 = arith.mulf %639, %645 : vector<8x256xf32>
    %647 = arith.addf %630, %646 : vector<8x256xf32>
    %c92_129 = arith.constant 92 : index
    %648 = memref.load %arg5[%c92_129] : memref<180xf32, #tpu.memory_space<smem>>
    %649 = vector.broadcast %648 : f32 to vector<8x256xf32>
    %650 = arith.mulf %639, %649 : vector<8x256xf32>
    %651 = arith.addf %634, %650 : vector<8x256xf32>
    %c137 = arith.constant 137 : index
    %652 = memref.load %arg5[%c137] : memref<180xf32, #tpu.memory_space<smem>>
    %653 = vector.broadcast %652 : f32 to vector<8x256xf32>
    %654 = arith.mulf %639, %653 : vector<8x256xf32>
    %655 = arith.addf %638, %654 : vector<8x256xf32>
    %c1_130 = arith.constant 1 : index
    %c0_131 = arith.constant 0 : index
    %656 = vector.load %arg9[%c1_130, %c0_131] : memref<50x258xf32, #tpu.memory_space<vmem>>, vector<8x256xf32>
    %c3_132 = arith.constant 3 : index
    %657 = memref.load %arg5[%c3_132] : memref<180xf32, #tpu.memory_space<smem>>
    %658 = vector.broadcast %657 : f32 to vector<8x256xf32>
    %659 = arith.mulf %656, %658 : vector<8x256xf32>
    %660 = arith.addf %643, %659 : vector<8x256xf32>
    %c48_133 = arith.constant 48 : index
    %661 = memref.load %arg5[%c48_133] : memref<180xf32, #tpu.memory_space<smem>>
    %662 = vector.broadcast %661 : f32 to vector<8x256xf32>
    %663 = arith.mulf %656, %662 : vector<8x256xf32>
    %664 = arith.addf %647, %663 : vector<8x256xf32>
    %c93_134 = arith.constant 93 : index
    %665 = memref.load %arg5[%c93_134] : memref<180xf32, #tpu.memory_space<smem>>
    %666 = vector.broadcast %665 : f32 to vector<8x256xf32>
    %667 = arith.mulf %656, %666 : vector<8x256xf32>
    %668 = arith.addf %651, %667 : vector<8x256xf32>
    %c138 = arith.constant 138 : index
    %669 = memref.load %arg5[%c138] : memref<180xf32, #tpu.memory_space<smem>>
    %670 = vector.broadcast %669 : f32 to vector<8x256xf32>
    %671 = arith.mulf %656, %670 : vector<8x256xf32>
    %672 = arith.addf %655, %671 : vector<8x256xf32>
    %c1_135 = arith.constant 1 : index
    %c1_136 = arith.constant 1 : index
    %673 = vector.load %arg9[%c1_135, %c1_136] : memref<50x258xf32, #tpu.memory_space<vmem>>, vector<8x256xf32>
    %c4_137 = arith.constant 4 : index
    %674 = memref.load %arg5[%c4_137] : memref<180xf32, #tpu.memory_space<smem>>
    %675 = vector.broadcast %674 : f32 to vector<8x256xf32>
    %676 = arith.mulf %673, %675 : vector<8x256xf32>
    %677 = arith.addf %660, %676 : vector<8x256xf32>
    %c49_138 = arith.constant 49 : index
    %678 = memref.load %arg5[%c49_138] : memref<180xf32, #tpu.memory_space<smem>>
    %679 = vector.broadcast %678 : f32 to vector<8x256xf32>
    %680 = arith.mulf %673, %679 : vector<8x256xf32>
    %681 = arith.addf %664, %680 : vector<8x256xf32>
    %c94_139 = arith.constant 94 : index
    %682 = memref.load %arg5[%c94_139] : memref<180xf32, #tpu.memory_space<smem>>
    %683 = vector.broadcast %682 : f32 to vector<8x256xf32>
    %684 = arith.mulf %673, %683 : vector<8x256xf32>
    %685 = arith.addf %668, %684 : vector<8x256xf32>
    %c139 = arith.constant 139 : index
    %686 = memref.load %arg5[%c139] : memref<180xf32, #tpu.memory_space<smem>>
    %687 = vector.broadcast %686 : f32 to vector<8x256xf32>
    %688 = arith.mulf %673, %687 : vector<8x256xf32>
    %689 = arith.addf %672, %688 : vector<8x256xf32>
    %c1_140 = arith.constant 1 : index
    %c2_141 = arith.constant 2 : index
    %690 = vector.load %arg9[%c1_140, %c2_141] : memref<50x258xf32, #tpu.memory_space<vmem>>, vector<8x256xf32>
    %c5_142 = arith.constant 5 : index
    %691 = memref.load %arg5[%c5_142] : memref<180xf32, #tpu.memory_space<smem>>
    %692 = vector.broadcast %691 : f32 to vector<8x256xf32>
    %693 = arith.mulf %690, %692 : vector<8x256xf32>
    %694 = arith.addf %677, %693 : vector<8x256xf32>
    %c50_143 = arith.constant 50 : index
    %695 = memref.load %arg5[%c50_143] : memref<180xf32, #tpu.memory_space<smem>>
    %696 = vector.broadcast %695 : f32 to vector<8x256xf32>
    %697 = arith.mulf %690, %696 : vector<8x256xf32>
    %698 = arith.addf %681, %697 : vector<8x256xf32>
    %c95_144 = arith.constant 95 : index
    %699 = memref.load %arg5[%c95_144] : memref<180xf32, #tpu.memory_space<smem>>
    %700 = vector.broadcast %699 : f32 to vector<8x256xf32>
    %701 = arith.mulf %690, %700 : vector<8x256xf32>
    %702 = arith.addf %685, %701 : vector<8x256xf32>
    %c140 = arith.constant 140 : index
    %703 = memref.load %arg5[%c140] : memref<180xf32, #tpu.memory_space<smem>>
    %704 = vector.broadcast %703 : f32 to vector<8x256xf32>
    %705 = arith.mulf %690, %704 : vector<8x256xf32>
    %706 = arith.addf %689, %705 : vector<8x256xf32>
    %c2_145 = arith.constant 2 : index
    %c0_146 = arith.constant 0 : index
    %707 = vector.load %arg9[%c2_145, %c0_146] : memref<50x258xf32, #tpu.memory_space<vmem>>, vector<8x256xf32>
    %c6_147 = arith.constant 6 : index
    %708 = memref.load %arg5[%c6_147] : memref<180xf32, #tpu.memory_space<smem>>
    %709 = vector.broadcast %708 : f32 to vector<8x256xf32>
    %710 = arith.mulf %707, %709 : vector<8x256xf32>
    %711 = arith.addf %694, %710 : vector<8x256xf32>
    %c51_148 = arith.constant 51 : index
    %712 = memref.load %arg5[%c51_148] : memref<180xf32, #tpu.memory_space<smem>>
    %713 = vector.broadcast %712 : f32 to vector<8x256xf32>
    %714 = arith.mulf %707, %713 : vector<8x256xf32>
    %715 = arith.addf %698, %714 : vector<8x256xf32>
    %c96_149 = arith.constant 96 : index
    %716 = memref.load %arg5[%c96_149] : memref<180xf32, #tpu.memory_space<smem>>
    %717 = vector.broadcast %716 : f32 to vector<8x256xf32>
    %718 = arith.mulf %707, %717 : vector<8x256xf32>
    %719 = arith.addf %702, %718 : vector<8x256xf32>
    %c141 = arith.constant 141 : index
    %720 = memref.load %arg5[%c141] : memref<180xf32, #tpu.memory_space<smem>>
    %721 = vector.broadcast %720 : f32 to vector<8x256xf32>
    %722 = arith.mulf %707, %721 : vector<8x256xf32>
    %723 = arith.addf %706, %722 : vector<8x256xf32>
    %c2_150 = arith.constant 2 : index
    %c1_151 = arith.constant 1 : index
    %724 = vector.load %arg9[%c2_150, %c1_151] : memref<50x258xf32, #tpu.memory_space<vmem>>, vector<8x256xf32>
    %c7_152 = arith.constant 7 : index
    %725 = memref.load %arg5[%c7_152] : memref<180xf32, #tpu.memory_space<smem>>
    %726 = vector.broadcast %725 : f32 to vector<8x256xf32>
    %727 = arith.mulf %724, %726 : vector<8x256xf32>
    %728 = arith.addf %711, %727 : vector<8x256xf32>
    %c52_153 = arith.constant 52 : index
    %729 = memref.load %arg5[%c52_153] : memref<180xf32, #tpu.memory_space<smem>>
    %730 = vector.broadcast %729 : f32 to vector<8x256xf32>
    %731 = arith.mulf %724, %730 : vector<8x256xf32>
    %732 = arith.addf %715, %731 : vector<8x256xf32>
    %c97_154 = arith.constant 97 : index
    %733 = memref.load %arg5[%c97_154] : memref<180xf32, #tpu.memory_space<smem>>
    %734 = vector.broadcast %733 : f32 to vector<8x256xf32>
    %735 = arith.mulf %724, %734 : vector<8x256xf32>
    %736 = arith.addf %719, %735 : vector<8x256xf32>
    %c142 = arith.constant 142 : index
    %737 = memref.load %arg5[%c142] : memref<180xf32, #tpu.memory_space<smem>>
    %738 = vector.broadcast %737 : f32 to vector<8x256xf32>
    %739 = arith.mulf %724, %738 : vector<8x256xf32>
    %740 = arith.addf %723, %739 : vector<8x256xf32>
    %c2_155 = arith.constant 2 : index
    %c2_156 = arith.constant 2 : index
    %741 = vector.load %arg9[%c2_155, %c2_156] : memref<50x258xf32, #tpu.memory_space<vmem>>, vector<8x256xf32>
    %c8_157 = arith.constant 8 : index
    %742 = memref.load %arg5[%c8_157] : memref<180xf32, #tpu.memory_space<smem>>
    %743 = vector.broadcast %742 : f32 to vector<8x256xf32>
    %744 = arith.mulf %741, %743 : vector<8x256xf32>
    %745 = arith.addf %728, %744 : vector<8x256xf32>
    %c53_158 = arith.constant 53 : index
    %746 = memref.load %arg5[%c53_158] : memref<180xf32, #tpu.memory_space<smem>>
    %747 = vector.broadcast %746 : f32 to vector<8x256xf32>
    %748 = arith.mulf %741, %747 : vector<8x256xf32>
    %749 = arith.addf %732, %748 : vector<8x256xf32>
    %c98_159 = arith.constant 98 : index
    %750 = memref.load %arg5[%c98_159] : memref<180xf32, #tpu.memory_space<smem>>
    %751 = vector.broadcast %750 : f32 to vector<8x256xf32>
    %752 = arith.mulf %741, %751 : vector<8x256xf32>
    %753 = arith.addf %736, %752 : vector<8x256xf32>
    %c143 = arith.constant 143 : index
    %754 = memref.load %arg5[%c143] : memref<180xf32, #tpu.memory_space<smem>>
    %755 = vector.broadcast %754 : f32 to vector<8x256xf32>
    %756 = arith.mulf %741, %755 : vector<8x256xf32>
    %757 = arith.addf %740, %756 : vector<8x256xf32>
    %c10_160 = arith.constant 10 : index
    %c0_161 = arith.constant 0 : index
    %758 = vector.load %arg9[%c10_160, %c0_161] : memref<50x258xf32, #tpu.memory_space<vmem>>, vector<8x256xf32>
    %c9_162 = arith.constant 9 : index
    %759 = memref.load %arg5[%c9_162] : memref<180xf32, #tpu.memory_space<smem>>
    %760 = vector.broadcast %759 : f32 to vector<8x256xf32>
    %761 = arith.mulf %758, %760 : vector<8x256xf32>
    %762 = arith.addf %745, %761 : vector<8x256xf32>
    %c54_163 = arith.constant 54 : index
    %763 = memref.load %arg5[%c54_163] : memref<180xf32, #tpu.memory_space<smem>>
    %764 = vector.broadcast %763 : f32 to vector<8x256xf32>
    %765 = arith.mulf %758, %764 : vector<8x256xf32>
    %766 = arith.addf %749, %765 : vector<8x256xf32>
    %c99_164 = arith.constant 99 : index
    %767 = memref.load %arg5[%c99_164] : memref<180xf32, #tpu.memory_space<smem>>
    %768 = vector.broadcast %767 : f32 to vector<8x256xf32>
    %769 = arith.mulf %758, %768 : vector<8x256xf32>
    %770 = arith.addf %753, %769 : vector<8x256xf32>
    %c144 = arith.constant 144 : index
    %771 = memref.load %arg5[%c144] : memref<180xf32, #tpu.memory_space<smem>>
    %772 = vector.broadcast %771 : f32 to vector<8x256xf32>
    %773 = arith.mulf %758, %772 : vector<8x256xf32>
    %774 = arith.addf %757, %773 : vector<8x256xf32>
    %c10_165 = arith.constant 10 : index
    %c1_166 = arith.constant 1 : index
    %775 = vector.load %arg9[%c10_165, %c1_166] : memref<50x258xf32, #tpu.memory_space<vmem>>, vector<8x256xf32>
    %c10_167 = arith.constant 10 : index
    %776 = memref.load %arg5[%c10_167] : memref<180xf32, #tpu.memory_space<smem>>
    %777 = vector.broadcast %776 : f32 to vector<8x256xf32>
    %778 = arith.mulf %775, %777 : vector<8x256xf32>
    %779 = arith.addf %762, %778 : vector<8x256xf32>
    %c55_168 = arith.constant 55 : index
    %780 = memref.load %arg5[%c55_168] : memref<180xf32, #tpu.memory_space<smem>>
    %781 = vector.broadcast %780 : f32 to vector<8x256xf32>
    %782 = arith.mulf %775, %781 : vector<8x256xf32>
    %783 = arith.addf %766, %782 : vector<8x256xf32>
    %c100_169 = arith.constant 100 : index
    %784 = memref.load %arg5[%c100_169] : memref<180xf32, #tpu.memory_space<smem>>
    %785 = vector.broadcast %784 : f32 to vector<8x256xf32>
    %786 = arith.mulf %775, %785 : vector<8x256xf32>
    %787 = arith.addf %770, %786 : vector<8x256xf32>
    %c145 = arith.constant 145 : index
    %788 = memref.load %arg5[%c145] : memref<180xf32, #tpu.memory_space<smem>>
    %789 = vector.broadcast %788 : f32 to vector<8x256xf32>
    %790 = arith.mulf %775, %789 : vector<8x256xf32>
    %791 = arith.addf %774, %790 : vector<8x256xf32>
    %c10_170 = arith.constant 10 : index
    %c2_171 = arith.constant 2 : index
    %792 = vector.load %arg9[%c10_170, %c2_171] : memref<50x258xf32, #tpu.memory_space<vmem>>, vector<8x256xf32>
    %c11_172 = arith.constant 11 : index
    %793 = memref.load %arg5[%c11_172] : memref<180xf32, #tpu.memory_space<smem>>
    %794 = vector.broadcast %793 : f32 to vector<8x256xf32>
    %795 = arith.mulf %792, %794 : vector<8x256xf32>
    %796 = arith.addf %779, %795 : vector<8x256xf32>
    %c56_173 = arith.constant 56 : index
    %797 = memref.load %arg5[%c56_173] : memref<180xf32, #tpu.memory_space<smem>>
    %798 = vector.broadcast %797 : f32 to vector<8x256xf32>
    %799 = arith.mulf %792, %798 : vector<8x256xf32>
    %800 = arith.addf %783, %799 : vector<8x256xf32>
    %c101_174 = arith.constant 101 : index
    %801 = memref.load %arg5[%c101_174] : memref<180xf32, #tpu.memory_space<smem>>
    %802 = vector.broadcast %801 : f32 to vector<8x256xf32>
    %803 = arith.mulf %792, %802 : vector<8x256xf32>
    %804 = arith.addf %787, %803 : vector<8x256xf32>
    %c146 = arith.constant 146 : index
    %805 = memref.load %arg5[%c146] : memref<180xf32, #tpu.memory_space<smem>>
    %806 = vector.broadcast %805 : f32 to vector<8x256xf32>
    %807 = arith.mulf %792, %806 : vector<8x256xf32>
    %808 = arith.addf %791, %807 : vector<8x256xf32>
    %c11_175 = arith.constant 11 : index
    %c0_176 = arith.constant 0 : index
    %809 = vector.load %arg9[%c11_175, %c0_176] : memref<50x258xf32, #tpu.memory_space<vmem>>, vector<8x256xf32>
    %c12_177 = arith.constant 12 : index
    %810 = memref.load %arg5[%c12_177] : memref<180xf32, #tpu.memory_space<smem>>
    %811 = vector.broadcast %810 : f32 to vector<8x256xf32>
    %812 = arith.mulf %809, %811 : vector<8x256xf32>
    %813 = arith.addf %796, %812 : vector<8x256xf32>
    %c57_178 = arith.constant 57 : index
    %814 = memref.load %arg5[%c57_178] : memref<180xf32, #tpu.memory_space<smem>>
    %815 = vector.broadcast %814 : f32 to vector<8x256xf32>
    %816 = arith.mulf %809, %815 : vector<8x256xf32>
    %817 = arith.addf %800, %816 : vector<8x256xf32>
    %c102_179 = arith.constant 102 : index
    %818 = memref.load %arg5[%c102_179] : memref<180xf32, #tpu.memory_space<smem>>
    %819 = vector.broadcast %818 : f32 to vector<8x256xf32>
    %820 = arith.mulf %809, %819 : vector<8x256xf32>
    %821 = arith.addf %804, %820 : vector<8x256xf32>
    %c147 = arith.constant 147 : index
    %822 = memref.load %arg5[%c147] : memref<180xf32, #tpu.memory_space<smem>>
    %823 = vector.broadcast %822 : f32 to vector<8x256xf32>
    %824 = arith.mulf %809, %823 : vector<8x256xf32>
    %825 = arith.addf %808, %824 : vector<8x256xf32>
    %c11_180 = arith.constant 11 : index
    %c1_181 = arith.constant 1 : index
    %826 = vector.load %arg9[%c11_180, %c1_181] : memref<50x258xf32, #tpu.memory_space<vmem>>, vector<8x256xf32>
    %c13_182 = arith.constant 13 : index
    %827 = memref.load %arg5[%c13_182] : memref<180xf32, #tpu.memory_space<smem>>
    %828 = vector.broadcast %827 : f32 to vector<8x256xf32>
    %829 = arith.mulf %826, %828 : vector<8x256xf32>
    %830 = arith.addf %813, %829 : vector<8x256xf32>
    %c58_183 = arith.constant 58 : index
    %831 = memref.load %arg5[%c58_183] : memref<180xf32, #tpu.memory_space<smem>>
    %832 = vector.broadcast %831 : f32 to vector<8x256xf32>
    %833 = arith.mulf %826, %832 : vector<8x256xf32>
    %834 = arith.addf %817, %833 : vector<8x256xf32>
    %c103_184 = arith.constant 103 : index
    %835 = memref.load %arg5[%c103_184] : memref<180xf32, #tpu.memory_space<smem>>
    %836 = vector.broadcast %835 : f32 to vector<8x256xf32>
    %837 = arith.mulf %826, %836 : vector<8x256xf32>
    %838 = arith.addf %821, %837 : vector<8x256xf32>
    %c148 = arith.constant 148 : index
    %839 = memref.load %arg5[%c148] : memref<180xf32, #tpu.memory_space<smem>>
    %840 = vector.broadcast %839 : f32 to vector<8x256xf32>
    %841 = arith.mulf %826, %840 : vector<8x256xf32>
    %842 = arith.addf %825, %841 : vector<8x256xf32>
    %c11_185 = arith.constant 11 : index
    %c2_186 = arith.constant 2 : index
    %843 = vector.load %arg9[%c11_185, %c2_186] : memref<50x258xf32, #tpu.memory_space<vmem>>, vector<8x256xf32>
    %c14_187 = arith.constant 14 : index
    %844 = memref.load %arg5[%c14_187] : memref<180xf32, #tpu.memory_space<smem>>
    %845 = vector.broadcast %844 : f32 to vector<8x256xf32>
    %846 = arith.mulf %843, %845 : vector<8x256xf32>
    %847 = arith.addf %830, %846 : vector<8x256xf32>
    %c59_188 = arith.constant 59 : index
    %848 = memref.load %arg5[%c59_188] : memref<180xf32, #tpu.memory_space<smem>>
    %849 = vector.broadcast %848 : f32 to vector<8x256xf32>
    %850 = arith.mulf %843, %849 : vector<8x256xf32>
    %851 = arith.addf %834, %850 : vector<8x256xf32>
    %c104_189 = arith.constant 104 : index
    %852 = memref.load %arg5[%c104_189] : memref<180xf32, #tpu.memory_space<smem>>
    %853 = vector.broadcast %852 : f32 to vector<8x256xf32>
    %854 = arith.mulf %843, %853 : vector<8x256xf32>
    %855 = arith.addf %838, %854 : vector<8x256xf32>
    %c149 = arith.constant 149 : index
    %856 = memref.load %arg5[%c149] : memref<180xf32, #tpu.memory_space<smem>>
    %857 = vector.broadcast %856 : f32 to vector<8x256xf32>
    %858 = arith.mulf %843, %857 : vector<8x256xf32>
    %859 = arith.addf %842, %858 : vector<8x256xf32>
    %c12_190 = arith.constant 12 : index
    %c0_191 = arith.constant 0 : index
    %860 = vector.load %arg9[%c12_190, %c0_191] : memref<50x258xf32, #tpu.memory_space<vmem>>, vector<8x256xf32>
    %c15_192 = arith.constant 15 : index
    %861 = memref.load %arg5[%c15_192] : memref<180xf32, #tpu.memory_space<smem>>
    %862 = vector.broadcast %861 : f32 to vector<8x256xf32>
    %863 = arith.mulf %860, %862 : vector<8x256xf32>
    %864 = arith.addf %847, %863 : vector<8x256xf32>
    %c60_193 = arith.constant 60 : index
    %865 = memref.load %arg5[%c60_193] : memref<180xf32, #tpu.memory_space<smem>>
    %866 = vector.broadcast %865 : f32 to vector<8x256xf32>
    %867 = arith.mulf %860, %866 : vector<8x256xf32>
    %868 = arith.addf %851, %867 : vector<8x256xf32>
    %c105_194 = arith.constant 105 : index
    %869 = memref.load %arg5[%c105_194] : memref<180xf32, #tpu.memory_space<smem>>
    %870 = vector.broadcast %869 : f32 to vector<8x256xf32>
    %871 = arith.mulf %860, %870 : vector<8x256xf32>
    %872 = arith.addf %855, %871 : vector<8x256xf32>
    %c150 = arith.constant 150 : index
    %873 = memref.load %arg5[%c150] : memref<180xf32, #tpu.memory_space<smem>>
    %874 = vector.broadcast %873 : f32 to vector<8x256xf32>
    %875 = arith.mulf %860, %874 : vector<8x256xf32>
    %876 = arith.addf %859, %875 : vector<8x256xf32>
    %c12_195 = arith.constant 12 : index
    %c1_196 = arith.constant 1 : index
    %877 = vector.load %arg9[%c12_195, %c1_196] : memref<50x258xf32, #tpu.memory_space<vmem>>, vector<8x256xf32>
    %c16_197 = arith.constant 16 : index
    %878 = memref.load %arg5[%c16_197] : memref<180xf32, #tpu.memory_space<smem>>
    %879 = vector.broadcast %878 : f32 to vector<8x256xf32>
    %880 = arith.mulf %877, %879 : vector<8x256xf32>
    %881 = arith.addf %864, %880 : vector<8x256xf32>
    %c61_198 = arith.constant 61 : index
    %882 = memref.load %arg5[%c61_198] : memref<180xf32, #tpu.memory_space<smem>>
    %883 = vector.broadcast %882 : f32 to vector<8x256xf32>
    %884 = arith.mulf %877, %883 : vector<8x256xf32>
    %885 = arith.addf %868, %884 : vector<8x256xf32>
    %c106_199 = arith.constant 106 : index
    %886 = memref.load %arg5[%c106_199] : memref<180xf32, #tpu.memory_space<smem>>
    %887 = vector.broadcast %886 : f32 to vector<8x256xf32>
    %888 = arith.mulf %877, %887 : vector<8x256xf32>
    %889 = arith.addf %872, %888 : vector<8x256xf32>
    %c151 = arith.constant 151 : index
    %890 = memref.load %arg5[%c151] : memref<180xf32, #tpu.memory_space<smem>>
    %891 = vector.broadcast %890 : f32 to vector<8x256xf32>
    %892 = arith.mulf %877, %891 : vector<8x256xf32>
    %893 = arith.addf %876, %892 : vector<8x256xf32>
    %c12_200 = arith.constant 12 : index
    %c2_201 = arith.constant 2 : index
    %894 = vector.load %arg9[%c12_200, %c2_201] : memref<50x258xf32, #tpu.memory_space<vmem>>, vector<8x256xf32>
    %c17_202 = arith.constant 17 : index
    %895 = memref.load %arg5[%c17_202] : memref<180xf32, #tpu.memory_space<smem>>
    %896 = vector.broadcast %895 : f32 to vector<8x256xf32>
    %897 = arith.mulf %894, %896 : vector<8x256xf32>
    %898 = arith.addf %881, %897 : vector<8x256xf32>
    %c62_203 = arith.constant 62 : index
    %899 = memref.load %arg5[%c62_203] : memref<180xf32, #tpu.memory_space<smem>>
    %900 = vector.broadcast %899 : f32 to vector<8x256xf32>
    %901 = arith.mulf %894, %900 : vector<8x256xf32>
    %902 = arith.addf %885, %901 : vector<8x256xf32>
    %c107_204 = arith.constant 107 : index
    %903 = memref.load %arg5[%c107_204] : memref<180xf32, #tpu.memory_space<smem>>
    %904 = vector.broadcast %903 : f32 to vector<8x256xf32>
    %905 = arith.mulf %894, %904 : vector<8x256xf32>
    %906 = arith.addf %889, %905 : vector<8x256xf32>
    %c152 = arith.constant 152 : index
    %907 = memref.load %arg5[%c152] : memref<180xf32, #tpu.memory_space<smem>>
    %908 = vector.broadcast %907 : f32 to vector<8x256xf32>
    %909 = arith.mulf %894, %908 : vector<8x256xf32>
    %910 = arith.addf %893, %909 : vector<8x256xf32>
    %c20_205 = arith.constant 20 : index
    %c0_206 = arith.constant 0 : index
    %911 = vector.load %arg9[%c20_205, %c0_206] : memref<50x258xf32, #tpu.memory_space<vmem>>, vector<8x256xf32>
    %c18_207 = arith.constant 18 : index
    %912 = memref.load %arg5[%c18_207] : memref<180xf32, #tpu.memory_space<smem>>
    %913 = vector.broadcast %912 : f32 to vector<8x256xf32>
    %914 = arith.mulf %911, %913 : vector<8x256xf32>
    %915 = arith.addf %898, %914 : vector<8x256xf32>
    %c63_208 = arith.constant 63 : index
    %916 = memref.load %arg5[%c63_208] : memref<180xf32, #tpu.memory_space<smem>>
    %917 = vector.broadcast %916 : f32 to vector<8x256xf32>
    %918 = arith.mulf %911, %917 : vector<8x256xf32>
    %919 = arith.addf %902, %918 : vector<8x256xf32>
    %c108_209 = arith.constant 108 : index
    %920 = memref.load %arg5[%c108_209] : memref<180xf32, #tpu.memory_space<smem>>
    %921 = vector.broadcast %920 : f32 to vector<8x256xf32>
    %922 = arith.mulf %911, %921 : vector<8x256xf32>
    %923 = arith.addf %906, %922 : vector<8x256xf32>
    %c153 = arith.constant 153 : index
    %924 = memref.load %arg5[%c153] : memref<180xf32, #tpu.memory_space<smem>>
    %925 = vector.broadcast %924 : f32 to vector<8x256xf32>
    %926 = arith.mulf %911, %925 : vector<8x256xf32>
    %927 = arith.addf %910, %926 : vector<8x256xf32>
    %c20_210 = arith.constant 20 : index
    %c1_211 = arith.constant 1 : index
    %928 = vector.load %arg9[%c20_210, %c1_211] : memref<50x258xf32, #tpu.memory_space<vmem>>, vector<8x256xf32>
    %c19_212 = arith.constant 19 : index
    %929 = memref.load %arg5[%c19_212] : memref<180xf32, #tpu.memory_space<smem>>
    %930 = vector.broadcast %929 : f32 to vector<8x256xf32>
    %931 = arith.mulf %928, %930 : vector<8x256xf32>
    %932 = arith.addf %915, %931 : vector<8x256xf32>
    %c64_213 = arith.constant 64 : index
    %933 = memref.load %arg5[%c64_213] : memref<180xf32, #tpu.memory_space<smem>>
    %934 = vector.broadcast %933 : f32 to vector<8x256xf32>
    %935 = arith.mulf %928, %934 : vector<8x256xf32>
    %936 = arith.addf %919, %935 : vector<8x256xf32>
    %c109_214 = arith.constant 109 : index
    %937 = memref.load %arg5[%c109_214] : memref<180xf32, #tpu.memory_space<smem>>
    %938 = vector.broadcast %937 : f32 to vector<8x256xf32>
    %939 = arith.mulf %928, %938 : vector<8x256xf32>
    %940 = arith.addf %923, %939 : vector<8x256xf32>
    %c154 = arith.constant 154 : index
    %941 = memref.load %arg5[%c154] : memref<180xf32, #tpu.memory_space<smem>>
    %942 = vector.broadcast %941 : f32 to vector<8x256xf32>
    %943 = arith.mulf %928, %942 : vector<8x256xf32>
    %944 = arith.addf %927, %943 : vector<8x256xf32>
    %c20_215 = arith.constant 20 : index
    %c2_216 = arith.constant 2 : index
    %945 = vector.load %arg9[%c20_215, %c2_216] : memref<50x258xf32, #tpu.memory_space<vmem>>, vector<8x256xf32>
    %c20_217 = arith.constant 20 : index
    %946 = memref.load %arg5[%c20_217] : memref<180xf32, #tpu.memory_space<smem>>
    %947 = vector.broadcast %946 : f32 to vector<8x256xf32>
    %948 = arith.mulf %945, %947 : vector<8x256xf32>
    %949 = arith.addf %932, %948 : vector<8x256xf32>
    %c65_218 = arith.constant 65 : index
    %950 = memref.load %arg5[%c65_218] : memref<180xf32, #tpu.memory_space<smem>>
    %951 = vector.broadcast %950 : f32 to vector<8x256xf32>
    %952 = arith.mulf %945, %951 : vector<8x256xf32>
    %953 = arith.addf %936, %952 : vector<8x256xf32>
    %c110_219 = arith.constant 110 : index
    %954 = memref.load %arg5[%c110_219] : memref<180xf32, #tpu.memory_space<smem>>
    %955 = vector.broadcast %954 : f32 to vector<8x256xf32>
    %956 = arith.mulf %945, %955 : vector<8x256xf32>
    %957 = arith.addf %940, %956 : vector<8x256xf32>
    %c155 = arith.constant 155 : index
    %958 = memref.load %arg5[%c155] : memref<180xf32, #tpu.memory_space<smem>>
    %959 = vector.broadcast %958 : f32 to vector<8x256xf32>
    %960 = arith.mulf %945, %959 : vector<8x256xf32>
    %961 = arith.addf %944, %960 : vector<8x256xf32>
    %c21_220 = arith.constant 21 : index
    %c0_221 = arith.constant 0 : index
    %962 = vector.load %arg9[%c21_220, %c0_221] : memref<50x258xf32, #tpu.memory_space<vmem>>, vector<8x256xf32>
    %c21_222 = arith.constant 21 : index
    %963 = memref.load %arg5[%c21_222] : memref<180xf32, #tpu.memory_space<smem>>
    %964 = vector.broadcast %963 : f32 to vector<8x256xf32>
    %965 = arith.mulf %962, %964 : vector<8x256xf32>
    %966 = arith.addf %949, %965 : vector<8x256xf32>
    %c66_223 = arith.constant 66 : index
    %967 = memref.load %arg5[%c66_223] : memref<180xf32, #tpu.memory_space<smem>>
    %968 = vector.broadcast %967 : f32 to vector<8x256xf32>
    %969 = arith.mulf %962, %968 : vector<8x256xf32>
    %970 = arith.addf %953, %969 : vector<8x256xf32>
    %c111_224 = arith.constant 111 : index
    %971 = memref.load %arg5[%c111_224] : memref<180xf32, #tpu.memory_space<smem>>
    %972 = vector.broadcast %971 : f32 to vector<8x256xf32>
    %973 = arith.mulf %962, %972 : vector<8x256xf32>
    %974 = arith.addf %957, %973 : vector<8x256xf32>
    %c156 = arith.constant 156 : index
    %975 = memref.load %arg5[%c156] : memref<180xf32, #tpu.memory_space<smem>>
    %976 = vector.broadcast %975 : f32 to vector<8x256xf32>
    %977 = arith.mulf %962, %976 : vector<8x256xf32>
    %978 = arith.addf %961, %977 : vector<8x256xf32>
    %c21_225 = arith.constant 21 : index
    %c1_226 = arith.constant 1 : index
    %979 = vector.load %arg9[%c21_225, %c1_226] : memref<50x258xf32, #tpu.memory_space<vmem>>, vector<8x256xf32>
    %c22_227 = arith.constant 22 : index
    %980 = memref.load %arg5[%c22_227] : memref<180xf32, #tpu.memory_space<smem>>
    %981 = vector.broadcast %980 : f32 to vector<8x256xf32>
    %982 = arith.mulf %979, %981 : vector<8x256xf32>
    %983 = arith.addf %966, %982 : vector<8x256xf32>
    %c67_228 = arith.constant 67 : index
    %984 = memref.load %arg5[%c67_228] : memref<180xf32, #tpu.memory_space<smem>>
    %985 = vector.broadcast %984 : f32 to vector<8x256xf32>
    %986 = arith.mulf %979, %985 : vector<8x256xf32>
    %987 = arith.addf %970, %986 : vector<8x256xf32>
    %c112_229 = arith.constant 112 : index
    %988 = memref.load %arg5[%c112_229] : memref<180xf32, #tpu.memory_space<smem>>
    %989 = vector.broadcast %988 : f32 to vector<8x256xf32>
    %990 = arith.mulf %979, %989 : vector<8x256xf32>
    %991 = arith.addf %974, %990 : vector<8x256xf32>
    %c157 = arith.constant 157 : index
    %992 = memref.load %arg5[%c157] : memref<180xf32, #tpu.memory_space<smem>>
    %993 = vector.broadcast %992 : f32 to vector<8x256xf32>
    %994 = arith.mulf %979, %993 : vector<8x256xf32>
    %995 = arith.addf %978, %994 : vector<8x256xf32>
    %c21_230 = arith.constant 21 : index
    %c2_231 = arith.constant 2 : index
    %996 = vector.load %arg9[%c21_230, %c2_231] : memref<50x258xf32, #tpu.memory_space<vmem>>, vector<8x256xf32>
    %c23_232 = arith.constant 23 : index
    %997 = memref.load %arg5[%c23_232] : memref<180xf32, #tpu.memory_space<smem>>
    %998 = vector.broadcast %997 : f32 to vector<8x256xf32>
    %999 = arith.mulf %996, %998 : vector<8x256xf32>
    %1000 = arith.addf %983, %999 : vector<8x256xf32>
    %c68_233 = arith.constant 68 : index
    %1001 = memref.load %arg5[%c68_233] : memref<180xf32, #tpu.memory_space<smem>>
    %1002 = vector.broadcast %1001 : f32 to vector<8x256xf32>
    %1003 = arith.mulf %996, %1002 : vector<8x256xf32>
    %1004 = arith.addf %987, %1003 : vector<8x256xf32>
    %c113_234 = arith.constant 113 : index
    %1005 = memref.load %arg5[%c113_234] : memref<180xf32, #tpu.memory_space<smem>>
    %1006 = vector.broadcast %1005 : f32 to vector<8x256xf32>
    %1007 = arith.mulf %996, %1006 : vector<8x256xf32>
    %1008 = arith.addf %991, %1007 : vector<8x256xf32>
    %c158 = arith.constant 158 : index
    %1009 = memref.load %arg5[%c158] : memref<180xf32, #tpu.memory_space<smem>>
    %1010 = vector.broadcast %1009 : f32 to vector<8x256xf32>
    %1011 = arith.mulf %996, %1010 : vector<8x256xf32>
    %1012 = arith.addf %995, %1011 : vector<8x256xf32>
    %c22_235 = arith.constant 22 : index
    %c0_236 = arith.constant 0 : index
    %1013 = vector.load %arg9[%c22_235, %c0_236] : memref<50x258xf32, #tpu.memory_space<vmem>>, vector<8x256xf32>
    %c24_237 = arith.constant 24 : index
    %1014 = memref.load %arg5[%c24_237] : memref<180xf32, #tpu.memory_space<smem>>
    %1015 = vector.broadcast %1014 : f32 to vector<8x256xf32>
    %1016 = arith.mulf %1013, %1015 : vector<8x256xf32>
    %1017 = arith.addf %1000, %1016 : vector<8x256xf32>
    %c69_238 = arith.constant 69 : index
    %1018 = memref.load %arg5[%c69_238] : memref<180xf32, #tpu.memory_space<smem>>
    %1019 = vector.broadcast %1018 : f32 to vector<8x256xf32>
    %1020 = arith.mulf %1013, %1019 : vector<8x256xf32>
    %1021 = arith.addf %1004, %1020 : vector<8x256xf32>
    %c114_239 = arith.constant 114 : index
    %1022 = memref.load %arg5[%c114_239] : memref<180xf32, #tpu.memory_space<smem>>
    %1023 = vector.broadcast %1022 : f32 to vector<8x256xf32>
    %1024 = arith.mulf %1013, %1023 : vector<8x256xf32>
    %1025 = arith.addf %1008, %1024 : vector<8x256xf32>
    %c159 = arith.constant 159 : index
    %1026 = memref.load %arg5[%c159] : memref<180xf32, #tpu.memory_space<smem>>
    %1027 = vector.broadcast %1026 : f32 to vector<8x256xf32>
    %1028 = arith.mulf %1013, %1027 : vector<8x256xf32>
    %1029 = arith.addf %1012, %1028 : vector<8x256xf32>
    %c22_240 = arith.constant 22 : index
    %c1_241 = arith.constant 1 : index
    %1030 = vector.load %arg9[%c22_240, %c1_241] : memref<50x258xf32, #tpu.memory_space<vmem>>, vector<8x256xf32>
    %c25_242 = arith.constant 25 : index
    %1031 = memref.load %arg5[%c25_242] : memref<180xf32, #tpu.memory_space<smem>>
    %1032 = vector.broadcast %1031 : f32 to vector<8x256xf32>
    %1033 = arith.mulf %1030, %1032 : vector<8x256xf32>
    %1034 = arith.addf %1017, %1033 : vector<8x256xf32>
    %c70_243 = arith.constant 70 : index
    %1035 = memref.load %arg5[%c70_243] : memref<180xf32, #tpu.memory_space<smem>>
    %1036 = vector.broadcast %1035 : f32 to vector<8x256xf32>
    %1037 = arith.mulf %1030, %1036 : vector<8x256xf32>
    %1038 = arith.addf %1021, %1037 : vector<8x256xf32>
    %c115_244 = arith.constant 115 : index
    %1039 = memref.load %arg5[%c115_244] : memref<180xf32, #tpu.memory_space<smem>>
    %1040 = vector.broadcast %1039 : f32 to vector<8x256xf32>
    %1041 = arith.mulf %1030, %1040 : vector<8x256xf32>
    %1042 = arith.addf %1025, %1041 : vector<8x256xf32>
    %c160 = arith.constant 160 : index
    %1043 = memref.load %arg5[%c160] : memref<180xf32, #tpu.memory_space<smem>>
    %1044 = vector.broadcast %1043 : f32 to vector<8x256xf32>
    %1045 = arith.mulf %1030, %1044 : vector<8x256xf32>
    %1046 = arith.addf %1029, %1045 : vector<8x256xf32>
    %c22_245 = arith.constant 22 : index
    %c2_246 = arith.constant 2 : index
    %1047 = vector.load %arg9[%c22_245, %c2_246] : memref<50x258xf32, #tpu.memory_space<vmem>>, vector<8x256xf32>
    %c26_247 = arith.constant 26 : index
    %1048 = memref.load %arg5[%c26_247] : memref<180xf32, #tpu.memory_space<smem>>
    %1049 = vector.broadcast %1048 : f32 to vector<8x256xf32>
    %1050 = arith.mulf %1047, %1049 : vector<8x256xf32>
    %1051 = arith.addf %1034, %1050 : vector<8x256xf32>
    %c71_248 = arith.constant 71 : index
    %1052 = memref.load %arg5[%c71_248] : memref<180xf32, #tpu.memory_space<smem>>
    %1053 = vector.broadcast %1052 : f32 to vector<8x256xf32>
    %1054 = arith.mulf %1047, %1053 : vector<8x256xf32>
    %1055 = arith.addf %1038, %1054 : vector<8x256xf32>
    %c116_249 = arith.constant 116 : index
    %1056 = memref.load %arg5[%c116_249] : memref<180xf32, #tpu.memory_space<smem>>
    %1057 = vector.broadcast %1056 : f32 to vector<8x256xf32>
    %1058 = arith.mulf %1047, %1057 : vector<8x256xf32>
    %1059 = arith.addf %1042, %1058 : vector<8x256xf32>
    %c161 = arith.constant 161 : index
    %1060 = memref.load %arg5[%c161] : memref<180xf32, #tpu.memory_space<smem>>
    %1061 = vector.broadcast %1060 : f32 to vector<8x256xf32>
    %1062 = arith.mulf %1047, %1061 : vector<8x256xf32>
    %1063 = arith.addf %1046, %1062 : vector<8x256xf32>
    %c30_250 = arith.constant 30 : index
    %c0_251 = arith.constant 0 : index
    %1064 = vector.load %arg9[%c30_250, %c0_251] : memref<50x258xf32, #tpu.memory_space<vmem>>, vector<8x256xf32>
    %c27_252 = arith.constant 27 : index
    %1065 = memref.load %arg5[%c27_252] : memref<180xf32, #tpu.memory_space<smem>>
    %1066 = vector.broadcast %1065 : f32 to vector<8x256xf32>
    %1067 = arith.mulf %1064, %1066 : vector<8x256xf32>
    %1068 = arith.addf %1051, %1067 : vector<8x256xf32>
    %c72_253 = arith.constant 72 : index
    %1069 = memref.load %arg5[%c72_253] : memref<180xf32, #tpu.memory_space<smem>>
    %1070 = vector.broadcast %1069 : f32 to vector<8x256xf32>
    %1071 = arith.mulf %1064, %1070 : vector<8x256xf32>
    %1072 = arith.addf %1055, %1071 : vector<8x256xf32>
    %c117_254 = arith.constant 117 : index
    %1073 = memref.load %arg5[%c117_254] : memref<180xf32, #tpu.memory_space<smem>>
    %1074 = vector.broadcast %1073 : f32 to vector<8x256xf32>
    %1075 = arith.mulf %1064, %1074 : vector<8x256xf32>
    %1076 = arith.addf %1059, %1075 : vector<8x256xf32>
    %c162 = arith.constant 162 : index
    %1077 = memref.load %arg5[%c162] : memref<180xf32, #tpu.memory_space<smem>>
    %1078 = vector.broadcast %1077 : f32 to vector<8x256xf32>
    %1079 = arith.mulf %1064, %1078 : vector<8x256xf32>
    %1080 = arith.addf %1063, %1079 : vector<8x256xf32>
    %c30_255 = arith.constant 30 : index
    %c1_256 = arith.constant 1 : index
    %1081 = vector.load %arg9[%c30_255, %c1_256] : memref<50x258xf32, #tpu.memory_space<vmem>>, vector<8x256xf32>
    %c28_257 = arith.constant 28 : index
    %1082 = memref.load %arg5[%c28_257] : memref<180xf32, #tpu.memory_space<smem>>
    %1083 = vector.broadcast %1082 : f32 to vector<8x256xf32>
    %1084 = arith.mulf %1081, %1083 : vector<8x256xf32>
    %1085 = arith.addf %1068, %1084 : vector<8x256xf32>
    %c73_258 = arith.constant 73 : index
    %1086 = memref.load %arg5[%c73_258] : memref<180xf32, #tpu.memory_space<smem>>
    %1087 = vector.broadcast %1086 : f32 to vector<8x256xf32>
    %1088 = arith.mulf %1081, %1087 : vector<8x256xf32>
    %1089 = arith.addf %1072, %1088 : vector<8x256xf32>
    %c118_259 = arith.constant 118 : index
    %1090 = memref.load %arg5[%c118_259] : memref<180xf32, #tpu.memory_space<smem>>
    %1091 = vector.broadcast %1090 : f32 to vector<8x256xf32>
    %1092 = arith.mulf %1081, %1091 : vector<8x256xf32>
    %1093 = arith.addf %1076, %1092 : vector<8x256xf32>
    %c163 = arith.constant 163 : index
    %1094 = memref.load %arg5[%c163] : memref<180xf32, #tpu.memory_space<smem>>
    %1095 = vector.broadcast %1094 : f32 to vector<8x256xf32>
    %1096 = arith.mulf %1081, %1095 : vector<8x256xf32>
    %1097 = arith.addf %1080, %1096 : vector<8x256xf32>
    %c30_260 = arith.constant 30 : index
    %c2_261 = arith.constant 2 : index
    %1098 = vector.load %arg9[%c30_260, %c2_261] : memref<50x258xf32, #tpu.memory_space<vmem>>, vector<8x256xf32>
    %c29_262 = arith.constant 29 : index
    %1099 = memref.load %arg5[%c29_262] : memref<180xf32, #tpu.memory_space<smem>>
    %1100 = vector.broadcast %1099 : f32 to vector<8x256xf32>
    %1101 = arith.mulf %1098, %1100 : vector<8x256xf32>
    %1102 = arith.addf %1085, %1101 : vector<8x256xf32>
    %c74_263 = arith.constant 74 : index
    %1103 = memref.load %arg5[%c74_263] : memref<180xf32, #tpu.memory_space<smem>>
    %1104 = vector.broadcast %1103 : f32 to vector<8x256xf32>
    %1105 = arith.mulf %1098, %1104 : vector<8x256xf32>
    %1106 = arith.addf %1089, %1105 : vector<8x256xf32>
    %c119_264 = arith.constant 119 : index
    %1107 = memref.load %arg5[%c119_264] : memref<180xf32, #tpu.memory_space<smem>>
    %1108 = vector.broadcast %1107 : f32 to vector<8x256xf32>
    %1109 = arith.mulf %1098, %1108 : vector<8x256xf32>
    %1110 = arith.addf %1093, %1109 : vector<8x256xf32>
    %c164 = arith.constant 164 : index
    %1111 = memref.load %arg5[%c164] : memref<180xf32, #tpu.memory_space<smem>>
    %1112 = vector.broadcast %1111 : f32 to vector<8x256xf32>
    %1113 = arith.mulf %1098, %1112 : vector<8x256xf32>
    %1114 = arith.addf %1097, %1113 : vector<8x256xf32>
    %c31_265 = arith.constant 31 : index
    %c0_266 = arith.constant 0 : index
    %1115 = vector.load %arg9[%c31_265, %c0_266] : memref<50x258xf32, #tpu.memory_space<vmem>>, vector<8x256xf32>
    %c30_267 = arith.constant 30 : index
    %1116 = memref.load %arg5[%c30_267] : memref<180xf32, #tpu.memory_space<smem>>
    %1117 = vector.broadcast %1116 : f32 to vector<8x256xf32>
    %1118 = arith.mulf %1115, %1117 : vector<8x256xf32>
    %1119 = arith.addf %1102, %1118 : vector<8x256xf32>
    %c75_268 = arith.constant 75 : index
    %1120 = memref.load %arg5[%c75_268] : memref<180xf32, #tpu.memory_space<smem>>
    %1121 = vector.broadcast %1120 : f32 to vector<8x256xf32>
    %1122 = arith.mulf %1115, %1121 : vector<8x256xf32>
    %1123 = arith.addf %1106, %1122 : vector<8x256xf32>
    %c120_269 = arith.constant 120 : index
    %1124 = memref.load %arg5[%c120_269] : memref<180xf32, #tpu.memory_space<smem>>
    %1125 = vector.broadcast %1124 : f32 to vector<8x256xf32>
    %1126 = arith.mulf %1115, %1125 : vector<8x256xf32>
    %1127 = arith.addf %1110, %1126 : vector<8x256xf32>
    %c165 = arith.constant 165 : index
    %1128 = memref.load %arg5[%c165] : memref<180xf32, #tpu.memory_space<smem>>
    %1129 = vector.broadcast %1128 : f32 to vector<8x256xf32>
    %1130 = arith.mulf %1115, %1129 : vector<8x256xf32>
    %1131 = arith.addf %1114, %1130 : vector<8x256xf32>
    %c31_270 = arith.constant 31 : index
    %c1_271 = arith.constant 1 : index
    %1132 = vector.load %arg9[%c31_270, %c1_271] : memref<50x258xf32, #tpu.memory_space<vmem>>, vector<8x256xf32>
    %c31_272 = arith.constant 31 : index
    %1133 = memref.load %arg5[%c31_272] : memref<180xf32, #tpu.memory_space<smem>>
    %1134 = vector.broadcast %1133 : f32 to vector<8x256xf32>
    %1135 = arith.mulf %1132, %1134 : vector<8x256xf32>
    %1136 = arith.addf %1119, %1135 : vector<8x256xf32>
    %c76_273 = arith.constant 76 : index
    %1137 = memref.load %arg5[%c76_273] : memref<180xf32, #tpu.memory_space<smem>>
    %1138 = vector.broadcast %1137 : f32 to vector<8x256xf32>
    %1139 = arith.mulf %1132, %1138 : vector<8x256xf32>
    %1140 = arith.addf %1123, %1139 : vector<8x256xf32>
    %c121_274 = arith.constant 121 : index
    %1141 = memref.load %arg5[%c121_274] : memref<180xf32, #tpu.memory_space<smem>>
    %1142 = vector.broadcast %1141 : f32 to vector<8x256xf32>
    %1143 = arith.mulf %1132, %1142 : vector<8x256xf32>
    %1144 = arith.addf %1127, %1143 : vector<8x256xf32>
    %c166 = arith.constant 166 : index
    %1145 = memref.load %arg5[%c166] : memref<180xf32, #tpu.memory_space<smem>>
    %1146 = vector.broadcast %1145 : f32 to vector<8x256xf32>
    %1147 = arith.mulf %1132, %1146 : vector<8x256xf32>
    %1148 = arith.addf %1131, %1147 : vector<8x256xf32>
    %c31_275 = arith.constant 31 : index
    %c2_276 = arith.constant 2 : index
    %1149 = vector.load %arg9[%c31_275, %c2_276] : memref<50x258xf32, #tpu.memory_space<vmem>>, vector<8x256xf32>
    %c32_277 = arith.constant 32 : index
    %1150 = memref.load %arg5[%c32_277] : memref<180xf32, #tpu.memory_space<smem>>
    %1151 = vector.broadcast %1150 : f32 to vector<8x256xf32>
    %1152 = arith.mulf %1149, %1151 : vector<8x256xf32>
    %1153 = arith.addf %1136, %1152 : vector<8x256xf32>
    %c77_278 = arith.constant 77 : index
    %1154 = memref.load %arg5[%c77_278] : memref<180xf32, #tpu.memory_space<smem>>
    %1155 = vector.broadcast %1154 : f32 to vector<8x256xf32>
    %1156 = arith.mulf %1149, %1155 : vector<8x256xf32>
    %1157 = arith.addf %1140, %1156 : vector<8x256xf32>
    %c122_279 = arith.constant 122 : index
    %1158 = memref.load %arg5[%c122_279] : memref<180xf32, #tpu.memory_space<smem>>
    %1159 = vector.broadcast %1158 : f32 to vector<8x256xf32>
    %1160 = arith.mulf %1149, %1159 : vector<8x256xf32>
    %1161 = arith.addf %1144, %1160 : vector<8x256xf32>
    %c167 = arith.constant 167 : index
    %1162 = memref.load %arg5[%c167] : memref<180xf32, #tpu.memory_space<smem>>
    %1163 = vector.broadcast %1162 : f32 to vector<8x256xf32>
    %1164 = arith.mulf %1149, %1163 : vector<8x256xf32>
    %1165 = arith.addf %1148, %1164 : vector<8x256xf32>
    %c32_280 = arith.constant 32 : index
    %c0_281 = arith.constant 0 : index
    %1166 = vector.load %arg9[%c32_280, %c0_281] : memref<50x258xf32, #tpu.memory_space<vmem>>, vector<8x256xf32>
    %c33_282 = arith.constant 33 : index
    %1167 = memref.load %arg5[%c33_282] : memref<180xf32, #tpu.memory_space<smem>>
    %1168 = vector.broadcast %1167 : f32 to vector<8x256xf32>
    %1169 = arith.mulf %1166, %1168 : vector<8x256xf32>
    %1170 = arith.addf %1153, %1169 : vector<8x256xf32>
    %c78_283 = arith.constant 78 : index
    %1171 = memref.load %arg5[%c78_283] : memref<180xf32, #tpu.memory_space<smem>>
    %1172 = vector.broadcast %1171 : f32 to vector<8x256xf32>
    %1173 = arith.mulf %1166, %1172 : vector<8x256xf32>
    %1174 = arith.addf %1157, %1173 : vector<8x256xf32>
    %c123_284 = arith.constant 123 : index
    %1175 = memref.load %arg5[%c123_284] : memref<180xf32, #tpu.memory_space<smem>>
    %1176 = vector.broadcast %1175 : f32 to vector<8x256xf32>
    %1177 = arith.mulf %1166, %1176 : vector<8x256xf32>
    %1178 = arith.addf %1161, %1177 : vector<8x256xf32>
    %c168 = arith.constant 168 : index
    %1179 = memref.load %arg5[%c168] : memref<180xf32, #tpu.memory_space<smem>>
    %1180 = vector.broadcast %1179 : f32 to vector<8x256xf32>
    %1181 = arith.mulf %1166, %1180 : vector<8x256xf32>
    %1182 = arith.addf %1165, %1181 : vector<8x256xf32>
    %c32_285 = arith.constant 32 : index
    %c1_286 = arith.constant 1 : index
    %1183 = vector.load %arg9[%c32_285, %c1_286] : memref<50x258xf32, #tpu.memory_space<vmem>>, vector<8x256xf32>
    %c34_287 = arith.constant 34 : index
    %1184 = memref.load %arg5[%c34_287] : memref<180xf32, #tpu.memory_space<smem>>
    %1185 = vector.broadcast %1184 : f32 to vector<8x256xf32>
    %1186 = arith.mulf %1183, %1185 : vector<8x256xf32>
    %1187 = arith.addf %1170, %1186 : vector<8x256xf32>
    %c79_288 = arith.constant 79 : index
    %1188 = memref.load %arg5[%c79_288] : memref<180xf32, #tpu.memory_space<smem>>
    %1189 = vector.broadcast %1188 : f32 to vector<8x256xf32>
    %1190 = arith.mulf %1183, %1189 : vector<8x256xf32>
    %1191 = arith.addf %1174, %1190 : vector<8x256xf32>
    %c124_289 = arith.constant 124 : index
    %1192 = memref.load %arg5[%c124_289] : memref<180xf32, #tpu.memory_space<smem>>
    %1193 = vector.broadcast %1192 : f32 to vector<8x256xf32>
    %1194 = arith.mulf %1183, %1193 : vector<8x256xf32>
    %1195 = arith.addf %1178, %1194 : vector<8x256xf32>
    %c169 = arith.constant 169 : index
    %1196 = memref.load %arg5[%c169] : memref<180xf32, #tpu.memory_space<smem>>
    %1197 = vector.broadcast %1196 : f32 to vector<8x256xf32>
    %1198 = arith.mulf %1183, %1197 : vector<8x256xf32>
    %1199 = arith.addf %1182, %1198 : vector<8x256xf32>
    %c32_290 = arith.constant 32 : index
    %c2_291 = arith.constant 2 : index
    %1200 = vector.load %arg9[%c32_290, %c2_291] : memref<50x258xf32, #tpu.memory_space<vmem>>, vector<8x256xf32>
    %c35_292 = arith.constant 35 : index
    %1201 = memref.load %arg5[%c35_292] : memref<180xf32, #tpu.memory_space<smem>>
    %1202 = vector.broadcast %1201 : f32 to vector<8x256xf32>
    %1203 = arith.mulf %1200, %1202 : vector<8x256xf32>
    %1204 = arith.addf %1187, %1203 : vector<8x256xf32>
    %c80_293 = arith.constant 80 : index
    %1205 = memref.load %arg5[%c80_293] : memref<180xf32, #tpu.memory_space<smem>>
    %1206 = vector.broadcast %1205 : f32 to vector<8x256xf32>
    %1207 = arith.mulf %1200, %1206 : vector<8x256xf32>
    %1208 = arith.addf %1191, %1207 : vector<8x256xf32>
    %c125_294 = arith.constant 125 : index
    %1209 = memref.load %arg5[%c125_294] : memref<180xf32, #tpu.memory_space<smem>>
    %1210 = vector.broadcast %1209 : f32 to vector<8x256xf32>
    %1211 = arith.mulf %1200, %1210 : vector<8x256xf32>
    %1212 = arith.addf %1195, %1211 : vector<8x256xf32>
    %c170 = arith.constant 170 : index
    %1213 = memref.load %arg5[%c170] : memref<180xf32, #tpu.memory_space<smem>>
    %1214 = vector.broadcast %1213 : f32 to vector<8x256xf32>
    %1215 = arith.mulf %1200, %1214 : vector<8x256xf32>
    %1216 = arith.addf %1199, %1215 : vector<8x256xf32>
    %c40_295 = arith.constant 40 : index
    %c0_296 = arith.constant 0 : index
    %1217 = vector.load %arg9[%c40_295, %c0_296] : memref<50x258xf32, #tpu.memory_space<vmem>>, vector<8x256xf32>
    %c36_297 = arith.constant 36 : index
    %1218 = memref.load %arg5[%c36_297] : memref<180xf32, #tpu.memory_space<smem>>
    %1219 = vector.broadcast %1218 : f32 to vector<8x256xf32>
    %1220 = arith.mulf %1217, %1219 : vector<8x256xf32>
    %1221 = arith.addf %1204, %1220 : vector<8x256xf32>
    %c81_298 = arith.constant 81 : index
    %1222 = memref.load %arg5[%c81_298] : memref<180xf32, #tpu.memory_space<smem>>
    %1223 = vector.broadcast %1222 : f32 to vector<8x256xf32>
    %1224 = arith.mulf %1217, %1223 : vector<8x256xf32>
    %1225 = arith.addf %1208, %1224 : vector<8x256xf32>
    %c126_299 = arith.constant 126 : index
    %1226 = memref.load %arg5[%c126_299] : memref<180xf32, #tpu.memory_space<smem>>
    %1227 = vector.broadcast %1226 : f32 to vector<8x256xf32>
    %1228 = arith.mulf %1217, %1227 : vector<8x256xf32>
    %1229 = arith.addf %1212, %1228 : vector<8x256xf32>
    %c171 = arith.constant 171 : index
    %1230 = memref.load %arg5[%c171] : memref<180xf32, #tpu.memory_space<smem>>
    %1231 = vector.broadcast %1230 : f32 to vector<8x256xf32>
    %1232 = arith.mulf %1217, %1231 : vector<8x256xf32>
    %1233 = arith.addf %1216, %1232 : vector<8x256xf32>
    %c40_300 = arith.constant 40 : index
    %c1_301 = arith.constant 1 : index
    %1234 = vector.load %arg9[%c40_300, %c1_301] : memref<50x258xf32, #tpu.memory_space<vmem>>, vector<8x256xf32>
    %c37_302 = arith.constant 37 : index
    %1235 = memref.load %arg5[%c37_302] : memref<180xf32, #tpu.memory_space<smem>>
    %1236 = vector.broadcast %1235 : f32 to vector<8x256xf32>
    %1237 = arith.mulf %1234, %1236 : vector<8x256xf32>
    %1238 = arith.addf %1221, %1237 : vector<8x256xf32>
    %c82_303 = arith.constant 82 : index
    %1239 = memref.load %arg5[%c82_303] : memref<180xf32, #tpu.memory_space<smem>>
    %1240 = vector.broadcast %1239 : f32 to vector<8x256xf32>
    %1241 = arith.mulf %1234, %1240 : vector<8x256xf32>
    %1242 = arith.addf %1225, %1241 : vector<8x256xf32>
    %c127_304 = arith.constant 127 : index
    %1243 = memref.load %arg5[%c127_304] : memref<180xf32, #tpu.memory_space<smem>>
    %1244 = vector.broadcast %1243 : f32 to vector<8x256xf32>
    %1245 = arith.mulf %1234, %1244 : vector<8x256xf32>
    %1246 = arith.addf %1229, %1245 : vector<8x256xf32>
    %c172 = arith.constant 172 : index
    %1247 = memref.load %arg5[%c172] : memref<180xf32, #tpu.memory_space<smem>>
    %1248 = vector.broadcast %1247 : f32 to vector<8x256xf32>
    %1249 = arith.mulf %1234, %1248 : vector<8x256xf32>
    %1250 = arith.addf %1233, %1249 : vector<8x256xf32>
    %c40_305 = arith.constant 40 : index
    %c2_306 = arith.constant 2 : index
    %1251 = vector.load %arg9[%c40_305, %c2_306] : memref<50x258xf32, #tpu.memory_space<vmem>>, vector<8x256xf32>
    %c38_307 = arith.constant 38 : index
    %1252 = memref.load %arg5[%c38_307] : memref<180xf32, #tpu.memory_space<smem>>
    %1253 = vector.broadcast %1252 : f32 to vector<8x256xf32>
    %1254 = arith.mulf %1251, %1253 : vector<8x256xf32>
    %1255 = arith.addf %1238, %1254 : vector<8x256xf32>
    %c83_308 = arith.constant 83 : index
    %1256 = memref.load %arg5[%c83_308] : memref<180xf32, #tpu.memory_space<smem>>
    %1257 = vector.broadcast %1256 : f32 to vector<8x256xf32>
    %1258 = arith.mulf %1251, %1257 : vector<8x256xf32>
    %1259 = arith.addf %1242, %1258 : vector<8x256xf32>
    %c128_309 = arith.constant 128 : index
    %1260 = memref.load %arg5[%c128_309] : memref<180xf32, #tpu.memory_space<smem>>
    %1261 = vector.broadcast %1260 : f32 to vector<8x256xf32>
    %1262 = arith.mulf %1251, %1261 : vector<8x256xf32>
    %1263 = arith.addf %1246, %1262 : vector<8x256xf32>
    %c173 = arith.constant 173 : index
    %1264 = memref.load %arg5[%c173] : memref<180xf32, #tpu.memory_space<smem>>
    %1265 = vector.broadcast %1264 : f32 to vector<8x256xf32>
    %1266 = arith.mulf %1251, %1265 : vector<8x256xf32>
    %1267 = arith.addf %1250, %1266 : vector<8x256xf32>
    %c41_310 = arith.constant 41 : index
    %c0_311 = arith.constant 0 : index
    %1268 = vector.load %arg9[%c41_310, %c0_311] : memref<50x258xf32, #tpu.memory_space<vmem>>, vector<8x256xf32>
    %c39_312 = arith.constant 39 : index
    %1269 = memref.load %arg5[%c39_312] : memref<180xf32, #tpu.memory_space<smem>>
    %1270 = vector.broadcast %1269 : f32 to vector<8x256xf32>
    %1271 = arith.mulf %1268, %1270 : vector<8x256xf32>
    %1272 = arith.addf %1255, %1271 : vector<8x256xf32>
    %c84_313 = arith.constant 84 : index
    %1273 = memref.load %arg5[%c84_313] : memref<180xf32, #tpu.memory_space<smem>>
    %1274 = vector.broadcast %1273 : f32 to vector<8x256xf32>
    %1275 = arith.mulf %1268, %1274 : vector<8x256xf32>
    %1276 = arith.addf %1259, %1275 : vector<8x256xf32>
    %c129_314 = arith.constant 129 : index
    %1277 = memref.load %arg5[%c129_314] : memref<180xf32, #tpu.memory_space<smem>>
    %1278 = vector.broadcast %1277 : f32 to vector<8x256xf32>
    %1279 = arith.mulf %1268, %1278 : vector<8x256xf32>
    %1280 = arith.addf %1263, %1279 : vector<8x256xf32>
    %c174 = arith.constant 174 : index
    %1281 = memref.load %arg5[%c174] : memref<180xf32, #tpu.memory_space<smem>>
    %1282 = vector.broadcast %1281 : f32 to vector<8x256xf32>
    %1283 = arith.mulf %1268, %1282 : vector<8x256xf32>
    %1284 = arith.addf %1267, %1283 : vector<8x256xf32>
    %c41_315 = arith.constant 41 : index
    %c1_316 = arith.constant 1 : index
    %1285 = vector.load %arg9[%c41_315, %c1_316] : memref<50x258xf32, #tpu.memory_space<vmem>>, vector<8x256xf32>
    %c40_317 = arith.constant 40 : index
    %1286 = memref.load %arg5[%c40_317] : memref<180xf32, #tpu.memory_space<smem>>
    %1287 = vector.broadcast %1286 : f32 to vector<8x256xf32>
    %1288 = arith.mulf %1285, %1287 : vector<8x256xf32>
    %1289 = arith.addf %1272, %1288 : vector<8x256xf32>
    %c85_318 = arith.constant 85 : index
    %1290 = memref.load %arg5[%c85_318] : memref<180xf32, #tpu.memory_space<smem>>
    %1291 = vector.broadcast %1290 : f32 to vector<8x256xf32>
    %1292 = arith.mulf %1285, %1291 : vector<8x256xf32>
    %1293 = arith.addf %1276, %1292 : vector<8x256xf32>
    %c130_319 = arith.constant 130 : index
    %1294 = memref.load %arg5[%c130_319] : memref<180xf32, #tpu.memory_space<smem>>
    %1295 = vector.broadcast %1294 : f32 to vector<8x256xf32>
    %1296 = arith.mulf %1285, %1295 : vector<8x256xf32>
    %1297 = arith.addf %1280, %1296 : vector<8x256xf32>
    %c175 = arith.constant 175 : index
    %1298 = memref.load %arg5[%c175] : memref<180xf32, #tpu.memory_space<smem>>
    %1299 = vector.broadcast %1298 : f32 to vector<8x256xf32>
    %1300 = arith.mulf %1285, %1299 : vector<8x256xf32>
    %1301 = arith.addf %1284, %1300 : vector<8x256xf32>
    %c41_320 = arith.constant 41 : index
    %c2_321 = arith.constant 2 : index
    %1302 = vector.load %arg9[%c41_320, %c2_321] : memref<50x258xf32, #tpu.memory_space<vmem>>, vector<8x256xf32>
    %c41_322 = arith.constant 41 : index
    %1303 = memref.load %arg5[%c41_322] : memref<180xf32, #tpu.memory_space<smem>>
    %1304 = vector.broadcast %1303 : f32 to vector<8x256xf32>
    %1305 = arith.mulf %1302, %1304 : vector<8x256xf32>
    %1306 = arith.addf %1289, %1305 : vector<8x256xf32>
    %c86_323 = arith.constant 86 : index
    %1307 = memref.load %arg5[%c86_323] : memref<180xf32, #tpu.memory_space<smem>>
    %1308 = vector.broadcast %1307 : f32 to vector<8x256xf32>
    %1309 = arith.mulf %1302, %1308 : vector<8x256xf32>
    %1310 = arith.addf %1293, %1309 : vector<8x256xf32>
    %c131_324 = arith.constant 131 : index
    %1311 = memref.load %arg5[%c131_324] : memref<180xf32, #tpu.memory_space<smem>>
    %1312 = vector.broadcast %1311 : f32 to vector<8x256xf32>
    %1313 = arith.mulf %1302, %1312 : vector<8x256xf32>
    %1314 = arith.addf %1297, %1313 : vector<8x256xf32>
    %c176 = arith.constant 176 : index
    %1315 = memref.load %arg5[%c176] : memref<180xf32, #tpu.memory_space<smem>>
    %1316 = vector.broadcast %1315 : f32 to vector<8x256xf32>
    %1317 = arith.mulf %1302, %1316 : vector<8x256xf32>
    %1318 = arith.addf %1301, %1317 : vector<8x256xf32>
    %c42_325 = arith.constant 42 : index
    %c0_326 = arith.constant 0 : index
    %1319 = vector.load %arg9[%c42_325, %c0_326] : memref<50x258xf32, #tpu.memory_space<vmem>>, vector<8x256xf32>
    %c42_327 = arith.constant 42 : index
    %1320 = memref.load %arg5[%c42_327] : memref<180xf32, #tpu.memory_space<smem>>
    %1321 = vector.broadcast %1320 : f32 to vector<8x256xf32>
    %1322 = arith.mulf %1319, %1321 : vector<8x256xf32>
    %1323 = arith.addf %1306, %1322 : vector<8x256xf32>
    %c87_328 = arith.constant 87 : index
    %1324 = memref.load %arg5[%c87_328] : memref<180xf32, #tpu.memory_space<smem>>
    %1325 = vector.broadcast %1324 : f32 to vector<8x256xf32>
    %1326 = arith.mulf %1319, %1325 : vector<8x256xf32>
    %1327 = arith.addf %1310, %1326 : vector<8x256xf32>
    %c132_329 = arith.constant 132 : index
    %1328 = memref.load %arg5[%c132_329] : memref<180xf32, #tpu.memory_space<smem>>
    %1329 = vector.broadcast %1328 : f32 to vector<8x256xf32>
    %1330 = arith.mulf %1319, %1329 : vector<8x256xf32>
    %1331 = arith.addf %1314, %1330 : vector<8x256xf32>
    %c177 = arith.constant 177 : index
    %1332 = memref.load %arg5[%c177] : memref<180xf32, #tpu.memory_space<smem>>
    %1333 = vector.broadcast %1332 : f32 to vector<8x256xf32>
    %1334 = arith.mulf %1319, %1333 : vector<8x256xf32>
    %1335 = arith.addf %1318, %1334 : vector<8x256xf32>
    %c42_330 = arith.constant 42 : index
    %c1_331 = arith.constant 1 : index
    %1336 = vector.load %arg9[%c42_330, %c1_331] : memref<50x258xf32, #tpu.memory_space<vmem>>, vector<8x256xf32>
    %c43_332 = arith.constant 43 : index
    %1337 = memref.load %arg5[%c43_332] : memref<180xf32, #tpu.memory_space<smem>>
    %1338 = vector.broadcast %1337 : f32 to vector<8x256xf32>
    %1339 = arith.mulf %1336, %1338 : vector<8x256xf32>
    %1340 = arith.addf %1323, %1339 : vector<8x256xf32>
    %c88_333 = arith.constant 88 : index
    %1341 = memref.load %arg5[%c88_333] : memref<180xf32, #tpu.memory_space<smem>>
    %1342 = vector.broadcast %1341 : f32 to vector<8x256xf32>
    %1343 = arith.mulf %1336, %1342 : vector<8x256xf32>
    %1344 = arith.addf %1327, %1343 : vector<8x256xf32>
    %c133_334 = arith.constant 133 : index
    %1345 = memref.load %arg5[%c133_334] : memref<180xf32, #tpu.memory_space<smem>>
    %1346 = vector.broadcast %1345 : f32 to vector<8x256xf32>
    %1347 = arith.mulf %1336, %1346 : vector<8x256xf32>
    %1348 = arith.addf %1331, %1347 : vector<8x256xf32>
    %c178 = arith.constant 178 : index
    %1349 = memref.load %arg5[%c178] : memref<180xf32, #tpu.memory_space<smem>>
    %1350 = vector.broadcast %1349 : f32 to vector<8x256xf32>
    %1351 = arith.mulf %1336, %1350 : vector<8x256xf32>
    %1352 = arith.addf %1335, %1351 : vector<8x256xf32>
    %c42_335 = arith.constant 42 : index
    %c2_336 = arith.constant 2 : index
    %1353 = vector.load %arg9[%c42_335, %c2_336] : memref<50x258xf32, #tpu.memory_space<vmem>>, vector<8x256xf32>
    %c44_337 = arith.constant 44 : index
    %1354 = memref.load %arg5[%c44_337] : memref<180xf32, #tpu.memory_space<smem>>
    %1355 = vector.broadcast %1354 : f32 to vector<8x256xf32>
    %1356 = arith.mulf %1353, %1355 : vector<8x256xf32>
    %1357 = arith.addf %1340, %1356 : vector<8x256xf32>
    %c89_338 = arith.constant 89 : index
    %1358 = memref.load %arg5[%c89_338] : memref<180xf32, #tpu.memory_space<smem>>
    %1359 = vector.broadcast %1358 : f32 to vector<8x256xf32>
    %1360 = arith.mulf %1353, %1359 : vector<8x256xf32>
    %1361 = arith.addf %1344, %1360 : vector<8x256xf32>
    %c134_339 = arith.constant 134 : index
    %1362 = memref.load %arg5[%c134_339] : memref<180xf32, #tpu.memory_space<smem>>
    %1363 = vector.broadcast %1362 : f32 to vector<8x256xf32>
    %1364 = arith.mulf %1353, %1363 : vector<8x256xf32>
    %1365 = arith.addf %1348, %1364 : vector<8x256xf32>
    %c179 = arith.constant 179 : index
    %1366 = memref.load %arg5[%c179] : memref<180xf32, #tpu.memory_space<smem>>
    %1367 = vector.broadcast %1366 : f32 to vector<8x256xf32>
    %1368 = arith.mulf %1353, %1367 : vector<8x256xf32>
    %1369 = arith.addf %1352, %1368 : vector<8x256xf32>
    %c0_340 = arith.constant 0 : index
    %c0_341 = arith.constant 0 : index
    %c0_342 = arith.constant 0 : index
    %c0_343 = arith.constant 0 : index
    %1370 = vector.load %arg6[%c0_340, %c0_341, %c0_342, %c0_343] : memref<1x4x8x256xf32, #tpu.memory_space<vmem>>, vector<1x1x8x256xf32>
    %1371 = vector.shape_cast %1370 : vector<1x1x8x256xf32> to vector<8x256xf32>
    %1372 = vector.shape_cast %1357 : vector<8x256xf32> to vector<1x1x8x256xf32>
    tpu.vector_store %arg6[%c0_340, %c0_341, %c0_342, %c0_343], %1372 {strides = array<i32>} : memref<1x4x8x256xf32, #tpu.memory_space<vmem>>, vector<1x1x8x256xf32>,
    %c0_344 = arith.constant 0 : index
    %c1_345 = arith.constant 1 : index
    %c0_346 = arith.constant 0 : index
    %c0_347 = arith.constant 0 : index
    %1373 = vector.load %arg6[%c0_344, %c1_345, %c0_346, %c0_347] : memref<1x4x8x256xf32, #tpu.memory_space<vmem>>, vector<1x1x8x256xf32>
    %1374 = vector.shape_cast %1373 : vector<1x1x8x256xf32> to vector<8x256xf32>
    %1375 = vector.shape_cast %1361 : vector<8x256xf32> to vector<1x1x8x256xf32>
    tpu.vector_store %arg6[%c0_344, %c1_345, %c0_346, %c0_347], %1375 {strides = array<i32>} : memref<1x4x8x256xf32, #tpu.memory_space<vmem>>, vector<1x1x8x256xf32>,
    %c0_348 = arith.constant 0 : index
    %c2_349 = arith.constant 2 : index
    %c0_350 = arith.constant 0 : index
    %c0_351 = arith.constant 0 : index
    %1376 = vector.load %arg6[%c0_348, %c2_349, %c0_350, %c0_351] : memref<1x4x8x256xf32, #tpu.memory_space<vmem>>, vector<1x1x8x256xf32>
    %1377 = vector.shape_cast %1376 : vector<1x1x8x256xf32> to vector<8x256xf32>
    %1378 = vector.shape_cast %1365 : vector<8x256xf32> to vector<1x1x8x256xf32>
    tpu.vector_store %arg6[%c0_348, %c2_349, %c0_350, %c0_351], %1378 {strides = array<i32>} : memref<1x4x8x256xf32, #tpu.memory_space<vmem>>, vector<1x1x8x256xf32>,
    %c0_352 = arith.constant 0 : index
    %c3_353 = arith.constant 3 : index
    %c0_354 = arith.constant 0 : index
    %c0_355 = arith.constant 0 : index
    %1379 = vector.load %arg6[%c0_352, %c3_353, %c0_354, %c0_355] : memref<1x4x8x256xf32, #tpu.memory_space<vmem>>, vector<1x1x8x256xf32>
    %1380 = vector.shape_cast %1379 : vector<1x1x8x256xf32> to vector<8x256xf32>
    %1381 = vector.shape_cast %1369 : vector<8x256xf32> to vector<1x1x8x256xf32>
    tpu.vector_store %arg6[%c0_352, %c3_353, %c0_354, %c0_355], %1381 {strides = array<i32>} : memref<1x4x8x256xf32, #tpu.memory_space<vmem>>, vector<1x1x8x256xf32>,
    return
  }
  func.func @transform_0(%arg0: i32) -> (i32, i32, i32, i32) {
    %c0_i32 = arith.constant 0 : i32
    %c0_i32_0 = arith.constant 0 : i32
    %c0_i32_1 = arith.constant 0 : i32
    %c0_i32_2 = arith.constant 0 : i32
    return %arg0, %c0_i32, %c0_i32_0, %c0_i32_1 : i32, i32, i32, i32
  }
  func.func @transform_1(%arg0: i32) -> (i32, i32, i32, i32) {
    %c0_i32 = arith.constant 0 : i32
    %c0_i32_0 = arith.constant 0 : i32
    %c0_i32_1 = arith.constant 0 : i32
    %c0_i32_2 = arith.constant 0 : i32
    %c0_i32_3 = arith.constant 0 : i32
    return %c0_i32, %c0_i32_0, %c0_i32_1, %c0_i32_2 : i32, i32, i32, i32
  }
  func.func @transform_2(%arg0: i32) -> (i32, i32) {
    %c0_i32 = arith.constant 0 : i32
    %c0_i32_0 = arith.constant 0 : i32
    %c0_i32_1 = arith.constant 0 : i32
    return %c0_i32, %c0_i32_0 : i32, i32
  }
  func.func @transform_3(%arg0: i32) -> i32 {
    %c0_i32 = arith.constant 0 : i32
    %c0_i32_0 = arith.constant 0 : i32
    return %c0_i32 : i32
  }
  func.func @transform_4(%arg0: i32) -> i32 {
    %c0_i32 = arith.constant 0 : i32
    %c0_i32_0 = arith.constant 0 : i32
    return %c0_i32 : i32
  }
  func.func @transform_5(%arg0: i32) -> (i32, i32, i32, i32) {
    %c0_i32 = arith.constant 0 : i32
    %c0_i32_0 = arith.constant 0 : i32
    %c0_i32_1 = arith.constant 0 : i32
    %c0_i32_2 = arith.constant 0 : i32
    return %arg0, %c0_i32, %c0_i32_0, %c0_i32_1 : i32, i32, i32, i32
  }
}

</mosaic_0001>

<llo_original>
// kernel: functional_model_forward.1
$region0: #{functional_model_forward.1}
  #allocation0 [shape = 'u32[]', space=smem, size = 0x4, offset = 0x4, fixed_abs, tag = 'smem constant byte address 0x4 - core index']
  #allocation1 [shape = 'u32[144,128]{1,0:T(1,128)}', space=vmem, size = 0x12000, scoped, tag = 'internal scratch']
  #allocation2 [shape = 'f32[24,256]{1,0:T(8,128)}', space=vmem, size = 0x6000, scoped, tag = 'scratch operand']
  #allocation3 [shape = 'f32[24,256]{1,0:T(8,128)}', space=vmem, size = 0x6000, scoped, tag = 'scratch operand']
  #allocation4 [shape = 'f32[50,258]{1,0:T(8,128)}', space=vmem, size = 0x15000, scoped, tag = 'scratch operand']
  %s0 = inlined_call_operand.vmem [shape: f32[2,3,8,256], index: 0, kind: input, shape index: {}]
  %s1 = inlined_call_operand.hbm [shape: f32[1,3,256,256], index: 1, kind: input, shape index: {}]
  %s2 = inlined_call_operand.hbm [shape: f32[256,256], index: 2, kind: input, shape index: {}]
  %s3 = inlined_call_operand.vmem [shape: f32[135], index: 3, kind: input, shape index: {}]
  %s4 = inlined_call_operand.vmem [shape: f32[180], index: 4, kind: input, shape index: {}]
  %s5 = inlined_call_operand.hbm [shape: f32[2,4,8,256], index: 5, kind: output, shape index: {}]
  %s6 = sld [smem:[#allocation0]]
  $region69: #{functional_model_forward.1} parent=0
    _
  %s8 = ssub.s32 1, %s6
  %s9 = scalar_select 0, %s8, %s6
  $region1: #{functional_model_forward.1} parent=0
    #allocation5 [shape = 'u8[786432]{0}', space=vmem, size = 0xc0000, scoped, tag = 'input window, operand 1, single buffered']
    #allocation6 [shape = 's32[2]{0}', space=sflag, size = 0x8, scoped, tag = 'scoped memory for functional_model_forward.1']
    #allocation7 [shape = 's32[2]{0}', space=sflag, size = 0x8, scoped, tag = 'scoped memory for functional_model_forward.1']
    #allocation8 [shape = 's32[2]{0}', space=sflag, size = 0x8, scoped, tag = 'scoped memory for functional_model_forward.1']
    #allocation9 [shape = 'u8[262144]{0}', space=vmem, size = 0x40000, scoped, tag = 'input window, operand 2, single buffered']
    #allocation10 [shape = 's32[1]{0}', space=sflag, size = 0x4, scoped, tag = 'scoped memory for functional_model_forward.1']
    #allocation11 [shape = 'u8[1024]{0}', space=smem, size = 0x400, scoped, tag = 'input window, operand 3, single buffered']
    #allocation12 [shape = 'u8[1024]{0}', space=smem, size = 0x400, scoped, tag = 'input window, operand 4, single buffered']
    #allocation13 [shape = 's32[1]{0}', space=sflag, size = 0x4, scoped, tag = 'scoped memory for functional_model_forward.1']
    #allocation14 [shape = 'u8[65536]{0}', space=vmem, size = 0x10000, scoped, tag = 'output window, operand 0']
    %10 = vsyncpa [#allocation6], 0
    %11 = vsyncpa [#allocation10], 0
    %12 = vsyncpa [#allocation8], 0
    %13 = vsyncpa [#allocation13], 0
    %14 = vsyncpa [#allocation7], 0
    %s15 = scalar_lea.sflag [#allocation7], 1
    %16 = vsyncpa %s15, 0
    loop: start=0, step=1, limit=4
    $region2: #{functional_model_forward.1} parent=1 // loop_pre_header
      _
    $region3: #{functional_model_forward.1} parent=1 // loop_header
      %s18 = sphi 0, %s22
      %p19 = scmp.ge.s32.totalorder %s18, 4
      %s28 = sphi 0, %s30
      %s31 = sphi 0, %s28
      %s32 = sphi 0, %s31
      %s48 = sphi 0, %s32
      %s52 = sphi 0, %s52
      %s54 = sphi 0, %s52
      %s55 = sphi 0, %s54
      %s69 = sphi 0, %s55
      %s73 = sphi 0, %s73
      %s75 = sphi 0, %s73
      %s76 = sphi 0, %s75
      %s90 = sphi 0, %s76
      %s94 = sphi 0, %s94
      %s96 = sphi 0, %s94
      %s97 = sphi 0, %s96
      %s111 = sphi 0, %s97
      %s115 = sphi 0, %s115
      %s117 = sphi 0, %s115
      %s118 = sphi 0, %s117
      %s132 = sphi 0, %s118
      %s138 = sphi 0, %s140
      %s141 = sphi 0, %s138
      %s142 = sphi 0, %s141
      %s158 = sphi 0, %s142
    $region4: #{functional_model_forward.1} parent=1 // loop_header_branch
      %21 = sbr.rel (%p19) target = $region8
    $region5: #{functional_model_forward.1} parent=1 // loop_body
      %s23 = ssub.s32 %s18, 1
      %s24 = ssub.s32 %s18, 2
      %s25 = sadd.s32 %s18, 1
      %s26 = ssub.s32 %s18, %s25
      %p27 = scmp.eq.s32.totalorder %s26, 0
      %s29 = sadd.s32 %s28, 1
      %s30 = scalar_select %p27, %s28, %s29
      %p33 = pneg %p27
      %p34 = scmp.eq.s32.totalorder %s18, 1
      %p35 = por %p33, %p34
      %p36 = scmp.ne.s32.totalorder %s28, %s31
      %p37 = scmp.eq.s32.totalorder %s18, 0
      %p38 = por %p36, %p37
      %p39 = scmp.ne.s32.totalorder %s28, %s31
      %p40 = scmp.eq.s32.totalorder %s23, 1
      %p41 = por %p39, %p40
      %p42 = scmp.ne.s32.totalorder %s31, %s32
      %p43 = scmp.eq.s32.totalorder %s23, 0
      %p44 = por %p42, %p43
      %p45 = scmp.ne.s32.totalorder %s31, %s32
      %p46 = scmp.eq.s32.totalorder %s24, 1
      %p47 = por %p45, %p46
      %p49 = scmp.ne.s32.totalorder %s32, %s48
      %p50 = scmp.eq.s32.totalorder %s24, 0
      %p51 = por %p49, %p50
      %s53 = sadd.s32 %s52, 1
      %p56 = scmp.eq.s32.totalorder %s18, 1
      %p57 = scmp.ne.s32.totalorder %s52, %s54
      %p58 = scmp.eq.s32.totalorder %s18, 0
      %p59 = por %p57, %p58
      %p60 = scmp.ne.s32.totalorder %s52, %s54
      %p61 = scmp.eq.s32.totalorder %s23, 1
      %p62 = por %p60, %p61
      %p63 = scmp.ne.s32.totalorder %s54, %s55
      %p64 = scmp.eq.s32.totalorder %s23, 0
      %p65 = por %p63, %p64
      %p66 = scmp.ne.s32.totalorder %s54, %s55
      %p67 = scmp.eq.s32.totalorder %s24, 1
      %p68 = por %p66, %p67
      %p70 = scmp.ne.s32.totalorder %s55, %s69
      %p71 = scmp.eq.s32.totalorder %s24, 0
      %p72 = por %p70, %p71
      %s74 = sadd.s32 %s73, 1
      %p77 = scmp.eq.s32.totalorder %s18, 1
      %p78 = scmp.ne.s32.totalorder %s73, %s75
      %p79 = scmp.eq.s32.totalorder %s18, 0
      %p80 = por %p78, %p79
      %p81 = scmp.ne.s32.totalorder %s73, %s75
      %p82 = scmp.eq.s32.totalorder %s23, 1
      %p83 = por %p81, %p82
      %p84 = scmp.ne.s32.totalorder %s75, %s76
      %p85 = scmp.eq.s32.totalorder %s23, 0
      %p86 = por %p84, %p85
      %p87 = scmp.ne.s32.totalorder %s75, %s76
      %p88 = scmp.eq.s32.totalorder %s24, 1
      %p89 = por %p87, %p88
      %p91 = scmp.ne.s32.totalorder %s76, %s90
      %p92 = scmp.eq.s32.totalorder %s24, 0
      %p93 = por %p91, %p92
      %s95 = sadd.s32 %s94, 1
      %p98 = scmp.eq.s32.totalorder %s18, 1
      %p99 = scmp.ne.s32.totalorder %s94, %s96
      %p100 = scmp.eq.s32.totalorder %s18, 0
      %p101 = por %p99, %p100
      %p102 = scmp.ne.s32.totalorder %s94, %s96
      %p103 = scmp.eq.s32.totalorder %s23, 1
      %p104 = por %p102, %p103
      %p105 = scmp.ne.s32.totalorder %s96, %s97
      %p106 = scmp.eq.s32.totalorder %s23, 0
      %p107 = por %p105, %p106
      %p108 = scmp.ne.s32.totalorder %s96, %s97
      %p109 = scmp.eq.s32.totalorder %s24, 1
      %p110 = por %p108, %p109
      %p112 = scmp.ne.s32.totalorder %s97, %s111
      %p113 = scmp.eq.s32.totalorder %s24, 0
      %p114 = por %p112, %p113
      %s116 = sadd.s32 %s115, 1
      %p119 = scmp.eq.s32.totalorder %s18, 1
      %p120 = scmp.ne.s32.totalorder %s115, %s117
      %p121 = scmp.eq.s32.totalorder %s18, 0
      %p122 = por %p120, %p121
      %p123 = scmp.ne.s32.totalorder %s115, %s117
      %p124 = scmp.eq.s32.totalorder %s23, 1
      %p125 = por %p123, %p124
      %p126 = scmp.ne.s32.totalorder %s117, %s118
      %p127 = scmp.eq.s32.totalorder %s23, 0
      %p128 = por %p126, %p127
      %p129 = scmp.ne.s32.totalorder %s117, %s118
      %p130 = scmp.eq.s32.totalorder %s24, 1
      %p131 = por %p129, %p130
      %p133 = scmp.ne.s32.totalorder %s118, %s132
      %p134 = scmp.eq.s32.totalorder %s24, 0
      %p135 = por %p133, %p134
      %s136 = ssub.s32 %s18, %s25
      %p137 = scmp.eq.s32.totalorder %s136, 0
      %s139 = sadd.s32 %s138, 1
      %s140 = scalar_select %p137, %s138, %s139
      %p143 = pneg %p137
      %p144 = scmp.eq.s32.totalorder %s18, 1
      %p145 = por %p143, %p144
      %p146 = scmp.ne.s32.totalorder %s138, %s141
      %p147 = scmp.eq.s32.totalorder %s18, 0
      %p148 = por %p146, %p147
      %p149 = scmp.ne.s32.totalorder %s138, %s141
      %p150 = scmp.eq.s32.totalorder %s23, 1
      %p151 = por %p149, %p150
      %p152 = scmp.ne.s32.totalorder %s141, %s142
      %p153 = scmp.eq.s32.totalorder %s23, 0
      %p154 = por %p152, %p153
      %p155 = scmp.ne.s32.totalorder %s141, %s142
      %p156 = scmp.eq.s32.totalorder %s24, 1
      %p157 = por %p155, %p156
      %p159 = scmp.ne.s32.totalorder %s142, %s158
      %p160 = scmp.eq.s32.totalorder %s24, 0
      %p161 = por %p159, %p160
      %p162 = scmp.le.s32.totalorder 1, %s18
      %p163 = scmp.lt.s32.totalorder %s18, 3
      %p164 = pnand %p162, %p163
      %p165 = pneg %p164
      // Predicated region
      $region9: #{functional_model_forward.1} parent=5 // pred_check
        _
      $region10: #{functional_model_forward.1} parent=5 // pred_check_branch
        %167 = sbr.rel (%p164) target = $region12
      $region11: #{functional_model_forward.1} parent=5 // pred_region
        %s168 = ssub.s32 %s18, 1
        // Predicated region
        $region13: #{functional_model_forward.1} parent=11 // pred_check
          %p169 = pneg %p65
        $region14: #{functional_model_forward.1} parent=11 // pred_check_branch
          %171 = sbr.rel (%p169) target = $region16
        $region15: #{functional_model_forward.1} parent=11 // pred_region
          %s173 = ssub.s32 24576, 24576
          %174 = vsyncadd [#allocation6], %s173
          %s175 = sshll.u32 [#allocation5], 4
          %s176 = int_to_ptr.vmem [resolvable:$true] %s175
          %181 = dma.hbm_to_vmem [thread:$0]  %s1, 24576, %s176, [#allocation6], 256, 256, 16
        $region16: #{functional_model_forward.1} parent=11 // pred_fallthru
          _
        // Predicated region
        $region17: #{functional_model_forward.1} parent=11 // pred_check
          %p182 = pneg %p86
        $region18: #{functional_model_forward.1} parent=11 // pred_check_branch
          %184 = sbr.rel (%p182) target = $region20
        $region19: #{functional_model_forward.1} parent=11 // pred_region
          %s186 = ssub.s32 8192, 8192
          %187 = vsyncadd [#allocation10], %s186
          %s188 = sshll.u32 [#allocation9], 4
          %s189 = int_to_ptr.vmem [resolvable:$true] %s188
          %194 = dma.hbm_to_vmem [thread:$0]  %s2, 8192, %s189, [#allocation10], 256, 256, 16
        $region20: #{functional_model_forward.1} parent=11 // pred_fallthru
          _
        // Predicated region
        $region21: #{functional_model_forward.1} parent=11 // pred_check
          %p195 = pneg %p107
        $region22: #{functional_model_forward.1} parent=11 // pred_check_branch
          %197 = sbr.rel (%p195) target = $region24
        $region23: #{functional_model_forward.1} parent=11 // pred_region
          %s199 = ssub.s32 32, 32
          %200 = vsyncadd [#allocation8], %s199
          %s202 = sshll.u32 %s3, 4
          %s203 = int_to_ptr.vmem [resolvable:$true] %s202
          %205 = dma.vmem_to_smem %s203, 32, [#allocation11], [#allocation8]
        $region24: #{functional_model_forward.1} parent=11 // pred_fallthru
          _
        // Predicated region
        $region25: #{functional_model_forward.1} parent=11 // pred_check
          %p206 = pneg %p128
        $region26: #{functional_model_forward.1} parent=11 // pred_check_branch
          %208 = sbr.rel (%p206) target = $region28
        $region27: #{functional_model_forward.1} parent=11 // pred_region
          %s210 = ssub.s32 32, 32
          %211 = vsyncadd [#allocation13], %s210
          %s213 = sshll.u32 %s4, 4
          %s214 = int_to_ptr.vmem [resolvable:$true] %s213
          %216 = dma.vmem_to_smem %s214, 32, [#allocation12], [#allocation13]
        $region28: #{functional_model_forward.1} parent=11 // pred_fallthru
          _
      $region12: #{functional_model_forward.1} parent=5 // pred_fallthru
        _
      %p217 = scmp.lt.s32.totalorder %s18, 2
      // Predicated region
      $region29: #{functional_model_forward.1} parent=5 // pred_check
        %p218 = pneg %p217
      $region30: #{functional_model_forward.1} parent=5 // pred_check_branch
        %220 = sbr.rel (%p218) target = $region32
      $region31: #{functional_model_forward.1} parent=5 // pred_region
        // Predicated region
        $region33: #{functional_model_forward.1} parent=31 // pred_check
          %p221 = pneg %p38
        $region34: #{functional_model_forward.1} parent=31 // pred_check_branch
          %223 = sbr.rel (%p221) target = $region36
        $region35: #{functional_model_forward.1} parent=31 // pred_region
          %p224 = scmp.lt.s32.totalorder %s18, 1
          %s225 = scalar_select %p224, %s18, 1
          %s226 = smul.addr %s225, 6
          %s227 = smul.addr %s226, 8
          %s228 = scalar_lea.vmem %s0, %s227
        $region36: #{functional_model_forward.1} parent=31 // pred_fallthru
          _
      $region32: #{functional_model_forward.1} parent=5 // pred_fallthru
        _
      %p229 = scmp.le.s32.totalorder 1, %s18
      %p230 = scmp.lt.s32.totalorder %s18, 3
      %p231 = pnand %p229, %p230
      %p232 = pneg %p231
      // Predicated region
      $region37: #{functional_model_forward.1} parent=5 // pred_check
        _
      $region38: #{functional_model_forward.1} parent=5 // pred_check_branch
        %234 = sbr.rel (%p231) target = $region40
      $region39: #{functional_model_forward.1} parent=5 // pred_region
        %s235 = ssub.s32 %s18, 1
        // Predicated region
        $region41: #{functional_model_forward.1} parent=39 // pred_check
          %p236 = pneg %p65
        $region42: #{functional_model_forward.1} parent=39 // pred_check_branch
          %238 = sbr.rel (%p236) target = $region44
        $region43: #{functional_model_forward.1} parent=39 // pred_region
          %239 = dma.done [#allocation6], 24576
        $region44: #{functional_model_forward.1} parent=39 // pred_fallthru
          _
        // Predicated region
        $region45: #{functional_model_forward.1} parent=39 // pred_check
          %p240 = pneg %p86
        $region46: #{functional_model_forward.1} parent=39 // pred_check_branch
          %242 = sbr.rel (%p240) target = $region48
        $region47: #{functional_model_forward.1} parent=39 // pred_region
          %243 = dma.done [#allocation10], 8192
        $region48: #{functional_model_forward.1} parent=39 // pred_fallthru
          _
        // Predicated region
        $region49: #{functional_model_forward.1} parent=39 // pred_check
          %p244 = pneg %p107
        $region50: #{functional_model_forward.1} parent=39 // pred_check_branch
          %246 = sbr.rel (%p244) target = $region52
        $region51: #{functional_model_forward.1} parent=39 // pred_region
          %247 = dma.done [#allocation8], 32
        $region52: #{functional_model_forward.1} parent=39 // pred_fallthru
          _
        // Predicated region
        $region53: #{functional_model_forward.1} parent=39 // pred_check
          %p248 = pneg %p128
        $region54: #{functional_model_forward.1} parent=39 // pred_check_branch
          %250 = sbr.rel (%p248) target = $region56
        $region55: #{functional_model_forward.1} parent=39 // pred_region
          %251 = dma.done [#allocation13], 32
        $region56: #{functional_model_forward.1} parent=39 // pred_fallthru
          _
        %252 = sfence
        %p253 = scmp.lt.s32.totalorder %s23, 1
        %s254 = scalar_select %p253, %s23, 1
        %s255 = smul.addr %s254, 6
        %s256 = smul.addr %s255, 8
        %s257 = scalar_lea.vmem %s0, %s256
        %p258 = pneg %p44
        %p259 = pneg %p41
        %p260 = pneg %p65
        %p261 = pneg %p62
        %p262 = pneg %p86
        %p263 = pneg %p83
        %p264 = pneg %p107
        %p265 = pneg %p104
        %p266 = pneg %p128
        %p267 = pneg %p125
        %p268 = pneg %p154
        %p269 = pneg %p151
        %s270 = sand.u32 %s141, 1
        %s271 = scalar_lea.sflag [#allocation7], %s270
        %s272 = sand.u32 %s141, 1
        %s273 = smul.addr %s272, 64
        %s274 = scalar_lea.vmem [#allocation14], %s273
        %p275 = scmp.lt.s32.totalorder %s23, 1
        %s276 = scalar_select %p275, %s23, 1
        %s277 = smul.addr %s276, 6
        %s278 = smul.addr %s277, 8
        %s279 = scalar_lea.vmem %s0, %s278
        %v280 = vld [vmem:[%s279] sm:$0xff]
        %v281 = vld [vmem:[%s279 + $0x8] sm:$0xff]
        %v282 = vld [vmem:[#allocation5] sm:$0xff]
        %v283 = vld [vmem:[#allocation5 + $0x8] sm:$0xff]
        %v284 = vld [vmem:[#allocation5 + $0x10] sm:$0xff]
        %v285 = vld [vmem:[#allocation5 + $0x18] sm:$0xff]
        %v286 = vld [vmem:[#allocation5 + $0x20] sm:$0xff]
        %v287 = vld [vmem:[#allocation5 + $0x28] sm:$0xff]
        %v288 = vld [vmem:[#allocation5 + $0x30] sm:$0xff]
        %v289 = vld [vmem:[#allocation5 + $0x38] sm:$0xff]
        %v290 = vld [vmem:[#allocation5 + $0x40] sm:$0xff]
        %v291 = vld [vmem:[#allocation5 + $0x48] sm:$0xff]
        %v292 = vld [vmem:[#allocation5 + $0x50] sm:$0xff]
        %v293 = vld [vmem:[#allocation5 + $0x58] sm:$0xff]
        %v294 = vld [vmem:[#allocation5 + $0x60] sm:$0xff]
        %v295 = vld [vmem:[#allocation5 + $0x68] sm:$0xff]
        %v296 = vld [vmem:[#allocation5 + $0x70] sm:$0xff]
        %v297 = vld [vmem:[#allocation5 + $0x78] sm:$0xff]
        %v298 = vld [vmem:[#allocation5 + $0x80] sm:$0xff]
        %v299 = vld [vmem:[#allocation5 + $0x88] sm:$0xff]
        %v300 = vld [vmem:[#allocation5 + $0x90] sm:$0xff]
        %v301 = vld [vmem:[#allocation5 + $0x98] sm:$0xff]
        %v302 = vld [vmem:[#allocation5 + $0xa0] sm:$0xff]
        %v303 = vld [vmem:[#allocation5 + $0xa8] sm:$0xff]
        %v304 = vld [vmem:[#allocation5 + $0xb0] sm:$0xff]
        %v305 = vld [vmem:[#allocation5 + $0xb8] sm:$0xff]
        %v306 = vld [vmem:[#allocation5 + $0xc0] sm:$0xff]
        %v307 = vld [vmem:[#allocation5 + $0xc8] sm:$0xff]
        %v308 = vld [vmem:[#allocation5 + $0xd0] sm:$0xff]
        %v309 = vld [vmem:[#allocation5 + $0xd8] sm:$0xff]
        %v310 = vld [vmem:[#allocation5 + $0xe0] sm:$0xff]
        %v311 = vld [vmem:[#allocation5 + $0xe8] sm:$0xff]
        %v312 = vld [vmem:[#allocation5 + $0xf0] sm:$0xff]
        %v313 = vld [vmem:[#allocation5 + $0xf8] sm:$0xff]
        %v314 = vld [vmem:[#allocation5 + $0x100] sm:$0xff]
        %v315 = vld [vmem:[#allocation5 + $0x108] sm:$0xff]
        %v316 = vld [vmem:[#allocation5 + $0x110] sm:$0xff]
        %v317 = vld [vmem:[#allocation5 + $0x118] sm:$0xff]
        %v318 = vld [vmem:[#allocation5 + $0x120] sm:$0xff]
        %v319 = vld [vmem:[#allocation5 + $0x128] sm:$0xff]
        %v320 = vld [vmem:[#allocation5 + $0x130] sm:$0xff]
        %v321 = vld [vmem:[#allocation5 + $0x138] sm:$0xff]
        %v322 = vld [vmem:[#allocation5 + $0x140] sm:$0xff]
        %v323 = vld [vmem:[#allocation5 + $0x148] sm:$0xff]
        %v324 = vld [vmem:[#allocation5 + $0x150] sm:$0xff]
        %v325 = vld [vmem:[#allocation5 + $0x158] sm:$0xff]
        %v326 = vld [vmem:[#allocation5 + $0x160] sm:$0xff]
        %v327 = vld [vmem:[#allocation5 + $0x168] sm:$0xff]
        %v328 = vld [vmem:[#allocation5 + $0x170] sm:$0xff]
        %v329 = vld [vmem:[#allocation5 + $0x178] sm:$0xff]
        %v330 = vld [vmem:[#allocation5 + $0x180] sm:$0xff]
        %v331 = vld [vmem:[#allocation5 + $0x188] sm:$0xff]
        %v332 = vld [vmem:[#allocation5 + $0x190] sm:$0xff]
        %v333 = vld [vmem:[#allocation5 + $0x198] sm:$0xff]
        %v334 = vld [vmem:[#allocation5 + $0x1a0] sm:$0xff]
        %v335 = vld [vmem:[#allocation5 + $0x1a8] sm:$0xff]
        %v336 = vld [vmem:[#allocation5 + $0x1b0] sm:$0xff]
        %v337 = vld [vmem:[#allocation5 + $0x1b8] sm:$0xff]
        %v338 = vld [vmem:[#allocation5 + $0x1c0] sm:$0xff]
        %v339 = vld [vmem:[#allocation5 + $0x1c8] sm:$0xff]
        %v340 = vld [vmem:[#allocation5 + $0x1d0] sm:$0xff]
        %v341 = vld [vmem:[#allocation5 + $0x1d8] sm:$0xff]
        %v342 = vld [vmem:[#allocation5 + $0x1e0] sm:$0xff]
        %v343 = vld [vmem:[#allocation5 + $0x1e8] sm:$0xff]
        %v344 = vld [vmem:[#allocation5 + $0x1f0] sm:$0xff]
        %v345 = vld [vmem:[#allocation5 + $0x1f8] sm:$0xff]
        %346 = vmatprep.subr.mxu0 %v283
        %347 = vmatpush1.msra.mxu0 %v282
        %348 = vmatprep.subr.mxu0 %v285
        %349 = vmatpush1.msra.mxu0 %v284
        %350 = vmatprep.subr.mxu0 %v287
        %351 = vmatpush1.msra.mxu0 %v286
        %352 = vmatprep.subr.mxu0 %v289
        %353 = vmatpush1.msra.mxu0 %v288
        %354 = vmatprep.subr.mxu0 %v291
        %355 = vmatpush1.msra.mxu0 %v290
        %356 = vmatprep.subr.mxu0 %v293
        %357 = vmatpush1.msra.mxu0 %v292
        %358 = vmatprep.subr.mxu0 %v295
        %359 = vmatpush1.msra.mxu0 %v294
        %360 = vmatprep.subr.mxu0 %v297
        %361 = vmatpush1.msra.mxu0 %v296
        %362 = vmatprep.subr.mxu0 %v299
        %363 = vmatpush1.msra.mxu0 %v298
        %364 = vmatprep.subr.mxu0 %v301
        %365 = vmatpush1.msra.mxu0 %v300
        %366 = vmatprep.subr.mxu0 %v303
        %367 = vmatpush1.msra.mxu0 %v302
        %368 = vmatprep.subr.mxu0 %v305
        %369 = vmatpush1.msra.mxu0 %v304
        %370 = vmatprep.subr.mxu0 %v307
        %371 = vmatpush1.msra.mxu0 %v306
        %372 = vmatprep.subr.mxu0 %v309
        %373 = vmatpush1.msra.mxu0 %v308
        %374 = vmatprep.subr.mxu0 %v311
        %375 = vmatpush1.msra.mxu0 %v310
        %376 = vmatprep.subr.mxu0 %v313
        %377 = vmatpush1.msra.mxu0 %v312
        %378 = vmatprep.subr.mxu0 %v315
        %379 = vmatpush1.msra.mxu0 %v314
        %380 = vmatprep.subr.mxu0 %v317
        %381 = vmatpush1.msra.mxu0 %v316
        %382 = vmatprep.subr.mxu0 %v319
        %383 = vmatpush1.msra.mxu0 %v318
        %384 = vmatprep.subr.mxu0 %v321
        %385 = vmatpush1.msra.mxu0 %v320
        %386 = vmatprep.subr.mxu0 %v323
        %387 = vmatpush1.msra.mxu0 %v322
        %388 = vmatprep.subr.mxu0 %v325
        %389 = vmatpush1.msra.mxu0 %v324
        %390 = vmatprep.subr.mxu0 %v327
        %391 = vmatpush1.msra.mxu0 %v326
        %392 = vmatprep.subr.mxu0 %v329
        %393 = vmatpush1.msra.mxu0 %v328
        %394 = vmatprep.subr.mxu0 %v331
        %395 = vmatpush1.msra.mxu0 %v330
        %396 = vmatprep.subr.mxu0 %v333
        %397 = vmatpush1.msra.mxu0 %v332
        %398 = vmatprep.subr.mxu0 %v335
        %399 = vmatpush1.msra.mxu0 %v334
        %400 = vmatprep.subr.mxu0 %v337
        %401 = vmatpush1.msra.mxu0 %v336
        %402 = vmatprep.subr.mxu0 %v339
        %403 = vmatpush1.msra.mxu0 %v338
        %404 = vmatprep.subr.mxu0 %v341
        %405 = vmatpush1.msra.mxu0 %v340
        %406 = vmatprep.subr.mxu0 %v343
        %407 = vmatpush1.msra.mxu0 %v342
        %408 = vmatprep.subr.mxu0 %v345
        %409 = vmatpush1.msra.mxu0 %v344
        %410 = vmatprep.mubr.f32.mxu0 %v281
        %411 = vmatmul.mubr.f32.gmra.mrb[0].mxu0 %v280
        %v412 = vpop.f32.mrb[0].mxu0
        %v413 = vadd.f32 0.0, %v412
        %v414 = vpop.f32.mrb[0].mxu0
        %v415 = vadd.f32 0.0, %v414
        %416 = vdwg.mxu0
        %417 = vst [vmem:[#allocation2] sm:$0xff] %v413
        %418 = vst [vmem:[#allocation2 + $0x8] sm:$0xff] %v415
        %s419 = scalar_lea.vmem %s279, 16
        %v420 = vld [vmem:[%s419] sm:$0xff]
        %v421 = vld [vmem:[%s419 + $0x8] sm:$0xff]
        %s422 = scalar_lea.vmem [#allocation5], 512
        %v423 = vld [vmem:[%s422] sm:$0xff]
        %v424 = vld [vmem:[%s422 + $0x8] sm:$0xff]
        %v425 = vld [vmem:[%s422 + $0x10] sm:$0xff]
        %v426 = vld [vmem:[%s422 + $0x18] sm:$0xff]
        %v427 = vld [vmem:[%s422 + $0x20] sm:$0xff]
        %v428 = vld [vmem:[%s422 + $0x28] sm:$0xff]
        %v429 = vld [vmem:[%s422 + $0x30] sm:$0xff]
        %v430 = vld [vmem:[%s422 + $0x38] sm:$0xff]
        %v431 = vld [vmem:[%s422 + $0x40] sm:$0xff]
        %v432 = vld [vmem:[%s422 + $0x48] sm:$0xff]
        %v433 = vld [vmem:[%s422 + $0x50] sm:$0xff]
        %v434 = vld [vmem:[%s422 + $0x58] sm:$0xff]
        %v435 = vld [vmem:[%s422 + $0x60] sm:$0xff]
        %v436 = vld [vmem:[%s422 + $0x68] sm:$0xff]
        %v437 = vld [vmem:[%s422 + $0x70] sm:$0xff]
        %v438 = vld [vmem:[%s422 + $0x78] sm:$0xff]
        %v439 = vld [vmem:[%s422 + $0x80] sm:$0xff]
        %v440 = vld [vmem:[%s422 + $0x88] sm:$0xff]
        %v441 = vld [vmem:[%s422 + $0x90] sm:$0xff]
        %v442 = vld [vmem:[%s422 + $0x98] sm:$0xff]
        %v443 = vld [vmem:[%s422 + $0xa0] sm:$0xff]
        %v444 = vld [vmem:[%s422 + $0xa8] sm:$0xff]
        %v445 = vld [vmem:[%s422 + $0xb0] sm:$0xff]
        %v446 = vld [vmem:[%s422 + $0xb8] sm:$0xff]
        %v447 = vld [vmem:[%s422 + $0xc0] sm:$0xff]
        %v448 = vld [vmem:[%s422 + $0xc8] sm:$0xff]
        %v449 = vld [vmem:[%s422 + $0xd0] sm:$0xff]
        %v450 = vld [vmem:[%s422 + $0xd8] sm:$0xff]
        %v451 = vld [vmem:[%s422 + $0xe0] sm:$0xff]
        %v452 = vld [vmem:[%s422 + $0xe8] sm:$0xff]
        %v453 = vld [vmem:[%s422 + $0xf0] sm:$0xff]
        %v454 = vld [vmem:[%s422 + $0xf8] sm:$0xff]
        %v455 = vld [vmem:[%s422 + $0x100] sm:$0xff]
        %v456 = vld [vmem:[%s422 + $0x108] sm:$0xff]
        %v457 = vld [vmem:[%s422 + $0x110] sm:$0xff]
        %v458 = vld [vmem:[%s422 + $0x118] sm:$0xff]
        %v459 = vld [vmem:[%s422 + $0x120] sm:$0xff]
        %v460 = vld [vmem:[%s422 + $0x128] sm:$0xff]
        %v461 = vld [vmem:[%s422 + $0x130] sm:$0xff]
        %v462 = vld [vmem:[%s422 + $0x138] sm:$0xff]
        %v463 = vld [vmem:[%s422 + $0x140] sm:$0xff]
        %v464 = vld [vmem:[%s422 + $0x148] sm:$0xff]
        %v465 = vld [vmem:[%s422 + $0x150] sm:$0xff]
        %v466 = vld [vmem:[%s422 + $0x158] sm:$0xff]
        %v467 = vld [vmem:[%s422 + $0x160] sm:$0xff]
        %v468 = vld [vmem:[%s422 + $0x168] sm:$0xff]
        %v469 = vld [vmem:[%s422 + $0x170] sm:$0xff]
        %v470 = vld [vmem:[%s422 + $0x178] sm:$0xff]
        %v471 = vld [vmem:[%s422 + $0x180] sm:$0xff]
        %v472 = vld [vmem:[%s422 + $0x188] sm:$0xff]
        %v473 = vld [vmem:[%s422 + $0x190] sm:$0xff]
        %v474 = vld [vmem:[%s422 + $0x198] sm:$0xff]
        %v475 = vld [vmem:[%s422 + $0x1a0] sm:$0xff]
        %v476 = vld [vmem:[%s422 + $0x1a8] sm:$0xff]
        %v477 = vld [vmem:[%s422 + $0x1b0] sm:$0xff]
        %v478 = vld [vmem:[%s422 + $0x1b8] sm:$0xff]
        %v479 = vld [vmem:[%s422 + $0x1c0] sm:$0xff]
        %v480 = vld [vmem:[%s422 + $0x1c8] sm:$0xff]
        %v481 = vld [vmem:[%s422 + $0x1d0] sm:$0xff]
        %v482 = vld [vmem:[%s422 + $0x1d8] sm:$0xff]
        %v483 = vld [vmem:[%s422 + $0x1e0] sm:$0xff]
        %v484 = vld [vmem:[%s422 + $0x1e8] sm:$0xff]
        %v485 = vld [vmem:[%s422 + $0x1f0] sm:$0xff]
        %v486 = vld [vmem:[%s422 + $0x1f8] sm:$0xff]
        %487 = vmatprep.subr.mxu0 %v424
        %488 = vmatpush1.msra.mxu0 %v423
        %489 = vmatprep.subr.mxu0 %v426
        %490 = vmatpush1.msra.mxu0 %v425
        %491 = vmatprep.subr.mxu0 %v428
        %492 = vmatpush1.msra.mxu0 %v427
        %493 = vmatprep.subr.mxu0 %v430
        %494 = vmatpush1.msra.mxu0 %v429
        %495 = vmatprep.subr.mxu0 %v432
        %496 = vmatpush1.msra.mxu0 %v431
        %497 = vmatprep.subr.mxu0 %v434
        %498 = vmatpush1.msra.mxu0 %v433
        %499 = vmatprep.subr.mxu0 %v436
        %500 = vmatpush1.msra.mxu0 %v435
        %501 = vmatprep.subr.mxu0 %v438
        %502 = vmatpush1.msra.mxu0 %v437
        %503 = vmatprep.subr.mxu0 %v440
        %504 = vmatpush1.msra.mxu0 %v439
        %505 = vmatprep.subr.mxu0 %v442
        %506 = vmatpush1.msra.mxu0 %v441
        %507 = vmatprep.subr.mxu0 %v444
        %508 = vmatpush1.msra.mxu0 %v443
        %509 = vmatprep.subr.mxu0 %v446
        %510 = vmatpush1.msra.mxu0 %v445
        %511 = vmatprep.subr.mxu0 %v448
        %512 = vmatpush1.msra.mxu0 %v447
        %513 = vmatprep.subr.mxu0 %v450
        %514 = vmatpush1.msra.mxu0 %v449
        %515 = vmatprep.subr.mxu0 %v452
        %516 = vmatpush1.msra.mxu0 %v451
        %517 = vmatprep.subr.mxu0 %v454
        %518 = vmatpush1.msra.mxu0 %v453
        %519 = vmatprep.subr.mxu0 %v456
        %520 = vmatpush1.msra.mxu0 %v455
        %521 = vmatprep.subr.mxu0 %v458
        %522 = vmatpush1.msra.mxu0 %v457
        %523 = vmatprep.subr.mxu0 %v460
        %524 = vmatpush1.msra.mxu0 %v459
        %525 = vmatprep.subr.mxu0 %v462
        %526 = vmatpush1.msra.mxu0 %v461
        %527 = vmatprep.subr.mxu0 %v464
        %528 = vmatpush1.msra.mxu0 %v463
        %529 = vmatprep.subr.mxu0 %v466
        %530 = vmatpush1.msra.mxu0 %v465
        %531 = vmatprep.subr.mxu0 %v468
        %532 = vmatpush1.msra.mxu0 %v467
        %533 = vmatprep.subr.mxu0 %v470
        %534 = vmatpush1.msra.mxu0 %v469
        %535 = vmatprep.subr.mxu0 %v472
        %536 = vmatpush1.msra.mxu0 %v471
        %537 = vmatprep.subr.mxu0 %v474
        %538 = vmatpush1.msra.mxu0 %v473
        %539 = vmatprep.subr.mxu0 %v476
        %540 = vmatpush1.msra.mxu0 %v475
        %541 = vmatprep.subr.mxu0 %v478
        %542 = vmatpush1.msra.mxu0 %v477
        %543 = vmatprep.subr.mxu0 %v480
        %544 = vmatpush1.msra.mxu0 %v479
        %545 = vmatprep.subr.mxu0 %v482
        %546 = vmatpush1.msra.mxu0 %v481
        %547 = vmatprep.subr.mxu0 %v484
        %548 = vmatpush1.msra.mxu0 %v483
        %549 = vmatprep.subr.mxu0 %v486
        %550 = vmatpush1.msra.mxu0 %v485
        %551 = vmatprep.mubr.f32.mxu0 %v421
        %552 = vmatmul.mubr.f32.gmra.mrb[0].mxu0 %v420
        %v553 = vpop.f32.mrb[0].mxu0
        %v554 = vadd.f32 0.0, %v553
        %v555 = vpop.f32.mrb[0].mxu0
        %v556 = vadd.f32 0.0, %v555
        %557 = vdwg.mxu0
        %558 = vst [vmem:[#allocation2 + $0x10] sm:$0xff] %v554
        %559 = vst [vmem:[#allocation2 + $0x18] sm:$0xff] %v556
        %s560 = scalar_lea.vmem %s279, 32
        %v561 = vld [vmem:[%s560] sm:$0xff]
        %v562 = vld [vmem:[%s560 + $0x8] sm:$0xff]
        %s563 = scalar_lea.vmem [#allocation5], 1024
        %v564 = vld [vmem:[%s563] sm:$0xff]
        %v565 = vld [vmem:[%s563 + $0x8] sm:$0xff]
        %v566 = vld [vmem:[%s563 + $0x10] sm:$0xff]
        %v567 = vld [vmem:[%s563 + $0x18] sm:$0xff]
        %v568 = vld [vmem:[%s563 + $0x20] sm:$0xff]
        %v569 = vld [vmem:[%s563 + $0x28] sm:$0xff]
        %v570 = vld [vmem:[%s563 + $0x30] sm:$0xff]
        %v571 = vld [vmem:[%s563 + $0x38] sm:$0xff]
        %v572 = vld [vmem:[%s563 + $0x40] sm:$0xff]
        %v573 = vld [vmem:[%s563 + $0x48] sm:$0xff]
        %v574 = vld [vmem:[%s563 + $0x50] sm:$0xff]
        %v575 = vld [vmem:[%s563 + $0x58] sm:$0xff]
        %v576 = vld [vmem:[%s563 + $0x60] sm:$0xff]
        %v577 = vld [vmem:[%s563 + $0x68] sm:$0xff]
        %v578 = vld [vmem:[%s563 + $0x70] sm:$0xff]
        %v579 = vld [vmem:[%s563 + $0x78] sm:$0xff]
        %v580 = vld [vmem:[%s563 + $0x80] sm:$0xff]
        %v581 = vld [vmem:[%s563 + $0x88] sm:$0xff]
        %v582 = vld [vmem:[%s563 + $0x90] sm:$0xff]
        %v583 = vld [vmem:[%s563 + $0x98] sm:$0xff]
        %v584 = vld [vmem:[%s563 + $0xa0] sm:$0xff]
        %v585 = vld [vmem:[%s563 + $0xa8] sm:$0xff]
        %v586 = vld [vmem:[%s563 + $0xb0] sm:$0xff]
        %v587 = vld [vmem:[%s563 + $0xb8] sm:$0xff]
        %v588 = vld [vmem:[%s563 + $0xc0] sm:$0xff]
        %v589 = vld [vmem:[%s563 + $0xc8] sm:$0xff]
        %v590 = vld [vmem:[%s563 + $0xd0] sm:$0xff]
        %v591 = vld [vmem:[%s563 + $0xd8] sm:$0xff]
        %v592 = vld [vmem:[%s563 + $0xe0] sm:$0xff]
        %v593 = vld [vmem:[%s563 + $0xe8] sm:$0xff]
        %v594 = vld [vmem:[%s563 + $0xf0] sm:$0xff]
        %v595 = vld [vmem:[%s563 + $0xf8] sm:$0xff]
        %v596 = vld [vmem:[%s563 + $0x100] sm:$0xff]
        %v597 = vld [vmem:[%s563 + $0x108] sm:$0xff]
        %v598 = vld [vmem:[%s563 + $0x110] sm:$0xff]
        %v599 = vld [vmem:[%s563 + $0x118] sm:$0xff]
        %v600 = vld [vmem:[%s563 + $0x120] sm:$0xff]
        %v601 = vld [vmem:[%s563 + $0x128] sm:$0xff]
        %v602 = vld [vmem:[%s563 + $0x130] sm:$0xff]
        %v603 = vld [vmem:[%s563 + $0x138] sm:$0xff]
        %v604 = vld [vmem:[%s563 + $0x140] sm:$0xff]
        %v605 = vld [vmem:[%s563 + $0x148] sm:$0xff]
        %v606 = vld [vmem:[%s563 + $0x150] sm:$0xff]
        %v607 = vld [vmem:[%s563 + $0x158] sm:$0xff]
        %v608 = vld [vmem:[%s563 + $0x160] sm:$0xff]
        %v609 = vld [vmem:[%s563 + $0x168] sm:$0xff]
        %v610 = vld [vmem:[%s563 + $0x170] sm:$0xff]
        %v611 = vld [vmem:[%s563 + $0x178] sm:$0xff]
        %v612 = vld [vmem:[%s563 + $0x180] sm:$0xff]
        %v613 = vld [vmem:[%s563 + $0x188] sm:$0xff]
        %v614 = vld [vmem:[%s563 + $0x190] sm:$0xff]
        %v615 = vld [vmem:[%s563 + $0x198] sm:$0xff]
        %v616 = vld [vmem:[%s563 + $0x1a0] sm:$0xff]
        %v617 = vld [vmem:[%s563 + $0x1a8] sm:$0xff]
        %v618 = vld [vmem:[%s563 + $0x1b0] sm:$0xff]
        %v619 = vld [vmem:[%s563 + $0x1b8] sm:$0xff]
        %v620 = vld [vmem:[%s563 + $0x1c0] sm:$0xff]
        %v621 = vld [vmem:[%s563 + $0x1c8] sm:$0xff]
        %v622 = vld [vmem:[%s563 + $0x1d0] sm:$0xff]
        %v623 = vld [vmem:[%s563 + $0x1d8] sm:$0xff]
        %v624 = vld [vmem:[%s563 + $0x1e0] sm:$0xff]
        %v625 = vld [vmem:[%s563 + $0x1e8] sm:$0xff]
        %v626 = vld [vmem:[%s563 + $0x1f0] sm:$0xff]
        %v627 = vld [vmem:[%s563 + $0x1f8] sm:$0xff]
        %628 = vmatprep.subr.mxu0 %v565
        %629 = vmatpush1.msra.mxu0 %v564
        %630 = vmatprep.subr.mxu0 %v567
        %631 = vmatpush1.msra.mxu0 %v566
        %632 = vmatprep.subr.mxu0 %v569
        %633 = vmatpush1.msra.mxu0 %v568
        %634 = vmatprep.subr.mxu0 %v571
        %635 = vmatpush1.msra.mxu0 %v570
        %636 = vmatprep.subr.mxu0 %v573
        %637 = vmatpush1.msra.mxu0 %v572
        %638 = vmatprep.subr.mxu0 %v575
        %639 = vmatpush1.msra.mxu0 %v574
        %640 = vmatprep.subr.mxu0 %v577
        %641 = vmatpush1.msra.mxu0 %v576
        %642 = vmatprep.subr.mxu0 %v579
        %643 = vmatpush1.msra.mxu0 %v578
        %644 = vmatprep.subr.mxu0 %v581
        %645 = vmatpush1.msra.mxu0 %v580
        %646 = vmatprep.subr.mxu0 %v583
        %647 = vmatpush1.msra.mxu0 %v582
        %648 = vmatprep.subr.mxu0 %v585
        %649 = vmatpush1.msra.mxu0 %v584
        %650 = vmatprep.subr.mxu0 %v587
        %651 = vmatpush1.msra.mxu0 %v586
        %652 = vmatprep.subr.mxu0 %v589
        %653 = vmatpush1.msra.mxu0 %v588
        %654 = vmatprep.subr.mxu0 %v591
        %655 = vmatpush1.msra.mxu0 %v590
        %656 = vmatprep.subr.mxu0 %v593
        %657 = vmatpush1.msra.mxu0 %v592
        %658 = vmatprep.subr.mxu0 %v595
        %659 = vmatpush1.msra.mxu0 %v594
        %660 = vmatprep.subr.mxu0 %v597
        %661 = vmatpush1.msra.mxu0 %v596
        %662 = vmatprep.subr.mxu0 %v599
        %663 = vmatpush1.msra.mxu0 %v598
        %664 = vmatprep.subr.mxu0 %v601
        %665 = vmatpush1.msra.mxu0 %v600
        %666 = vmatprep.subr.mxu0 %v603
        %667 = vmatpush1.msra.mxu0 %v602
        %668 = vmatprep.subr.mxu0 %v605
        %669 = vmatpush1.msra.mxu0 %v604
        %670 = vmatprep.subr.mxu0 %v607
        %671 = vmatpush1.msra.mxu0 %v606
        %672 = vmatprep.subr.mxu0 %v609
        %673 = vmatpush1.msra.mxu0 %v608
        %674 = vmatprep.subr.mxu0 %v611
        %675 = vmatpush1.msra.mxu0 %v610
        %676 = vmatprep.subr.mxu0 %v613
        %677 = vmatpush1.msra.mxu0 %v612
        %678 = vmatprep.subr.mxu0 %v615
        %679 = vmatpush1.msra.mxu0 %v614
        %680 = vmatprep.subr.mxu0 %v617
        %681 = vmatpush1.msra.mxu0 %v616
        %682 = vmatprep.subr.mxu0 %v619
        %683 = vmatpush1.msra.mxu0 %v618
        %684 = vmatprep.subr.mxu0 %v621
        %685 = vmatpush1.msra.mxu0 %v620
        %686 = vmatprep.subr.mxu0 %v623
        %687 = vmatpush1.msra.mxu0 %v622
        %688 = vmatprep.subr.mxu0 %v625
        %689 = vmatpush1.msra.mxu0 %v624
        %690 = vmatprep.subr.mxu0 %v627
        %691 = vmatpush1.msra.mxu0 %v626
        %692 = vmatprep.mubr.f32.mxu0 %v562
        %693 = vmatmul.mubr.f32.gmra.mrb[0].mxu0 %v561
        %v694 = vpop.f32.mrb[0].mxu0
        %v695 = vadd.f32 0.0, %v694
        %v696 = vpop.f32.mrb[0].mxu0
        %v697 = vadd.f32 0.0, %v696
        %698 = vdwg.mxu0
        %699 = vst [vmem:[#allocation2 + $0x20] sm:$0xff] %v695
        %700 = vst [vmem:[#allocation2 + $0x28] sm:$0xff] %v697
        %v701 = vld [vmem:[#allocation2] sm:$0xff]
        %v702 = vld [vmem:[#allocation2 + $0x8] sm:$0xff]
        %v703 = vld [vmem:[#allocation2 + $0x10] sm:$0xff]
        %v704 = vld [vmem:[#allocation2 + $0x18] sm:$0xff]
        %v705 = vld [vmem:[#allocation2 + $0x20] sm:$0xff]
        %v706 = vld [vmem:[#allocation2 + $0x28] sm:$0xff]
        %v707 = vld [vmem:[#allocation9] sm:$0xff]
        %v708 = vld [vmem:[#allocation9 + $0x8] sm:$0xff]
        %v709 = vld [vmem:[#allocation9 + $0x10] sm:$0xff]
        %v710 = vld [vmem:[#allocation9 + $0x18] sm:$0xff]
        %v711 = vld [vmem:[#allocation9 + $0x20] sm:$0xff]
        %v712 = vld [vmem:[#allocation9 + $0x28] sm:$0xff]
        %v713 = vld [vmem:[#allocation9 + $0x30] sm:$0xff]
        %v714 = vld [vmem:[#allocation9 + $0x38] sm:$0xff]
        %v715 = vld [vmem:[#allocation9 + $0x40] sm:$0xff]
        %v716 = vld [vmem:[#allocation9 + $0x48] sm:$0xff]
        %v717 = vld [vmem:[#allocation9 + $0x50] sm:$0xff]
        %v718 = vld [vmem:[#allocation9 + $0x58] sm:$0xff]
        %v719 = vld [vmem:[#allocation9 + $0x60] sm:$0xff]
        %v720 = vld [vmem:[#allocation9 + $0x68] sm:$0xff]
        %v721 = vld [vmem:[#allocation9 + $0x70] sm:$0xff]
        %v722 = vld [vmem:[#allocation9 + $0x78] sm:$0xff]
        %v723 = vld [vmem:[#allocation9 + $0x80] sm:$0xff]
        %v724 = vld [vmem:[#allocation9 + $0x88] sm:$0xff]
        %v725 = vld [vmem:[#allocation9 + $0x90] sm:$0xff]
        %v726 = vld [vmem:[#allocation9 + $0x98] sm:$0xff]
        %v727 = vld [vmem:[#allocation9 + $0xa0] sm:$0xff]
        %v728 = vld [vmem:[#allocation9 + $0xa8] sm:$0xff]
        %v729 = vld [vmem:[#allocation9 + $0xb0] sm:$0xff]
        %v730 = vld [vmem:[#allocation9 + $0xb8] sm:$0xff]
        %v731 = vld [vmem:[#allocation9 + $0xc0] sm:$0xff]
        %v732 = vld [vmem:[#allocation9 + $0xc8] sm:$0xff]
        %v733 = vld [vmem:[#allocation9 + $0xd0] sm:$0xff]
        %v734 = vld [vmem:[#allocation9 + $0xd8] sm:$0xff]
        %v735 = vld [vmem:[#allocation9 + $0xe0] sm:$0xff]
        %v736 = vld [vmem:[#allocation9 + $0xe8] sm:$0xff]
        %v737 = vld [vmem:[#allocation9 + $0xf0] sm:$0xff]
        %v738 = vld [vmem:[#allocation9 + $0xf8] sm:$0xff]
        %v739 = vld [vmem:[#allocation9 + $0x100] sm:$0xff]
        %v740 = vld [vmem:[#allocation9 + $0x108] sm:$0xff]
        %v741 = vld [vmem:[#allocation9 + $0x110] sm:$0xff]
        %v742 = vld [vmem:[#allocation9 + $0x118] sm:$0xff]
        %v743 = vld [vmem:[#allocation9 + $0x120] sm:$0xff]
        %v744 = vld [vmem:[#allocation9 + $0x128] sm:$0xff]
        %v745 = vld [vmem:[#allocation9 + $0x130] sm:$0xff]
        %v746 = vld [vmem:[#allocation9 + $0x138] sm:$0xff]
        %v747 = vld [vmem:[#allocation9 + $0x140] sm:$0xff]
        %v748 = vld [vmem:[#allocation9 + $0x148] sm:$0xff]
        %v749 = vld [vmem:[#allocation9 + $0x150] sm:$0xff]
        %v750 = vld [vmem:[#allocation9 + $0x158] sm:$0xff]
        %v751 = vld [vmem:[#allocation9 + $0x160] sm:$0xff]
        %v752 = vld [vmem:[#allocation9 + $0x168] sm:$0xff]
        %v753 = vld [vmem:[#allocation9 + $0x170] sm:$0xff]
        %v754 = vld [vmem:[#allocation9 + $0x178] sm:$0xff]
        %v755 = vld [vmem:[#allocation9 + $0x180] sm:$0xff]
        %v756 = vld [vmem:[#allocation9 + $0x188] sm:$0xff]
        %v757 = vld [vmem:[#allocation9 + $0x190] sm:$0xff]
        %v758 = vld [vmem:[#allocation9 + $0x198] sm:$0xff]
        %v759 = vld [vmem:[#allocation9 + $0x1a0] sm:$0xff]
        %v760 = vld [vmem:[#allocation9 + $0x1a8] sm:$0xff]
        %v761 = vld [vmem:[#allocation9 + $0x1b0] sm:$0xff]
        %v762 = vld [vmem:[#allocation9 + $0x1b8] sm:$0xff]
        %v763 = vld [vmem:[#allocation9 + $0x1c0] sm:$0xff]
        %v764 = vld [vmem:[#allocation9 + $0x1c8] sm:$0xff]
        %v765 = vld [vmem:[#allocation9 + $0x1d0] sm:$0xff]
        %v766 = vld [vmem:[#allocation9 + $0x1d8] sm:$0xff]
        %v767 = vld [vmem:[#allocation9 + $0x1e0] sm:$0xff]
        %v768 = vld [vmem:[#allocation9 + $0x1e8] sm:$0xff]
        %v769 = vld [vmem:[#allocation9 + $0x1f0] sm:$0xff]
        %v770 = vld [vmem:[#allocation9 + $0x1f8] sm:$0xff]
        %771 = vmatprep.subr.mxu0 %v708
        %772 = vmatpush1.msra.mxu0 %v707
        %773 = vmatprep.subr.mxu0 %v710
        %774 = vmatpush1.msra.mxu0 %v709
        %775 = vmatprep.subr.mxu0 %v712
        %776 = vmatpush1.msra.mxu0 %v711
        %777 = vmatprep.subr.mxu0 %v714
        %778 = vmatpush1.msra.mxu0 %v713
        %779 = vmatprep.subr.mxu0 %v716
        %780 = vmatpush1.msra.mxu0 %v715
        %781 = vmatprep.subr.mxu0 %v718
        %782 = vmatpush1.msra.mxu0 %v717
        %783 = vmatprep.subr.mxu0 %v720
        %784 = vmatpush1.msra.mxu0 %v719
        %785 = vmatprep.subr.mxu0 %v722
        %786 = vmatpush1.msra.mxu0 %v721
        %787 = vmatprep.subr.mxu0 %v724
        %788 = vmatpush1.msra.mxu0 %v723
        %789 = vmatprep.subr.mxu0 %v726
        %790 = vmatpush1.msra.mxu0 %v725
        %791 = vmatprep.subr.mxu0 %v728
        %792 = vmatpush1.msra.mxu0 %v727
        %793 = vmatprep.subr.mxu0 %v730
        %794 = vmatpush1.msra.mxu0 %v729
        %795 = vmatprep.subr.mxu0 %v732
        %796 = vmatpush1.msra.mxu0 %v731
        %797 = vmatprep.subr.mxu0 %v734
        %798 = vmatpush1.msra.mxu0 %v733
        %799 = vmatprep.subr.mxu0 %v736
        %800 = vmatpush1.msra.mxu0 %v735
        %801 = vmatprep.subr.mxu0 %v738
        %802 = vmatpush1.msra.mxu0 %v737
        %803 = vmatprep.subr.mxu0 %v740
        %804 = vmatpush1.msra.mxu0 %v739
        %805 = vmatprep.subr.mxu0 %v742
        %806 = vmatpush1.msra.mxu0 %v741
        %807 = vmatprep.subr.mxu0 %v744
        %808 = vmatpush1.msra.mxu0 %v743
        %809 = vmatprep.subr.mxu0 %v746
        %810 = vmatpush1.msra.mxu0 %v745
        %811 = vmatprep.subr.mxu0 %v748
        %812 = vmatpush1.msra.mxu0 %v747
        %813 = vmatprep.subr.mxu0 %v750
        %814 = vmatpush1.msra.mxu0 %v749
        %815 = vmatprep.subr.mxu0 %v752
        %816 = vmatpush1.msra.mxu0 %v751
        %817 = vmatprep.subr.mxu0 %v754
        %818 = vmatpush1.msra.mxu0 %v753
        %819 = vmatprep.subr.mxu0 %v756
        %820 = vmatpush1.msra.mxu0 %v755
        %821 = vmatprep.subr.mxu0 %v758
        %822 = vmatpush1.msra.mxu0 %v757
        %823 = vmatprep.subr.mxu0 %v760
        %824 = vmatpush1.msra.mxu0 %v759
        %825 = vmatprep.subr.mxu0 %v762
        %826 = vmatpush1.msra.mxu0 %v761
        %827 = vmatprep.subr.mxu0 %v764
        %828 = vmatpush1.msra.mxu0 %v763
        %829 = vmatprep.subr.mxu0 %v766
        %830 = vmatpush1.msra.mxu0 %v765
        %831 = vmatprep.subr.mxu0 %v768
        %832 = vmatpush1.msra.mxu0 %v767
        %833 = vmatprep.subr.mxu0 %v770
        %834 = vmatpush1.msra.mxu0 %v769
        %835 = vmatprep.mubr.f32.mxu0 %v702
        %836 = vmatmul.mubr.f32.gmra.mrb[0].mxu0 %v701
        %v837 = vpop.f32.mrb[0].mxu0
        %v838 = vadd.f32 0.0, %v837
        %v839 = vpop.f32.mrb[0].mxu0
        %v840 = vadd.f32 0.0, %v839
        %841 = vmatprep.mubr.f32.mxu0 %v704
        %842 = vmatmul.mubr.f32.gmra.mrb[0].mxu0 %v703
        %v843 = vpop.f32.mrb[0].mxu0
        %v844 = vadd.f32 0.0, %v843
        %v845 = vpop.f32.mrb[0].mxu0
        %v846 = vadd.f32 0.0, %v845
        %847 = vmatprep.mubr.f32.mxu0 %v706
        %848 = vmatmul.mubr.f32.gmra.mrb[0].mxu0 %v705
        %v849 = vpop.f32.mrb[0].mxu0
        %v850 = vadd.f32 0.0, %v849
        %v851 = vpop.f32.mrb[0].mxu0
        %v852 = vadd.f32 0.0, %v851
        %853 = vdwg.mxu0
        %854 = vst [vmem:[#allocation3] sm:$0xff] %v838
        %855 = vst [vmem:[#allocation3 + $0x8] sm:$0xff] %v840
        %856 = vst [vmem:[#allocation3 + $0x10] sm:$0xff] %v844
        %857 = vst [vmem:[#allocation3 + $0x18] sm:$0xff] %v846
        %858 = vst [vmem:[#allocation3 + $0x20] sm:$0xff] %v850
        %859 = vst [vmem:[#allocation3 + $0x28] sm:$0xff] %v852
        %v860 = vld [vmem:[#allocation3] sm:$0x3f]
        %v861 = vld [vmem:[#allocation3 + $0x8] sm:$0x3f]
        %s862 = sld [smem:[#allocation11]]
        %v863 = vstv %s862
        %v864 = vmul.f32 %v860, %v863
        %v865 = vmul.f32 %v861, %v863
        %v866 = vadd.f32 %v864, 0.0
        %v867 = vadd.f32 %v865, 0.0
        %s868 = sld [smem:[#allocation11 + $0x1b]]
        %v869 = vstv %s868
        %v870 = vmul.f32 %v860, %v869
        %v871 = vmul.f32 %v861, %v869
        %v872 = vadd.f32 %v870, 0.0
        %v873 = vadd.f32 %v871, 0.0
        %s874 = sld [smem:[#allocation11 + $0x36]]
        %v875 = vstv %s874
        %v876 = vmul.f32 %v860, %v875
        %v877 = vmul.f32 %v861, %v875
        %v878 = vadd.f32 %v876, 0.0
        %v879 = vadd.f32 %v877, 0.0
        %s880 = sld [smem:[#allocation11 + $0x51]]
        %v881 = vstv %s880
        %v882 = vmul.f32 %v860, %v881
        %v883 = vmul.f32 %v861, %v881
        %v884 = vadd.f32 %v882, 0.0
        %v885 = vadd.f32 %v883, 0.0
        %s886 = sld [smem:[#allocation11 + $0x6c]]
        %v887 = vstv %s886
        %v888 = vmul.f32 %v860, %v887
        %v889 = vmul.f32 %v861, %v887
        %v890 = vadd.f32 %v888, 0.0
        %v891 = vadd.f32 %v889, 0.0
        %s892 = sld [smem:[#allocation11 + $0x1]]
        %v893 = vstv %s892
        %v894 = vmul.f32 %v860, %v893
        %v895 = vmul.f32 %v861, %v893
        %898 = vrot.lane.b32.xlu0 %v894, 127
        %v899 = vpop.permute.xlu0 %898
        %900 = vrot.lane.b32.xlu0 %v895, 127
        %v901 = vpop.permute.xlu0 %900
        %vm902 = vcmask 1039360
        %v903 = vsel %vm902, %v899, %v901
        %v906 = vadd.f32 %v866, %v903
        %v907 = vadd.f32 %v867, %v901
        %s908 = sld [smem:[#allocation11 + $0x1c]]
        %v909 = vstv %s908
        %v910 = vmul.f32 %v860, %v909
        %v911 = vmul.f32 %v861, %v909
        %914 = vrot.lane.b32.xlu0 %v910, 127
        %v915 = vpop.permute.xlu0 %914
        %916 = vrot.lane.b32.xlu0 %v911, 127
        %v917 = vpop.permute.xlu0 %916
        %v918 = vsel %vm902, %v915, %v917
        %v921 = vadd.f32 %v872, %v918
        %v922 = vadd.f32 %v873, %v917
        %s923 = sld [smem:[#allocation11 + $0x37]]
        %v924 = vstv %s923
        %v925 = vmul.f32 %v860, %v924
        %v926 = vmul.f32 %v861, %v924
        %929 = vrot.lane.b32.xlu0 %v925, 127
        %v930 = vpop.permute.xlu0 %929
        %931 = vrot.lane.b32.xlu0 %v926, 127
        %v932 = vpop.permute.xlu0 %931
        %v933 = vsel %vm902, %v930, %v932
        %v936 = vadd.f32 %v878, %v933
        %v937 = vadd.f32 %v879, %v932
        %s938 = sld [smem:[#allocation11 + $0x52]]
        %v939 = vstv %s938
        %v940 = vmul.f32 %v860, %v939
        %v941 = vmul.f32 %v861, %v939
        %944 = vrot.lane.b32.xlu0 %v940, 127
        %v945 = vpop.permute.xlu0 %944
        %946 = vrot.lane.b32.xlu0 %v941, 127
        %v947 = vpop.permute.xlu0 %946
        %v948 = vsel %vm902, %v945, %v947
        %v951 = vadd.f32 %v884, %v948
        %v952 = vadd.f32 %v885, %v947
        %s953 = sld [smem:[#allocation11 + $0x6d]]
        %v954 = vstv %s953
        %v955 = vmul.f32 %v860, %v954
        %v956 = vmul.f32 %v861, %v954
        %959 = vrot.lane.b32.xlu0 %v955, 127
        %v960 = vpop.permute.xlu0 %959
        %961 = vrot.lane.b32.xlu0 %v956, 127
        %v962 = vpop.permute.xlu0 %961
        %v963 = vsel %vm902, %v960, %v962
        %v966 = vadd.f32 %v890, %v963
        %v967 = vadd.f32 %v891, %v962
        %s968 = sld [smem:[#allocation11 + $0x2]]
        %v969 = vstv %s968
        %v970 = vmul.f32 %v860, %v969
        %v971 = vmul.f32 %v861, %v969
        %974 = vrot.lane.b32.xlu0 %v970, 126
        %v975 = vpop.permute.xlu0 %974
        %976 = vrot.lane.b32.xlu0 %v971, 126
        %v977 = vpop.permute.xlu0 %976
        %vm978 = vcmask 1031168
        %v979 = vsel %vm978, %v975, %v977
        %v982 = vadd.f32 %v906, %v979
        %v983 = vadd.f32 %v907, %v977
        %s984 = sld [smem:[#allocation11 + $0x1d]]
        %v985 = vstv %s984
        %v986 = vmul.f32 %v860, %v985
        %v987 = vmul.f32 %v861, %v985
        %990 = vrot.lane.b32.xlu0 %v986, 126
        %v991 = vpop.permute.xlu0 %990
        %992 = vrot.lane.b32.xlu0 %v987, 126
        %v993 = vpop.permute.xlu0 %992
        %v994 = vsel %vm978, %v991, %v993
        %v997 = vadd.f32 %v921, %v994
        %v998 = vadd.f32 %v922, %v993
        %s999 = sld [smem:[#allocation11 + $0x38]]
        %v1000 = vstv %s999
        %v1001 = vmul.f32 %v860, %v1000
        %v1002 = vmul.f32 %v861, %v1000
        %1005 = vrot.lane.b32.xlu0 %v1001, 126
        %v1006 = vpop.permute.xlu0 %1005
        %1007 = vrot.lane.b32.xlu0 %v1002, 126
        %v1008 = vpop.permute.xlu0 %1007
        %v1009 = vsel %vm978, %v1006, %v1008
        %v1012 = vadd.f32 %v936, %v1009
        %v1013 = vadd.f32 %v937, %v1008
        %s1014 = sld [smem:[#allocation11 + $0x53]]
        %v1015 = vstv %s1014
        %v1016 = vmul.f32 %v860, %v1015
        %v1017 = vmul.f32 %v861, %v1015
        %1020 = vrot.lane.b32.xlu0 %v1016, 126
        %v1021 = vpop.permute.xlu0 %1020
        %1022 = vrot.lane.b32.xlu0 %v1017, 126
        %v1023 = vpop.permute.xlu0 %1022
        %v1024 = vsel %vm978, %v1021, %v1023
        %v1027 = vadd.f32 %v951, %v1024
        %v1028 = vadd.f32 %v952, %v1023
        %s1029 = sld [smem:[#allocation11 + $0x6e]]
        %v1030 = vstv %s1029
        %v1031 = vmul.f32 %v860, %v1030
        %v1032 = vmul.f32 %v861, %v1030
        %1035 = vrot.lane.b32.xlu0 %v1031, 126
        %v1036 = vpop.permute.xlu0 %1035
        %1037 = vrot.lane.b32.xlu0 %v1032, 126
        %v1038 = vpop.permute.xlu0 %1037
        %v1039 = vsel %vm978, %v1036, %v1038
        %v1042 = vadd.f32 %v966, %v1039
        %v1043 = vadd.f32 %v967, %v1038
        %v1044 = vld [vmem:[#allocation3] sm:$0x7e]
        %v1045 = vld [vmem:[#allocation3 + $0x8] sm:$0x7e]
        %s1046 = sld [smem:[#allocation11 + $0x3]]
        %v1047 = vstv %s1046
        %v1048 = vmul.f32 %v1044, %v1047
        %v1049 = vmul.f32 %v1045, %v1047
        %v1052 = vrot.slane %v1048, 1
        %v1053 = vrot.slane %v1049, 1
        %v1056 = vadd.f32 %v982, %v1052
        %v1057 = vadd.f32 %v983, %v1053
        %s1058 = sld [smem:[#allocation11 + $0x1e]]
        %v1059 = vstv %s1058
        %v1060 = vmul.f32 %v1044, %v1059
        %v1061 = vmul.f32 %v1045, %v1059
        %v1064 = vrot.slane %v1060, 1
        %v1065 = vrot.slane %v1061, 1
        %v1068 = vadd.f32 %v997, %v1064
        %v1069 = vadd.f32 %v998, %v1065
        %s1070 = sld [smem:[#allocation11 + $0x39]]
        %v1071 = vstv %s1070
        %v1072 = vmul.f32 %v1044, %v1071
        %v1073 = vmul.f32 %v1045, %v1071
        %v1076 = vrot.slane %v1072, 1
        %v1077 = vrot.slane %v1073, 1
        %v1080 = vadd.f32 %v1012, %v1076
        %v1081 = vadd.f32 %v1013, %v1077
        %s1082 = sld [smem:[#allocation11 + $0x54]]
        %v1083 = vstv %s1082
        %v1084 = vmul.f32 %v1044, %v1083
        %v1085 = vmul.f32 %v1045, %v1083
        %v1088 = vrot.slane %v1084, 1
        %v1089 = vrot.slane %v1085, 1
        %v1092 = vadd.f32 %v1027, %v1088
        %v1093 = vadd.f32 %v1028, %v1089
        %s1094 = sld [smem:[#allocation11 + $0x6f]]
        %v1095 = vstv %s1094
        %v1096 = vmul.f32 %v1044, %v1095
        %v1097 = vmul.f32 %v1045, %v1095
        %v1100 = vrot.slane %v1096, 1
        %v1101 = vrot.slane %v1097, 1
        %v1104 = vadd.f32 %v1042, %v1100
        %v1105 = vadd.f32 %v1043, %v1101
        %s1106 = sld [smem:[#allocation11 + $0x4]]
        %v1107 = vstv %s1106
        %v1108 = vmul.f32 %v1044, %v1107
        %v1109 = vmul.f32 %v1045, %v1107
        %v1112 = vrot.slane %v1108, 1
        %v1113 = vrot.slane %v1109, 1
        %1114 = vrot.lane.b32.xlu0 %v1112, 127
        %v1115 = vpop.permute.xlu0 %1114
        %1116 = vrot.lane.b32.xlu0 %v1113, 127
        %v1117 = vpop.permute.xlu0 %1116
        %v1118 = vsel %vm902, %v1115, %v1117
        %v1121 = vadd.f32 %v1056, %v1118
        %v1122 = vadd.f32 %v1057, %v1117
        %s1123 = sld [smem:[#allocation11 + $0x1f]]
        %v1124 = vstv %s1123
        %v1125 = vmul.f32 %v1044, %v1124
        %v1126 = vmul.f32 %v1045, %v1124
        %v1129 = vrot.slane %v1125, 1
        %v1130 = vrot.slane %v1126, 1
        %1131 = vrot.lane.b32.xlu0 %v1129, 127
        %v1132 = vpop.permute.xlu0 %1131
        %1133 = vrot.lane.b32.xlu0 %v1130, 127
        %v1134 = vpop.permute.xlu0 %1133
        %v1135 = vsel %vm902, %v1132, %v1134
        %v1138 = vadd.f32 %v1068, %v1135
        %v1139 = vadd.f32 %v1069, %v1134
        %s1140 = sld [smem:[#allocation11 + $0x3a]]
        %v1141 = vstv %s1140
        %v1142 = vmul.f32 %v1044, %v1141
        %v1143 = vmul.f32 %v1045, %v1141
        %v1146 = vrot.slane %v1142, 1
        %v1147 = vrot.slane %v1143, 1
        %1148 = vrot.lane.b32.xlu0 %v1146, 127
        %v1149 = vpop.permute.xlu0 %1148
        %1150 = vrot.lane.b32.xlu0 %v1147, 127
        %v1151 = vpop.permute.xlu0 %1150
        %v1152 = vsel %vm902, %v1149, %v1151
        %v1155 = vadd.f32 %v1080, %v1152
        %v1156 = vadd.f32 %v1081, %v1151
        %s1157 = sld [smem:[#allocation11 + $0x55]]
        %v1158 = vstv %s1157
        %v1159 = vmul.f32 %v1044, %v1158
        %v1160 = vmul.f32 %v1045, %v1158
        %v1163 = vrot.slane %v1159, 1
        %v1164 = vrot.slane %v1160, 1
        %1165 = vrot.lane.b32.xlu0 %v1163, 127
        %v1166 = vpop.permute.xlu0 %1165
        %1167 = vrot.lane.b32.xlu0 %v1164, 127
        %v1168 = vpop.permute.xlu0 %1167
        %v1169 = vsel %vm902, %v1166, %v1168
        %v1172 = vadd.f32 %v1092, %v1169
        %v1173 = vadd.f32 %v1093, %v1168
        %s1174 = sld [smem:[#allocation11 + $0x70]]
        %v1175 = vstv %s1174
        %v1176 = vmul.f32 %v1044, %v1175
        %v1177 = vmul.f32 %v1045, %v1175
        %v1180 = vrot.slane %v1176, 1
        %v1181 = vrot.slane %v1177, 1
        %1182 = vrot.lane.b32.xlu0 %v1180, 127
        %v1183 = vpop.permute.xlu0 %1182
        %1184 = vrot.lane.b32.xlu0 %v1181, 127
        %v1185 = vpop.permute.xlu0 %1184
        %v1186 = vsel %vm902, %v1183, %v1185
        %v1189 = vadd.f32 %v1104, %v1186
        %v1190 = vadd.f32 %v1105, %v1185
        %s1191 = sld [smem:[#allocation11 + $0x5]]
        %v1192 = vstv %s1191
        %v1193 = vmul.f32 %v1044, %v1192
        %v1194 = vmul.f32 %v1045, %v1192
        %v1197 = vrot.slane %v1193, 1
        %v1198 = vrot.slane %v1194, 1
        %1199 = vrot.lane.b32.xlu0 %v1197, 126
        %v1200 = vpop.permute.xlu0 %1199
        %1201 = vrot.lane.b32.xlu0 %v1198, 126
        %v1202 = vpop.permute.xlu0 %1201
        %v1203 = vsel %vm978, %v1200, %v1202
        %v1206 = vadd.f32 %v1121, %v1203
        %v1207 = vadd.f32 %v1122, %v1202
        %s1208 = sld [smem:[#allocation11 + $0x20]]
        %v1209 = vstv %s1208
        %v1210 = vmul.f32 %v1044, %v1209
        %v1211 = vmul.f32 %v1045, %v1209
        %v1214 = vrot.slane %v1210, 1
        %v1215 = vrot.slane %v1211, 1
        %1216 = vrot.lane.b32.xlu0 %v1214, 126
        %v1217 = vpop.permute.xlu0 %1216
        %1218 = vrot.lane.b32.xlu0 %v1215, 126
        %v1219 = vpop.permute.xlu0 %1218
        %v1220 = vsel %vm978, %v1217, %v1219
        %v1223 = vadd.f32 %v1138, %v1220
        %v1224 = vadd.f32 %v1139, %v1219
        %s1225 = sld [smem:[#allocation11 + $0x3b]]
        %v1226 = vstv %s1225
        %v1227 = vmul.f32 %v1044, %v1226
        %v1228 = vmul.f32 %v1045, %v1226
        %v1231 = vrot.slane %v1227, 1
        %v1232 = vrot.slane %v1228, 1
        %1233 = vrot.lane.b32.xlu0 %v1231, 126
        %v1234 = vpop.permute.xlu0 %1233
        %1235 = vrot.lane.b32.xlu0 %v1232, 126
        %v1236 = vpop.permute.xlu0 %1235
        %v1237 = vsel %vm978, %v1234, %v1236
        %v1240 = vadd.f32 %v1155, %v1237
        %v1241 = vadd.f32 %v1156, %v1236
        %s1242 = sld [smem:[#allocation11 + $0x56]]
        %v1243 = vstv %s1242
        %v1244 = vmul.f32 %v1044, %v1243
        %v1245 = vmul.f32 %v1045, %v1243
        %v1248 = vrot.slane %v1244, 1
        %v1249 = vrot.slane %v1245, 1
        %1250 = vrot.lane.b32.xlu0 %v1248, 126
        %v1251 = vpop.permute.xlu0 %1250
        %1252 = vrot.lane.b32.xlu0 %v1249, 126
        %v1253 = vpop.permute.xlu0 %1252
        %v1254 = vsel %vm978, %v1251, %v1253
        %v1257 = vadd.f32 %v1172, %v1254
        %v1258 = vadd.f32 %v1173, %v1253
        %s1259 = sld [smem:[#allocation11 + $0x71]]
        %v1260 = vstv %s1259
        %v1261 = vmul.f32 %v1044, %v1260
        %v1262 = vmul.f32 %v1045, %v1260
        %v1265 = vrot.slane %v1261, 1
        %v1266 = vrot.slane %v1262, 1
        %1267 = vrot.lane.b32.xlu0 %v1265, 126
        %v1268 = vpop.permute.xlu0 %1267
        %1269 = vrot.lane.b32.xlu0 %v1266, 126
        %v1270 = vpop.permute.xlu0 %1269
        %v1271 = vsel %vm978, %v1268, %v1270
        %v1274 = vadd.f32 %v1189, %v1271
        %v1275 = vadd.f32 %v1190, %v1270
        %v1276 = vld [vmem:[#allocation3] sm:$0xfc]
        %v1277 = vld [vmem:[#allocation3 + $0x8] sm:$0xfc]
        %s1278 = sld [smem:[#allocation11 + $0x6]]
        %v1279 = vstv %s1278
        %v1280 = vmul.f32 %v1276, %v1279
        %v1281 = vmul.f32 %v1277, %v1279
        %v1284 = vrot.slane %v1280, 2
        %v1285 = vrot.slane %v1281, 2
        %v1288 = vadd.f32 %v1206, %v1284
        %v1289 = vadd.f32 %v1207, %v1285
        %s1290 = sld [smem:[#allocation11 + $0x21]]
        %v1291 = vstv %s1290
        %v1292 = vmul.f32 %v1276, %v1291
        %v1293 = vmul.f32 %v1277, %v1291
        %v1296 = vrot.slane %v1292, 2
        %v1297 = vrot.slane %v1293, 2
        %v1300 = vadd.f32 %v1223, %v1296
        %v1301 = vadd.f32 %v1224, %v1297
        %s1302 = sld [smem:[#allocation11 + $0x3c]]
        %v1303 = vstv %s1302
        %v1304 = vmul.f32 %v1276, %v1303
        %v1305 = vmul.f32 %v1277, %v1303
        %v1308 = vrot.slane %v1304, 2
        %v1309 = vrot.slane %v1305, 2
        %v1312 = vadd.f32 %v1240, %v1308
        %v1313 = vadd.f32 %v1241, %v1309
        %s1314 = sld [smem:[#allocation11 + $0x57]]
        %v1315 = vstv %s1314
        %v1316 = vmul.f32 %v1276, %v1315
        %v1317 = vmul.f32 %v1277, %v1315
        %v1320 = vrot.slane %v1316, 2
        %v1321 = vrot.slane %v1317, 2
        %v1324 = vadd.f32 %v1257, %v1320
        %v1325 = vadd.f32 %v1258, %v1321
        %s1326 = sld [smem:[#allocation11 + $0x72]]
        %v1327 = vstv %s1326
        %v1328 = vmul.f32 %v1276, %v1327
        %v1329 = vmul.f32 %v1277, %v1327
        %v1332 = vrot.slane %v1328, 2
        %v1333 = vrot.slane %v1329, 2
        %v1336 = vadd.f32 %v1274, %v1332
        %v1337 = vadd.f32 %v1275, %v1333
        %s1338 = sld [smem:[#allocation11 + $0x7]]
        %v1339 = vstv %s1338
        %v1340 = vmul.f32 %v1276, %v1339
        %v1341 = vmul.f32 %v1277, %v1339
        %v1344 = vrot.slane %v1340, 2
        %v1345 = vrot.slane %v1341, 2
        %1346 = vrot.lane.b32.xlu0 %v1344, 127
        %v1347 = vpop.permute.xlu0 %1346
        %1348 = vrot.lane.b32.xlu0 %v1345, 127
        %v1349 = vpop.permute.xlu0 %1348
        %v1350 = vsel %vm902, %v1347, %v1349
        %v1353 = vadd.f32 %v1288, %v1350
        %v1354 = vadd.f32 %v1289, %v1349
        %s1355 = sld [smem:[#allocation11 + $0x22]]
        %v1356 = vstv %s1355
        %v1357 = vmul.f32 %v1276, %v1356
        %v1358 = vmul.f32 %v1277, %v1356
        %v1361 = vrot.slane %v1357, 2
        %v1362 = vrot.slane %v1358, 2
        %1363 = vrot.lane.b32.xlu0 %v1361, 127
        %v1364 = vpop.permute.xlu0 %1363
        %1365 = vrot.lane.b32.xlu0 %v1362, 127
        %v1366 = vpop.permute.xlu0 %1365
        %v1367 = vsel %vm902, %v1364, %v1366
        %v1370 = vadd.f32 %v1300, %v1367
        %v1371 = vadd.f32 %v1301, %v1366
        %s1372 = sld [smem:[#allocation11 + $0x3d]]
        %v1373 = vstv %s1372
        %v1374 = vmul.f32 %v1276, %v1373
        %v1375 = vmul.f32 %v1277, %v1373
        %v1378 = vrot.slane %v1374, 2
        %v1379 = vrot.slane %v1375, 2
        %1380 = vrot.lane.b32.xlu0 %v1378, 127
        %v1381 = vpop.permute.xlu0 %1380
        %1382 = vrot.lane.b32.xlu0 %v1379, 127
        %v1383 = vpop.permute.xlu0 %1382
        %v1384 = vsel %vm902, %v1381, %v1383
        %v1387 = vadd.f32 %v1312, %v1384
        %v1388 = vadd.f32 %v1313, %v1383
        %s1389 = sld [smem:[#allocation11 + $0x58]]
        %v1390 = vstv %s1389
        %v1391 = vmul.f32 %v1276, %v1390
        %v1392 = vmul.f32 %v1277, %v1390
        %v1395 = vrot.slane %v1391, 2
        %v1396 = vrot.slane %v1392, 2
        %1397 = vrot.lane.b32.xlu0 %v1395, 127
        %v1398 = vpop.permute.xlu0 %1397
        %1399 = vrot.lane.b32.xlu0 %v1396, 127
        %v1400 = vpop.permute.xlu0 %1399
        %v1401 = vsel %vm902, %v1398, %v1400
        %v1404 = vadd.f32 %v1324, %v1401
        %v1405 = vadd.f32 %v1325, %v1400
        %s1406 = sld [smem:[#allocation11 + $0x73]]
        %v1407 = vstv %s1406
        %v1408 = vmul.f32 %v1276, %v1407
        %v1409 = vmul.f32 %v1277, %v1407
        %v1412 = vrot.slane %v1408, 2
        %v1413 = vrot.slane %v1409, 2
        %1414 = vrot.lane.b32.xlu0 %v1412, 127
        %v1415 = vpop.permute.xlu0 %1414
        %1416 = vrot.lane.b32.xlu0 %v1413, 127
        %v1417 = vpop.permute.xlu0 %1416
        %v1418 = vsel %vm902, %v1415, %v1417
        %v1421 = vadd.f32 %v1336, %v1418
        %v1422 = vadd.f32 %v1337, %v1417
        %s1423 = sld [smem:[#allocation11 + $0x8]]
        %v1424 = vstv %s1423
        %v1425 = vmul.f32 %v1276, %v1424
        %v1426 = vmul.f32 %v1277, %v1424
        %v1429 = vrot.slane %v1425, 2
        %v1430 = vrot.slane %v1426, 2
        %1431 = vrot.lane.b32.xlu0 %v1429, 126
        %v1432 = vpop.permute.xlu0 %1431
        %1433 = vrot.lane.b32.xlu0 %v1430, 126
        %v1434 = vpop.permute.xlu0 %1433
        %v1435 = vsel %vm978, %v1432, %v1434
        %v1438 = vadd.f32 %v1353, %v1435
        %v1439 = vadd.f32 %v1354, %v1434
        %s1440 = sld [smem:[#allocation11 + $0x23]]
        %v1441 = vstv %s1440
        %v1442 = vmul.f32 %v1276, %v1441
        %v1443 = vmul.f32 %v1277, %v1441
        %v1446 = vrot.slane %v1442, 2
        %v1447 = vrot.slane %v1443, 2
        %1448 = vrot.lane.b32.xlu0 %v1446, 126
        %v1449 = vpop.permute.xlu0 %1448
        %1450 = vrot.lane.b32.xlu0 %v1447, 126
        %v1451 = vpop.permute.xlu0 %1450
        %v1452 = vsel %vm978, %v1449, %v1451
        %v1455 = vadd.f32 %v1370, %v1452
        %v1456 = vadd.f32 %v1371, %v1451
        %s1457 = sld [smem:[#allocation11 + $0x3e]]
        %v1458 = vstv %s1457
        %v1459 = vmul.f32 %v1276, %v1458
        %v1460 = vmul.f32 %v1277, %v1458
        %v1463 = vrot.slane %v1459, 2
        %v1464 = vrot.slane %v1460, 2
        %1465 = vrot.lane.b32.xlu0 %v1463, 126
        %v1466 = vpop.permute.xlu0 %1465
        %1467 = vrot.lane.b32.xlu0 %v1464, 126
        %v1468 = vpop.permute.xlu0 %1467
        %v1469 = vsel %vm978, %v1466, %v1468
        %v1472 = vadd.f32 %v1387, %v1469
        %v1473 = vadd.f32 %v1388, %v1468
        %s1474 = sld [smem:[#allocation11 + $0x59]]
        %v1475 = vstv %s1474
        %v1476 = vmul.f32 %v1276, %v1475
        %v1477 = vmul.f32 %v1277, %v1475
        %v1480 = vrot.slane %v1476, 2
        %v1481 = vrot.slane %v1477, 2
        %1482 = vrot.lane.b32.xlu0 %v1480, 126
        %v1483 = vpop.permute.xlu0 %1482
        %1484 = vrot.lane.b32.xlu0 %v1481, 126
        %v1485 = vpop.permute.xlu0 %1484
        %v1486 = vsel %vm978, %v1483, %v1485
        %v1489 = vadd.f32 %v1404, %v1486
        %v1490 = vadd.f32 %v1405, %v1485
        %s1491 = sld [smem:[#allocation11 + $0x74]]
        %v1492 = vstv %s1491
        %v1493 = vmul.f32 %v1276, %v1492
        %v1494 = vmul.f32 %v1277, %v1492
        %v1497 = vrot.slane %v1493, 2
        %v1498 = vrot.slane %v1494, 2
        %1499 = vrot.lane.b32.xlu0 %v1497, 126
        %v1500 = vpop.permute.xlu0 %1499
        %1501 = vrot.lane.b32.xlu0 %v1498, 126
        %v1502 = vpop.permute.xlu0 %1501
        %v1503 = vsel %vm978, %v1500, %v1502
        %v1506 = vadd.f32 %v1421, %v1503
        %v1507 = vadd.f32 %v1422, %v1502
        %v1508 = vld [vmem:[#allocation3 + $0x10] sm:$0x3f]
        %v1509 = vld [vmem:[#allocation3 + $0x18] sm:$0x3f]
        %s1510 = sld [smem:[#allocation11 + $0x9]]
        %v1511 = vstv %s1510
        %v1512 = vmul.f32 %v1508, %v1511
        %v1513 = vmul.f32 %v1509, %v1511
        %v1514 = vadd.f32 %v1438, %v1512
        %v1515 = vadd.f32 %v1439, %v1513
        %s1516 = sld [smem:[#allocation11 + $0x24]]
        %v1517 = vstv %s1516
        %v1518 = vmul.f32 %v1508, %v1517
        %v1519 = vmul.f32 %v1509, %v1517
        %v1520 = vadd.f32 %v1455, %v1518
        %v1521 = vadd.f32 %v1456, %v1519
        %s1522 = sld [smem:[#allocation11 + $0x3f]]
        %v1523 = vstv %s1522
        %v1524 = vmul.f32 %v1508, %v1523
        %v1525 = vmul.f32 %v1509, %v1523
        %v1526 = vadd.f32 %v1472, %v1524
        %v1527 = vadd.f32 %v1473, %v1525
        %s1528 = sld [smem:[#allocation11 + $0x5a]]
        %v1529 = vstv %s1528
        %v1530 = vmul.f32 %v1508, %v1529
        %v1531 = vmul.f32 %v1509, %v1529
        %v1532 = vadd.f32 %v1489, %v1530
        %v1533 = vadd.f32 %v1490, %v1531
        %s1534 = sld [smem:[#allocation11 + $0x75]]
        %v1535 = vstv %s1534
        %v1536 = vmul.f32 %v1508, %v1535
        %v1537 = vmul.f32 %v1509, %v1535
        %v1538 = vadd.f32 %v1506, %v1536
        %v1539 = vadd.f32 %v1507, %v1537
        %s1540 = sld [smem:[#allocation11 + $0xa]]
        %v1541 = vstv %s1540
        %v1542 = vmul.f32 %v1508, %v1541
        %v1543 = vmul.f32 %v1509, %v1541
        %1546 = vrot.lane.b32.xlu0 %v1542, 127
        %v1547 = vpop.permute.xlu0 %1546
        %1548 = vrot.lane.b32.xlu0 %v1543, 127
        %v1549 = vpop.permute.xlu0 %1548
        %v1550 = vsel %vm902, %v1547, %v1549
        %v1553 = vadd.f32 %v1514, %v1550
        %v1554 = vadd.f32 %v1515, %v1549
        %s1555 = sld [smem:[#allocation11 + $0x25]]
        %v1556 = vstv %s1555
        %v1557 = vmul.f32 %v1508, %v1556
        %v1558 = vmul.f32 %v1509, %v1556
        %1561 = vrot.lane.b32.xlu0 %v1557, 127
        %v1562 = vpop.permute.xlu0 %1561
        %1563 = vrot.lane.b32.xlu0 %v1558, 127
        %v1564 = vpop.permute.xlu0 %1563
        %v1565 = vsel %vm902, %v1562, %v1564
        %v1568 = vadd.f32 %v1520, %v1565
        %v1569 = vadd.f32 %v1521, %v1564
        %s1570 = sld [smem:[#allocation11 + $0x40]]
        %v1571 = vstv %s1570
        %v1572 = vmul.f32 %v1508, %v1571
        %v1573 = vmul.f32 %v1509, %v1571
        %1576 = vrot.lane.b32.xlu0 %v1572, 127
        %v1577 = vpop.permute.xlu0 %1576
        %1578 = vrot.lane.b32.xlu0 %v1573, 127
        %v1579 = vpop.permute.xlu0 %1578
        %v1580 = vsel %vm902, %v1577, %v1579
        %v1583 = vadd.f32 %v1526, %v1580
        %v1584 = vadd.f32 %v1527, %v1579
        %s1585 = sld [smem:[#allocation11 + $0x5b]]
        %v1586 = vstv %s1585
        %v1587 = vmul.f32 %v1508, %v1586
        %v1588 = vmul.f32 %v1509, %v1586
        %1591 = vrot.lane.b32.xlu0 %v1587, 127
        %v1592 = vpop.permute.xlu0 %1591
        %1593 = vrot.lane.b32.xlu0 %v1588, 127
        %v1594 = vpop.permute.xlu0 %1593
        %v1595 = vsel %vm902, %v1592, %v1594
        %v1598 = vadd.f32 %v1532, %v1595
        %v1599 = vadd.f32 %v1533, %v1594
        %s1600 = sld [smem:[#allocation11 + $0x76]]
        %v1601 = vstv %s1600
        %v1602 = vmul.f32 %v1508, %v1601
        %v1603 = vmul.f32 %v1509, %v1601
        %1606 = vrot.lane.b32.xlu0 %v1602, 127
        %v1607 = vpop.permute.xlu0 %1606
        %1608 = vrot.lane.b32.xlu0 %v1603, 127
        %v1609 = vpop.permute.xlu0 %1608
        %v1610 = vsel %vm902, %v1607, %v1609
        %v1613 = vadd.f32 %v1538, %v1610
        %v1614 = vadd.f32 %v1539, %v1609
        %s1615 = sld [smem:[#allocation11 + $0xb]]
        %v1616 = vstv %s1615
        %v1617 = vmul.f32 %v1508, %v1616
        %v1618 = vmul.f32 %v1509, %v1616
        %1621 = vrot.lane.b32.xlu0 %v1617, 126
        %v1622 = vpop.permute.xlu0 %1621
        %1623 = vrot.lane.b32.xlu0 %v1618, 126
        %v1624 = vpop.permute.xlu0 %1623
        %v1625 = vsel %vm978, %v1622, %v1624
        %v1628 = vadd.f32 %v1553, %v1625
        %v1629 = vadd.f32 %v1554, %v1624
        %s1630 = sld [smem:[#allocation11 + $0x26]]
        %v1631 = vstv %s1630
        %v1632 = vmul.f32 %v1508, %v1631
        %v1633 = vmul.f32 %v1509, %v1631
        %1636 = vrot.lane.b32.xlu0 %v1632, 126
        %v1637 = vpop.permute.xlu0 %1636
        %1638 = vrot.lane.b32.xlu0 %v1633, 126
        %v1639 = vpop.permute.xlu0 %1638
        %v1640 = vsel %vm978, %v1637, %v1639
        %v1643 = vadd.f32 %v1568, %v1640
        %v1644 = vadd.f32 %v1569, %v1639
        %s1645 = sld [smem:[#allocation11 + $0x41]]
        %v1646 = vstv %s1645
        %v1647 = vmul.f32 %v1508, %v1646
        %v1648 = vmul.f32 %v1509, %v1646
        %1651 = vrot.lane.b32.xlu0 %v1647, 126
        %v1652 = vpop.permute.xlu0 %1651
        %1653 = vrot.lane.b32.xlu0 %v1648, 126
        %v1654 = vpop.permute.xlu0 %1653
        %v1655 = vsel %vm978, %v1652, %v1654
        %v1658 = vadd.f32 %v1583, %v1655
        %v1659 = vadd.f32 %v1584, %v1654
        %s1660 = sld [smem:[#allocation11 + $0x5c]]
        %v1661 = vstv %s1660
        %v1662 = vmul.f32 %v1508, %v1661
        %v1663 = vmul.f32 %v1509, %v1661
        %1666 = vrot.lane.b32.xlu0 %v1662, 126
        %v1667 = vpop.permute.xlu0 %1666
        %1668 = vrot.lane.b32.xlu0 %v1663, 126
        %v1669 = vpop.permute.xlu0 %1668
        %v1670 = vsel %vm978, %v1667, %v1669
        %v1673 = vadd.f32 %v1598, %v1670
        %v1674 = vadd.f32 %v1599, %v1669
        %s1675 = sld [smem:[#allocation11 + $0x77]]
        %v1676 = vstv %s1675
        %v1677 = vmul.f32 %v1508, %v1676
        %v1678 = vmul.f32 %v1509, %v1676
        %1681 = vrot.lane.b32.xlu0 %v1677, 126
        %v1682 = vpop.permute.xlu0 %1681
        %1683 = vrot.lane.b32.xlu0 %v1678, 126
        %v1684 = vpop.permute.xlu0 %1683
        %v1685 = vsel %vm978, %v1682, %v1684
        %v1688 = vadd.f32 %v1613, %v1685
        %v1689 = vadd.f32 %v1614, %v1684
        %v1690 = vld [vmem:[#allocation3 + $0x10] sm:$0x7e]
        %v1691 = vld [vmem:[#allocation3 + $0x18] sm:$0x7e]
        %s1692 = sld [smem:[#allocation11 + $0xc]]
        %v1693 = vstv %s1692
        %v1694 = vmul.f32 %v1690, %v1693
        %v1695 = vmul.f32 %v1691, %v1693
        %v1698 = vrot.slane %v1694, 1
        %v1699 = vrot.slane %v1695, 1
        %v1702 = vadd.f32 %v1628, %v1698
        %v1703 = vadd.f32 %v1629, %v1699
        %s1704 = sld [smem:[#allocation11 + $0x27]]
        %v1705 = vstv %s1704
        %v1706 = vmul.f32 %v1690, %v1705
        %v1707 = vmul.f32 %v1691, %v1705
        %v1710 = vrot.slane %v1706, 1
        %v1711 = vrot.slane %v1707, 1
        %v1714 = vadd.f32 %v1643, %v1710
        %v1715 = vadd.f32 %v1644, %v1711
        %s1716 = sld [smem:[#allocation11 + $0x42]]
        %v1717 = vstv %s1716
        %v1718 = vmul.f32 %v1690, %v1717
        %v1719 = vmul.f32 %v1691, %v1717
        %v1722 = vrot.slane %v1718, 1
        %v1723 = vrot.slane %v1719, 1
        %v1726 = vadd.f32 %v1658, %v1722
        %v1727 = vadd.f32 %v1659, %v1723
        %s1728 = sld [smem:[#allocation11 + $0x5d]]
        %v1729 = vstv %s1728
        %v1730 = vmul.f32 %v1690, %v1729
        %v1731 = vmul.f32 %v1691, %v1729
        %v1734 = vrot.slane %v1730, 1
        %v1735 = vrot.slane %v1731, 1
        %v1738 = vadd.f32 %v1673, %v1734
        %v1739 = vadd.f32 %v1674, %v1735
        %s1740 = sld [smem:[#allocation11 + $0x78]]
        %v1741 = vstv %s1740
        %v1742 = vmul.f32 %v1690, %v1741
        %v1743 = vmul.f32 %v1691, %v1741
        %v1746 = vrot.slane %v1742, 1
        %v1747 = vrot.slane %v1743, 1
        %v1750 = vadd.f32 %v1688, %v1746
        %v1751 = vadd.f32 %v1689, %v1747
        %s1752 = sld [smem:[#allocation11 + $0xd]]
        %v1753 = vstv %s1752
        %v1754 = vmul.f32 %v1690, %v1753
        %v1755 = vmul.f32 %v1691, %v1753
        %v1758 = vrot.slane %v1754, 1
        %v1759 = vrot.slane %v1755, 1
        %1760 = vrot.lane.b32.xlu0 %v1758, 127
        %v1761 = vpop.permute.xlu0 %1760
        %1762 = vrot.lane.b32.xlu0 %v1759, 127
        %v1763 = vpop.permute.xlu0 %1762
        %v1764 = vsel %vm902, %v1761, %v1763
        %v1767 = vadd.f32 %v1702, %v1764
        %v1768 = vadd.f32 %v1703, %v1763
        %s1769 = sld [smem:[#allocation11 + $0x28]]
        %v1770 = vstv %s1769
        %v1771 = vmul.f32 %v1690, %v1770
        %v1772 = vmul.f32 %v1691, %v1770
        %v1775 = vrot.slane %v1771, 1
        %v1776 = vrot.slane %v1772, 1
        %1777 = vrot.lane.b32.xlu0 %v1775, 127
        %v1778 = vpop.permute.xlu0 %1777
        %1779 = vrot.lane.b32.xlu0 %v1776, 127
        %v1780 = vpop.permute.xlu0 %1779
        %v1781 = vsel %vm902, %v1778, %v1780
        %v1784 = vadd.f32 %v1714, %v1781
        %v1785 = vadd.f32 %v1715, %v1780
        %s1786 = sld [smem:[#allocation11 + $0x43]]
        %v1787 = vstv %s1786
        %v1788 = vmul.f32 %v1690, %v1787
        %v1789 = vmul.f32 %v1691, %v1787
        %v1792 = vrot.slane %v1788, 1
        %v1793 = vrot.slane %v1789, 1
        %1794 = vrot.lane.b32.xlu0 %v1792, 127
        %v1795 = vpop.permute.xlu0 %1794
        %1796 = vrot.lane.b32.xlu0 %v1793, 127
        %v1797 = vpop.permute.xlu0 %1796
        %v1798 = vsel %vm902, %v1795, %v1797
        %v1801 = vadd.f32 %v1726, %v1798
        %v1802 = vadd.f32 %v1727, %v1797
        %s1803 = sld [smem:[#allocation11 + $0x5e]]
        %v1804 = vstv %s1803
        %v1805 = vmul.f32 %v1690, %v1804
        %v1806 = vmul.f32 %v1691, %v1804
        %v1809 = vrot.slane %v1805, 1
        %v1810 = vrot.slane %v1806, 1
        %1811 = vrot.lane.b32.xlu0 %v1809, 127
        %v1812 = vpop.permute.xlu0 %1811
        %1813 = vrot.lane.b32.xlu0 %v1810, 127
        %v1814 = vpop.permute.xlu0 %1813
        %v1815 = vsel %vm902, %v1812, %v1814
        %v1818 = vadd.f32 %v1738, %v1815
        %v1819 = vadd.f32 %v1739, %v1814
        %s1820 = sld [smem:[#allocation11 + $0x79]]
        %v1821 = vstv %s1820
        %v1822 = vmul.f32 %v1690, %v1821
        %v1823 = vmul.f32 %v1691, %v1821
        %v1826 = vrot.slane %v1822, 1
        %v1827 = vrot.slane %v1823, 1
        %1828 = vrot.lane.b32.xlu0 %v1826, 127
        %v1829 = vpop.permute.xlu0 %1828
        %1830 = vrot.lane.b32.xlu0 %v1827, 127
        %v1831 = vpop.permute.xlu0 %1830
        %v1832 = vsel %vm902, %v1829, %v1831
        %v1835 = vadd.f32 %v1750, %v1832
        %v1836 = vadd.f32 %v1751, %v1831
        %s1837 = sld [smem:[#allocation11 + $0xe]]
        %v1838 = vstv %s1837
        %v1839 = vmul.f32 %v1690, %v1838
        %v1840 = vmul.f32 %v1691, %v1838
        %v1843 = vrot.slane %v1839, 1
        %v1844 = vrot.slane %v1840, 1
        %1845 = vrot.lane.b32.xlu0 %v1843, 126
        %v1846 = vpop.permute.xlu0 %1845
        %1847 = vrot.lane.b32.xlu0 %v1844, 126
        %v1848 = vpop.permute.xlu0 %1847
        %v1849 = vsel %vm978, %v1846, %v1848
        %v1852 = vadd.f32 %v1767, %v1849
        %v1853 = vadd.f32 %v1768, %v1848
        %s1854 = sld [smem:[#allocation11 + $0x29]]
        %v1855 = vstv %s1854
        %v1856 = vmul.f32 %v1690, %v1855
        %v1857 = vmul.f32 %v1691, %v1855
        %v1860 = vrot.slane %v1856, 1
        %v1861 = vrot.slane %v1857, 1
        %1862 = vrot.lane.b32.xlu0 %v1860, 126
        %v1863 = vpop.permute.xlu0 %1862
        %1864 = vrot.lane.b32.xlu0 %v1861, 126
        %v1865 = vpop.permute.xlu0 %1864
        %v1866 = vsel %vm978, %v1863, %v1865
        %v1869 = vadd.f32 %v1784, %v1866
        %v1870 = vadd.f32 %v1785, %v1865
        %s1871 = sld [smem:[#allocation11 + $0x44]]
        %v1872 = vstv %s1871
        %v1873 = vmul.f32 %v1690, %v1872
        %v1874 = vmul.f32 %v1691, %v1872
        %v1877 = vrot.slane %v1873, 1
        %v1878 = vrot.slane %v1874, 1
        %1879 = vrot.lane.b32.xlu0 %v1877, 126
        %v1880 = vpop.permute.xlu0 %1879
        %1881 = vrot.lane.b32.xlu0 %v1878, 126
        %v1882 = vpop.permute.xlu0 %1881
        %v1883 = vsel %vm978, %v1880, %v1882
        %v1886 = vadd.f32 %v1801, %v1883
        %v1887 = vadd.f32 %v1802, %v1882
        %s1888 = sld [smem:[#allocation11 + $0x5f]]
        %v1889 = vstv %s1888
        %v1890 = vmul.f32 %v1690, %v1889
        %v1891 = vmul.f32 %v1691, %v1889
        %v1894 = vrot.slane %v1890, 1
        %v1895 = vrot.slane %v1891, 1
        %1896 = vrot.lane.b32.xlu0 %v1894, 126
        %v1897 = vpop.permute.xlu0 %1896
        %1898 = vrot.lane.b32.xlu0 %v1895, 126
        %v1899 = vpop.permute.xlu0 %1898
        %v1900 = vsel %vm978, %v1897, %v1899
        %v1903 = vadd.f32 %v1818, %v1900
        %v1904 = vadd.f32 %v1819, %v1899
        %s1905 = sld [smem:[#allocation11 + $0x7a]]
        %v1906 = vstv %s1905
        %v1907 = vmul.f32 %v1690, %v1906
        %v1908 = vmul.f32 %v1691, %v1906
        %v1911 = vrot.slane %v1907, 1
        %v1912 = vrot.slane %v1908, 1
        %1913 = vrot.lane.b32.xlu0 %v1911, 126
        %v1914 = vpop.permute.xlu0 %1913
        %1915 = vrot.lane.b32.xlu0 %v1912, 126
        %v1916 = vpop.permute.xlu0 %1915
        %v1917 = vsel %vm978, %v1914, %v1916
        %v1920 = vadd.f32 %v1835, %v1917
        %v1921 = vadd.f32 %v1836, %v1916
        %v1922 = vld [vmem:[#allocation3 + $0x10] sm:$0xfc]
        %v1923 = vld [vmem:[#allocation3 + $0x18] sm:$0xfc]
        %s1924 = sld [smem:[#allocation11 + $0xf]]
        %v1925 = vstv %s1924
        %v1926 = vmul.f32 %v1922, %v1925
        %v1927 = vmul.f32 %v1923, %v1925
        %v1930 = vrot.slane %v1926, 2
        %v1931 = vrot.slane %v1927, 2
        %v1934 = vadd.f32 %v1852, %v1930
        %v1935 = vadd.f32 %v1853, %v1931
        %s1936 = sld [smem:[#allocation11 + $0x2a]]
        %v1937 = vstv %s1936
        %v1938 = vmul.f32 %v1922, %v1937
        %v1939 = vmul.f32 %v1923, %v1937
        %v1942 = vrot.slane %v1938, 2
        %v1943 = vrot.slane %v1939, 2
        %v1946 = vadd.f32 %v1869, %v1942
        %v1947 = vadd.f32 %v1870, %v1943
        %s1948 = sld [smem:[#allocation11 + $0x45]]
        %v1949 = vstv %s1948
        %v1950 = vmul.f32 %v1922, %v1949
        %v1951 = vmul.f32 %v1923, %v1949
        %v1954 = vrot.slane %v1950, 2
        %v1955 = vrot.slane %v1951, 2
        %v1958 = vadd.f32 %v1886, %v1954
        %v1959 = vadd.f32 %v1887, %v1955
        %s1960 = sld [smem:[#allocation11 + $0x60]]
        %v1961 = vstv %s1960
        %v1962 = vmul.f32 %v1922, %v1961
        %v1963 = vmul.f32 %v1923, %v1961
        %v1966 = vrot.slane %v1962, 2
        %v1967 = vrot.slane %v1963, 2
        %v1970 = vadd.f32 %v1903, %v1966
        %v1971 = vadd.f32 %v1904, %v1967
        %s1972 = sld [smem:[#allocation11 + $0x7b]]
        %v1973 = vstv %s1972
        %v1974 = vmul.f32 %v1922, %v1973
        %v1975 = vmul.f32 %v1923, %v1973
        %v1978 = vrot.slane %v1974, 2
        %v1979 = vrot.slane %v1975, 2
        %v1982 = vadd.f32 %v1920, %v1978
        %v1983 = vadd.f32 %v1921, %v1979
        %s1984 = sld [smem:[#allocation11 + $0x10]]
        %v1985 = vstv %s1984
        %v1986 = vmul.f32 %v1922, %v1985
        %v1987 = vmul.f32 %v1923, %v1985
        %v1990 = vrot.slane %v1986, 2
        %v1991 = vrot.slane %v1987, 2
        %1992 = vrot.lane.b32.xlu0 %v1990, 127
        %v1993 = vpop.permute.xlu0 %1992
        %1994 = vrot.lane.b32.xlu0 %v1991, 127
        %v1995 = vpop.permute.xlu0 %1994
        %v1996 = vsel %vm902, %v1993, %v1995
        %v1999 = vadd.f32 %v1934, %v1996
        %v2000 = vadd.f32 %v1935, %v1995
        %s2001 = sld [smem:[#allocation11 + $0x2b]]
        %v2002 = vstv %s2001
        %v2003 = vmul.f32 %v1922, %v2002
        %v2004 = vmul.f32 %v1923, %v2002
        %v2007 = vrot.slane %v2003, 2
        %v2008 = vrot.slane %v2004, 2
        %2009 = vrot.lane.b32.xlu0 %v2007, 127
        %v2010 = vpop.permute.xlu0 %2009
        %2011 = vrot.lane.b32.xlu0 %v2008, 127
        %v2012 = vpop.permute.xlu0 %2011
        %v2013 = vsel %vm902, %v2010, %v2012
        %v2016 = vadd.f32 %v1946, %v2013
        %v2017 = vadd.f32 %v1947, %v2012
        %s2018 = sld [smem:[#allocation11 + $0x46]]
        %v2019 = vstv %s2018
        %v2020 = vmul.f32 %v1922, %v2019
        %v2021 = vmul.f32 %v1923, %v2019
        %v2024 = vrot.slane %v2020, 2
        %v2025 = vrot.slane %v2021, 2
        %2026 = vrot.lane.b32.xlu0 %v2024, 127
        %v2027 = vpop.permute.xlu0 %2026
        %2028 = vrot.lane.b32.xlu0 %v2025, 127
        %v2029 = vpop.permute.xlu0 %2028
        %v2030 = vsel %vm902, %v2027, %v2029
        %v2033 = vadd.f32 %v1958, %v2030
        %v2034 = vadd.f32 %v1959, %v2029
        %s2035 = sld [smem:[#allocation11 + $0x61]]
        %v2036 = vstv %s2035
        %v2037 = vmul.f32 %v1922, %v2036
        %v2038 = vmul.f32 %v1923, %v2036
        %v2041 = vrot.slane %v2037, 2
        %v2042 = vrot.slane %v2038, 2
        %2043 = vrot.lane.b32.xlu0 %v2041, 127
        %v2044 = vpop.permute.xlu0 %2043
        %2045 = vrot.lane.b32.xlu0 %v2042, 127
        %v2046 = vpop.permute.xlu0 %2045
        %v2047 = vsel %vm902, %v2044, %v2046
        %v2050 = vadd.f32 %v1970, %v2047
        %v2051 = vadd.f32 %v1971, %v2046
        %s2052 = sld [smem:[#allocation11 + $0x7c]]
        %v2053 = vstv %s2052
        %v2054 = vmul.f32 %v1922, %v2053
        %v2055 = vmul.f32 %v1923, %v2053
        %v2058 = vrot.slane %v2054, 2
        %v2059 = vrot.slane %v2055, 2
        %2060 = vrot.lane.b32.xlu0 %v2058, 127
        %v2061 = vpop.permute.xlu0 %2060
        %2062 = vrot.lane.b32.xlu0 %v2059, 127
        %v2063 = vpop.permute.xlu0 %2062
        %v2064 = vsel %vm902, %v2061, %v2063
        %v2067 = vadd.f32 %v1982, %v2064
        %v2068 = vadd.f32 %v1983, %v2063
        %s2069 = sld [smem:[#allocation11 + $0x11]]
        %v2070 = vstv %s2069
        %v2071 = vmul.f32 %v1922, %v2070
        %v2072 = vmul.f32 %v1923, %v2070
        %v2075 = vrot.slane %v2071, 2
        %v2076 = vrot.slane %v2072, 2
        %2077 = vrot.lane.b32.xlu0 %v2075, 126
        %v2078 = vpop.permute.xlu0 %2077
        %2079 = vrot.lane.b32.xlu0 %v2076, 126
        %v2080 = vpop.permute.xlu0 %2079
        %v2081 = vsel %vm978, %v2078, %v2080
        %v2084 = vadd.f32 %v1999, %v2081
        %v2085 = vadd.f32 %v2000, %v2080
        %s2086 = sld [smem:[#allocation11 + $0x2c]]
        %v2087 = vstv %s2086
        %v2088 = vmul.f32 %v1922, %v2087
        %v2089 = vmul.f32 %v1923, %v2087
        %v2092 = vrot.slane %v2088, 2
        %v2093 = vrot.slane %v2089, 2
        %2094 = vrot.lane.b32.xlu0 %v2092, 126
        %v2095 = vpop.permute.xlu0 %2094
        %2096 = vrot.lane.b32.xlu0 %v2093, 126
        %v2097 = vpop.permute.xlu0 %2096
        %v2098 = vsel %vm978, %v2095, %v2097
        %v2101 = vadd.f32 %v2016, %v2098
        %v2102 = vadd.f32 %v2017, %v2097
        %s2103 = sld [smem:[#allocation11 + $0x47]]
        %v2104 = vstv %s2103
        %v2105 = vmul.f32 %v1922, %v2104
        %v2106 = vmul.f32 %v1923, %v2104
        %v2109 = vrot.slane %v2105, 2
        %v2110 = vrot.slane %v2106, 2
        %2111 = vrot.lane.b32.xlu0 %v2109, 126
        %v2112 = vpop.permute.xlu0 %2111
        %2113 = vrot.lane.b32.xlu0 %v2110, 126
        %v2114 = vpop.permute.xlu0 %2113
        %v2115 = vsel %vm978, %v2112, %v2114
        %v2118 = vadd.f32 %v2033, %v2115
        %v2119 = vadd.f32 %v2034, %v2114
        %s2120 = sld [smem:[#allocation11 + $0x62]]
        %v2121 = vstv %s2120
        %v2122 = vmul.f32 %v1922, %v2121
        %v2123 = vmul.f32 %v1923, %v2121
        %v2126 = vrot.slane %v2122, 2
        %v2127 = vrot.slane %v2123, 2
        %2128 = vrot.lane.b32.xlu0 %v2126, 126
        %v2129 = vpop.permute.xlu0 %2128
        %2130 = vrot.lane.b32.xlu0 %v2127, 126
        %v2131 = vpop.permute.xlu0 %2130
        %v2132 = vsel %vm978, %v2129, %v2131
        %v2135 = vadd.f32 %v2050, %v2132
        %v2136 = vadd.f32 %v2051, %v2131
        %s2137 = sld [smem:[#allocation11 + $0x7d]]
        %v2138 = vstv %s2137
        %v2139 = vmul.f32 %v1922, %v2138
        %v2140 = vmul.f32 %v1923, %v2138
        %v2143 = vrot.slane %v2139, 2
        %v2144 = vrot.slane %v2140, 2
        %2145 = vrot.lane.b32.xlu0 %v2143, 126
        %v2146 = vpop.permute.xlu0 %2145
        %2147 = vrot.lane.b32.xlu0 %v2144, 126
        %v2148 = vpop.permute.xlu0 %2147
        %v2149 = vsel %vm978, %v2146, %v2148
        %v2152 = vadd.f32 %v2067, %v2149
        %v2153 = vadd.f32 %v2068, %v2148
        %v2154 = vld [vmem:[#allocation3 + $0x20] sm:$0x3f]
        %v2155 = vld [vmem:[#allocation3 + $0x28] sm:$0x3f]
        %s2156 = sld [smem:[#allocation11 + $0x12]]
        %v2157 = vstv %s2156
        %v2158 = vmul.f32 %v2154, %v2157
        %v2159 = vmul.f32 %v2155, %v2157
        %v2160 = vadd.f32 %v2084, %v2158
        %v2161 = vadd.f32 %v2085, %v2159
        %s2162 = sld [smem:[#allocation11 + $0x2d]]
        %v2163 = vstv %s2162
        %v2164 = vmul.f32 %v2154, %v2163
        %v2165 = vmul.f32 %v2155, %v2163
        %v2166 = vadd.f32 %v2101, %v2164
        %v2167 = vadd.f32 %v2102, %v2165
        %s2168 = sld [smem:[#allocation11 + $0x48]]
        %v2169 = vstv %s2168
        %v2170 = vmul.f32 %v2154, %v2169
        %v2171 = vmul.f32 %v2155, %v2169
        %v2172 = vadd.f32 %v2118, %v2170
        %v2173 = vadd.f32 %v2119, %v2171
        %s2174 = sld [smem:[#allocation11 + $0x63]]
        %v2175 = vstv %s2174
        %v2176 = vmul.f32 %v2154, %v2175
        %v2177 = vmul.f32 %v2155, %v2175
        %v2178 = vadd.f32 %v2135, %v2176
        %v2179 = vadd.f32 %v2136, %v2177
        %s2180 = sld [smem:[#allocation11 + $0x7e]]
        %v2181 = vstv %s2180
        %v2182 = vmul.f32 %v2154, %v2181
        %v2183 = vmul.f32 %v2155, %v2181
        %v2184 = vadd.f32 %v2152, %v2182
        %v2185 = vadd.f32 %v2153, %v2183
        %s2186 = sld [smem:[#allocation11 + $0x13]]
        %v2187 = vstv %s2186
        %v2188 = vmul.f32 %v2154, %v2187
        %v2189 = vmul.f32 %v2155, %v2187
        %2192 = vrot.lane.b32.xlu0 %v2188, 127
        %v2193 = vpop.permute.xlu0 %2192
        %2194 = vrot.lane.b32.xlu0 %v2189, 127
        %v2195 = vpop.permute.xlu0 %2194
        %v2196 = vsel %vm902, %v2193, %v2195
        %v2199 = vadd.f32 %v2160, %v2196
        %v2200 = vadd.f32 %v2161, %v2195
        %s2201 = sld [smem:[#allocation11 + $0x2e]]
        %v2202 = vstv %s2201
        %v2203 = vmul.f32 %v2154, %v2202
        %v2204 = vmul.f32 %v2155, %v2202
        %2207 = vrot.lane.b32.xlu0 %v2203, 127
        %v2208 = vpop.permute.xlu0 %2207
        %2209 = vrot.lane.b32.xlu0 %v2204, 127
        %v2210 = vpop.permute.xlu0 %2209
        %v2211 = vsel %vm902, %v2208, %v2210
        %v2214 = vadd.f32 %v2166, %v2211
        %v2215 = vadd.f32 %v2167, %v2210
        %s2216 = sld [smem:[#allocation11 + $0x49]]
        %v2217 = vstv %s2216
        %v2218 = vmul.f32 %v2154, %v2217
        %v2219 = vmul.f32 %v2155, %v2217
        %2222 = vrot.lane.b32.xlu0 %v2218, 127
        %v2223 = vpop.permute.xlu0 %2222
        %2224 = vrot.lane.b32.xlu0 %v2219, 127
        %v2225 = vpop.permute.xlu0 %2224
        %v2226 = vsel %vm902, %v2223, %v2225
        %v2229 = vadd.f32 %v2172, %v2226
        %v2230 = vadd.f32 %v2173, %v2225
        %s2231 = sld [smem:[#allocation11 + $0x64]]
        %v2232 = vstv %s2231
        %v2233 = vmul.f32 %v2154, %v2232
        %v2234 = vmul.f32 %v2155, %v2232
        %2237 = vrot.lane.b32.xlu0 %v2233, 127
        %v2238 = vpop.permute.xlu0 %2237
        %2239 = vrot.lane.b32.xlu0 %v2234, 127
        %v2240 = vpop.permute.xlu0 %2239
        %v2241 = vsel %vm902, %v2238, %v2240
        %v2244 = vadd.f32 %v2178, %v2241
        %v2245 = vadd.f32 %v2179, %v2240
        %s2246 = sld [smem:[#allocation11 + $0x7f]]
        %v2247 = vstv %s2246
        %v2248 = vmul.f32 %v2154, %v2247
        %v2249 = vmul.f32 %v2155, %v2247
        %2252 = vrot.lane.b32.xlu0 %v2248, 127
        %v2253 = vpop.permute.xlu0 %2252
        %2254 = vrot.lane.b32.xlu0 %v2249, 127
        %v2255 = vpop.permute.xlu0 %2254
        %v2256 = vsel %vm902, %v2253, %v2255
        %v2259 = vadd.f32 %v2184, %v2256
        %v2260 = vadd.f32 %v2185, %v2255
        %s2261 = sld [smem:[#allocation11 + $0x14]]
        %v2262 = vstv %s2261
        %v2263 = vmul.f32 %v2154, %v2262
        %v2264 = vmul.f32 %v2155, %v2262
        %2267 = vrot.lane.b32.xlu0 %v2263, 126
        %v2268 = vpop.permute.xlu0 %2267
        %2269 = vrot.lane.b32.xlu0 %v2264, 126
        %v2270 = vpop.permute.xlu0 %2269
        %v2271 = vsel %vm978, %v2268, %v2270
        %v2274 = vadd.f32 %v2199, %v2271
        %v2275 = vadd.f32 %v2200, %v2270
        %s2276 = sld [smem:[#allocation11 + $0x2f]]
        %v2277 = vstv %s2276
        %v2278 = vmul.f32 %v2154, %v2277
        %v2279 = vmul.f32 %v2155, %v2277
        %2282 = vrot.lane.b32.xlu0 %v2278, 126
        %v2283 = vpop.permute.xlu0 %2282
        %2284 = vrot.lane.b32.xlu0 %v2279, 126
        %v2285 = vpop.permute.xlu0 %2284
        %v2286 = vsel %vm978, %v2283, %v2285
        %v2289 = vadd.f32 %v2214, %v2286
        %v2290 = vadd.f32 %v2215, %v2285
        %s2291 = sld [smem:[#allocation11 + $0x4a]]
        %v2292 = vstv %s2291
        %v2293 = vmul.f32 %v2154, %v2292
        %v2294 = vmul.f32 %v2155, %v2292
        %2297 = vrot.lane.b32.xlu0 %v2293, 126
        %v2298 = vpop.permute.xlu0 %2297
        %2299 = vrot.lane.b32.xlu0 %v2294, 126
        %v2300 = vpop.permute.xlu0 %2299
        %v2301 = vsel %vm978, %v2298, %v2300
        %v2304 = vadd.f32 %v2229, %v2301
        %v2305 = vadd.f32 %v2230, %v2300
        %s2306 = sld [smem:[#allocation11 + $0x65]]
        %v2307 = vstv %s2306
        %v2308 = vmul.f32 %v2154, %v2307
        %v2309 = vmul.f32 %v2155, %v2307
        %2312 = vrot.lane.b32.xlu0 %v2308, 126
        %v2313 = vpop.permute.xlu0 %2312
        %2314 = vrot.lane.b32.xlu0 %v2309, 126
        %v2315 = vpop.permute.xlu0 %2314
        %v2316 = vsel %vm978, %v2313, %v2315
        %v2319 = vadd.f32 %v2244, %v2316
        %v2320 = vadd.f32 %v2245, %v2315
        %s2321 = sld [smem:[#allocation11 + $0x80]]
        %v2322 = vstv %s2321
        %v2323 = vmul.f32 %v2154, %v2322
        %v2324 = vmul.f32 %v2155, %v2322
        %2327 = vrot.lane.b32.xlu0 %v2323, 126
        %v2328 = vpop.permute.xlu0 %2327
        %2329 = vrot.lane.b32.xlu0 %v2324, 126
        %v2330 = vpop.permute.xlu0 %2329
        %v2331 = vsel %vm978, %v2328, %v2330
        %v2334 = vadd.f32 %v2259, %v2331
        %v2335 = vadd.f32 %v2260, %v2330
        %v2336 = vld [vmem:[#allocation3 + $0x20] sm:$0x7e]
        %v2337 = vld [vmem:[#allocation3 + $0x28] sm:$0x7e]
        %s2338 = sld [smem:[#allocation11 + $0x15]]
        %v2339 = vstv %s2338
        %v2340 = vmul.f32 %v2336, %v2339
        %v2341 = vmul.f32 %v2337, %v2339
        %v2344 = vrot.slane %v2340, 1
        %v2345 = vrot.slane %v2341, 1
        %v2348 = vadd.f32 %v2274, %v2344
        %v2349 = vadd.f32 %v2275, %v2345
        %s2350 = sld [smem:[#allocation11 + $0x30]]
        %v2351 = vstv %s2350
        %v2352 = vmul.f32 %v2336, %v2351
        %v2353 = vmul.f32 %v2337, %v2351
        %v2356 = vrot.slane %v2352, 1
        %v2357 = vrot.slane %v2353, 1
        %v2360 = vadd.f32 %v2289, %v2356
        %v2361 = vadd.f32 %v2290, %v2357
        %s2362 = sld [smem:[#allocation11 + $0x4b]]
        %v2363 = vstv %s2362
        %v2364 = vmul.f32 %v2336, %v2363
        %v2365 = vmul.f32 %v2337, %v2363
        %v2368 = vrot.slane %v2364, 1
        %v2369 = vrot.slane %v2365, 1
        %v2372 = vadd.f32 %v2304, %v2368
        %v2373 = vadd.f32 %v2305, %v2369
        %s2374 = sld [smem:[#allocation11 + $0x66]]
        %v2375 = vstv %s2374
        %v2376 = vmul.f32 %v2336, %v2375
        %v2377 = vmul.f32 %v2337, %v2375
        %v2380 = vrot.slane %v2376, 1
        %v2381 = vrot.slane %v2377, 1
        %v2384 = vadd.f32 %v2319, %v2380
        %v2385 = vadd.f32 %v2320, %v2381
        %s2386 = sld [smem:[#allocation11 + $0x81]]
        %v2387 = vstv %s2386
        %v2388 = vmul.f32 %v2336, %v2387
        %v2389 = vmul.f32 %v2337, %v2387
        %v2392 = vrot.slane %v2388, 1
        %v2393 = vrot.slane %v2389, 1
        %v2396 = vadd.f32 %v2334, %v2392
        %v2397 = vadd.f32 %v2335, %v2393
        %s2398 = sld [smem:[#allocation11 + $0x16]]
        %v2399 = vstv %s2398
        %v2400 = vmul.f32 %v2336, %v2399
        %v2401 = vmul.f32 %v2337, %v2399
        %v2404 = vrot.slane %v2400, 1
        %v2405 = vrot.slane %v2401, 1
        %2406 = vrot.lane.b32.xlu0 %v2404, 127
        %v2407 = vpop.permute.xlu0 %2406
        %2408 = vrot.lane.b32.xlu0 %v2405, 127
        %v2409 = vpop.permute.xlu0 %2408
        %v2410 = vsel %vm902, %v2407, %v2409
        %v2413 = vadd.f32 %v2348, %v2410
        %v2414 = vadd.f32 %v2349, %v2409
        %s2415 = sld [smem:[#allocation11 + $0x31]]
        %v2416 = vstv %s2415
        %v2417 = vmul.f32 %v2336, %v2416
        %v2418 = vmul.f32 %v2337, %v2416
        %v2421 = vrot.slane %v2417, 1
        %v2422 = vrot.slane %v2418, 1
        %2423 = vrot.lane.b32.xlu0 %v2421, 127
        %v2424 = vpop.permute.xlu0 %2423
        %2425 = vrot.lane.b32.xlu0 %v2422, 127
        %v2426 = vpop.permute.xlu0 %2425
        %v2427 = vsel %vm902, %v2424, %v2426
        %v2430 = vadd.f32 %v2360, %v2427
        %v2431 = vadd.f32 %v2361, %v2426
        %s2432 = sld [smem:[#allocation11 + $0x4c]]
        %v2433 = vstv %s2432
        %v2434 = vmul.f32 %v2336, %v2433
        %v2435 = vmul.f32 %v2337, %v2433
        %v2438 = vrot.slane %v2434, 1
        %v2439 = vrot.slane %v2435, 1
        %2440 = vrot.lane.b32.xlu0 %v2438, 127
        %v2441 = vpop.permute.xlu0 %2440
        %2442 = vrot.lane.b32.xlu0 %v2439, 127
        %v2443 = vpop.permute.xlu0 %2442
        %v2444 = vsel %vm902, %v2441, %v2443
        %v2447 = vadd.f32 %v2372, %v2444
        %v2448 = vadd.f32 %v2373, %v2443
        %s2449 = sld [smem:[#allocation11 + $0x67]]
        %v2450 = vstv %s2449
        %v2451 = vmul.f32 %v2336, %v2450
        %v2452 = vmul.f32 %v2337, %v2450
        %v2455 = vrot.slane %v2451, 1
        %v2456 = vrot.slane %v2452, 1
        %2457 = vrot.lane.b32.xlu0 %v2455, 127
        %v2458 = vpop.permute.xlu0 %2457
        %2459 = vrot.lane.b32.xlu0 %v2456, 127
        %v2460 = vpop.permute.xlu0 %2459
        %v2461 = vsel %vm902, %v2458, %v2460
        %v2464 = vadd.f32 %v2384, %v2461
        %v2465 = vadd.f32 %v2385, %v2460
        %s2466 = sld [smem:[#allocation11 + $0x82]]
        %v2467 = vstv %s2466
        %v2468 = vmul.f32 %v2336, %v2467
        %v2469 = vmul.f32 %v2337, %v2467
        %v2472 = vrot.slane %v2468, 1
        %v2473 = vrot.slane %v2469, 1
        %2474 = vrot.lane.b32.xlu0 %v2472, 127
        %v2475 = vpop.permute.xlu0 %2474
        %2476 = vrot.lane.b32.xlu0 %v2473, 127
        %v2477 = vpop.permute.xlu0 %2476
        %v2478 = vsel %vm902, %v2475, %v2477
        %v2481 = vadd.f32 %v2396, %v2478
        %v2482 = vadd.f32 %v2397, %v2477
        %s2483 = sld [smem:[#allocation11 + $0x17]]
        %v2484 = vstv %s2483
        %v2485 = vmul.f32 %v2336, %v2484
        %v2486 = vmul.f32 %v2337, %v2484
        %v2489 = vrot.slane %v2485, 1
        %v2490 = vrot.slane %v2486, 1
        %2491 = vrot.lane.b32.xlu0 %v2489, 126
        %v2492 = vpop.permute.xlu0 %2491
        %2493 = vrot.lane.b32.xlu0 %v2490, 126
        %v2494 = vpop.permute.xlu0 %2493
        %v2495 = vsel %vm978, %v2492, %v2494
        %v2498 = vadd.f32 %v2413, %v2495
        %v2499 = vadd.f32 %v2414, %v2494
        %s2500 = sld [smem:[#allocation11 + $0x32]]
        %v2501 = vstv %s2500
        %v2502 = vmul.f32 %v2336, %v2501
        %v2503 = vmul.f32 %v2337, %v2501
        %v2506 = vrot.slane %v2502, 1
        %v2507 = vrot.slane %v2503, 1
        %2508 = vrot.lane.b32.xlu0 %v2506, 126
        %v2509 = vpop.permute.xlu0 %2508
        %2510 = vrot.lane.b32.xlu0 %v2507, 126
        %v2511 = vpop.permute.xlu0 %2510
        %v2512 = vsel %vm978, %v2509, %v2511
        %v2515 = vadd.f32 %v2430, %v2512
        %v2516 = vadd.f32 %v2431, %v2511
        %s2517 = sld [smem:[#allocation11 + $0x4d]]
        %v2518 = vstv %s2517
        %v2519 = vmul.f32 %v2336, %v2518
        %v2520 = vmul.f32 %v2337, %v2518
        %v2523 = vrot.slane %v2519, 1
        %v2524 = vrot.slane %v2520, 1
        %2525 = vrot.lane.b32.xlu0 %v2523, 126
        %v2526 = vpop.permute.xlu0 %2525
        %2527 = vrot.lane.b32.xlu0 %v2524, 126
        %v2528 = vpop.permute.xlu0 %2527
        %v2529 = vsel %vm978, %v2526, %v2528
        %v2532 = vadd.f32 %v2447, %v2529
        %v2533 = vadd.f32 %v2448, %v2528
        %s2534 = sld [smem:[#allocation11 + $0x68]]
        %v2535 = vstv %s2534
        %v2536 = vmul.f32 %v2336, %v2535
        %v2537 = vmul.f32 %v2337, %v2535
        %v2540 = vrot.slane %v2536, 1
        %v2541 = vrot.slane %v2537, 1
        %2542 = vrot.lane.b32.xlu0 %v2540, 126
        %v2543 = vpop.permute.xlu0 %2542
        %2544 = vrot.lane.b32.xlu0 %v2541, 126
        %v2545 = vpop.permute.xlu0 %2544
        %v2546 = vsel %vm978, %v2543, %v2545
        %v2549 = vadd.f32 %v2464, %v2546
        %v2550 = vadd.f32 %v2465, %v2545
        %s2551 = sld [smem:[#allocation11 + $0x83]]
        %v2552 = vstv %s2551
        %v2553 = vmul.f32 %v2336, %v2552
        %v2554 = vmul.f32 %v2337, %v2552
        %v2557 = vrot.slane %v2553, 1
        %v2558 = vrot.slane %v2554, 1
        %2559 = vrot.lane.b32.xlu0 %v2557, 126
        %v2560 = vpop.permute.xlu0 %2559
        %2561 = vrot.lane.b32.xlu0 %v2558, 126
        %v2562 = vpop.permute.xlu0 %2561
        %v2563 = vsel %vm978, %v2560, %v2562
        %v2566 = vadd.f32 %v2481, %v2563
        %v2567 = vadd.f32 %v2482, %v2562
        %v2568 = vld [vmem:[#allocation3 + $0x20] sm:$0xfc]
        %v2569 = vld [vmem:[#allocation3 + $0x28] sm:$0xfc]
        %s2570 = sld [smem:[#allocation11 + $0x18]]
        %v2571 = vstv %s2570
        %v2572 = vmul.f32 %v2568, %v2571
        %v2573 = vmul.f32 %v2569, %v2571
        %v2576 = vrot.slane %v2572, 2
        %v2577 = vrot.slane %v2573, 2
        %v2580 = vadd.f32 %v2498, %v2576
        %v2581 = vadd.f32 %v2499, %v2577
        %s2582 = sld [smem:[#allocation11 + $0x33]]
        %v2583 = vstv %s2582
        %v2584 = vmul.f32 %v2568, %v2583
        %v2585 = vmul.f32 %v2569, %v2583
        %v2588 = vrot.slane %v2584, 2
        %v2589 = vrot.slane %v2585, 2
        %v2592 = vadd.f32 %v2515, %v2588
        %v2593 = vadd.f32 %v2516, %v2589
        %s2594 = sld [smem:[#allocation11 + $0x4e]]
        %v2595 = vstv %s2594
        %v2596 = vmul.f32 %v2568, %v2595
        %v2597 = vmul.f32 %v2569, %v2595
        %v2600 = vrot.slane %v2596, 2
        %v2601 = vrot.slane %v2597, 2
        %v2604 = vadd.f32 %v2532, %v2600
        %v2605 = vadd.f32 %v2533, %v2601
        %s2606 = sld [smem:[#allocation11 + $0x69]]
        %v2607 = vstv %s2606
        %v2608 = vmul.f32 %v2568, %v2607
        %v2609 = vmul.f32 %v2569, %v2607
        %v2612 = vrot.slane %v2608, 2
        %v2613 = vrot.slane %v2609, 2
        %v2616 = vadd.f32 %v2549, %v2612
        %v2617 = vadd.f32 %v2550, %v2613
        %s2618 = sld [smem:[#allocation11 + $0x84]]
        %v2619 = vstv %s2618
        %v2620 = vmul.f32 %v2568, %v2619
        %v2621 = vmul.f32 %v2569, %v2619
        %v2624 = vrot.slane %v2620, 2
        %v2625 = vrot.slane %v2621, 2
        %v2628 = vadd.f32 %v2566, %v2624
        %v2629 = vadd.f32 %v2567, %v2625
        %s2630 = sld [smem:[#allocation11 + $0x19]]
        %v2631 = vstv %s2630
        %v2632 = vmul.f32 %v2568, %v2631
        %v2633 = vmul.f32 %v2569, %v2631
        %v2636 = vrot.slane %v2632, 2
        %v2637 = vrot.slane %v2633, 2
        %2638 = vrot.lane.b32.xlu0 %v2636, 127
        %v2639 = vpop.permute.xlu0 %2638
        %2640 = vrot.lane.b32.xlu0 %v2637, 127
        %v2641 = vpop.permute.xlu0 %2640
        %v2642 = vsel %vm902, %v2639, %v2641
        %v2645 = vadd.f32 %v2580, %v2642
        %v2646 = vadd.f32 %v2581, %v2641
        %s2647 = sld [smem:[#allocation11 + $0x34]]
        %v2648 = vstv %s2647
        %v2649 = vmul.f32 %v2568, %v2648
        %v2650 = vmul.f32 %v2569, %v2648
        %v2653 = vrot.slane %v2649, 2
        %v2654 = vrot.slane %v2650, 2
        %2655 = vrot.lane.b32.xlu0 %v2653, 127
        %v2656 = vpop.permute.xlu0 %2655
        %2657 = vrot.lane.b32.xlu0 %v2654, 127
        %v2658 = vpop.permute.xlu0 %2657
        %v2659 = vsel %vm902, %v2656, %v2658
        %v2662 = vadd.f32 %v2592, %v2659
        %v2663 = vadd.f32 %v2593, %v2658
        %s2664 = sld [smem:[#allocation11 + $0x4f]]
        %v2665 = vstv %s2664
        %v2666 = vmul.f32 %v2568, %v2665
        %v2667 = vmul.f32 %v2569, %v2665
        %v2670 = vrot.slane %v2666, 2
        %v2671 = vrot.slane %v2667, 2
        %2672 = vrot.lane.b32.xlu0 %v2670, 127
        %v2673 = vpop.permute.xlu0 %2672
        %2674 = vrot.lane.b32.xlu0 %v2671, 127
        %v2675 = vpop.permute.xlu0 %2674
        %v2676 = vsel %vm902, %v2673, %v2675
        %v2679 = vadd.f32 %v2604, %v2676
        %v2680 = vadd.f32 %v2605, %v2675
        %s2681 = sld [smem:[#allocation11 + $0x6a]]
        %v2682 = vstv %s2681
        %v2683 = vmul.f32 %v2568, %v2682
        %v2684 = vmul.f32 %v2569, %v2682
        %v2687 = vrot.slane %v2683, 2
        %v2688 = vrot.slane %v2684, 2
        %2689 = vrot.lane.b32.xlu0 %v2687, 127
        %v2690 = vpop.permute.xlu0 %2689
        %2691 = vrot.lane.b32.xlu0 %v2688, 127
        %v2692 = vpop.permute.xlu0 %2691
        %v2693 = vsel %vm902, %v2690, %v2692
        %v2696 = vadd.f32 %v2616, %v2693
        %v2697 = vadd.f32 %v2617, %v2692
        %s2698 = sld [smem:[#allocation11 + $0x85]]
        %v2699 = vstv %s2698
        %v2700 = vmul.f32 %v2568, %v2699
        %v2701 = vmul.f32 %v2569, %v2699
        %v2704 = vrot.slane %v2700, 2
        %v2705 = vrot.slane %v2701, 2
        %2706 = vrot.lane.b32.xlu0 %v2704, 127
        %v2707 = vpop.permute.xlu0 %2706
        %2708 = vrot.lane.b32.xlu0 %v2705, 127
        %v2709 = vpop.permute.xlu0 %2708
        %v2710 = vsel %vm902, %v2707, %v2709
        %v2713 = vadd.f32 %v2628, %v2710
        %v2714 = vadd.f32 %v2629, %v2709
        %s2715 = sld [smem:[#allocation11 + $0x1a]]
        %v2716 = vstv %s2715
        %v2717 = vmul.f32 %v2568, %v2716
        %v2718 = vmul.f32 %v2569, %v2716
        %v2721 = vrot.slane %v2717, 2
        %v2722 = vrot.slane %v2718, 2
        %2723 = vrot.lane.b32.xlu0 %v2721, 126
        %v2724 = vpop.permute.xlu0 %2723
        %2725 = vrot.lane.b32.xlu0 %v2722, 126
        %v2726 = vpop.permute.xlu0 %2725
        %v2727 = vsel %vm978, %v2724, %v2726
        %v2730 = vadd.f32 %v2645, %v2727
        %v2731 = vadd.f32 %v2646, %v2726
        %s2732 = sld [smem:[#allocation11 + $0x35]]
        %v2733 = vstv %s2732
        %v2734 = vmul.f32 %v2568, %v2733
        %v2735 = vmul.f32 %v2569, %v2733
        %v2738 = vrot.slane %v2734, 2
        %v2739 = vrot.slane %v2735, 2
        %2740 = vrot.lane.b32.xlu0 %v2738, 126
        %v2741 = vpop.permute.xlu0 %2740
        %2742 = vrot.lane.b32.xlu0 %v2739, 126
        %v2743 = vpop.permute.xlu0 %2742
        %v2744 = vsel %vm978, %v2741, %v2743
        %v2747 = vadd.f32 %v2662, %v2744
        %v2748 = vadd.f32 %v2663, %v2743
        %s2749 = sld [smem:[#allocation11 + $0x50]]
        %v2750 = vstv %s2749
        %v2751 = vmul.f32 %v2568, %v2750
        %v2752 = vmul.f32 %v2569, %v2750
        %v2755 = vrot.slane %v2751, 2
        %v2756 = vrot.slane %v2752, 2
        %2757 = vrot.lane.b32.xlu0 %v2755, 126
        %v2758 = vpop.permute.xlu0 %2757
        %2759 = vrot.lane.b32.xlu0 %v2756, 126
        %v2760 = vpop.permute.xlu0 %2759
        %v2761 = vsel %vm978, %v2758, %v2760
        %v2764 = vadd.f32 %v2679, %v2761
        %v2765 = vadd.f32 %v2680, %v2760
        %s2766 = sld [smem:[#allocation11 + $0x6b]]
        %v2767 = vstv %s2766
        %v2768 = vmul.f32 %v2568, %v2767
        %v2769 = vmul.f32 %v2569, %v2767
        %v2772 = vrot.slane %v2768, 2
        %v2773 = vrot.slane %v2769, 2
        %2774 = vrot.lane.b32.xlu0 %v2772, 126
        %v2775 = vpop.permute.xlu0 %2774
        %2776 = vrot.lane.b32.xlu0 %v2773, 126
        %v2777 = vpop.permute.xlu0 %2776
        %v2778 = vsel %vm978, %v2775, %v2777
        %v2781 = vadd.f32 %v2696, %v2778
        %v2782 = vadd.f32 %v2697, %v2777
        %s2783 = sld [smem:[#allocation11 + $0x86]]
        %v2784 = vstv %s2783
        %v2785 = vmul.f32 %v2568, %v2784
        %v2786 = vmul.f32 %v2569, %v2784
        %v2789 = vrot.slane %v2785, 2
        %v2790 = vrot.slane %v2786, 2
        %2791 = vrot.lane.b32.xlu0 %v2789, 126
        %v2792 = vpop.permute.xlu0 %2791
        %2793 = vrot.lane.b32.xlu0 %v2790, 126
        %v2794 = vpop.permute.xlu0 %2793
        %v2795 = vsel %vm978, %v2792, %v2794
        %v2798 = vadd.f32 %v2713, %v2795
        %v2799 = vadd.f32 %v2714, %v2794
        %2800 = vst [vmem:[#allocation4] sm:$0xff] 0.0
        %2801 = vst [vmem:[#allocation4 + $0x8] sm:$0xff] 0.0
        %vm2802 = vcmask 15360
        %2803 = vst.msk [vmem:[#allocation4 + $0x10] sm:$0xff] %vm2802, 0.0
        %2804 = vst [vmem:[#allocation4 + $0x18] sm:$0xff] 0.0
        %2805 = vst [vmem:[#allocation4 + $0x20] sm:$0xff] 0.0
        %2806 = vst.msk [vmem:[#allocation4 + $0x28] sm:$0xff] %vm2802, 0.0
        %2807 = vst [vmem:[#allocation4 + $0x30] sm:$0xff] 0.0
        %2808 = vst [vmem:[#allocation4 + $0x38] sm:$0xff] 0.0
        %2809 = vst.msk [vmem:[#allocation4 + $0x40] sm:$0xff] %vm2802, 0.0
        %2810 = vst [vmem:[#allocation4 + $0x48] sm:$0xff] 0.0
        %2811 = vst [vmem:[#allocation4 + $0x50] sm:$0xff] 0.0
        %2812 = vst.msk [vmem:[#allocation4 + $0x58] sm:$0xff] %vm2802, 0.0
        %2813 = vst [vmem:[#allocation4 + $0x60] sm:$0xff] 0.0
        %2814 = vst [vmem:[#allocation4 + $0x68] sm:$0xff] 0.0
        %2815 = vst.msk [vmem:[#allocation4 + $0x70] sm:$0xff] %vm2802, 0.0
        %2816 = vst [vmem:[#allocation4 + $0x78] sm:$0xff] 0.0
        %2817 = vst [vmem:[#allocation4 + $0x80] sm:$0xff] 0.0
        %2818 = vst.msk [vmem:[#allocation4 + $0x88] sm:$0xff] %vm2802, 0.0
        %2819 = vst [vmem:[#allocation4 + $0x90] sm:$0x3] 0.0
        %2820 = vst [vmem:[#allocation4 + $0x98] sm:$0x3] 0.0
        %vm2821 = vcmask 9216
        %2822 = vst.msk [vmem:[#allocation4 + $0xa0] sm:$0x3] %vm2821, 0.0
        %v2825 = vrot.slane %v2730, 6
        %v2826 = vrot.slane %v2731, 6
        %2827 = vrot.lane.b32.xlu0 %v2825, 2
        %v2828 = vpop.permute.xlu0 %2827
        %2829 = vrot.lane.b32.xlu0 %v2826, 2
        %v2830 = vpop.permute.xlu0 %2829
        %v2831 = vsel %vm2802, %v2828, %v2830
        %vm2834 = vcmask 1047570
        %2835 = vst.msk [vmem:[#allocation4] sm:$0xfc] %vm2834, %v2828
        %2836 = vst [vmem:[#allocation4 + $0x8] sm:$0xfc] %v2831
        %v2839 = vrot.slane %v2747, 4
        %v2840 = vrot.slane %v2748, 4
        %2841 = vrot.lane.b32.xlu0 %v2839, 2
        %v2842 = vpop.permute.xlu0 %2841
        %2843 = vrot.lane.b32.xlu0 %v2840, 2
        %v2844 = vpop.permute.xlu0 %2843
        %v2845 = vsel %vm2802, %v2842, %v2844
        %vm2848 = vcmask 1047572
        %2849 = vst.msk [vmem:[#allocation4 + $0x18] sm:$0xf0] %vm2848, %v2842
        %2850 = vst [vmem:[#allocation4 + $0x20] sm:$0xf0] %v2845
        %vm2851 = vcmask 1041424
        %2852 = vst.msk [vmem:[#allocation4 + $0x30] sm:$0x3] %vm2851, %v2842
        %2853 = vst [vmem:[#allocation4 + $0x38] sm:$0x3] %v2845
        %v2856 = vrot.slane %v2764, 2
        %v2857 = vrot.slane %v2765, 2
        %2858 = vrot.lane.b32.xlu0 %v2856, 2
        %v2859 = vpop.permute.xlu0 %2858
        %2860 = vrot.lane.b32.xlu0 %v2857, 2
        %v2861 = vpop.permute.xlu0 %2860
        %v2862 = vsel %vm2802, %v2859, %v2861
        %vm2865 = vcmask 1047574
        %2866 = vst.msk [vmem:[#allocation4 + $0x30] sm:$0xc0] %vm2865, %v2859
        %2867 = vst [vmem:[#allocation4 + $0x38] sm:$0xc0] %v2862
        %vm2868 = vcmask 1043472
        %2869 = vst.msk [vmem:[#allocation4 + $0x48] sm:$0xf] %vm2868, %v2859
        %2870 = vst [vmem:[#allocation4 + $0x50] sm:$0xf] %v2862
        %2873 = vrot.lane.b32.xlu0 %v2781, 2
        %v2874 = vpop.permute.xlu0 %2873
        %2875 = vrot.lane.b32.xlu0 %v2782, 2
        %v2876 = vpop.permute.xlu0 %2875
        %v2877 = vsel %vm2802, %v2874, %v2876
        %vm2880 = vcmask 1045520
        %2881 = vst.msk [vmem:[#allocation4 + $0x60] sm:$0x3f] %vm2880, %v2874
        %2882 = vst [vmem:[#allocation4 + $0x68] sm:$0x3f] %v2877
        %v2885 = vrot.slane %v2798, 6
        %v2886 = vrot.slane %v2799, 6
        %2887 = vrot.lane.b32.xlu0 %v2885, 2
        %v2888 = vpop.permute.xlu0 %2887
        %2889 = vrot.lane.b32.xlu0 %v2886, 2
        %v2890 = vpop.permute.xlu0 %2889
        %v2891 = vsel %vm2802, %v2888, %v2890
        %2894 = vst.msk [vmem:[#allocation4 + $0x78] sm:$0xfc] %vm2834, %v2888
        %2895 = vst [vmem:[#allocation4 + $0x80] sm:$0xfc] %v2891
        %v2896 = vld [vmem:[#allocation4] sm:$0xff]
        %v2897 = vld [vmem:[#allocation4 + $0x8] sm:$0xff]
        %s2898 = sld [smem:[#allocation12]]
        %v2899 = vstv %s2898
        %v2900 = vmul.f32 %v2896, %v2899
        %v2901 = vmul.f32 %v2897, %v2899
        %v2902 = vadd.f32 %v2900, 0.0
        %v2903 = vadd.f32 %v2901, 0.0
        %s2904 = sld [smem:[#allocation12 + $0x2d]]
        %v2905 = vstv %s2904
        %v2906 = vmul.f32 %v2896, %v2905
        %v2907 = vmul.f32 %v2897, %v2905
        %v2908 = vadd.f32 %v2906, 0.0
        %v2909 = vadd.f32 %v2907, 0.0
        %s2910 = sld [smem:[#allocation12 + $0x5a]]
        %v2911 = vstv %s2910
        %v2912 = vmul.f32 %v2896, %v2911
        %v2913 = vmul.f32 %v2897, %v2911
        %v2914 = vadd.f32 %v2912, 0.0
        %v2915 = vadd.f32 %v2913, 0.0
        %s2916 = sld [smem:[#allocation12 + $0x87]]
        %v2917 = vstv %s2916
        %v2918 = vmul.f32 %v2896, %v2917
        %v2919 = vmul.f32 %v2897, %v2917
        %v2920 = vadd.f32 %v2918, 0.0
        %v2921 = vadd.f32 %v2919, 0.0
        %v2922 = vld [vmem:[#allocation4] sm:$0xff]
        %v2923 = vld [vmem:[#allocation4 + $0x8] sm:$0xff]
        %v2924 = vld [vmem:[#allocation4 + $0x10] sm:$0xff]
        %s2925 = sld [smem:[#allocation12 + $0x1]]
        %v2926 = vstv %s2925
        %v2927 = vmul.f32 %v2922, %v2926
        %v2928 = vmul.f32 %v2923, %v2926
        %v2929 = vmul.f32 %v2924, %v2926
        %2933 = vrot.lane.b32.xlu0 %v2927, 127
        %v2934 = vpop.permute.xlu0 %2933
        %2935 = vrot.lane.b32.xlu0 %v2928, 127
        %v2936 = vpop.permute.xlu0 %2935
        %2937 = vrot.lane.b32.xlu0 %v2929, 127
        %v2938 = vpop.permute.xlu0 %2937
        %v2939 = vsel %vm902, %v2934, %v2936
        %v2940 = vsel %vm902, %v2936, %v2938
        %v2943 = vadd.f32 %v2902, %v2939
        %v2944 = vadd.f32 %v2903, %v2940
        %s2945 = sld [smem:[#allocation12 + $0x2e]]
        %v2946 = vstv %s2945
        %v2947 = vmul.f32 %v2922, %v2946
        %v2948 = vmul.f32 %v2923, %v2946
        %v2949 = vmul.f32 %v2924, %v2946
        %2953 = vrot.lane.b32.xlu0 %v2947, 127
        %v2954 = vpop.permute.xlu0 %2953
        %2955 = vrot.lane.b32.xlu0 %v2948, 127
        %v2956 = vpop.permute.xlu0 %2955
        %2957 = vrot.lane.b32.xlu0 %v2949, 127
        %v2958 = vpop.permute.xlu0 %2957
        %v2959 = vsel %vm902, %v2954, %v2956
        %v2960 = vsel %vm902, %v2956, %v2958
        %v2963 = vadd.f32 %v2908, %v2959
        %v2964 = vadd.f32 %v2909, %v2960
        %s2965 = sld [smem:[#allocation12 + $0x5b]]
        %v2966 = vstv %s2965
        %v2967 = vmul.f32 %v2922, %v2966
        %v2968 = vmul.f32 %v2923, %v2966
        %v2969 = vmul.f32 %v2924, %v2966
        %2973 = vrot.lane.b32.xlu0 %v2967, 127
        %v2974 = vpop.permute.xlu0 %2973
        %2975 = vrot.lane.b32.xlu0 %v2968, 127
        %v2976 = vpop.permute.xlu0 %2975
        %2977 = vrot.lane.b32.xlu0 %v2969, 127
        %v2978 = vpop.permute.xlu0 %2977
        %v2979 = vsel %vm902, %v2974, %v2976
        %v2980 = vsel %vm902, %v2976, %v2978
        %v2983 = vadd.f32 %v2914, %v2979
        %v2984 = vadd.f32 %v2915, %v2980
        %s2985 = sld [smem:[#allocation12 + $0x88]]
        %v2986 = vstv %s2985
        %v2987 = vmul.f32 %v2922, %v2986
        %v2988 = vmul.f32 %v2923, %v2986
        %v2989 = vmul.f32 %v2924, %v2986
        %2993 = vrot.lane.b32.xlu0 %v2987, 127
        %v2994 = vpop.permute.xlu0 %2993
        %2995 = vrot.lane.b32.xlu0 %v2988, 127
        %v2996 = vpop.permute.xlu0 %2995
        %2997 = vrot.lane.b32.xlu0 %v2989, 127
        %v2998 = vpop.permute.xlu0 %2997
        %v2999 = vsel %vm902, %v2994, %v2996
        %v3000 = vsel %vm902, %v2996, %v2998
        %v3003 = vadd.f32 %v2920, %v2999
        %v3004 = vadd.f32 %v2921, %v3000
        %s3005 = sld [smem:[#allocation12 + $0x2]]
        %v3006 = vstv %s3005
        %v3007 = vmul.f32 %v2922, %v3006
        %v3008 = vmul.f32 %v2923, %v3006
        %v3009 = vmul.f32 %v2924, %v3006
        %3013 = vrot.lane.b32.xlu0 %v3007, 126
        %v3014 = vpop.permute.xlu0 %3013
        %3015 = vrot.lane.b32.xlu0 %v3008, 126
        %v3016 = vpop.permute.xlu0 %3015
        %3017 = vrot.lane.b32.xlu0 %v3009, 126
        %v3018 = vpop.permute.xlu0 %3017
        %v3019 = vsel %vm978, %v3014, %v3016
        %v3020 = vsel %vm978, %v3016, %v3018
        %v3023 = vadd.f32 %v2943, %v3019
        %v3024 = vadd.f32 %v2944, %v3020
        %s3025 = sld [smem:[#allocation12 + $0x2f]]
        %v3026 = vstv %s3025
        %v3027 = vmul.f32 %v2922, %v3026
        %v3028 = vmul.f32 %v2923, %v3026
        %v3029 = vmul.f32 %v2924, %v3026
        %3033 = vrot.lane.b32.xlu0 %v3027, 126
        %v3034 = vpop.permute.xlu0 %3033
        %3035 = vrot.lane.b32.xlu0 %v3028, 126
        %v3036 = vpop.permute.xlu0 %3035
        %3037 = vrot.lane.b32.xlu0 %v3029, 126
        %v3038 = vpop.permute.xlu0 %3037
        %v3039 = vsel %vm978, %v3034, %v3036
        %v3040 = vsel %vm978, %v3036, %v3038
        %v3043 = vadd.f32 %v2963, %v3039
        %v3044 = vadd.f32 %v2964, %v3040
        %s3045 = sld [smem:[#allocation12 + $0x5c]]
        %v3046 = vstv %s3045
        %v3047 = vmul.f32 %v2922, %v3046
        %v3048 = vmul.f32 %v2923, %v3046
        %v3049 = vmul.f32 %v2924, %v3046
        %3053 = vrot.lane.b32.xlu0 %v3047, 126
        %v3054 = vpop.permute.xlu0 %3053
        %3055 = vrot.lane.b32.xlu0 %v3048, 126
        %v3056 = vpop.permute.xlu0 %3055
        %3057 = vrot.lane.b32.xlu0 %v3049, 126
        %v3058 = vpop.permute.xlu0 %3057
        %v3059 = vsel %vm978, %v3054, %v3056
        %v3060 = vsel %vm978, %v3056, %v3058
        %v3063 = vadd.f32 %v2983, %v3059
        %v3064 = vadd.f32 %v2984, %v3060
        %s3065 = sld [smem:[#allocation12 + $0x89]]
        %v3066 = vstv %s3065
        %v3067 = vmul.f32 %v2922, %v3066
        %v3068 = vmul.f32 %v2923, %v3066
        %v3069 = vmul.f32 %v2924, %v3066
        %3073 = vrot.lane.b32.xlu0 %v3067, 126
        %v3074 = vpop.permute.xlu0 %3073
        %3075 = vrot.lane.b32.xlu0 %v3068, 126
        %v3076 = vpop.permute.xlu0 %3075
        %3077 = vrot.lane.b32.xlu0 %v3069, 126
        %v3078 = vpop.permute.xlu0 %3077
        %v3079 = vsel %vm978, %v3074, %v3076
        %v3080 = vsel %vm978, %v3076, %v3078
        %v3083 = vadd.f32 %v3003, %v3079
        %v3084 = vadd.f32 %v3004, %v3080
        %v3085 = vld [vmem:[#allocation4] sm:$0xfe]
        %v3086 = vld [vmem:[#allocation4 + $0x8] sm:$0xfe]
        %v3087 = vld [vmem:[#allocation4 + $0x18] sm:$0x1]
        %v3088 = vld [vmem:[#allocation4 + $0x20] sm:$0x1]
        %s3089 = sld [smem:[#allocation12 + $0x3]]
        %v3090 = vstv %s3089
        %v3091 = vmul.f32 %v3085, %v3090
        %v3092 = vmul.f32 %v3086, %v3090
        %v3093 = vmul.f32 %v3087, %v3090
        %v3094 = vmul.f32 %v3088, %v3090
        %vm3099 = vcmask 1046528
        %v3100 = vrot.slane %v3091, 1
        %v3101 = vrot.slane %v3093, 1
        %v3102 = vsel %vm3099, %v3100, %v3101
        %v3103 = vrot.slane %v3092, 1
        %v3104 = vrot.slane %v3094, 1
        %v3105 = vsel %vm3099, %v3103, %v3104
        %v3108 = vadd.f32 %v3023, %v3102
        %v3109 = vadd.f32 %v3024, %v3105
        %s3110 = sld [smem:[#allocation12 + $0x30]]
        %v3111 = vstv %s3110
        %v3112 = vmul.f32 %v3085, %v3111
        %v3113 = vmul.f32 %v3086, %v3111
        %v3114 = vmul.f32 %v3087, %v3111
        %v3115 = vmul.f32 %v3088, %v3111
        %v3120 = vrot.slane %v3112, 1
        %v3121 = vrot.slane %v3114, 1
        %v3122 = vsel %vm3099, %v3120, %v3121
        %v3123 = vrot.slane %v3113, 1
        %v3124 = vrot.slane %v3115, 1
        %v3125 = vsel %vm3099, %v3123, %v3124
        %v3128 = vadd.f32 %v3043, %v3122
        %v3129 = vadd.f32 %v3044, %v3125
        %s3130 = sld [smem:[#allocation12 + $0x5d]]
        %v3131 = vstv %s3130
        %v3132 = vmul.f32 %v3085, %v3131
        %v3133 = vmul.f32 %v3086, %v3131
        %v3134 = vmul.f32 %v3087, %v3131
        %v3135 = vmul.f32 %v3088, %v3131
        %v3140 = vrot.slane %v3132, 1
        %v3141 = vrot.slane %v3134, 1
        %v3142 = vsel %vm3099, %v3140, %v3141
        %v3143 = vrot.slane %v3133, 1
        %v3144 = vrot.slane %v3135, 1
        %v3145 = vsel %vm3099, %v3143, %v3144
        %v3148 = vadd.f32 %v3063, %v3142
        %v3149 = vadd.f32 %v3064, %v3145
        %s3150 = sld [smem:[#allocation12 + $0x8a]]
        %v3151 = vstv %s3150
        %v3152 = vmul.f32 %v3085, %v3151
        %v3153 = vmul.f32 %v3086, %v3151
        %v3154 = vmul.f32 %v3087, %v3151
        %v3155 = vmul.f32 %v3088, %v3151
        %v3160 = vrot.slane %v3152, 1
        %v3161 = vrot.slane %v3154, 1
        %v3162 = vsel %vm3099, %v3160, %v3161
        %v3163 = vrot.slane %v3153, 1
        %v3164 = vrot.slane %v3155, 1
        %v3165 = vsel %vm3099, %v3163, %v3164
        %v3168 = vadd.f32 %v3083, %v3162
        %v3169 = vadd.f32 %v3084, %v3165
        %v3170 = vld [vmem:[#allocation4] sm:$0xfe]
        %v3171 = vld [vmem:[#allocation4 + $0x8] sm:$0xfe]
        %v3172 = vld [vmem:[#allocation4 + $0x10] sm:$0xfe]
        %v3173 = vld [vmem:[#allocation4 + $0x18] sm:$0x1]
        %v3174 = vld [vmem:[#allocation4 + $0x20] sm:$0x1]
        %v3175 = vld [vmem:[#allocation4 + $0x28] sm:$0x1]
        %s3176 = sld [smem:[#allocation12 + $0x4]]
        %v3177 = vstv %s3176
        %v3178 = vmul.f32 %v3170, %v3177
        %v3179 = vmul.f32 %v3171, %v3177
        %v3180 = vmul.f32 %v3172, %v3177
        %v3181 = vmul.f32 %v3173, %v3177
        %v3182 = vmul.f32 %v3174, %v3177
        %v3183 = vmul.f32 %v3175, %v3177
        %v3190 = vrot.slane %v3178, 1
        %v3191 = vrot.slane %v3181, 1
        %v3192 = vsel %vm3099, %v3190, %v3191
        %v3193 = vrot.slane %v3179, 1
        %v3194 = vrot.slane %v3182, 1
        %v3195 = vsel %vm3099, %v3193, %v3194
        %v3196 = vrot.slane %v3180, 1
        %v3197 = vrot.slane %v3183, 1
        %v3198 = vsel %vm3099, %v3196, %v3197
        %3199 = vrot.lane.b32.xlu0 %v3192, 127
        %v3200 = vpop.permute.xlu0 %3199
        %3201 = vrot.lane.b32.xlu0 %v3195, 127
        %v3202 = vpop.permute.xlu0 %3201
        %3203 = vrot.lane.b32.xlu0 %v3198, 127
        %v3204 = vpop.permute.xlu0 %3203
        %v3205 = vsel %vm902, %v3200, %v3202
        %v3206 = vsel %vm902, %v3202, %v3204
        %v3209 = vadd.f32 %v3108, %v3205
        %v3210 = vadd.f32 %v3109, %v3206
        %s3211 = sld [smem:[#allocation12 + $0x31]]
        %v3212 = vstv %s3211
        %v3213 = vmul.f32 %v3170, %v3212
        %v3214 = vmul.f32 %v3171, %v3212
        %v3215 = vmul.f32 %v3172, %v3212
        %v3216 = vmul.f32 %v3173, %v3212
        %v3217 = vmul.f32 %v3174, %v3212
        %v3218 = vmul.f32 %v3175, %v3212
        %v3225 = vrot.slane %v3213, 1
        %v3226 = vrot.slane %v3216, 1
        %v3227 = vsel %vm3099, %v3225, %v3226
        %v3228 = vrot.slane %v3214, 1
        %v3229 = vrot.slane %v3217, 1
        %v3230 = vsel %vm3099, %v3228, %v3229
        %v3231 = vrot.slane %v3215, 1
        %v3232 = vrot.slane %v3218, 1
        %v3233 = vsel %vm3099, %v3231, %v3232
        %3234 = vrot.lane.b32.xlu0 %v3227, 127
        %v3235 = vpop.permute.xlu0 %3234
        %3236 = vrot.lane.b32.xlu0 %v3230, 127
        %v3237 = vpop.permute.xlu0 %3236
        %3238 = vrot.lane.b32.xlu0 %v3233, 127
        %v3239 = vpop.permute.xlu0 %3238
        %v3240 = vsel %vm902, %v3235, %v3237
        %v3241 = vsel %vm902, %v3237, %v3239
        %v3244 = vadd.f32 %v3128, %v3240
        %v3245 = vadd.f32 %v3129, %v3241
        %s3246 = sld [smem:[#allocation12 + $0x5e]]
        %v3247 = vstv %s3246
        %v3248 = vmul.f32 %v3170, %v3247
        %v3249 = vmul.f32 %v3171, %v3247
        %v3250 = vmul.f32 %v3172, %v3247
        %v3251 = vmul.f32 %v3173, %v3247
        %v3252 = vmul.f32 %v3174, %v3247
        %v3253 = vmul.f32 %v3175, %v3247
        %v3260 = vrot.slane %v3248, 1
        %v3261 = vrot.slane %v3251, 1
        %v3262 = vsel %vm3099, %v3260, %v3261
        %v3263 = vrot.slane %v3249, 1
        %v3264 = vrot.slane %v3252, 1
        %v3265 = vsel %vm3099, %v3263, %v3264
        %v3266 = vrot.slane %v3250, 1
        %v3267 = vrot.slane %v3253, 1
        %v3268 = vsel %vm3099, %v3266, %v3267
        %3269 = vrot.lane.b32.xlu0 %v3262, 127
        %v3270 = vpop.permute.xlu0 %3269
        %3271 = vrot.lane.b32.xlu0 %v3265, 127
        %v3272 = vpop.permute.xlu0 %3271
        %3273 = vrot.lane.b32.xlu0 %v3268, 127
        %v3274 = vpop.permute.xlu0 %3273
        %v3275 = vsel %vm902, %v3270, %v3272
        %v3276 = vsel %vm902, %v3272, %v3274
        %v3279 = vadd.f32 %v3148, %v3275
        %v3280 = vadd.f32 %v3149, %v3276
        %s3281 = sld [smem:[#allocation12 + $0x8b]]
        %v3282 = vstv %s3281
        %v3283 = vmul.f32 %v3170, %v3282
        %v3284 = vmul.f32 %v3171, %v3282
        %v3285 = vmul.f32 %v3172, %v3282
        %v3286 = vmul.f32 %v3173, %v3282
        %v3287 = vmul.f32 %v3174, %v3282
        %v3288 = vmul.f32 %v3175, %v3282
        %v3295 = vrot.slane %v3283, 1
        %v3296 = vrot.slane %v3286, 1
        %v3297 = vsel %vm3099, %v3295, %v3296
        %v3298 = vrot.slane %v3284, 1
        %v3299 = vrot.slane %v3287, 1
        %v3300 = vsel %vm3099, %v3298, %v3299
        %v3301 = vrot.slane %v3285, 1
        %v3302 = vrot.slane %v3288, 1
        %v3303 = vsel %vm3099, %v3301, %v3302
        %3304 = vrot.lane.b32.xlu0 %v3297, 127
        %v3305 = vpop.permute.xlu0 %3304
        %3306 = vrot.lane.b32.xlu0 %v3300, 127
        %v3307 = vpop.permute.xlu0 %3306
        %3308 = vrot.lane.b32.xlu0 %v3303, 127
        %v3309 = vpop.permute.xlu0 %3308
        %v3310 = vsel %vm902, %v3305, %v3307
        %v3311 = vsel %vm902, %v3307, %v3309
        %v3314 = vadd.f32 %v3168, %v3310
        %v3315 = vadd.f32 %v3169, %v3311
        %s3316 = sld [smem:[#allocation12 + $0x5]]
        %v3317 = vstv %s3316
        %v3318 = vmul.f32 %v3170, %v3317
        %v3319 = vmul.f32 %v3171, %v3317
        %v3320 = vmul.f32 %v3172, %v3317
        %v3321 = vmul.f32 %v3173, %v3317
        %v3322 = vmul.f32 %v3174, %v3317
        %v3323 = vmul.f32 %v3175, %v3317
        %v3330 = vrot.slane %v3318, 1
        %v3331 = vrot.slane %v3321, 1
        %v3332 = vsel %vm3099, %v3330, %v3331
        %v3333 = vrot.slane %v3319, 1
        %v3334 = vrot.slane %v3322, 1
        %v3335 = vsel %vm3099, %v3333, %v3334
        %v3336 = vrot.slane %v3320, 1
        %v3337 = vrot.slane %v3323, 1
        %v3338 = vsel %vm3099, %v3336, %v3337
        %3339 = vrot.lane.b32.xlu0 %v3332, 126
        %v3340 = vpop.permute.xlu0 %3339
        %3341 = vrot.lane.b32.xlu0 %v3335, 126
        %v3342 = vpop.permute.xlu0 %3341
        %3343 = vrot.lane.b32.xlu0 %v3338, 126
        %v3344 = vpop.permute.xlu0 %3343
        %v3345 = vsel %vm978, %v3340, %v3342
        %v3346 = vsel %vm978, %v3342, %v3344
        %v3349 = vadd.f32 %v3209, %v3345
        %v3350 = vadd.f32 %v3210, %v3346
        %s3351 = sld [smem:[#allocation12 + $0x32]]
        %v3352 = vstv %s3351
        %v3353 = vmul.f32 %v3170, %v3352
        %v3354 = vmul.f32 %v3171, %v3352
        %v3355 = vmul.f32 %v3172, %v3352
        %v3356 = vmul.f32 %v3173, %v3352
        %v3357 = vmul.f32 %v3174, %v3352
        %v3358 = vmul.f32 %v3175, %v3352
        %v3365 = vrot.slane %v3353, 1
        %v3366 = vrot.slane %v3356, 1
        %v3367 = vsel %vm3099, %v3365, %v3366
        %v3368 = vrot.slane %v3354, 1
        %v3369 = vrot.slane %v3357, 1
        %v3370 = vsel %vm3099, %v3368, %v3369
        %v3371 = vrot.slane %v3355, 1
        %v3372 = vrot.slane %v3358, 1
        %v3373 = vsel %vm3099, %v3371, %v3372
        %3374 = vrot.lane.b32.xlu0 %v3367, 126
        %v3375 = vpop.permute.xlu0 %3374
        %3376 = vrot.lane.b32.xlu0 %v3370, 126
        %v3377 = vpop.permute.xlu0 %3376
        %3378 = vrot.lane.b32.xlu0 %v3373, 126
        %v3379 = vpop.permute.xlu0 %3378
        %v3380 = vsel %vm978, %v3375, %v3377
        %v3381 = vsel %vm978, %v3377, %v3379
        %v3384 = vadd.f32 %v3244, %v3380
        %v3385 = vadd.f32 %v3245, %v3381
        %s3386 = sld [smem:[#allocation12 + $0x5f]]
        %v3387 = vstv %s3386
        %v3388 = vmul.f32 %v3170, %v3387
        %v3389 = vmul.f32 %v3171, %v3387
        %v3390 = vmul.f32 %v3172, %v3387
        %v3391 = vmul.f32 %v3173, %v3387
        %v3392 = vmul.f32 %v3174, %v3387
        %v3393 = vmul.f32 %v3175, %v3387
        %v3400 = vrot.slane %v3388, 1
        %v3401 = vrot.slane %v3391, 1
        %v3402 = vsel %vm3099, %v3400, %v3401
        %v3403 = vrot.slane %v3389, 1
        %v3404 = vrot.slane %v3392, 1
        %v3405 = vsel %vm3099, %v3403, %v3404
        %v3406 = vrot.slane %v3390, 1
        %v3407 = vrot.slane %v3393, 1
        %v3408 = vsel %vm3099, %v3406, %v3407
        %3409 = vrot.lane.b32.xlu0 %v3402, 126
        %v3410 = vpop.permute.xlu0 %3409
        %3411 = vrot.lane.b32.xlu0 %v3405, 126
        %v3412 = vpop.permute.xlu0 %3411
        %3413 = vrot.lane.b32.xlu0 %v3408, 126
        %v3414 = vpop.permute.xlu0 %3413
        %v3415 = vsel %vm978, %v3410, %v3412
        %v3416 = vsel %vm978, %v3412, %v3414
        %v3419 = vadd.f32 %v3279, %v3415
        %v3420 = vadd.f32 %v3280, %v3416
        %s3421 = sld [smem:[#allocation12 + $0x8c]]
        %v3422 = vstv %s3421
        %v3423 = vmul.f32 %v3170, %v3422
        %v3424 = vmul.f32 %v3171, %v3422
        %v3425 = vmul.f32 %v3172, %v3422
        %v3426 = vmul.f32 %v3173, %v3422
        %v3427 = vmul.f32 %v3174, %v3422
        %v3428 = vmul.f32 %v3175, %v3422
        %v3435 = vrot.slane %v3423, 1
        %v3436 = vrot.slane %v3426, 1
        %v3437 = vsel %vm3099, %v3435, %v3436
        %v3438 = vrot.slane %v3424, 1
        %v3439 = vrot.slane %v3427, 1
        %v3440 = vsel %vm3099, %v3438, %v3439
        %v3441 = vrot.slane %v3425, 1
        %v3442 = vrot.slane %v3428, 1
        %v3443 = vsel %vm3099, %v3441, %v3442
        %3444 = vrot.lane.b32.xlu0 %v3437, 126
        %v3445 = vpop.permute.xlu0 %3444
        %3446 = vrot.lane.b32.xlu0 %v3440, 126
        %v3447 = vpop.permute.xlu0 %3446
        %3448 = vrot.lane.b32.xlu0 %v3443, 126
        %v3449 = vpop.permute.xlu0 %3448
        %v3450 = vsel %vm978, %v3445, %v3447
        %v3451 = vsel %vm978, %v3447, %v3449
        %v3454 = vadd.f32 %v3314, %v3450
        %v3455 = vadd.f32 %v3315, %v3451
        %v3456 = vld [vmem:[#allocation4] sm:$0xfc]
        %v3457 = vld [vmem:[#allocation4 + $0x8] sm:$0xfc]
        %v3458 = vld [vmem:[#allocation4 + $0x18] sm:$0x3]
        %v3459 = vld [vmem:[#allocation4 + $0x20] sm:$0x3]
        %s3460 = sld [smem:[#allocation12 + $0x6]]
        %v3461 = vstv %s3460
        %v3462 = vmul.f32 %v3456, %v3461
        %v3463 = vmul.f32 %v3457, %v3461
        %v3464 = vmul.f32 %v3458, %v3461
        %v3465 = vmul.f32 %v3459, %v3461
        %vm3470 = vcmask 1045504
        %v3471 = vrot.slane %v3462, 2
        %v3472 = vrot.slane %v3464, 2
        %v3473 = vsel %vm3470, %v3471, %v3472
        %v3474 = vrot.slane %v3463, 2
        %v3475 = vrot.slane %v3465, 2
        %v3476 = vsel %vm3470, %v3474, %v3475
        %v3479 = vadd.f32 %v3349, %v3473
        %v3480 = vadd.f32 %v3350, %v3476
        %s3481 = sld [smem:[#allocation12 + $0x33]]
        %v3482 = vstv %s3481
        %v3483 = vmul.f32 %v3456, %v3482
        %v3484 = vmul.f32 %v3457, %v3482
        %v3485 = vmul.f32 %v3458, %v3482
        %v3486 = vmul.f32 %v3459, %v3482
        %v3491 = vrot.slane %v3483, 2
        %v3492 = vrot.slane %v3485, 2
        %v3493 = vsel %vm3470, %v3491, %v3492
        %v3494 = vrot.slane %v3484, 2
        %v3495 = vrot.slane %v3486, 2
        %v3496 = vsel %vm3470, %v3494, %v3495
        %v3499 = vadd.f32 %v3384, %v3493
        %v3500 = vadd.f32 %v3385, %v3496
        %s3501 = sld [smem:[#allocation12 + $0x60]]
        %v3502 = vstv %s3501
        %v3503 = vmul.f32 %v3456, %v3502
        %v3504 = vmul.f32 %v3457, %v3502
        %v3505 = vmul.f32 %v3458, %v3502
        %v3506 = vmul.f32 %v3459, %v3502
        %v3511 = vrot.slane %v3503, 2
        %v3512 = vrot.slane %v3505, 2
        %v3513 = vsel %vm3470, %v3511, %v3512
        %v3514 = vrot.slane %v3504, 2
        %v3515 = vrot.slane %v3506, 2
        %v3516 = vsel %vm3470, %v3514, %v3515
        %v3519 = vadd.f32 %v3419, %v3513
        %v3520 = vadd.f32 %v3420, %v3516
        %s3521 = sld [smem:[#allocation12 + $0x8d]]
        %v3522 = vstv %s3521
        %v3523 = vmul.f32 %v3456, %v3522
        %v3524 = vmul.f32 %v3457, %v3522
        %v3525 = vmul.f32 %v3458, %v3522
        %v3526 = vmul.f32 %v3459, %v3522
        %v3531 = vrot.slane %v3523, 2
        %v3532 = vrot.slane %v3525, 2
        %v3533 = vsel %vm3470, %v3531, %v3532
        %v3534 = vrot.slane %v3524, 2
        %v3535 = vrot.slane %v3526, 2
        %v3536 = vsel %vm3470, %v3534, %v3535
        %v3539 = vadd.f32 %v3454, %v3533
        %v3540 = vadd.f32 %v3455, %v3536
        %v3541 = vld [vmem:[#allocation4] sm:$0xfc]
        %v3542 = vld [vmem:[#allocation4 + $0x8] sm:$0xfc]
        %v3543 = vld [vmem:[#allocation4 + $0x10] sm:$0xfc]
        %v3544 = vld [vmem:[#allocation4 + $0x18] sm:$0x3]
        %v3545 = vld [vmem:[#allocation4 + $0x20] sm:$0x3]
        %v3546 = vld [vmem:[#allocation4 + $0x28] sm:$0x3]
        %s3547 = sld [smem:[#allocation12 + $0x7]]
        %v3548 = vstv %s3547
        %v3549 = vmul.f32 %v3541, %v3548
        %v3550 = vmul.f32 %v3542, %v3548
        %v3551 = vmul.f32 %v3543, %v3548
        %v3552 = vmul.f32 %v3544, %v3548
        %v3553 = vmul.f32 %v3545, %v3548
        %v3554 = vmul.f32 %v3546, %v3548
        %v3561 = vrot.slane %v3549, 2
        %v3562 = vrot.slane %v3552, 2
        %v3563 = vsel %vm3470, %v3561, %v3562
        %v3564 = vrot.slane %v3550, 2
        %v3565 = vrot.slane %v3553, 2
        %v3566 = vsel %vm3470, %v3564, %v3565
        %v3567 = vrot.slane %v3551, 2
        %v3568 = vrot.slane %v3554, 2
        %v3569 = vsel %vm3470, %v3567, %v3568
        %3570 = vrot.lane.b32.xlu0 %v3563, 127
        %v3571 = vpop.permute.xlu0 %3570
        %3572 = vrot.lane.b32.xlu0 %v3566, 127
        %v3573 = vpop.permute.xlu0 %3572
        %3574 = vrot.lane.b32.xlu0 %v3569, 127
        %v3575 = vpop.permute.xlu0 %3574
        %v3576 = vsel %vm902, %v3571, %v3573
        %v3577 = vsel %vm902, %v3573, %v3575
        %v3580 = vadd.f32 %v3479, %v3576
        %v3581 = vadd.f32 %v3480, %v3577
        %s3582 = sld [smem:[#allocation12 + $0x34]]
        %v3583 = vstv %s3582
        %v3584 = vmul.f32 %v3541, %v3583
        %v3585 = vmul.f32 %v3542, %v3583
        %v3586 = vmul.f32 %v3543, %v3583
        %v3587 = vmul.f32 %v3544, %v3583
        %v3588 = vmul.f32 %v3545, %v3583
        %v3589 = vmul.f32 %v3546, %v3583
        %v3596 = vrot.slane %v3584, 2
        %v3597 = vrot.slane %v3587, 2
        %v3598 = vsel %vm3470, %v3596, %v3597
        %v3599 = vrot.slane %v3585, 2
        %v3600 = vrot.slane %v3588, 2
        %v3601 = vsel %vm3470, %v3599, %v3600
        %v3602 = vrot.slane %v3586, 2
        %v3603 = vrot.slane %v3589, 2
        %v3604 = vsel %vm3470, %v3602, %v3603
        %3605 = vrot.lane.b32.xlu0 %v3598, 127
        %v3606 = vpop.permute.xlu0 %3605
        %3607 = vrot.lane.b32.xlu0 %v3601, 127
        %v3608 = vpop.permute.xlu0 %3607
        %3609 = vrot.lane.b32.xlu0 %v3604, 127
        %v3610 = vpop.permute.xlu0 %3609
        %v3611 = vsel %vm902, %v3606, %v3608
        %v3612 = vsel %vm902, %v3608, %v3610
        %v3615 = vadd.f32 %v3499, %v3611
        %v3616 = vadd.f32 %v3500, %v3612
        %s3617 = sld [smem:[#allocation12 + $0x61]]
        %v3618 = vstv %s3617
        %v3619 = vmul.f32 %v3541, %v3618
        %v3620 = vmul.f32 %v3542, %v3618
        %v3621 = vmul.f32 %v3543, %v3618
        %v3622 = vmul.f32 %v3544, %v3618
        %v3623 = vmul.f32 %v3545, %v3618
        %v3624 = vmul.f32 %v3546, %v3618
        %v3631 = vrot.slane %v3619, 2
        %v3632 = vrot.slane %v3622, 2
        %v3633 = vsel %vm3470, %v3631, %v3632
        %v3634 = vrot.slane %v3620, 2
        %v3635 = vrot.slane %v3623, 2
        %v3636 = vsel %vm3470, %v3634, %v3635
        %v3637 = vrot.slane %v3621, 2
        %v3638 = vrot.slane %v3624, 2
        %v3639 = vsel %vm3470, %v3637, %v3638
        %3640 = vrot.lane.b32.xlu0 %v3633, 127
        %v3641 = vpop.permute.xlu0 %3640
        %3642 = vrot.lane.b32.xlu0 %v3636, 127
        %v3643 = vpop.permute.xlu0 %3642
        %3644 = vrot.lane.b32.xlu0 %v3639, 127
        %v3645 = vpop.permute.xlu0 %3644
        %v3646 = vsel %vm902, %v3641, %v3643
        %v3647 = vsel %vm902, %v3643, %v3645
        %v3650 = vadd.f32 %v3519, %v3646
        %v3651 = vadd.f32 %v3520, %v3647
        %s3652 = sld [smem:[#allocation12 + $0x8e]]
        %v3653 = vstv %s3652
        %v3654 = vmul.f32 %v3541, %v3653
        %v3655 = vmul.f32 %v3542, %v3653
        %v3656 = vmul.f32 %v3543, %v3653
        %v3657 = vmul.f32 %v3544, %v3653
        %v3658 = vmul.f32 %v3545, %v3653
        %v3659 = vmul.f32 %v3546, %v3653
        %v3666 = vrot.slane %v3654, 2
        %v3667 = vrot.slane %v3657, 2
        %v3668 = vsel %vm3470, %v3666, %v3667
        %v3669 = vrot.slane %v3655, 2
        %v3670 = vrot.slane %v3658, 2
        %v3671 = vsel %vm3470, %v3669, %v3670
        %v3672 = vrot.slane %v3656, 2
        %v3673 = vrot.slane %v3659, 2
        %v3674 = vsel %vm3470, %v3672, %v3673
        %3675 = vrot.lane.b32.xlu0 %v3668, 127
        %v3676 = vpop.permute.xlu0 %3675
        %3677 = vrot.lane.b32.xlu0 %v3671, 127
        %v3678 = vpop.permute.xlu0 %3677
        %3679 = vrot.lane.b32.xlu0 %v3674, 127
        %v3680 = vpop.permute.xlu0 %3679
        %v3681 = vsel %vm902, %v3676, %v3678
        %v3682 = vsel %vm902, %v3678, %v3680
        %v3685 = vadd.f32 %v3539, %v3681
        %v3686 = vadd.f32 %v3540, %v3682
        %s3687 = sld [smem:[#allocation12 + $0x8]]
        %v3688 = vstv %s3687
        %v3689 = vmul.f32 %v3541, %v3688
        %v3690 = vmul.f32 %v3542, %v3688
        %v3691 = vmul.f32 %v3543, %v3688
        %v3692 = vmul.f32 %v3544, %v3688
        %v3693 = vmul.f32 %v3545, %v3688
        %v3694 = vmul.f32 %v3546, %v3688
        %v3701 = vrot.slane %v3689, 2
        %v3702 = vrot.slane %v3692, 2
        %v3703 = vsel %vm3470, %v3701, %v3702
        %v3704 = vrot.slane %v3690, 2
        %v3705 = vrot.slane %v3693, 2
        %v3706 = vsel %vm3470, %v3704, %v3705
        %v3707 = vrot.slane %v3691, 2
        %v3708 = vrot.slane %v3694, 2
        %v3709 = vsel %vm3470, %v3707, %v3708
        %3710 = vrot.lane.b32.xlu0 %v3703, 126
        %v3711 = vpop.permute.xlu0 %3710
        %3712 = vrot.lane.b32.xlu0 %v3706, 126
        %v3713 = vpop.permute.xlu0 %3712
        %3714 = vrot.lane.b32.xlu0 %v3709, 126
        %v3715 = vpop.permute.xlu0 %3714
        %v3716 = vsel %vm978, %v3711, %v3713
        %v3717 = vsel %vm978, %v3713, %v3715
        %v3720 = vadd.f32 %v3580, %v3716
        %v3721 = vadd.f32 %v3581, %v3717
        %s3722 = sld [smem:[#allocation12 + $0x35]]
        %v3723 = vstv %s3722
        %v3724 = vmul.f32 %v3541, %v3723
        %v3725 = vmul.f32 %v3542, %v3723
        %v3726 = vmul.f32 %v3543, %v3723
        %v3727 = vmul.f32 %v3544, %v3723
        %v3728 = vmul.f32 %v3545, %v3723
        %v3729 = vmul.f32 %v3546, %v3723
        %v3736 = vrot.slane %v3724, 2
        %v3737 = vrot.slane %v3727, 2
        %v3738 = vsel %vm3470, %v3736, %v3737
        %v3739 = vrot.slane %v3725, 2
        %v3740 = vrot.slane %v3728, 2
        %v3741 = vsel %vm3470, %v3739, %v3740
        %v3742 = vrot.slane %v3726, 2
        %v3743 = vrot.slane %v3729, 2
        %v3744 = vsel %vm3470, %v3742, %v3743
        %3745 = vrot.lane.b32.xlu0 %v3738, 126
        %v3746 = vpop.permute.xlu0 %3745
        %3747 = vrot.lane.b32.xlu0 %v3741, 126
        %v3748 = vpop.permute.xlu0 %3747
        %3749 = vrot.lane.b32.xlu0 %v3744, 126
        %v3750 = vpop.permute.xlu0 %3749
        %v3751 = vsel %vm978, %v3746, %v3748
        %v3752 = vsel %vm978, %v3748, %v3750
        %v3755 = vadd.f32 %v3615, %v3751
        %v3756 = vadd.f32 %v3616, %v3752
        %s3757 = sld [smem:[#allocation12 + $0x62]]
        %v3758 = vstv %s3757
        %v3759 = vmul.f32 %v3541, %v3758
        %v3760 = vmul.f32 %v3542, %v3758
        %v3761 = vmul.f32 %v3543, %v3758
        %v3762 = vmul.f32 %v3544, %v3758
        %v3763 = vmul.f32 %v3545, %v3758
        %v3764 = vmul.f32 %v3546, %v3758
        %v3771 = vrot.slane %v3759, 2
        %v3772 = vrot.slane %v3762, 2
        %v3773 = vsel %vm3470, %v3771, %v3772
        %v3774 = vrot.slane %v3760, 2
        %v3775 = vrot.slane %v3763, 2
        %v3776 = vsel %vm3470, %v3774, %v3775
        %v3777 = vrot.slane %v3761, 2
        %v3778 = vrot.slane %v3764, 2
        %v3779 = vsel %vm3470, %v3777, %v3778
        %3780 = vrot.lane.b32.xlu0 %v3773, 126
        %v3781 = vpop.permute.xlu0 %3780
        %3782 = vrot.lane.b32.xlu0 %v3776, 126
        %v3783 = vpop.permute.xlu0 %3782
        %3784 = vrot.lane.b32.xlu0 %v3779, 126
        %v3785 = vpop.permute.xlu0 %3784
        %v3786 = vsel %vm978, %v3781, %v3783
        %v3787 = vsel %vm978, %v3783, %v3785
        %v3790 = vadd.f32 %v3650, %v3786
        %v3791 = vadd.f32 %v3651, %v3787
        %s3792 = sld [smem:[#allocation12 + $0x8f]]
        %v3793 = vstv %s3792
        %v3794 = vmul.f32 %v3541, %v3793
        %v3795 = vmul.f32 %v3542, %v3793
        %v3796 = vmul.f32 %v3543, %v3793
        %v3797 = vmul.f32 %v3544, %v3793
        %v3798 = vmul.f32 %v3545, %v3793
        %v3799 = vmul.f32 %v3546, %v3793
        %v3806 = vrot.slane %v3794, 2
        %v3807 = vrot.slane %v3797, 2
        %v3808 = vsel %vm3470, %v3806, %v3807
        %v3809 = vrot.slane %v3795, 2
        %v3810 = vrot.slane %v3798, 2
        %v3811 = vsel %vm3470, %v3809, %v3810
        %v3812 = vrot.slane %v3796, 2
        %v3813 = vrot.slane %v3799, 2
        %v3814 = vsel %vm3470, %v3812, %v3813
        %3815 = vrot.lane.b32.xlu0 %v3808, 126
        %v3816 = vpop.permute.xlu0 %3815
        %3817 = vrot.lane.b32.xlu0 %v3811, 126
        %v3818 = vpop.permute.xlu0 %3817
        %3819 = vrot.lane.b32.xlu0 %v3814, 126
        %v3820 = vpop.permute.xlu0 %3819
        %v3821 = vsel %vm978, %v3816, %v3818
        %v3822 = vsel %vm978, %v3818, %v3820
        %v3825 = vadd.f32 %v3685, %v3821
        %v3826 = vadd.f32 %v3686, %v3822
        %v3827 = vld [vmem:[#allocation4 + $0x18] sm:$0xfc]
        %v3828 = vld [vmem:[#allocation4 + $0x20] sm:$0xfc]
        %v3829 = vld [vmem:[#allocation4 + $0x30] sm:$0x3]
        %v3830 = vld [vmem:[#allocation4 + $0x38] sm:$0x3]
        %s3831 = sld [smem:[#allocation12 + $0x9]]
        %v3832 = vstv %s3831
        %v3833 = vmul.f32 %v3827, %v3832
        %v3834 = vmul.f32 %v3828, %v3832
        %v3835 = vmul.f32 %v3829, %v3832
        %v3836 = vmul.f32 %v3830, %v3832
        %v3841 = vrot.slane %v3833, 2
        %v3842 = vrot.slane %v3835, 2
        %v3843 = vsel %vm3470, %v3841, %v3842
        %v3844 = vrot.slane %v3834, 2
        %v3845 = vrot.slane %v3836, 2
        %v3846 = vsel %vm3470, %v3844, %v3845
        %v3849 = vadd.f32 %v3720, %v3843
        %v3850 = vadd.f32 %v3721, %v3846
        %s3851 = sld [smem:[#allocation12 + $0x36]]
        %v3852 = vstv %s3851
        %v3853 = vmul.f32 %v3827, %v3852
        %v3854 = vmul.f32 %v3828, %v3852
        %v3855 = vmul.f32 %v3829, %v3852
        %v3856 = vmul.f32 %v3830, %v3852
        %v3861 = vrot.slane %v3853, 2
        %v3862 = vrot.slane %v3855, 2
        %v3863 = vsel %vm3470, %v3861, %v3862
        %v3864 = vrot.slane %v3854, 2
        %v3865 = vrot.slane %v3856, 2
        %v3866 = vsel %vm3470, %v3864, %v3865
        %v3869 = vadd.f32 %v3755, %v3863
        %v3870 = vadd.f32 %v3756, %v3866
        %s3871 = sld [smem:[#allocation12 + $0x63]]
        %v3872 = vstv %s3871
        %v3873 = vmul.f32 %v3827, %v3872
        %v3874 = vmul.f32 %v3828, %v3872
        %v3875 = vmul.f32 %v3829, %v3872
        %v3876 = vmul.f32 %v3830, %v3872
        %v3881 = vrot.slane %v3873, 2
        %v3882 = vrot.slane %v3875, 2
        %v3883 = vsel %vm3470, %v3881, %v3882
        %v3884 = vrot.slane %v3874, 2
        %v3885 = vrot.slane %v3876, 2
        %v3886 = vsel %vm3470, %v3884, %v3885
        %v3889 = vadd.f32 %v3790, %v3883
        %v3890 = vadd.f32 %v3791, %v3886
        %s3891 = sld [smem:[#allocation12 + $0x90]]
        %v3892 = vstv %s3891
        %v3893 = vmul.f32 %v3827, %v3892
        %v3894 = vmul.f32 %v3828, %v3892
        %v3895 = vmul.f32 %v3829, %v3892
        %v3896 = vmul.f32 %v3830, %v3892
        %v3901 = vrot.slane %v3893, 2
        %v3902 = vrot.slane %v3895, 2
        %v3903 = vsel %vm3470, %v3901, %v3902
        %v3904 = vrot.slane %v3894, 2
        %v3905 = vrot.slane %v3896, 2
        %v3906 = vsel %vm3470, %v3904, %v3905
        %v3909 = vadd.f32 %v3825, %v3903
        %v3910 = vadd.f32 %v3826, %v3906
        %v3911 = vld [vmem:[#allocation4 + $0x18] sm:$0xfc]
        %v3912 = vld [vmem:[#allocation4 + $0x20] sm:$0xfc]
        %v3913 = vld [vmem:[#allocation4 + $0x28] sm:$0xfc]
        %v3914 = vld [vmem:[#allocation4 + $0x30] sm:$0x3]
        %v3915 = vld [vmem:[#allocation4 + $0x38] sm:$0x3]
        %v3916 = vld [vmem:[#allocation4 + $0x40] sm:$0x3]
        %s3917 = sld [smem:[#allocation12 + $0xa]]
        %v3918 = vstv %s3917
        %v3919 = vmul.f32 %v3911, %v3918
        %v3920 = vmul.f32 %v3912, %v3918
        %v3921 = vmul.f32 %v3913, %v3918
        %v3922 = vmul.f32 %v3914, %v3918
        %v3923 = vmul.f32 %v3915, %v3918
        %v3924 = vmul.f32 %v3916, %v3918
        %v3931 = vrot.slane %v3919, 2
        %v3932 = vrot.slane %v3922, 2
        %v3933 = vsel %vm3470, %v3931, %v3932
        %v3934 = vrot.slane %v3920, 2
        %v3935 = vrot.slane %v3923, 2
        %v3936 = vsel %vm3470, %v3934, %v3935
        %v3937 = vrot.slane %v3921, 2
        %v3938 = vrot.slane %v3924, 2
        %v3939 = vsel %vm3470, %v3937, %v3938
        %3940 = vrot.lane.b32.xlu0 %v3933, 127
        %v3941 = vpop.permute.xlu0 %3940
        %3942 = vrot.lane.b32.xlu0 %v3936, 127
        %v3943 = vpop.permute.xlu0 %3942
        %3944 = vrot.lane.b32.xlu0 %v3939, 127
        %v3945 = vpop.permute.xlu0 %3944
        %v3946 = vsel %vm902, %v3941, %v3943
        %v3947 = vsel %vm902, %v3943, %v3945
        %v3950 = vadd.f32 %v3849, %v3946
        %v3951 = vadd.f32 %v3850, %v3947
        %s3952 = sld [smem:[#allocation12 + $0x37]]
        %v3953 = vstv %s3952
        %v3954 = vmul.f32 %v3911, %v3953
        %v3955 = vmul.f32 %v3912, %v3953
        %v3956 = vmul.f32 %v3913, %v3953
        %v3957 = vmul.f32 %v3914, %v3953
        %v3958 = vmul.f32 %v3915, %v3953
        %v3959 = vmul.f32 %v3916, %v3953
        %v3966 = vrot.slane %v3954, 2
        %v3967 = vrot.slane %v3957, 2
        %v3968 = vsel %vm3470, %v3966, %v3967
        %v3969 = vrot.slane %v3955, 2
        %v3970 = vrot.slane %v3958, 2
        %v3971 = vsel %vm3470, %v3969, %v3970
        %v3972 = vrot.slane %v3956, 2
        %v3973 = vrot.slane %v3959, 2
        %v3974 = vsel %vm3470, %v3972, %v3973
        %3975 = vrot.lane.b32.xlu0 %v3968, 127
        %v3976 = vpop.permute.xlu0 %3975
        %3977 = vrot.lane.b32.xlu0 %v3971, 127
        %v3978 = vpop.permute.xlu0 %3977
        %3979 = vrot.lane.b32.xlu0 %v3974, 127
        %v3980 = vpop.permute.xlu0 %3979
        %v3981 = vsel %vm902, %v3976, %v3978
        %v3982 = vsel %vm902, %v3978, %v3980
        %v3985 = vadd.f32 %v3869, %v3981
        %v3986 = vadd.f32 %v3870, %v3982
        %s3987 = sld [smem:[#allocation12 + $0x64]]
        %v3988 = vstv %s3987
        %v3989 = vmul.f32 %v3911, %v3988
        %v3990 = vmul.f32 %v3912, %v3988
        %v3991 = vmul.f32 %v3913, %v3988
        %v3992 = vmul.f32 %v3914, %v3988
        %v3993 = vmul.f32 %v3915, %v3988
        %v3994 = vmul.f32 %v3916, %v3988
        %v4001 = vrot.slane %v3989, 2
        %v4002 = vrot.slane %v3992, 2
        %v4003 = vsel %vm3470, %v4001, %v4002
        %v4004 = vrot.slane %v3990, 2
        %v4005 = vrot.slane %v3993, 2
        %v4006 = vsel %vm3470, %v4004, %v4005
        %v4007 = vrot.slane %v3991, 2
        %v4008 = vrot.slane %v3994, 2
        %v4009 = vsel %vm3470, %v4007, %v4008
        %4010 = vrot.lane.b32.xlu0 %v4003, 127
        %v4011 = vpop.permute.xlu0 %4010
        %4012 = vrot.lane.b32.xlu0 %v4006, 127
        %v4013 = vpop.permute.xlu0 %4012
        %4014 = vrot.lane.b32.xlu0 %v4009, 127
        %v4015 = vpop.permute.xlu0 %4014
        %v4016 = vsel %vm902, %v4011, %v4013
        %v4017 = vsel %vm902, %v4013, %v4015
        %v4020 = vadd.f32 %v3889, %v4016
        %v4021 = vadd.f32 %v3890, %v4017
        %s4022 = sld [smem:[#allocation12 + $0x91]]
        %v4023 = vstv %s4022
        %v4024 = vmul.f32 %v3911, %v4023
        %v4025 = vmul.f32 %v3912, %v4023
        %v4026 = vmul.f32 %v3913, %v4023
        %v4027 = vmul.f32 %v3914, %v4023
        %v4028 = vmul.f32 %v3915, %v4023
        %v4029 = vmul.f32 %v3916, %v4023
        %v4036 = vrot.slane %v4024, 2
        %v4037 = vrot.slane %v4027, 2
        %v4038 = vsel %vm3470, %v4036, %v4037
        %v4039 = vrot.slane %v4025, 2
        %v4040 = vrot.slane %v4028, 2
        %v4041 = vsel %vm3470, %v4039, %v4040
        %v4042 = vrot.slane %v4026, 2
        %v4043 = vrot.slane %v4029, 2
        %v4044 = vsel %vm3470, %v4042, %v4043
        %4045 = vrot.lane.b32.xlu0 %v4038, 127
        %v4046 = vpop.permute.xlu0 %4045
        %4047 = vrot.lane.b32.xlu0 %v4041, 127
        %v4048 = vpop.permute.xlu0 %4047
        %4049 = vrot.lane.b32.xlu0 %v4044, 127
        %v4050 = vpop.permute.xlu0 %4049
        %v4051 = vsel %vm902, %v4046, %v4048
        %v4052 = vsel %vm902, %v4048, %v4050
        %v4055 = vadd.f32 %v3909, %v4051
        %v4056 = vadd.f32 %v3910, %v4052
        %s4057 = sld [smem:[#allocation12 + $0xb]]
        %v4058 = vstv %s4057
        %v4059 = vmul.f32 %v3911, %v4058
        %v4060 = vmul.f32 %v3912, %v4058
        %v4061 = vmul.f32 %v3913, %v4058
        %v4062 = vmul.f32 %v3914, %v4058
        %v4063 = vmul.f32 %v3915, %v4058
        %v4064 = vmul.f32 %v3916, %v4058
        %v4071 = vrot.slane %v4059, 2
        %v4072 = vrot.slane %v4062, 2
        %v4073 = vsel %vm3470, %v4071, %v4072
        %v4074 = vrot.slane %v4060, 2
        %v4075 = vrot.slane %v4063, 2
        %v4076 = vsel %vm3470, %v4074, %v4075
        %v4077 = vrot.slane %v4061, 2
        %v4078 = vrot.slane %v4064, 2
        %v4079 = vsel %vm3470, %v4077, %v4078
        %4080 = vrot.lane.b32.xlu0 %v4073, 126
        %v4081 = vpop.permute.xlu0 %4080
        %4082 = vrot.lane.b32.xlu0 %v4076, 126
        %v4083 = vpop.permute.xlu0 %4082
        %4084 = vrot.lane.b32.xlu0 %v4079, 126
        %v4085 = vpop.permute.xlu0 %4084
        %v4086 = vsel %vm978, %v4081, %v4083
        %v4087 = vsel %vm978, %v4083, %v4085
        %v4090 = vadd.f32 %v3950, %v4086
        %v4091 = vadd.f32 %v3951, %v4087
        %s4092 = sld [smem:[#allocation12 + $0x38]]
        %v4093 = vstv %s4092
        %v4094 = vmul.f32 %v3911, %v4093
        %v4095 = vmul.f32 %v3912, %v4093
        %v4096 = vmul.f32 %v3913, %v4093
        %v4097 = vmul.f32 %v3914, %v4093
        %v4098 = vmul.f32 %v3915, %v4093
        %v4099 = vmul.f32 %v3916, %v4093
        %v4106 = vrot.slane %v4094, 2
        %v4107 = vrot.slane %v4097, 2
        %v4108 = vsel %vm3470, %v4106, %v4107
        %v4109 = vrot.slane %v4095, 2
        %v4110 = vrot.slane %v4098, 2
        %v4111 = vsel %vm3470, %v4109, %v4110
        %v4112 = vrot.slane %v4096, 2
        %v4113 = vrot.slane %v4099, 2
        %v4114 = vsel %vm3470, %v4112, %v4113
        %4115 = vrot.lane.b32.xlu0 %v4108, 126
        %v4116 = vpop.permute.xlu0 %4115
        %4117 = vrot.lane.b32.xlu0 %v4111, 126
        %v4118 = vpop.permute.xlu0 %4117
        %4119 = vrot.lane.b32.xlu0 %v4114, 126
        %v4120 = vpop.permute.xlu0 %4119
        %v4121 = vsel %vm978, %v4116, %v4118
        %v4122 = vsel %vm978, %v4118, %v4120
        %v4125 = vadd.f32 %v3985, %v4121
        %v4126 = vadd.f32 %v3986, %v4122
        %s4127 = sld [smem:[#allocation12 + $0x65]]
        %v4128 = vstv %s4127
        %v4129 = vmul.f32 %v3911, %v4128
        %v4130 = vmul.f32 %v3912, %v4128
        %v4131 = vmul.f32 %v3913, %v4128
        %v4132 = vmul.f32 %v3914, %v4128
        %v4133 = vmul.f32 %v3915, %v4128
        %v4134 = vmul.f32 %v3916, %v4128
        %v4141 = vrot.slane %v4129, 2
        %v4142 = vrot.slane %v4132, 2
        %v4143 = vsel %vm3470, %v4141, %v4142
        %v4144 = vrot.slane %v4130, 2
        %v4145 = vrot.slane %v4133, 2
        %v4146 = vsel %vm3470, %v4144, %v4145
        %v4147 = vrot.slane %v4131, 2
        %v4148 = vrot.slane %v4134, 2
        %v4149 = vsel %vm3470, %v4147, %v4148
        %4150 = vrot.lane.b32.xlu0 %v4143, 126
        %v4151 = vpop.permute.xlu0 %4150
        %4152 = vrot.lane.b32.xlu0 %v4146, 126
        %v4153 = vpop.permute.xlu0 %4152
        %4154 = vrot.lane.b32.xlu0 %v4149, 126
        %v4155 = vpop.permute.xlu0 %4154
        %v4156 = vsel %vm978, %v4151, %v4153
        %v4157 = vsel %vm978, %v4153, %v4155
        %v4160 = vadd.f32 %v4020, %v4156
        %v4161 = vadd.f32 %v4021, %v4157
        %s4162 = sld [smem:[#allocation12 + $0x92]]
        %v4163 = vstv %s4162
        %v4164 = vmul.f32 %v3911, %v4163
        %v4165 = vmul.f32 %v3912, %v4163
        %v4166 = vmul.f32 %v3913, %v4163
        %v4167 = vmul.f32 %v3914, %v4163
        %v4168 = vmul.f32 %v3915, %v4163
        %v4169 = vmul.f32 %v3916, %v4163
        %v4176 = vrot.slane %v4164, 2
        %v4177 = vrot.slane %v4167, 2
        %v4178 = vsel %vm3470, %v4176, %v4177
        %v4179 = vrot.slane %v4165, 2
        %v4180 = vrot.slane %v4168, 2
        %v4181 = vsel %vm3470, %v4179, %v4180
        %v4182 = vrot.slane %v4166, 2
        %v4183 = vrot.slane %v4169, 2
        %v4184 = vsel %vm3470, %v4182, %v4183
        %4185 = vrot.lane.b32.xlu0 %v4178, 126
        %v4186 = vpop.permute.xlu0 %4185
        %4187 = vrot.lane.b32.xlu0 %v4181, 126
        %v4188 = vpop.permute.xlu0 %4187
        %4189 = vrot.lane.b32.xlu0 %v4184, 126
        %v4190 = vpop.permute.xlu0 %4189
        %v4191 = vsel %vm978, %v4186, %v4188
        %v4192 = vsel %vm978, %v4188, %v4190
        %v4195 = vadd.f32 %v4055, %v4191
        %v4196 = vadd.f32 %v4056, %v4192
        %v4197 = vld [vmem:[#allocation4 + $0x18] sm:$0xf8]
        %v4198 = vld [vmem:[#allocation4 + $0x20] sm:$0xf8]
        %v4199 = vld [vmem:[#allocation4 + $0x30] sm:$0x7]
        %v4200 = vld [vmem:[#allocation4 + $0x38] sm:$0x7]
        %s4201 = sld [smem:[#allocation12 + $0xc]]
        %v4202 = vstv %s4201
        %v4203 = vmul.f32 %v4197, %v4202
        %v4204 = vmul.f32 %v4198, %v4202
        %v4205 = vmul.f32 %v4199, %v4202
        %v4206 = vmul.f32 %v4200, %v4202
        %vm4211 = vcmask 1044480
        %v4212 = vrot.slane %v4203, 3
        %v4213 = vrot.slane %v4205, 3
        %v4214 = vsel %vm4211, %v4212, %v4213
        %v4215 = vrot.slane %v4204, 3
        %v4216 = vrot.slane %v4206, 3
        %v4217 = vsel %vm4211, %v4215, %v4216
        %v4220 = vadd.f32 %v4090, %v4214
        %v4221 = vadd.f32 %v4091, %v4217
        %s4222 = sld [smem:[#allocation12 + $0x39]]
        %v4223 = vstv %s4222
        %v4224 = vmul.f32 %v4197, %v4223
        %v4225 = vmul.f32 %v4198, %v4223
        %v4226 = vmul.f32 %v4199, %v4223
        %v4227 = vmul.f32 %v4200, %v4223
        %v4232 = vrot.slane %v4224, 3
        %v4233 = vrot.slane %v4226, 3
        %v4234 = vsel %vm4211, %v4232, %v4233
        %v4235 = vrot.slane %v4225, 3
        %v4236 = vrot.slane %v4227, 3
        %v4237 = vsel %vm4211, %v4235, %v4236
        %v4240 = vadd.f32 %v4125, %v4234
        %v4241 = vadd.f32 %v4126, %v4237
        %s4242 = sld [smem:[#allocation12 + $0x66]]
        %v4243 = vstv %s4242
        %v4244 = vmul.f32 %v4197, %v4243
        %v4245 = vmul.f32 %v4198, %v4243
        %v4246 = vmul.f32 %v4199, %v4243
        %v4247 = vmul.f32 %v4200, %v4243
        %v4252 = vrot.slane %v4244, 3
        %v4253 = vrot.slane %v4246, 3
        %v4254 = vsel %vm4211, %v4252, %v4253
        %v4255 = vrot.slane %v4245, 3
        %v4256 = vrot.slane %v4247, 3
        %v4257 = vsel %vm4211, %v4255, %v4256
        %v4260 = vadd.f32 %v4160, %v4254
        %v4261 = vadd.f32 %v4161, %v4257
        %s4262 = sld [smem:[#allocation12 + $0x93]]
        %v4263 = vstv %s4262
        %v4264 = vmul.f32 %v4197, %v4263
        %v4265 = vmul.f32 %v4198, %v4263
        %v4266 = vmul.f32 %v4199, %v4263
        %v4267 = vmul.f32 %v4200, %v4263
        %v4272 = vrot.slane %v4264, 3
        %v4273 = vrot.slane %v4266, 3
        %v4274 = vsel %vm4211, %v4272, %v4273
        %v4275 = vrot.slane %v4265, 3
        %v4276 = vrot.slane %v4267, 3
        %v4277 = vsel %vm4211, %v4275, %v4276
        %v4280 = vadd.f32 %v4195, %v4274
        %v4281 = vadd.f32 %v4196, %v4277
        %v4282 = vld [vmem:[#allocation4 + $0x18] sm:$0xf8]
        %v4283 = vld [vmem:[#allocation4 + $0x20] sm:$0xf8]
        %v4284 = vld [vmem:[#allocation4 + $0x28] sm:$0xf8]
        %v4285 = vld [vmem:[#allocation4 + $0x30] sm:$0x7]
        %v4286 = vld [vmem:[#allocation4 + $0x38] sm:$0x7]
        %v4287 = vld [vmem:[#allocation4 + $0x40] sm:$0x7]
        %s4288 = sld [smem:[#allocation12 + $0xd]]
        %v4289 = vstv %s4288
        %v4290 = vmul.f32 %v4282, %v4289
        %v4291 = vmul.f32 %v4283, %v4289
        %v4292 = vmul.f32 %v4284, %v4289
        %v4293 = vmul.f32 %v4285, %v4289
        %v4294 = vmul.f32 %v4286, %v4289
        %v4295 = vmul.f32 %v4287, %v4289
        %v4302 = vrot.slane %v4290, 3
        %v4303 = vrot.slane %v4293, 3
        %v4304 = vsel %vm4211, %v4302, %v4303
        %v4305 = vrot.slane %v4291, 3
        %v4306 = vrot.slane %v4294, 3
        %v4307 = vsel %vm4211, %v4305, %v4306
        %v4308 = vrot.slane %v4292, 3
        %v4309 = vrot.slane %v4295, 3
        %v4310 = vsel %vm4211, %v4308, %v4309
        %4311 = vrot.lane.b32.xlu0 %v4304, 127
        %v4312 = vpop.permute.xlu0 %4311
        %4313 = vrot.lane.b32.xlu0 %v4307, 127
        %v4314 = vpop.permute.xlu0 %4313
        %4315 = vrot.lane.b32.xlu0 %v4310, 127
        %v4316 = vpop.permute.xlu0 %4315
        %v4317 = vsel %vm902, %v4312, %v4314
        %v4318 = vsel %vm902, %v4314, %v4316
        %v4321 = vadd.f32 %v4220, %v4317
        %v4322 = vadd.f32 %v4221, %v4318
        %s4323 = sld [smem:[#allocation12 + $0x3a]]
        %v4324 = vstv %s4323
        %v4325 = vmul.f32 %v4282, %v4324
        %v4326 = vmul.f32 %v4283, %v4324
        %v4327 = vmul.f32 %v4284, %v4324
        %v4328 = vmul.f32 %v4285, %v4324
        %v4329 = vmul.f32 %v4286, %v4324
        %v4330 = vmul.f32 %v4287, %v4324
        %v4337 = vrot.slane %v4325, 3
        %v4338 = vrot.slane %v4328, 3
        %v4339 = vsel %vm4211, %v4337, %v4338
        %v4340 = vrot.slane %v4326, 3
        %v4341 = vrot.slane %v4329, 3
        %v4342 = vsel %vm4211, %v4340, %v4341
        %v4343 = vrot.slane %v4327, 3
        %v4344 = vrot.slane %v4330, 3
        %v4345 = vsel %vm4211, %v4343, %v4344
        %4346 = vrot.lane.b32.xlu0 %v4339, 127
        %v4347 = vpop.permute.xlu0 %4346
        %4348 = vrot.lane.b32.xlu0 %v4342, 127
        %v4349 = vpop.permute.xlu0 %4348
        %4350 = vrot.lane.b32.xlu0 %v4345, 127
        %v4351 = vpop.permute.xlu0 %4350
        %v4352 = vsel %vm902, %v4347, %v4349
        %v4353 = vsel %vm902, %v4349, %v4351
        %v4356 = vadd.f32 %v4240, %v4352
        %v4357 = vadd.f32 %v4241, %v4353
        %s4358 = sld [smem:[#allocation12 + $0x67]]
        %v4359 = vstv %s4358
        %v4360 = vmul.f32 %v4282, %v4359
        %v4361 = vmul.f32 %v4283, %v4359
        %v4362 = vmul.f32 %v4284, %v4359
        %v4363 = vmul.f32 %v4285, %v4359
        %v4364 = vmul.f32 %v4286, %v4359
        %v4365 = vmul.f32 %v4287, %v4359
        %v4372 = vrot.slane %v4360, 3
        %v4373 = vrot.slane %v4363, 3
        %v4374 = vsel %vm4211, %v4372, %v4373
        %v4375 = vrot.slane %v4361, 3
        %v4376 = vrot.slane %v4364, 3
        %v4377 = vsel %vm4211, %v4375, %v4376
        %v4378 = vrot.slane %v4362, 3
        %v4379 = vrot.slane %v4365, 3
        %v4380 = vsel %vm4211, %v4378, %v4379
        %4381 = vrot.lane.b32.xlu0 %v4374, 127
        %v4382 = vpop.permute.xlu0 %4381
        %4383 = vrot.lane.b32.xlu0 %v4377, 127
        %v4384 = vpop.permute.xlu0 %4383
        %4385 = vrot.lane.b32.xlu0 %v4380, 127
        %v4386 = vpop.permute.xlu0 %4385
        %v4387 = vsel %vm902, %v4382, %v4384
        %v4388 = vsel %vm902, %v4384, %v4386
        %v4391 = vadd.f32 %v4260, %v4387
        %v4392 = vadd.f32 %v4261, %v4388
        %s4393 = sld [smem:[#allocation12 + $0x94]]
        %v4394 = vstv %s4393
        %v4395 = vmul.f32 %v4282, %v4394
        %v4396 = vmul.f32 %v4283, %v4394
        %v4397 = vmul.f32 %v4284, %v4394
        %v4398 = vmul.f32 %v4285, %v4394
        %v4399 = vmul.f32 %v4286, %v4394
        %v4400 = vmul.f32 %v4287, %v4394
        %v4407 = vrot.slane %v4395, 3
        %v4408 = vrot.slane %v4398, 3
        %v4409 = vsel %vm4211, %v4407, %v4408
        %v4410 = vrot.slane %v4396, 3
        %v4411 = vrot.slane %v4399, 3
        %v4412 = vsel %vm4211, %v4410, %v4411
        %v4413 = vrot.slane %v4397, 3
        %v4414 = vrot.slane %v4400, 3
        %v4415 = vsel %vm4211, %v4413, %v4414
        %4416 = vrot.lane.b32.xlu0 %v4409, 127
        %v4417 = vpop.permute.xlu0 %4416
        %4418 = vrot.lane.b32.xlu0 %v4412, 127
        %v4419 = vpop.permute.xlu0 %4418
        %4420 = vrot.lane.b32.xlu0 %v4415, 127
        %v4421 = vpop.permute.xlu0 %4420
        %v4422 = vsel %vm902, %v4417, %v4419
        %v4423 = vsel %vm902, %v4419, %v4421
        %v4426 = vadd.f32 %v4280, %v4422
        %v4427 = vadd.f32 %v4281, %v4423
        %s4428 = sld [smem:[#allocation12 + $0xe]]
        %v4429 = vstv %s4428
        %v4430 = vmul.f32 %v4282, %v4429
        %v4431 = vmul.f32 %v4283, %v4429
        %v4432 = vmul.f32 %v4284, %v4429
        %v4433 = vmul.f32 %v4285, %v4429
        %v4434 = vmul.f32 %v4286, %v4429
        %v4435 = vmul.f32 %v4287, %v4429
        %v4442 = vrot.slane %v4430, 3
        %v4443 = vrot.slane %v4433, 3
        %v4444 = vsel %vm4211, %v4442, %v4443
        %v4445 = vrot.slane %v4431, 3
        %v4446 = vrot.slane %v4434, 3
        %v4447 = vsel %vm4211, %v4445, %v4446
        %v4448 = vrot.slane %v4432, 3
        %v4449 = vrot.slane %v4435, 3
        %v4450 = vsel %vm4211, %v4448, %v4449
        %4451 = vrot.lane.b32.xlu0 %v4444, 126
        %v4452 = vpop.permute.xlu0 %4451
        %4453 = vrot.lane.b32.xlu0 %v4447, 126
        %v4454 = vpop.permute.xlu0 %4453
        %4455 = vrot.lane.b32.xlu0 %v4450, 126
        %v4456 = vpop.permute.xlu0 %4455
        %v4457 = vsel %vm978, %v4452, %v4454
        %v4458 = vsel %vm978, %v4454, %v4456
        %v4461 = vadd.f32 %v4321, %v4457
        %v4462 = vadd.f32 %v4322, %v4458
        %s4463 = sld [smem:[#allocation12 + $0x3b]]
        %v4464 = vstv %s4463
        %v4465 = vmul.f32 %v4282, %v4464
        %v4466 = vmul.f32 %v4283, %v4464
        %v4467 = vmul.f32 %v4284, %v4464
        %v4468 = vmul.f32 %v4285, %v4464
        %v4469 = vmul.f32 %v4286, %v4464
        %v4470 = vmul.f32 %v4287, %v4464
        %v4477 = vrot.slane %v4465, 3
        %v4478 = vrot.slane %v4468, 3
        %v4479 = vsel %vm4211, %v4477, %v4478
        %v4480 = vrot.slane %v4466, 3
        %v4481 = vrot.slane %v4469, 3
        %v4482 = vsel %vm4211, %v4480, %v4481
        %v4483 = vrot.slane %v4467, 3
        %v4484 = vrot.slane %v4470, 3
        %v4485 = vsel %vm4211, %v4483, %v4484
        %4486 = vrot.lane.b32.xlu0 %v4479, 126
        %v4487 = vpop.permute.xlu0 %4486
        %4488 = vrot.lane.b32.xlu0 %v4482, 126
        %v4489 = vpop.permute.xlu0 %4488
        %4490 = vrot.lane.b32.xlu0 %v4485, 126
        %v4491 = vpop.permute.xlu0 %4490
        %v4492 = vsel %vm978, %v4487, %v4489
        %v4493 = vsel %vm978, %v4489, %v4491
        %v4496 = vadd.f32 %v4356, %v4492
        %v4497 = vadd.f32 %v4357, %v4493
        %s4498 = sld [smem:[#allocation12 + $0x68]]
        %v4499 = vstv %s4498
        %v4500 = vmul.f32 %v4282, %v4499
        %v4501 = vmul.f32 %v4283, %v4499
        %v4502 = vmul.f32 %v4284, %v4499
        %v4503 = vmul.f32 %v4285, %v4499
        %v4504 = vmul.f32 %v4286, %v4499
        %v4505 = vmul.f32 %v4287, %v4499
        %v4512 = vrot.slane %v4500, 3
        %v4513 = vrot.slane %v4503, 3
        %v4514 = vsel %vm4211, %v4512, %v4513
        %v4515 = vrot.slane %v4501, 3
        %v4516 = vrot.slane %v4504, 3
        %v4517 = vsel %vm4211, %v4515, %v4516
        %v4518 = vrot.slane %v4502, 3
        %v4519 = vrot.slane %v4505, 3
        %v4520 = vsel %vm4211, %v4518, %v4519
        %4521 = vrot.lane.b32.xlu0 %v4514, 126
        %v4522 = vpop.permute.xlu0 %4521
        %4523 = vrot.lane.b32.xlu0 %v4517, 126
        %v4524 = vpop.permute.xlu0 %4523
        %4525 = vrot.lane.b32.xlu0 %v4520, 126
        %v4526 = vpop.permute.xlu0 %4525
        %v4527 = vsel %vm978, %v4522, %v4524
        %v4528 = vsel %vm978, %v4524, %v4526
        %v4531 = vadd.f32 %v4391, %v4527
        %v4532 = vadd.f32 %v4392, %v4528
        %s4533 = sld [smem:[#allocation12 + $0x95]]
        %v4534 = vstv %s4533
        %v4535 = vmul.f32 %v4282, %v4534
        %v4536 = vmul.f32 %v4283, %v4534
        %v4537 = vmul.f32 %v4284, %v4534
        %v4538 = vmul.f32 %v4285, %v4534
        %v4539 = vmul.f32 %v4286, %v4534
        %v4540 = vmul.f32 %v4287, %v4534
        %v4547 = vrot.slane %v4535, 3
        %v4548 = vrot.slane %v4538, 3
        %v4549 = vsel %vm4211, %v4547, %v4548
        %v4550 = vrot.slane %v4536, 3
        %v4551 = vrot.slane %v4539, 3
        %v4552 = vsel %vm4211, %v4550, %v4551
        %v4553 = vrot.slane %v4537, 3
        %v4554 = vrot.slane %v4540, 3
        %v4555 = vsel %vm4211, %v4553, %v4554
        %4556 = vrot.lane.b32.xlu0 %v4549, 126
        %v4557 = vpop.permute.xlu0 %4556
        %4558 = vrot.lane.b32.xlu0 %v4552, 126
        %v4559 = vpop.permute.xlu0 %4558
        %4560 = vrot.lane.b32.xlu0 %v4555, 126
        %v4561 = vpop.permute.xlu0 %4560
        %v4562 = vsel %vm978, %v4557, %v4559
        %v4563 = vsel %vm978, %v4559, %v4561
        %v4566 = vadd.f32 %v4426, %v4562
        %v4567 = vadd.f32 %v4427, %v4563
        %v4568 = vld [vmem:[#allocation4 + $0x18] sm:$0xf0]
        %v4569 = vld [vmem:[#allocation4 + $0x20] sm:$0xf0]
        %v4570 = vld [vmem:[#allocation4 + $0x30] sm:$0xf]
        %v4571 = vld [vmem:[#allocation4 + $0x38] sm:$0xf]
        %s4572 = sld [smem:[#allocation12 + $0xf]]
        %v4573 = vstv %s4572
        %v4574 = vmul.f32 %v4568, %v4573
        %v4575 = vmul.f32 %v4569, %v4573
        %v4576 = vmul.f32 %v4570, %v4573
        %v4577 = vmul.f32 %v4571, %v4573
        %vm4582 = vcmask 1043456
        %v4583 = vrot.slane %v4574, 4
        %v4584 = vrot.slane %v4576, 4
        %v4585 = vsel %vm4582, %v4583, %v4584
        %v4586 = vrot.slane %v4575, 4
        %v4587 = vrot.slane %v4577, 4
        %v4588 = vsel %vm4582, %v4586, %v4587
        %v4591 = vadd.f32 %v4461, %v4585
        %v4592 = vadd.f32 %v4462, %v4588
        %s4593 = sld [smem:[#allocation12 + $0x3c]]
        %v4594 = vstv %s4593
        %v4595 = vmul.f32 %v4568, %v4594
        %v4596 = vmul.f32 %v4569, %v4594
        %v4597 = vmul.f32 %v4570, %v4594
        %v4598 = vmul.f32 %v4571, %v4594
        %v4603 = vrot.slane %v4595, 4
        %v4604 = vrot.slane %v4597, 4
        %v4605 = vsel %vm4582, %v4603, %v4604
        %v4606 = vrot.slane %v4596, 4
        %v4607 = vrot.slane %v4598, 4
        %v4608 = vsel %vm4582, %v4606, %v4607
        %v4611 = vadd.f32 %v4496, %v4605
        %v4612 = vadd.f32 %v4497, %v4608
        %s4613 = sld [smem:[#allocation12 + $0x69]]
        %v4614 = vstv %s4613
        %v4615 = vmul.f32 %v4568, %v4614
        %v4616 = vmul.f32 %v4569, %v4614
        %v4617 = vmul.f32 %v4570, %v4614
        %v4618 = vmul.f32 %v4571, %v4614
        %v4623 = vrot.slane %v4615, 4
        %v4624 = vrot.slane %v4617, 4
        %v4625 = vsel %vm4582, %v4623, %v4624
        %v4626 = vrot.slane %v4616, 4
        %v4627 = vrot.slane %v4618, 4
        %v4628 = vsel %vm4582, %v4626, %v4627
        %v4631 = vadd.f32 %v4531, %v4625
        %v4632 = vadd.f32 %v4532, %v4628
        %s4633 = sld [smem:[#allocation12 + $0x96]]
        %v4634 = vstv %s4633
        %v4635 = vmul.f32 %v4568, %v4634
        %v4636 = vmul.f32 %v4569, %v4634
        %v4637 = vmul.f32 %v4570, %v4634
        %v4638 = vmul.f32 %v4571, %v4634
        %v4643 = vrot.slane %v4635, 4
        %v4644 = vrot.slane %v4637, 4
        %v4645 = vsel %vm4582, %v4643, %v4644
        %v4646 = vrot.slane %v4636, 4
        %v4647 = vrot.slane %v4638, 4
        %v4648 = vsel %vm4582, %v4646, %v4647
        %v4651 = vadd.f32 %v4566, %v4645
        %v4652 = vadd.f32 %v4567, %v4648
        %v4653 = vld [vmem:[#allocation4 + $0x18] sm:$0xf0]
        %v4654 = vld [vmem:[#allocation4 + $0x20] sm:$0xf0]
        %v4655 = vld [vmem:[#allocation4 + $0x28] sm:$0xf0]
        %v4656 = vld [vmem:[#allocation4 + $0x30] sm:$0xf]
        %v4657 = vld [vmem:[#allocation4 + $0x38] sm:$0xf]
        %v4658 = vld [vmem:[#allocation4 + $0x40] sm:$0xf]
        %s4659 = sld [smem:[#allocation12 + $0x10]]
        %v4660 = vstv %s4659
        %v4661 = vmul.f32 %v4653, %v4660
        %v4662 = vmul.f32 %v4654, %v4660
        %v4663 = vmul.f32 %v4655, %v4660
        %v4664 = vmul.f32 %v4656, %v4660
        %v4665 = vmul.f32 %v4657, %v4660
        %v4666 = vmul.f32 %v4658, %v4660
        %v4673 = vrot.slane %v4661, 4
        %v4674 = vrot.slane %v4664, 4
        %v4675 = vsel %vm4582, %v4673, %v4674
        %v4676 = vrot.slane %v4662, 4
        %v4677 = vrot.slane %v4665, 4
        %v4678 = vsel %vm4582, %v4676, %v4677
        %v4679 = vrot.slane %v4663, 4
        %v4680 = vrot.slane %v4666, 4
        %v4681 = vsel %vm4582, %v4679, %v4680
        %4682 = vrot.lane.b32.xlu0 %v4675, 127
        %v4683 = vpop.permute.xlu0 %4682
        %4684 = vrot.lane.b32.xlu0 %v4678, 127
        %v4685 = vpop.permute.xlu0 %4684
        %4686 = vrot.lane.b32.xlu0 %v4681, 127
        %v4687 = vpop.permute.xlu0 %4686
        %v4688 = vsel %vm902, %v4683, %v4685
        %v4689 = vsel %vm902, %v4685, %v4687
        %v4692 = vadd.f32 %v4591, %v4688
        %v4693 = vadd.f32 %v4592, %v4689
        %s4694 = sld [smem:[#allocation12 + $0x3d]]
        %v4695 = vstv %s4694
        %v4696 = vmul.f32 %v4653, %v4695
        %v4697 = vmul.f32 %v4654, %v4695
        %v4698 = vmul.f32 %v4655, %v4695
        %v4699 = vmul.f32 %v4656, %v4695
        %v4700 = vmul.f32 %v4657, %v4695
        %v4701 = vmul.f32 %v4658, %v4695
        %v4708 = vrot.slane %v4696, 4
        %v4709 = vrot.slane %v4699, 4
        %v4710 = vsel %vm4582, %v4708, %v4709
        %v4711 = vrot.slane %v4697, 4
        %v4712 = vrot.slane %v4700, 4
        %v4713 = vsel %vm4582, %v4711, %v4712
        %v4714 = vrot.slane %v4698, 4
        %v4715 = vrot.slane %v4701, 4
        %v4716 = vsel %vm4582, %v4714, %v4715
        %4717 = vrot.lane.b32.xlu0 %v4710, 127
        %v4718 = vpop.permute.xlu0 %4717
        %4719 = vrot.lane.b32.xlu0 %v4713, 127
        %v4720 = vpop.permute.xlu0 %4719
        %4721 = vrot.lane.b32.xlu0 %v4716, 127
        %v4722 = vpop.permute.xlu0 %4721
        %v4723 = vsel %vm902, %v4718, %v4720
        %v4724 = vsel %vm902, %v4720, %v4722
        %v4727 = vadd.f32 %v4611, %v4723
        %v4728 = vadd.f32 %v4612, %v4724
        %s4729 = sld [smem:[#allocation12 + $0x6a]]
        %v4730 = vstv %s4729
        %v4731 = vmul.f32 %v4653, %v4730
        %v4732 = vmul.f32 %v4654, %v4730
        %v4733 = vmul.f32 %v4655, %v4730
        %v4734 = vmul.f32 %v4656, %v4730
        %v4735 = vmul.f32 %v4657, %v4730
        %v4736 = vmul.f32 %v4658, %v4730
        %v4743 = vrot.slane %v4731, 4
        %v4744 = vrot.slane %v4734, 4
        %v4745 = vsel %vm4582, %v4743, %v4744
        %v4746 = vrot.slane %v4732, 4
        %v4747 = vrot.slane %v4735, 4
        %v4748 = vsel %vm4582, %v4746, %v4747
        %v4749 = vrot.slane %v4733, 4
        %v4750 = vrot.slane %v4736, 4
        %v4751 = vsel %vm4582, %v4749, %v4750
        %4752 = vrot.lane.b32.xlu0 %v4745, 127
        %v4753 = vpop.permute.xlu0 %4752
        %4754 = vrot.lane.b32.xlu0 %v4748, 127
        %v4755 = vpop.permute.xlu0 %4754
        %4756 = vrot.lane.b32.xlu0 %v4751, 127
        %v4757 = vpop.permute.xlu0 %4756
        %v4758 = vsel %vm902, %v4753, %v4755
        %v4759 = vsel %vm902, %v4755, %v4757
        %v4762 = vadd.f32 %v4631, %v4758
        %v4763 = vadd.f32 %v4632, %v4759
        %s4764 = sld [smem:[#allocation12 + $0x97]]
        %v4765 = vstv %s4764
        %v4766 = vmul.f32 %v4653, %v4765
        %v4767 = vmul.f32 %v4654, %v4765
        %v4768 = vmul.f32 %v4655, %v4765
        %v4769 = vmul.f32 %v4656, %v4765
        %v4770 = vmul.f32 %v4657, %v4765
        %v4771 = vmul.f32 %v4658, %v4765
        %v4778 = vrot.slane %v4766, 4
        %v4779 = vrot.slane %v4769, 4
        %v4780 = vsel %vm4582, %v4778, %v4779
        %v4781 = vrot.slane %v4767, 4
        %v4782 = vrot.slane %v4770, 4
        %v4783 = vsel %vm4582, %v4781, %v4782
        %v4784 = vrot.slane %v4768, 4
        %v4785 = vrot.slane %v4771, 4
        %v4786 = vsel %vm4582, %v4784, %v4785
        %4787 = vrot.lane.b32.xlu0 %v4780, 127
        %v4788 = vpop.permute.xlu0 %4787
        %4789 = vrot.lane.b32.xlu0 %v4783, 127
        %v4790 = vpop.permute.xlu0 %4789
        %4791 = vrot.lane.b32.xlu0 %v4786, 127
        %v4792 = vpop.permute.xlu0 %4791
        %v4793 = vsel %vm902, %v4788, %v4790
        %v4794 = vsel %vm902, %v4790, %v4792
        %v4797 = vadd.f32 %v4651, %v4793
        %v4798 = vadd.f32 %v4652, %v4794
        %s4799 = sld [smem:[#allocation12 + $0x11]]
        %v4800 = vstv %s4799
        %v4801 = vmul.f32 %v4653, %v4800
        %v4802 = vmul.f32 %v4654, %v4800
        %v4803 = vmul.f32 %v4655, %v4800
        %v4804 = vmul.f32 %v4656, %v4800
        %v4805 = vmul.f32 %v4657, %v4800
        %v4806 = vmul.f32 %v4658, %v4800
        %v4813 = vrot.slane %v4801, 4
        %v4814 = vrot.slane %v4804, 4
        %v4815 = vsel %vm4582, %v4813, %v4814
        %v4816 = vrot.slane %v4802, 4
        %v4817 = vrot.slane %v4805, 4
        %v4818 = vsel %vm4582, %v4816, %v4817
        %v4819 = vrot.slane %v4803, 4
        %v4820 = vrot.slane %v4806, 4
        %v4821 = vsel %vm4582, %v4819, %v4820
        %4822 = vrot.lane.b32.xlu0 %v4815, 126
        %v4823 = vpop.permute.xlu0 %4822
        %4824 = vrot.lane.b32.xlu0 %v4818, 126
        %v4825 = vpop.permute.xlu0 %4824
        %4826 = vrot.lane.b32.xlu0 %v4821, 126
        %v4827 = vpop.permute.xlu0 %4826
        %v4828 = vsel %vm978, %v4823, %v4825
        %v4829 = vsel %vm978, %v4825, %v4827
        %v4832 = vadd.f32 %v4692, %v4828
        %v4833 = vadd.f32 %v4693, %v4829
        %s4834 = sld [smem:[#allocation12 + $0x3e]]
        %v4835 = vstv %s4834
        %v4836 = vmul.f32 %v4653, %v4835
        %v4837 = vmul.f32 %v4654, %v4835
        %v4838 = vmul.f32 %v4655, %v4835
        %v4839 = vmul.f32 %v4656, %v4835
        %v4840 = vmul.f32 %v4657, %v4835
        %v4841 = vmul.f32 %v4658, %v4835
        %v4848 = vrot.slane %v4836, 4
        %v4849 = vrot.slane %v4839, 4
        %v4850 = vsel %vm4582, %v4848, %v4849
        %v4851 = vrot.slane %v4837, 4
        %v4852 = vrot.slane %v4840, 4
        %v4853 = vsel %vm4582, %v4851, %v4852
        %v4854 = vrot.slane %v4838, 4
        %v4855 = vrot.slane %v4841, 4
        %v4856 = vsel %vm4582, %v4854, %v4855
        %4857 = vrot.lane.b32.xlu0 %v4850, 126
        %v4858 = vpop.permute.xlu0 %4857
        %4859 = vrot.lane.b32.xlu0 %v4853, 126
        %v4860 = vpop.permute.xlu0 %4859
        %4861 = vrot.lane.b32.xlu0 %v4856, 126
        %v4862 = vpop.permute.xlu0 %4861
        %v4863 = vsel %vm978, %v4858, %v4860
        %v4864 = vsel %vm978, %v4860, %v4862
        %v4867 = vadd.f32 %v4727, %v4863
        %v4868 = vadd.f32 %v4728, %v4864
        %s4869 = sld [smem:[#allocation12 + $0x6b]]
        %v4870 = vstv %s4869
        %v4871 = vmul.f32 %v4653, %v4870
        %v4872 = vmul.f32 %v4654, %v4870
        %v4873 = vmul.f32 %v4655, %v4870
        %v4874 = vmul.f32 %v4656, %v4870
        %v4875 = vmul.f32 %v4657, %v4870
        %v4876 = vmul.f32 %v4658, %v4870
        %v4883 = vrot.slane %v4871, 4
        %v4884 = vrot.slane %v4874, 4
        %v4885 = vsel %vm4582, %v4883, %v4884
        %v4886 = vrot.slane %v4872, 4
        %v4887 = vrot.slane %v4875, 4
        %v4888 = vsel %vm4582, %v4886, %v4887
        %v4889 = vrot.slane %v4873, 4
        %v4890 = vrot.slane %v4876, 4
        %v4891 = vsel %vm4582, %v4889, %v4890
        %4892 = vrot.lane.b32.xlu0 %v4885, 126
        %v4893 = vpop.permute.xlu0 %4892
        %4894 = vrot.lane.b32.xlu0 %v4888, 126
        %v4895 = vpop.permute.xlu0 %4894
        %4896 = vrot.lane.b32.xlu0 %v4891, 126
        %v4897 = vpop.permute.xlu0 %4896
        %v4898 = vsel %vm978, %v4893, %v4895
        %v4899 = vsel %vm978, %v4895, %v4897
        %v4902 = vadd.f32 %v4762, %v4898
        %v4903 = vadd.f32 %v4763, %v4899
        %s4904 = sld [smem:[#allocation12 + $0x98]]
        %v4905 = vstv %s4904
        %v4906 = vmul.f32 %v4653, %v4905
        %v4907 = vmul.f32 %v4654, %v4905
        %v4908 = vmul.f32 %v4655, %v4905
        %v4909 = vmul.f32 %v4656, %v4905
        %v4910 = vmul.f32 %v4657, %v4905
        %v4911 = vmul.f32 %v4658, %v4905
        %v4918 = vrot.slane %v4906, 4
        %v4919 = vrot.slane %v4909, 4
        %v4920 = vsel %vm4582, %v4918, %v4919
        %v4921 = vrot.slane %v4907, 4
        %v4922 = vrot.slane %v4910, 4
        %v4923 = vsel %vm4582, %v4921, %v4922
        %v4924 = vrot.slane %v4908, 4
        %v4925 = vrot.slane %v4911, 4
        %v4926 = vsel %vm4582, %v4924, %v4925
        %4927 = vrot.lane.b32.xlu0 %v4920, 126
        %v4928 = vpop.permute.xlu0 %4927
        %4929 = vrot.lane.b32.xlu0 %v4923, 126
        %v4930 = vpop.permute.xlu0 %4929
        %4931 = vrot.lane.b32.xlu0 %v4926, 126
        %v4932 = vpop.permute.xlu0 %4931
        %v4933 = vsel %vm978, %v4928, %v4930
        %v4934 = vsel %vm978, %v4930, %v4932
        %v4937 = vadd.f32 %v4797, %v4933
        %v4938 = vadd.f32 %v4798, %v4934
        %v4939 = vld [vmem:[#allocation4 + $0x30] sm:$0xf0]
        %v4940 = vld [vmem:[#allocation4 + $0x38] sm:$0xf0]
        %v4941 = vld [vmem:[#allocation4 + $0x48] sm:$0xf]
        %v4942 = vld [vmem:[#allocation4 + $0x50] sm:$0xf]
        %s4943 = sld [smem:[#allocation12 + $0x12]]
        %v4944 = vstv %s4943
        %v4945 = vmul.f32 %v4939, %v4944
        %v4946 = vmul.f32 %v4940, %v4944
        %v4947 = vmul.f32 %v4941, %v4944
        %v4948 = vmul.f32 %v4942, %v4944
        %v4953 = vrot.slane %v4945, 4
        %v4954 = vrot.slane %v4947, 4
        %v4955 = vsel %vm4582, %v4953, %v4954
        %v4956 = vrot.slane %v4946, 4
        %v4957 = vrot.slane %v4948, 4
        %v4958 = vsel %vm4582, %v4956, %v4957
        %v4961 = vadd.f32 %v4832, %v4955
        %v4962 = vadd.f32 %v4833, %v4958
        %s4963 = sld [smem:[#allocation12 + $0x3f]]
        %v4964 = vstv %s4963
        %v4965 = vmul.f32 %v4939, %v4964
        %v4966 = vmul.f32 %v4940, %v4964
        %v4967 = vmul.f32 %v4941, %v4964
        %v4968 = vmul.f32 %v4942, %v4964
        %v4973 = vrot.slane %v4965, 4
        %v4974 = vrot.slane %v4967, 4
        %v4975 = vsel %vm4582, %v4973, %v4974
        %v4976 = vrot.slane %v4966, 4
        %v4977 = vrot.slane %v4968, 4
        %v4978 = vsel %vm4582, %v4976, %v4977
        %v4981 = vadd.f32 %v4867, %v4975
        %v4982 = vadd.f32 %v4868, %v4978
        %s4983 = sld [smem:[#allocation12 + $0x6c]]
        %v4984 = vstv %s4983
        %v4985 = vmul.f32 %v4939, %v4984
        %v4986 = vmul.f32 %v4940, %v4984
        %v4987 = vmul.f32 %v4941, %v4984
        %v4988 = vmul.f32 %v4942, %v4984
        %v4993 = vrot.slane %v4985, 4
        %v4994 = vrot.slane %v4987, 4
        %v4995 = vsel %vm4582, %v4993, %v4994
        %v4996 = vrot.slane %v4986, 4
        %v4997 = vrot.slane %v4988, 4
        %v4998 = vsel %vm4582, %v4996, %v4997
        %v5001 = vadd.f32 %v4902, %v4995
        %v5002 = vadd.f32 %v4903, %v4998
        %s5003 = sld [smem:[#allocation12 + $0x99]]
        %v5004 = vstv %s5003
        %v5005 = vmul.f32 %v4939, %v5004
        %v5006 = vmul.f32 %v4940, %v5004
        %v5007 = vmul.f32 %v4941, %v5004
        %v5008 = vmul.f32 %v4942, %v5004
        %v5013 = vrot.slane %v5005, 4
        %v5014 = vrot.slane %v5007, 4
        %v5015 = vsel %vm4582, %v5013, %v5014
        %v5016 = vrot.slane %v5006, 4
        %v5017 = vrot.slane %v5008, 4
        %v5018 = vsel %vm4582, %v5016, %v5017
        %v5021 = vadd.f32 %v4937, %v5015
        %v5022 = vadd.f32 %v4938, %v5018
        %v5023 = vld [vmem:[#allocation4 + $0x30] sm:$0xf0]
        %v5024 = vld [vmem:[#allocation4 + $0x38] sm:$0xf0]
        %v5025 = vld [vmem:[#allocation4 + $0x40] sm:$0xf0]
        %v5026 = vld [vmem:[#allocation4 + $0x48] sm:$0xf]
        %v5027 = vld [vmem:[#allocation4 + $0x50] sm:$0xf]
        %v5028 = vld [vmem:[#allocation4 + $0x58] sm:$0xf]
        %s5029 = sld [smem:[#allocation12 + $0x13]]
        %v5030 = vstv %s5029
        %v5031 = vmul.f32 %v5023, %v5030
        %v5032 = vmul.f32 %v5024, %v5030
        %v5033 = vmul.f32 %v5025, %v5030
        %v5034 = vmul.f32 %v5026, %v5030
        %v5035 = vmul.f32 %v5027, %v5030
        %v5036 = vmul.f32 %v5028, %v5030
        %v5043 = vrot.slane %v5031, 4
        %v5044 = vrot.slane %v5034, 4
        %v5045 = vsel %vm4582, %v5043, %v5044
        %v5046 = vrot.slane %v5032, 4
        %v5047 = vrot.slane %v5035, 4
        %v5048 = vsel %vm4582, %v5046, %v5047
        %v5049 = vrot.slane %v5033, 4
        %v5050 = vrot.slane %v5036, 4
        %v5051 = vsel %vm4582, %v5049, %v5050
        %5052 = vrot.lane.b32.xlu0 %v5045, 127
        %v5053 = vpop.permute.xlu0 %5052
        %5054 = vrot.lane.b32.xlu0 %v5048, 127
        %v5055 = vpop.permute.xlu0 %5054
        %5056 = vrot.lane.b32.xlu0 %v5051, 127
        %v5057 = vpop.permute.xlu0 %5056
        %v5058 = vsel %vm902, %v5053, %v5055
        %v5059 = vsel %vm902, %v5055, %v5057
        %v5062 = vadd.f32 %v4961, %v5058
        %v5063 = vadd.f32 %v4962, %v5059
        %s5064 = sld [smem:[#allocation12 + $0x40]]
        %v5065 = vstv %s5064
        %v5066 = vmul.f32 %v5023, %v5065
        %v5067 = vmul.f32 %v5024, %v5065
        %v5068 = vmul.f32 %v5025, %v5065
        %v5069 = vmul.f32 %v5026, %v5065
        %v5070 = vmul.f32 %v5027, %v5065
        %v5071 = vmul.f32 %v5028, %v5065
        %v5078 = vrot.slane %v5066, 4
        %v5079 = vrot.slane %v5069, 4
        %v5080 = vsel %vm4582, %v5078, %v5079
        %v5081 = vrot.slane %v5067, 4
        %v5082 = vrot.slane %v5070, 4
        %v5083 = vsel %vm4582, %v5081, %v5082
        %v5084 = vrot.slane %v5068, 4
        %v5085 = vrot.slane %v5071, 4
        %v5086 = vsel %vm4582, %v5084, %v5085
        %5087 = vrot.lane.b32.xlu0 %v5080, 127
        %v5088 = vpop.permute.xlu0 %5087
        %5089 = vrot.lane.b32.xlu0 %v5083, 127
        %v5090 = vpop.permute.xlu0 %5089
        %5091 = vrot.lane.b32.xlu0 %v5086, 127
        %v5092 = vpop.permute.xlu0 %5091
        %v5093 = vsel %vm902, %v5088, %v5090
        %v5094 = vsel %vm902, %v5090, %v5092
        %v5097 = vadd.f32 %v4981, %v5093
        %v5098 = vadd.f32 %v4982, %v5094
        %s5099 = sld [smem:[#allocation12 + $0x6d]]
        %v5100 = vstv %s5099
        %v5101 = vmul.f32 %v5023, %v5100
        %v5102 = vmul.f32 %v5024, %v5100
        %v5103 = vmul.f32 %v5025, %v5100
        %v5104 = vmul.f32 %v5026, %v5100
        %v5105 = vmul.f32 %v5027, %v5100
        %v5106 = vmul.f32 %v5028, %v5100
        %v5113 = vrot.slane %v5101, 4
        %v5114 = vrot.slane %v5104, 4
        %v5115 = vsel %vm4582, %v5113, %v5114
        %v5116 = vrot.slane %v5102, 4
        %v5117 = vrot.slane %v5105, 4
        %v5118 = vsel %vm4582, %v5116, %v5117
        %v5119 = vrot.slane %v5103, 4
        %v5120 = vrot.slane %v5106, 4
        %v5121 = vsel %vm4582, %v5119, %v5120
        %5122 = vrot.lane.b32.xlu0 %v5115, 127
        %v5123 = vpop.permute.xlu0 %5122
        %5124 = vrot.lane.b32.xlu0 %v5118, 127
        %v5125 = vpop.permute.xlu0 %5124
        %5126 = vrot.lane.b32.xlu0 %v5121, 127
        %v5127 = vpop.permute.xlu0 %5126
        %v5128 = vsel %vm902, %v5123, %v5125
        %v5129 = vsel %vm902, %v5125, %v5127
        %v5132 = vadd.f32 %v5001, %v5128
        %v5133 = vadd.f32 %v5002, %v5129
        %s5134 = sld [smem:[#allocation12 + $0x9a]]
        %v5135 = vstv %s5134
        %v5136 = vmul.f32 %v5023, %v5135
        %v5137 = vmul.f32 %v5024, %v5135
        %v5138 = vmul.f32 %v5025, %v5135
        %v5139 = vmul.f32 %v5026, %v5135
        %v5140 = vmul.f32 %v5027, %v5135
        %v5141 = vmul.f32 %v5028, %v5135
        %v5148 = vrot.slane %v5136, 4
        %v5149 = vrot.slane %v5139, 4
        %v5150 = vsel %vm4582, %v5148, %v5149
        %v5151 = vrot.slane %v5137, 4
        %v5152 = vrot.slane %v5140, 4
        %v5153 = vsel %vm4582, %v5151, %v5152
        %v5154 = vrot.slane %v5138, 4
        %v5155 = vrot.slane %v5141, 4
        %v5156 = vsel %vm4582, %v5154, %v5155
        %5157 = vrot.lane.b32.xlu0 %v5150, 127
        %v5158 = vpop.permute.xlu0 %5157
        %5159 = vrot.lane.b32.xlu0 %v5153, 127
        %v5160 = vpop.permute.xlu0 %5159
        %5161 = vrot.lane.b32.xlu0 %v5156, 127
        %v5162 = vpop.permute.xlu0 %5161
        %v5163 = vsel %vm902, %v5158, %v5160
        %v5164 = vsel %vm902, %v5160, %v5162
        %v5167 = vadd.f32 %v5021, %v5163
        %v5168 = vadd.f32 %v5022, %v5164
        %s5169 = sld [smem:[#allocation12 + $0x14]]
        %v5170 = vstv %s5169
        %v5171 = vmul.f32 %v5023, %v5170
        %v5172 = vmul.f32 %v5024, %v5170
        %v5173 = vmul.f32 %v5025, %v5170
        %v5174 = vmul.f32 %v5026, %v5170
        %v5175 = vmul.f32 %v5027, %v5170
        %v5176 = vmul.f32 %v5028, %v5170
        %v5183 = vrot.slane %v5171, 4
        %v5184 = vrot.slane %v5174, 4
        %v5185 = vsel %vm4582, %v5183, %v5184
        %v5186 = vrot.slane %v5172, 4
        %v5187 = vrot.slane %v5175, 4
        %v5188 = vsel %vm4582, %v5186, %v5187
        %v5189 = vrot.slane %v5173, 4
        %v5190 = vrot.slane %v5176, 4
        %v5191 = vsel %vm4582, %v5189, %v5190
        %5192 = vrot.lane.b32.xlu0 %v5185, 126
        %v5193 = vpop.permute.xlu0 %5192
        %5194 = vrot.lane.b32.xlu0 %v5188, 126
        %v5195 = vpop.permute.xlu0 %5194
        %5196 = vrot.lane.b32.xlu0 %v5191, 126
        %v5197 = vpop.permute.xlu0 %5196
        %v5198 = vsel %vm978, %v5193, %v5195
        %v5199 = vsel %vm978, %v5195, %v5197
        %v5202 = vadd.f32 %v5062, %v5198
        %v5203 = vadd.f32 %v5063, %v5199
        %s5204 = sld [smem:[#allocation12 + $0x41]]
        %v5205 = vstv %s5204
        %v5206 = vmul.f32 %v5023, %v5205
        %v5207 = vmul.f32 %v5024, %v5205
        %v5208 = vmul.f32 %v5025, %v5205
        %v5209 = vmul.f32 %v5026, %v5205
        %v5210 = vmul.f32 %v5027, %v5205
        %v5211 = vmul.f32 %v5028, %v5205
        %v5218 = vrot.slane %v5206, 4
        %v5219 = vrot.slane %v5209, 4
        %v5220 = vsel %vm4582, %v5218, %v5219
        %v5221 = vrot.slane %v5207, 4
        %v5222 = vrot.slane %v5210, 4
        %v5223 = vsel %vm4582, %v5221, %v5222
        %v5224 = vrot.slane %v5208, 4
        %v5225 = vrot.slane %v5211, 4
        %v5226 = vsel %vm4582, %v5224, %v5225
        %5227 = vrot.lane.b32.xlu0 %v5220, 126
        %v5228 = vpop.permute.xlu0 %5227
        %5229 = vrot.lane.b32.xlu0 %v5223, 126
        %v5230 = vpop.permute.xlu0 %5229
        %5231 = vrot.lane.b32.xlu0 %v5226, 126
        %v5232 = vpop.permute.xlu0 %5231
        %v5233 = vsel %vm978, %v5228, %v5230
        %v5234 = vsel %vm978, %v5230, %v5232
        %v5237 = vadd.f32 %v5097, %v5233
        %v5238 = vadd.f32 %v5098, %v5234
        %s5239 = sld [smem:[#allocation12 + $0x6e]]
        %v5240 = vstv %s5239
        %v5241 = vmul.f32 %v5023, %v5240
        %v5242 = vmul.f32 %v5024, %v5240
        %v5243 = vmul.f32 %v5025, %v5240
        %v5244 = vmul.f32 %v5026, %v5240
        %v5245 = vmul.f32 %v5027, %v5240
        %v5246 = vmul.f32 %v5028, %v5240
        %v5253 = vrot.slane %v5241, 4
        %v5254 = vrot.slane %v5244, 4
        %v5255 = vsel %vm4582, %v5253, %v5254
        %v5256 = vrot.slane %v5242, 4
        %v5257 = vrot.slane %v5245, 4
        %v5258 = vsel %vm4582, %v5256, %v5257
        %v5259 = vrot.slane %v5243, 4
        %v5260 = vrot.slane %v5246, 4
        %v5261 = vsel %vm4582, %v5259, %v5260
        %5262 = vrot.lane.b32.xlu0 %v5255, 126
        %v5263 = vpop.permute.xlu0 %5262
        %5264 = vrot.lane.b32.xlu0 %v5258, 126
        %v5265 = vpop.permute.xlu0 %5264
        %5266 = vrot.lane.b32.xlu0 %v5261, 126
        %v5267 = vpop.permute.xlu0 %5266
        %v5268 = vsel %vm978, %v5263, %v5265
        %v5269 = vsel %vm978, %v5265, %v5267
        %v5272 = vadd.f32 %v5132, %v5268
        %v5273 = vadd.f32 %v5133, %v5269
        %s5274 = sld [smem:[#allocation12 + $0x9b]]
        %v5275 = vstv %s5274
        %v5276 = vmul.f32 %v5023, %v5275
        %v5277 = vmul.f32 %v5024, %v5275
        %v5278 = vmul.f32 %v5025, %v5275
        %v5279 = vmul.f32 %v5026, %v5275
        %v5280 = vmul.f32 %v5027, %v5275
        %v5281 = vmul.f32 %v5028, %v5275
        %v5288 = vrot.slane %v5276, 4
        %v5289 = vrot.slane %v5279, 4
        %v5290 = vsel %vm4582, %v5288, %v5289
        %v5291 = vrot.slane %v5277, 4
        %v5292 = vrot.slane %v5280, 4
        %v5293 = vsel %vm4582, %v5291, %v5292
        %v5294 = vrot.slane %v5278, 4
        %v5295 = vrot.slane %v5281, 4
        %v5296 = vsel %vm4582, %v5294, %v5295
        %5297 = vrot.lane.b32.xlu0 %v5290, 126
        %v5298 = vpop.permute.xlu0 %5297
        %5299 = vrot.lane.b32.xlu0 %v5293, 126
        %v5300 = vpop.permute.xlu0 %5299
        %5301 = vrot.lane.b32.xlu0 %v5296, 126
        %v5302 = vpop.permute.xlu0 %5301
        %v5303 = vsel %vm978, %v5298, %v5300
        %v5304 = vsel %vm978, %v5300, %v5302
        %v5307 = vadd.f32 %v5167, %v5303
        %v5308 = vadd.f32 %v5168, %v5304
        %v5309 = vld [vmem:[#allocation4 + $0x30] sm:$0xe0]
        %v5310 = vld [vmem:[#allocation4 + $0x38] sm:$0xe0]
        %v5311 = vld [vmem:[#allocation4 + $0x48] sm:$0x1f]
        %v5312 = vld [vmem:[#allocation4 + $0x50] sm:$0x1f]
        %s5313 = sld [smem:[#allocation12 + $0x15]]
        %v5314 = vstv %s5313
        %v5315 = vmul.f32 %v5309, %v5314
        %v5316 = vmul.f32 %v5310, %v5314
        %v5317 = vmul.f32 %v5311, %v5314
        %v5318 = vmul.f32 %v5312, %v5314
        %vm5323 = vcmask 1042432
        %v5324 = vrot.slane %v5315, 5
        %v5325 = vrot.slane %v5317, 5
        %v5326 = vsel %vm5323, %v5324, %v5325
        %v5327 = vrot.slane %v5316, 5
        %v5328 = vrot.slane %v5318, 5
        %v5329 = vsel %vm5323, %v5327, %v5328
        %v5332 = vadd.f32 %v5202, %v5326
        %v5333 = vadd.f32 %v5203, %v5329
        %s5334 = sld [smem:[#allocation12 + $0x42]]
        %v5335 = vstv %s5334
        %v5336 = vmul.f32 %v5309, %v5335
        %v5337 = vmul.f32 %v5310, %v5335
        %v5338 = vmul.f32 %v5311, %v5335
        %v5339 = vmul.f32 %v5312, %v5335
        %v5344 = vrot.slane %v5336, 5
        %v5345 = vrot.slane %v5338, 5
        %v5346 = vsel %vm5323, %v5344, %v5345
        %v5347 = vrot.slane %v5337, 5
        %v5348 = vrot.slane %v5339, 5
        %v5349 = vsel %vm5323, %v5347, %v5348
        %v5352 = vadd.f32 %v5237, %v5346
        %v5353 = vadd.f32 %v5238, %v5349
        %s5354 = sld [smem:[#allocation12 + $0x6f]]
        %v5355 = vstv %s5354
        %v5356 = vmul.f32 %v5309, %v5355
        %v5357 = vmul.f32 %v5310, %v5355
        %v5358 = vmul.f32 %v5311, %v5355
        %v5359 = vmul.f32 %v5312, %v5355
        %v5364 = vrot.slane %v5356, 5
        %v5365 = vrot.slane %v5358, 5
        %v5366 = vsel %vm5323, %v5364, %v5365
        %v5367 = vrot.slane %v5357, 5
        %v5368 = vrot.slane %v5359, 5
        %v5369 = vsel %vm5323, %v5367, %v5368
        %v5372 = vadd.f32 %v5272, %v5366
        %v5373 = vadd.f32 %v5273, %v5369
        %s5374 = sld [smem:[#allocation12 + $0x9c]]
        %v5375 = vstv %s5374
        %v5376 = vmul.f32 %v5309, %v5375
        %v5377 = vmul.f32 %v5310, %v5375
        %v5378 = vmul.f32 %v5311, %v5375
        %v5379 = vmul.f32 %v5312, %v5375
        %v5384 = vrot.slane %v5376, 5
        %v5385 = vrot.slane %v5378, 5
        %v5386 = vsel %vm5323, %v5384, %v5385
        %v5387 = vrot.slane %v5377, 5
        %v5388 = vrot.slane %v5379, 5
        %v5389 = vsel %vm5323, %v5387, %v5388
        %v5392 = vadd.f32 %v5307, %v5386
        %v5393 = vadd.f32 %v5308, %v5389
        %v5394 = vld [vmem:[#allocation4 + $0x30] sm:$0xe0]
        %v5395 = vld [vmem:[#allocation4 + $0x38] sm:$0xe0]
        %v5396 = vld [vmem:[#allocation4 + $0x40] sm:$0xe0]
        %v5397 = vld [vmem:[#allocation4 + $0x48] sm:$0x1f]
        %v5398 = vld [vmem:[#allocation4 + $0x50] sm:$0x1f]
        %v5399 = vld [vmem:[#allocation4 + $0x58] sm:$0x1f]
        %s5400 = sld [smem:[#allocation12 + $0x16]]
        %v5401 = vstv %s5400
        %v5402 = vmul.f32 %v5394, %v5401
        %v5403 = vmul.f32 %v5395, %v5401
        %v5404 = vmul.f32 %v5396, %v5401
        %v5405 = vmul.f32 %v5397, %v5401
        %v5406 = vmul.f32 %v5398, %v5401
        %v5407 = vmul.f32 %v5399, %v5401
        %v5414 = vrot.slane %v5402, 5
        %v5415 = vrot.slane %v5405, 5
        %v5416 = vsel %vm5323, %v5414, %v5415
        %v5417 = vrot.slane %v5403, 5
        %v5418 = vrot.slane %v5406, 5
        %v5419 = vsel %vm5323, %v5417, %v5418
        %v5420 = vrot.slane %v5404, 5
        %v5421 = vrot.slane %v5407, 5
        %v5422 = vsel %vm5323, %v5420, %v5421
        %5423 = vrot.lane.b32.xlu0 %v5416, 127
        %v5424 = vpop.permute.xlu0 %5423
        %5425 = vrot.lane.b32.xlu0 %v5419, 127
        %v5426 = vpop.permute.xlu0 %5425
        %5427 = vrot.lane.b32.xlu0 %v5422, 127
        %v5428 = vpop.permute.xlu0 %5427
        %v5429 = vsel %vm902, %v5424, %v5426
        %v5430 = vsel %vm902, %v5426, %v5428
        %v5433 = vadd.f32 %v5332, %v5429
        %v5434 = vadd.f32 %v5333, %v5430
        %s5435 = sld [smem:[#allocation12 + $0x43]]
        %v5436 = vstv %s5435
        %v5437 = vmul.f32 %v5394, %v5436
        %v5438 = vmul.f32 %v5395, %v5436
        %v5439 = vmul.f32 %v5396, %v5436
        %v5440 = vmul.f32 %v5397, %v5436
        %v5441 = vmul.f32 %v5398, %v5436
        %v5442 = vmul.f32 %v5399, %v5436
        %v5449 = vrot.slane %v5437, 5
        %v5450 = vrot.slane %v5440, 5
        %v5451 = vsel %vm5323, %v5449, %v5450
        %v5452 = vrot.slane %v5438, 5
        %v5453 = vrot.slane %v5441, 5
        %v5454 = vsel %vm5323, %v5452, %v5453
        %v5455 = vrot.slane %v5439, 5
        %v5456 = vrot.slane %v5442, 5
        %v5457 = vsel %vm5323, %v5455, %v5456
        %5458 = vrot.lane.b32.xlu0 %v5451, 127
        %v5459 = vpop.permute.xlu0 %5458
        %5460 = vrot.lane.b32.xlu0 %v5454, 127
        %v5461 = vpop.permute.xlu0 %5460
        %5462 = vrot.lane.b32.xlu0 %v5457, 127
        %v5463 = vpop.permute.xlu0 %5462
        %v5464 = vsel %vm902, %v5459, %v5461
        %v5465 = vsel %vm902, %v5461, %v5463
        %v5468 = vadd.f32 %v5352, %v5464
        %v5469 = vadd.f32 %v5353, %v5465
        %s5470 = sld [smem:[#allocation12 + $0x70]]
        %v5471 = vstv %s5470
        %v5472 = vmul.f32 %v5394, %v5471
        %v5473 = vmul.f32 %v5395, %v5471
        %v5474 = vmul.f32 %v5396, %v5471
        %v5475 = vmul.f32 %v5397, %v5471
        %v5476 = vmul.f32 %v5398, %v5471
        %v5477 = vmul.f32 %v5399, %v5471
        %v5484 = vrot.slane %v5472, 5
        %v5485 = vrot.slane %v5475, 5
        %v5486 = vsel %vm5323, %v5484, %v5485
        %v5487 = vrot.slane %v5473, 5
        %v5488 = vrot.slane %v5476, 5
        %v5489 = vsel %vm5323, %v5487, %v5488
        %v5490 = vrot.slane %v5474, 5
        %v5491 = vrot.slane %v5477, 5
        %v5492 = vsel %vm5323, %v5490, %v5491
        %5493 = vrot.lane.b32.xlu0 %v5486, 127
        %v5494 = vpop.permute.xlu0 %5493
        %5495 = vrot.lane.b32.xlu0 %v5489, 127
        %v5496 = vpop.permute.xlu0 %5495
        %5497 = vrot.lane.b32.xlu0 %v5492, 127
        %v5498 = vpop.permute.xlu0 %5497
        %v5499 = vsel %vm902, %v5494, %v5496
        %v5500 = vsel %vm902, %v5496, %v5498
        %v5503 = vadd.f32 %v5372, %v5499
        %v5504 = vadd.f32 %v5373, %v5500
        %s5505 = sld [smem:[#allocation12 + $0x9d]]
        %v5506 = vstv %s5505
        %v5507 = vmul.f32 %v5394, %v5506
        %v5508 = vmul.f32 %v5395, %v5506
        %v5509 = vmul.f32 %v5396, %v5506
        %v5510 = vmul.f32 %v5397, %v5506
        %v5511 = vmul.f32 %v5398, %v5506
        %v5512 = vmul.f32 %v5399, %v5506
        %v5519 = vrot.slane %v5507, 5
        %v5520 = vrot.slane %v5510, 5
        %v5521 = vsel %vm5323, %v5519, %v5520
        %v5522 = vrot.slane %v5508, 5
        %v5523 = vrot.slane %v5511, 5
        %v5524 = vsel %vm5323, %v5522, %v5523
        %v5525 = vrot.slane %v5509, 5
        %v5526 = vrot.slane %v5512, 5
        %v5527 = vsel %vm5323, %v5525, %v5526
        %5528 = vrot.lane.b32.xlu0 %v5521, 127
        %v5529 = vpop.permute.xlu0 %5528
        %5530 = vrot.lane.b32.xlu0 %v5524, 127
        %v5531 = vpop.permute.xlu0 %5530
        %5532 = vrot.lane.b32.xlu0 %v5527, 127
        %v5533 = vpop.permute.xlu0 %5532
        %v5534 = vsel %vm902, %v5529, %v5531
        %v5535 = vsel %vm902, %v5531, %v5533
        %v5538 = vadd.f32 %v5392, %v5534
        %v5539 = vadd.f32 %v5393, %v5535
        %s5540 = sld [smem:[#allocation12 + $0x17]]
        %v5541 = vstv %s5540
        %v5542 = vmul.f32 %v5394, %v5541
        %v5543 = vmul.f32 %v5395, %v5541
        %v5544 = vmul.f32 %v5396, %v5541
        %v5545 = vmul.f32 %v5397, %v5541
        %v5546 = vmul.f32 %v5398, %v5541
        %v5547 = vmul.f32 %v5399, %v5541
        %v5554 = vrot.slane %v5542, 5
        %v5555 = vrot.slane %v5545, 5
        %v5556 = vsel %vm5323, %v5554, %v5555
        %v5557 = vrot.slane %v5543, 5
        %v5558 = vrot.slane %v5546, 5
        %v5559 = vsel %vm5323, %v5557, %v5558
        %v5560 = vrot.slane %v5544, 5
        %v5561 = vrot.slane %v5547, 5
        %v5562 = vsel %vm5323, %v5560, %v5561
        %5563 = vrot.lane.b32.xlu0 %v5556, 126
        %v5564 = vpop.permute.xlu0 %5563
        %5565 = vrot.lane.b32.xlu0 %v5559, 126
        %v5566 = vpop.permute.xlu0 %5565
        %5567 = vrot.lane.b32.xlu0 %v5562, 126
        %v5568 = vpop.permute.xlu0 %5567
        %v5569 = vsel %vm978, %v5564, %v5566
        %v5570 = vsel %vm978, %v5566, %v5568
        %v5573 = vadd.f32 %v5433, %v5569
        %v5574 = vadd.f32 %v5434, %v5570
        %s5575 = sld [smem:[#allocation12 + $0x44]]
        %v5576 = vstv %s5575
        %v5577 = vmul.f32 %v5394, %v5576
        %v5578 = vmul.f32 %v5395, %v5576
        %v5579 = vmul.f32 %v5396, %v5576
        %v5580 = vmul.f32 %v5397, %v5576
        %v5581 = vmul.f32 %v5398, %v5576
        %v5582 = vmul.f32 %v5399, %v5576
        %v5589 = vrot.slane %v5577, 5
        %v5590 = vrot.slane %v5580, 5
        %v5591 = vsel %vm5323, %v5589, %v5590
        %v5592 = vrot.slane %v5578, 5
        %v5593 = vrot.slane %v5581, 5
        %v5594 = vsel %vm5323, %v5592, %v5593
        %v5595 = vrot.slane %v5579, 5
        %v5596 = vrot.slane %v5582, 5
        %v5597 = vsel %vm5323, %v5595, %v5596
        %5598 = vrot.lane.b32.xlu0 %v5591, 126
        %v5599 = vpop.permute.xlu0 %5598
        %5600 = vrot.lane.b32.xlu0 %v5594, 126
        %v5601 = vpop.permute.xlu0 %5600
        %5602 = vrot.lane.b32.xlu0 %v5597, 126
        %v5603 = vpop.permute.xlu0 %5602
        %v5604 = vsel %vm978, %v5599, %v5601
        %v5605 = vsel %vm978, %v5601, %v5603
        %v5608 = vadd.f32 %v5468, %v5604
        %v5609 = vadd.f32 %v5469, %v5605
        %s5610 = sld [smem:[#allocation12 + $0x71]]
        %v5611 = vstv %s5610
        %v5612 = vmul.f32 %v5394, %v5611
        %v5613 = vmul.f32 %v5395, %v5611
        %v5614 = vmul.f32 %v5396, %v5611
        %v5615 = vmul.f32 %v5397, %v5611
        %v5616 = vmul.f32 %v5398, %v5611
        %v5617 = vmul.f32 %v5399, %v5611
        %v5624 = vrot.slane %v5612, 5
        %v5625 = vrot.slane %v5615, 5
        %v5626 = vsel %vm5323, %v5624, %v5625
        %v5627 = vrot.slane %v5613, 5
        %v5628 = vrot.slane %v5616, 5
        %v5629 = vsel %vm5323, %v5627, %v5628
        %v5630 = vrot.slane %v5614, 5
        %v5631 = vrot.slane %v5617, 5
        %v5632 = vsel %vm5323, %v5630, %v5631
        %5633 = vrot.lane.b32.xlu0 %v5626, 126
        %v5634 = vpop.permute.xlu0 %5633
        %5635 = vrot.lane.b32.xlu0 %v5629, 126
        %v5636 = vpop.permute.xlu0 %5635
        %5637 = vrot.lane.b32.xlu0 %v5632, 126
        %v5638 = vpop.permute.xlu0 %5637
        %v5639 = vsel %vm978, %v5634, %v5636
        %v5640 = vsel %vm978, %v5636, %v5638
        %v5643 = vadd.f32 %v5503, %v5639
        %v5644 = vadd.f32 %v5504, %v5640
        %s5645 = sld [smem:[#allocation12 + $0x9e]]
        %v5646 = vstv %s5645
        %v5647 = vmul.f32 %v5394, %v5646
        %v5648 = vmul.f32 %v5395, %v5646
        %v5649 = vmul.f32 %v5396, %v5646
        %v5650 = vmul.f32 %v5397, %v5646
        %v5651 = vmul.f32 %v5398, %v5646
        %v5652 = vmul.f32 %v5399, %v5646
        %v5659 = vrot.slane %v5647, 5
        %v5660 = vrot.slane %v5650, 5
        %v5661 = vsel %vm5323, %v5659, %v5660
        %v5662 = vrot.slane %v5648, 5
        %v5663 = vrot.slane %v5651, 5
        %v5664 = vsel %vm5323, %v5662, %v5663
        %v5665 = vrot.slane %v5649, 5
        %v5666 = vrot.slane %v5652, 5
        %v5667 = vsel %vm5323, %v5665, %v5666
        %5668 = vrot.lane.b32.xlu0 %v5661, 126
        %v5669 = vpop.permute.xlu0 %5668
        %5670 = vrot.lane.b32.xlu0 %v5664, 126
        %v5671 = vpop.permute.xlu0 %5670
        %5672 = vrot.lane.b32.xlu0 %v5667, 126
        %v5673 = vpop.permute.xlu0 %5672
        %v5674 = vsel %vm978, %v5669, %v5671
        %v5675 = vsel %vm978, %v5671, %v5673
        %v5678 = vadd.f32 %v5538, %v5674
        %v5679 = vadd.f32 %v5539, %v5675
        %v5680 = vld [vmem:[#allocation4 + $0x30] sm:$0xc0]
        %v5681 = vld [vmem:[#allocation4 + $0x38] sm:$0xc0]
        %v5682 = vld [vmem:[#allocation4 + $0x48] sm:$0x3f]
        %v5683 = vld [vmem:[#allocation4 + $0x50] sm:$0x3f]
        %s5684 = sld [smem:[#allocation12 + $0x18]]
        %v5685 = vstv %s5684
        %v5686 = vmul.f32 %v5680, %v5685
        %v5687 = vmul.f32 %v5681, %v5685
        %v5688 = vmul.f32 %v5682, %v5685
        %v5689 = vmul.f32 %v5683, %v5685
        %vm5694 = vcmask 1041408
        %v5695 = vrot.slane %v5686, 6
        %v5696 = vrot.slane %v5688, 6
        %v5697 = vsel %vm5694, %v5695, %v5696
        %v5698 = vrot.slane %v5687, 6
        %v5699 = vrot.slane %v5689, 6
        %v5700 = vsel %vm5694, %v5698, %v5699
        %v5703 = vadd.f32 %v5573, %v5697
        %v5704 = vadd.f32 %v5574, %v5700
        %s5705 = sld [smem:[#allocation12 + $0x45]]
        %v5706 = vstv %s5705
        %v5707 = vmul.f32 %v5680, %v5706
        %v5708 = vmul.f32 %v5681, %v5706
        %v5709 = vmul.f32 %v5682, %v5706
        %v5710 = vmul.f32 %v5683, %v5706
        %v5715 = vrot.slane %v5707, 6
        %v5716 = vrot.slane %v5709, 6
        %v5717 = vsel %vm5694, %v5715, %v5716
        %v5718 = vrot.slane %v5708, 6
        %v5719 = vrot.slane %v5710, 6
        %v5720 = vsel %vm5694, %v5718, %v5719
        %v5723 = vadd.f32 %v5608, %v5717
        %v5724 = vadd.f32 %v5609, %v5720
        %s5725 = sld [smem:[#allocation12 + $0x72]]
        %v5726 = vstv %s5725
        %v5727 = vmul.f32 %v5680, %v5726
        %v5728 = vmul.f32 %v5681, %v5726
        %v5729 = vmul.f32 %v5682, %v5726
        %v5730 = vmul.f32 %v5683, %v5726
        %v5735 = vrot.slane %v5727, 6
        %v5736 = vrot.slane %v5729, 6
        %v5737 = vsel %vm5694, %v5735, %v5736
        %v5738 = vrot.slane %v5728, 6
        %v5739 = vrot.slane %v5730, 6
        %v5740 = vsel %vm5694, %v5738, %v5739
        %v5743 = vadd.f32 %v5643, %v5737
        %v5744 = vadd.f32 %v5644, %v5740
        %s5745 = sld [smem:[#allocation12 + $0x9f]]
        %v5746 = vstv %s5745
        %v5747 = vmul.f32 %v5680, %v5746
        %v5748 = vmul.f32 %v5681, %v5746
        %v5749 = vmul.f32 %v5682, %v5746
        %v5750 = vmul.f32 %v5683, %v5746
        %v5755 = vrot.slane %v5747, 6
        %v5756 = vrot.slane %v5749, 6
        %v5757 = vsel %vm5694, %v5755, %v5756
        %v5758 = vrot.slane %v5748, 6
        %v5759 = vrot.slane %v5750, 6
        %v5760 = vsel %vm5694, %v5758, %v5759
        %v5763 = vadd.f32 %v5678, %v5757
        %v5764 = vadd.f32 %v5679, %v5760
        %v5765 = vld [vmem:[#allocation4 + $0x30] sm:$0xc0]
        %v5766 = vld [vmem:[#allocation4 + $0x38] sm:$0xc0]
        %v5767 = vld [vmem:[#allocation4 + $0x40] sm:$0xc0]
        %v5768 = vld [vmem:[#allocation4 + $0x48] sm:$0x3f]
        %v5769 = vld [vmem:[#allocation4 + $0x50] sm:$0x3f]
        %v5770 = vld [vmem:[#allocation4 + $0x58] sm:$0x3f]
        %s5771 = sld [smem:[#allocation12 + $0x19]]
        %v5772 = vstv %s5771
        %v5773 = vmul.f32 %v5765, %v5772
        %v5774 = vmul.f32 %v5766, %v5772
        %v5775 = vmul.f32 %v5767, %v5772
        %v5776 = vmul.f32 %v5768, %v5772
        %v5777 = vmul.f32 %v5769, %v5772
        %v5778 = vmul.f32 %v5770, %v5772
        %v5785 = vrot.slane %v5773, 6
        %v5786 = vrot.slane %v5776, 6
        %v5787 = vsel %vm5694, %v5785, %v5786
        %v5788 = vrot.slane %v5774, 6
        %v5789 = vrot.slane %v5777, 6
        %v5790 = vsel %vm5694, %v5788, %v5789
        %v5791 = vrot.slane %v5775, 6
        %v5792 = vrot.slane %v5778, 6
        %v5793 = vsel %vm5694, %v5791, %v5792
        %5794 = vrot.lane.b32.xlu0 %v5787, 127
        %v5795 = vpop.permute.xlu0 %5794
        %5796 = vrot.lane.b32.xlu0 %v5790, 127
        %v5797 = vpop.permute.xlu0 %5796
        %5798 = vrot.lane.b32.xlu0 %v5793, 127
        %v5799 = vpop.permute.xlu0 %5798
        %v5800 = vsel %vm902, %v5795, %v5797
        %v5801 = vsel %vm902, %v5797, %v5799
        %v5804 = vadd.f32 %v5703, %v5800
        %v5805 = vadd.f32 %v5704, %v5801
        %s5806 = sld [smem:[#allocation12 + $0x46]]
        %v5807 = vstv %s5806
        %v5808 = vmul.f32 %v5765, %v5807
        %v5809 = vmul.f32 %v5766, %v5807
        %v5810 = vmul.f32 %v5767, %v5807
        %v5811 = vmul.f32 %v5768, %v5807
        %v5812 = vmul.f32 %v5769, %v5807
        %v5813 = vmul.f32 %v5770, %v5807
        %v5820 = vrot.slane %v5808, 6
        %v5821 = vrot.slane %v5811, 6
        %v5822 = vsel %vm5694, %v5820, %v5821
        %v5823 = vrot.slane %v5809, 6
        %v5824 = vrot.slane %v5812, 6
        %v5825 = vsel %vm5694, %v5823, %v5824
        %v5826 = vrot.slane %v5810, 6
        %v5827 = vrot.slane %v5813, 6
        %v5828 = vsel %vm5694, %v5826, %v5827
        %5829 = vrot.lane.b32.xlu0 %v5822, 127
        %v5830 = vpop.permute.xlu0 %5829
        %5831 = vrot.lane.b32.xlu0 %v5825, 127
        %v5832 = vpop.permute.xlu0 %5831
        %5833 = vrot.lane.b32.xlu0 %v5828, 127
        %v5834 = vpop.permute.xlu0 %5833
        %v5835 = vsel %vm902, %v5830, %v5832
        %v5836 = vsel %vm902, %v5832, %v5834
        %v5839 = vadd.f32 %v5723, %v5835
        %v5840 = vadd.f32 %v5724, %v5836
        %s5841 = sld [smem:[#allocation12 + $0x73]]
        %v5842 = vstv %s5841
        %v5843 = vmul.f32 %v5765, %v5842
        %v5844 = vmul.f32 %v5766, %v5842
        %v5845 = vmul.f32 %v5767, %v5842
        %v5846 = vmul.f32 %v5768, %v5842
        %v5847 = vmul.f32 %v5769, %v5842
        %v5848 = vmul.f32 %v5770, %v5842
        %v5855 = vrot.slane %v5843, 6
        %v5856 = vrot.slane %v5846, 6
        %v5857 = vsel %vm5694, %v5855, %v5856
        %v5858 = vrot.slane %v5844, 6
        %v5859 = vrot.slane %v5847, 6
        %v5860 = vsel %vm5694, %v5858, %v5859
        %v5861 = vrot.slane %v5845, 6
        %v5862 = vrot.slane %v5848, 6
        %v5863 = vsel %vm5694, %v5861, %v5862
        %5864 = vrot.lane.b32.xlu0 %v5857, 127
        %v5865 = vpop.permute.xlu0 %5864
        %5866 = vrot.lane.b32.xlu0 %v5860, 127
        %v5867 = vpop.permute.xlu0 %5866
        %5868 = vrot.lane.b32.xlu0 %v5863, 127
        %v5869 = vpop.permute.xlu0 %5868
        %v5870 = vsel %vm902, %v5865, %v5867
        %v5871 = vsel %vm902, %v5867, %v5869
        %v5874 = vadd.f32 %v5743, %v5870
        %v5875 = vadd.f32 %v5744, %v5871
        %s5876 = sld [smem:[#allocation12 + $0xa0]]
        %v5877 = vstv %s5876
        %v5878 = vmul.f32 %v5765, %v5877
        %v5879 = vmul.f32 %v5766, %v5877
        %v5880 = vmul.f32 %v5767, %v5877
        %v5881 = vmul.f32 %v5768, %v5877
        %v5882 = vmul.f32 %v5769, %v5877
        %v5883 = vmul.f32 %v5770, %v5877
        %v5890 = vrot.slane %v5878, 6
        %v5891 = vrot.slane %v5881, 6
        %v5892 = vsel %vm5694, %v5890, %v5891
        %v5893 = vrot.slane %v5879, 6
        %v5894 = vrot.slane %v5882, 6
        %v5895 = vsel %vm5694, %v5893, %v5894
        %v5896 = vrot.slane %v5880, 6
        %v5897 = vrot.slane %v5883, 6
        %v5898 = vsel %vm5694, %v5896, %v5897
        %5899 = vrot.lane.b32.xlu0 %v5892, 127
        %v5900 = vpop.permute.xlu0 %5899
        %5901 = vrot.lane.b32.xlu0 %v5895, 127
        %v5902 = vpop.permute.xlu0 %5901
        %5903 = vrot.lane.b32.xlu0 %v5898, 127
        %v5904 = vpop.permute.xlu0 %5903
        %v5905 = vsel %vm902, %v5900, %v5902
        %v5906 = vsel %vm902, %v5902, %v5904
        %v5909 = vadd.f32 %v5763, %v5905
        %v5910 = vadd.f32 %v5764, %v5906
        %s5911 = sld [smem:[#allocation12 + $0x1a]]
        %v5912 = vstv %s5911
        %v5913 = vmul.f32 %v5765, %v5912
        %v5914 = vmul.f32 %v5766, %v5912
        %v5915 = vmul.f32 %v5767, %v5912
        %v5916 = vmul.f32 %v5768, %v5912
        %v5917 = vmul.f32 %v5769, %v5912
        %v5918 = vmul.f32 %v5770, %v5912
        %v5925 = vrot.slane %v5913, 6
        %v5926 = vrot.slane %v5916, 6
        %v5927 = vsel %vm5694, %v5925, %v5926
        %v5928 = vrot.slane %v5914, 6
        %v5929 = vrot.slane %v5917, 6
        %v5930 = vsel %vm5694, %v5928, %v5929
        %v5931 = vrot.slane %v5915, 6
        %v5932 = vrot.slane %v5918, 6
        %v5933 = vsel %vm5694, %v5931, %v5932
        %5934 = vrot.lane.b32.xlu0 %v5927, 126
        %v5935 = vpop.permute.xlu0 %5934
        %5936 = vrot.lane.b32.xlu0 %v5930, 126
        %v5937 = vpop.permute.xlu0 %5936
        %5938 = vrot.lane.b32.xlu0 %v5933, 126
        %v5939 = vpop.permute.xlu0 %5938
        %v5940 = vsel %vm978, %v5935, %v5937
        %v5941 = vsel %vm978, %v5937, %v5939
        %v5944 = vadd.f32 %v5804, %v5940
        %v5945 = vadd.f32 %v5805, %v5941
        %s5946 = sld [smem:[#allocation12 + $0x47]]
        %v5947 = vstv %s5946
        %v5948 = vmul.f32 %v5765, %v5947
        %v5949 = vmul.f32 %v5766, %v5947
        %v5950 = vmul.f32 %v5767, %v5947
        %v5951 = vmul.f32 %v5768, %v5947
        %v5952 = vmul.f32 %v5769, %v5947
        %v5953 = vmul.f32 %v5770, %v5947
        %v5960 = vrot.slane %v5948, 6
        %v5961 = vrot.slane %v5951, 6
        %v5962 = vsel %vm5694, %v5960, %v5961
        %v5963 = vrot.slane %v5949, 6
        %v5964 = vrot.slane %v5952, 6
        %v5965 = vsel %vm5694, %v5963, %v5964
        %v5966 = vrot.slane %v5950, 6
        %v5967 = vrot.slane %v5953, 6
        %v5968 = vsel %vm5694, %v5966, %v5967
        %5969 = vrot.lane.b32.xlu0 %v5962, 126
        %v5970 = vpop.permute.xlu0 %5969
        %5971 = vrot.lane.b32.xlu0 %v5965, 126
        %v5972 = vpop.permute.xlu0 %5971
        %5973 = vrot.lane.b32.xlu0 %v5968, 126
        %v5974 = vpop.permute.xlu0 %5973
        %v5975 = vsel %vm978, %v5970, %v5972
        %v5976 = vsel %vm978, %v5972, %v5974
        %v5979 = vadd.f32 %v5839, %v5975
        %v5980 = vadd.f32 %v5840, %v5976
        %s5981 = sld [smem:[#allocation12 + $0x74]]
        %v5982 = vstv %s5981
        %v5983 = vmul.f32 %v5765, %v5982
        %v5984 = vmul.f32 %v5766, %v5982
        %v5985 = vmul.f32 %v5767, %v5982
        %v5986 = vmul.f32 %v5768, %v5982
        %v5987 = vmul.f32 %v5769, %v5982
        %v5988 = vmul.f32 %v5770, %v5982
        %v5995 = vrot.slane %v5983, 6
        %v5996 = vrot.slane %v5986, 6
        %v5997 = vsel %vm5694, %v5995, %v5996
        %v5998 = vrot.slane %v5984, 6
        %v5999 = vrot.slane %v5987, 6
        %v6000 = vsel %vm5694, %v5998, %v5999
        %v6001 = vrot.slane %v5985, 6
        %v6002 = vrot.slane %v5988, 6
        %v6003 = vsel %vm5694, %v6001, %v6002
        %6004 = vrot.lane.b32.xlu0 %v5997, 126
        %v6005 = vpop.permute.xlu0 %6004
        %6006 = vrot.lane.b32.xlu0 %v6000, 126
        %v6007 = vpop.permute.xlu0 %6006
        %6008 = vrot.lane.b32.xlu0 %v6003, 126
        %v6009 = vpop.permute.xlu0 %6008
        %v6010 = vsel %vm978, %v6005, %v6007
        %v6011 = vsel %vm978, %v6007, %v6009
        %v6014 = vadd.f32 %v5874, %v6010
        %v6015 = vadd.f32 %v5875, %v6011
        %s6016 = sld [smem:[#allocation12 + $0xa1]]
        %v6017 = vstv %s6016
        %v6018 = vmul.f32 %v5765, %v6017
        %v6019 = vmul.f32 %v5766, %v6017
        %v6020 = vmul.f32 %v5767, %v6017
        %v6021 = vmul.f32 %v5768, %v6017
        %v6022 = vmul.f32 %v5769, %v6017
        %v6023 = vmul.f32 %v5770, %v6017
        %v6030 = vrot.slane %v6018, 6
        %v6031 = vrot.slane %v6021, 6
        %v6032 = vsel %vm5694, %v6030, %v6031
        %v6033 = vrot.slane %v6019, 6
        %v6034 = vrot.slane %v6022, 6
        %v6035 = vsel %vm5694, %v6033, %v6034
        %v6036 = vrot.slane %v6020, 6
        %v6037 = vrot.slane %v6023, 6
        %v6038 = vsel %vm5694, %v6036, %v6037
        %6039 = vrot.lane.b32.xlu0 %v6032, 126
        %v6040 = vpop.permute.xlu0 %6039
        %6041 = vrot.lane.b32.xlu0 %v6035, 126
        %v6042 = vpop.permute.xlu0 %6041
        %6043 = vrot.lane.b32.xlu0 %v6038, 126
        %v6044 = vpop.permute.xlu0 %6043
        %v6045 = vsel %vm978, %v6040, %v6042
        %v6046 = vsel %vm978, %v6042, %v6044
        %v6049 = vadd.f32 %v5909, %v6045
        %v6050 = vadd.f32 %v5910, %v6046
        %v6051 = vld [vmem:[#allocation4 + $0x48] sm:$0xc0]
        %v6052 = vld [vmem:[#allocation4 + $0x50] sm:$0xc0]
        %v6053 = vld [vmem:[#allocation4 + $0x60] sm:$0x3f]
        %v6054 = vld [vmem:[#allocation4 + $0x68] sm:$0x3f]
        %s6055 = sld [smem:[#allocation12 + $0x1b]]
        %v6056 = vstv %s6055
        %v6057 = vmul.f32 %v6051, %v6056
        %v6058 = vmul.f32 %v6052, %v6056
        %v6059 = vmul.f32 %v6053, %v6056
        %v6060 = vmul.f32 %v6054, %v6056
        %v6065 = vrot.slane %v6057, 6
        %v6066 = vrot.slane %v6059, 6
        %v6067 = vsel %vm5694, %v6065, %v6066
        %v6068 = vrot.slane %v6058, 6
        %v6069 = vrot.slane %v6060, 6
        %v6070 = vsel %vm5694, %v6068, %v6069
        %v6073 = vadd.f32 %v5944, %v6067
        %v6074 = vadd.f32 %v5945, %v6070
        %s6075 = sld [smem:[#allocation12 + $0x48]]
        %v6076 = vstv %s6075
        %v6077 = vmul.f32 %v6051, %v6076
        %v6078 = vmul.f32 %v6052, %v6076
        %v6079 = vmul.f32 %v6053, %v6076
        %v6080 = vmul.f32 %v6054, %v6076
        %v6085 = vrot.slane %v6077, 6
        %v6086 = vrot.slane %v6079, 6
        %v6087 = vsel %vm5694, %v6085, %v6086
        %v6088 = vrot.slane %v6078, 6
        %v6089 = vrot.slane %v6080, 6
        %v6090 = vsel %vm5694, %v6088, %v6089
        %v6093 = vadd.f32 %v5979, %v6087
        %v6094 = vadd.f32 %v5980, %v6090
        %s6095 = sld [smem:[#allocation12 + $0x75]]
        %v6096 = vstv %s6095
        %v6097 = vmul.f32 %v6051, %v6096
        %v6098 = vmul.f32 %v6052, %v6096
        %v6099 = vmul.f32 %v6053, %v6096
        %v6100 = vmul.f32 %v6054, %v6096
        %v6105 = vrot.slane %v6097, 6
        %v6106 = vrot.slane %v6099, 6
        %v6107 = vsel %vm5694, %v6105, %v6106
        %v6108 = vrot.slane %v6098, 6
        %v6109 = vrot.slane %v6100, 6
        %v6110 = vsel %vm5694, %v6108, %v6109
        %v6113 = vadd.f32 %v6014, %v6107
        %v6114 = vadd.f32 %v6015, %v6110
        %s6115 = sld [smem:[#allocation12 + $0xa2]]
        %v6116 = vstv %s6115
        %v6117 = vmul.f32 %v6051, %v6116
        %v6118 = vmul.f32 %v6052, %v6116
        %v6119 = vmul.f32 %v6053, %v6116
        %v6120 = vmul.f32 %v6054, %v6116
        %v6125 = vrot.slane %v6117, 6
        %v6126 = vrot.slane %v6119, 6
        %v6127 = vsel %vm5694, %v6125, %v6126
        %v6128 = vrot.slane %v6118, 6
        %v6129 = vrot.slane %v6120, 6
        %v6130 = vsel %vm5694, %v6128, %v6129
        %v6133 = vadd.f32 %v6049, %v6127
        %v6134 = vadd.f32 %v6050, %v6130
        %v6135 = vld [vmem:[#allocation4 + $0x48] sm:$0xc0]
        %v6136 = vld [vmem:[#allocation4 + $0x50] sm:$0xc0]
        %v6137 = vld [vmem:[#allocation4 + $0x58] sm:$0xc0]
        %v6138 = vld [vmem:[#allocation4 + $0x60] sm:$0x3f]
        %v6139 = vld [vmem:[#allocation4 + $0x68] sm:$0x3f]
        %v6140 = vld [vmem:[#allocation4 + $0x70] sm:$0x3f]
        %s6141 = sld [smem:[#allocation12 + $0x1c]]
        %v6142 = vstv %s6141
        %v6143 = vmul.f32 %v6135, %v6142
        %v6144 = vmul.f32 %v6136, %v6142
        %v6145 = vmul.f32 %v6137, %v6142
        %v6146 = vmul.f32 %v6138, %v6142
        %v6147 = vmul.f32 %v6139, %v6142
        %v6148 = vmul.f32 %v6140, %v6142
        %v6155 = vrot.slane %v6143, 6
        %v6156 = vrot.slane %v6146, 6
        %v6157 = vsel %vm5694, %v6155, %v6156
        %v6158 = vrot.slane %v6144, 6
        %v6159 = vrot.slane %v6147, 6
        %v6160 = vsel %vm5694, %v6158, %v6159
        %v6161 = vrot.slane %v6145, 6
        %v6162 = vrot.slane %v6148, 6
        %v6163 = vsel %vm5694, %v6161, %v6162
        %6164 = vrot.lane.b32.xlu0 %v6157, 127
        %v6165 = vpop.permute.xlu0 %6164
        %6166 = vrot.lane.b32.xlu0 %v6160, 127
        %v6167 = vpop.permute.xlu0 %6166
        %6168 = vrot.lane.b32.xlu0 %v6163, 127
        %v6169 = vpop.permute.xlu0 %6168
        %v6170 = vsel %vm902, %v6165, %v6167
        %v6171 = vsel %vm902, %v6167, %v6169
        %v6174 = vadd.f32 %v6073, %v6170
        %v6175 = vadd.f32 %v6074, %v6171
        %s6176 = sld [smem:[#allocation12 + $0x49]]
        %v6177 = vstv %s6176
        %v6178 = vmul.f32 %v6135, %v6177
        %v6179 = vmul.f32 %v6136, %v6177
        %v6180 = vmul.f32 %v6137, %v6177
        %v6181 = vmul.f32 %v6138, %v6177
        %v6182 = vmul.f32 %v6139, %v6177
        %v6183 = vmul.f32 %v6140, %v6177
        %v6190 = vrot.slane %v6178, 6
        %v6191 = vrot.slane %v6181, 6
        %v6192 = vsel %vm5694, %v6190, %v6191
        %v6193 = vrot.slane %v6179, 6
        %v6194 = vrot.slane %v6182, 6
        %v6195 = vsel %vm5694, %v6193, %v6194
        %v6196 = vrot.slane %v6180, 6
        %v6197 = vrot.slane %v6183, 6
        %v6198 = vsel %vm5694, %v6196, %v6197
        %6199 = vrot.lane.b32.xlu0 %v6192, 127
        %v6200 = vpop.permute.xlu0 %6199
        %6201 = vrot.lane.b32.xlu0 %v6195, 127
        %v6202 = vpop.permute.xlu0 %6201
        %6203 = vrot.lane.b32.xlu0 %v6198, 127
        %v6204 = vpop.permute.xlu0 %6203
        %v6205 = vsel %vm902, %v6200, %v6202
        %v6206 = vsel %vm902, %v6202, %v6204
        %v6209 = vadd.f32 %v6093, %v6205
        %v6210 = vadd.f32 %v6094, %v6206
        %s6211 = sld [smem:[#allocation12 + $0x76]]
        %v6212 = vstv %s6211
        %v6213 = vmul.f32 %v6135, %v6212
        %v6214 = vmul.f32 %v6136, %v6212
        %v6215 = vmul.f32 %v6137, %v6212
        %v6216 = vmul.f32 %v6138, %v6212
        %v6217 = vmul.f32 %v6139, %v6212
        %v6218 = vmul.f32 %v6140, %v6212
        %v6225 = vrot.slane %v6213, 6
        %v6226 = vrot.slane %v6216, 6
        %v6227 = vsel %vm5694, %v6225, %v6226
        %v6228 = vrot.slane %v6214, 6
        %v6229 = vrot.slane %v6217, 6
        %v6230 = vsel %vm5694, %v6228, %v6229
        %v6231 = vrot.slane %v6215, 6
        %v6232 = vrot.slane %v6218, 6
        %v6233 = vsel %vm5694, %v6231, %v6232
        %6234 = vrot.lane.b32.xlu0 %v6227, 127
        %v6235 = vpop.permute.xlu0 %6234
        %6236 = vrot.lane.b32.xlu0 %v6230, 127
        %v6237 = vpop.permute.xlu0 %6236
        %6238 = vrot.lane.b32.xlu0 %v6233, 127
        %v6239 = vpop.permute.xlu0 %6238
        %v6240 = vsel %vm902, %v6235, %v6237
        %v6241 = vsel %vm902, %v6237, %v6239
        %v6244 = vadd.f32 %v6113, %v6240
        %v6245 = vadd.f32 %v6114, %v6241
        %s6246 = sld [smem:[#allocation12 + $0xa3]]
        %v6247 = vstv %s6246
        %v6248 = vmul.f32 %v6135, %v6247
        %v6249 = vmul.f32 %v6136, %v6247
        %v6250 = vmul.f32 %v6137, %v6247
        %v6251 = vmul.f32 %v6138, %v6247
        %v6252 = vmul.f32 %v6139, %v6247
        %v6253 = vmul.f32 %v6140, %v6247
        %v6260 = vrot.slane %v6248, 6
        %v6261 = vrot.slane %v6251, 6
        %v6262 = vsel %vm5694, %v6260, %v6261
        %v6263 = vrot.slane %v6249, 6
        %v6264 = vrot.slane %v6252, 6
        %v6265 = vsel %vm5694, %v6263, %v6264
        %v6266 = vrot.slane %v6250, 6
        %v6267 = vrot.slane %v6253, 6
        %v6268 = vsel %vm5694, %v6266, %v6267
        %6269 = vrot.lane.b32.xlu0 %v6262, 127
        %v6270 = vpop.permute.xlu0 %6269
        %6271 = vrot.lane.b32.xlu0 %v6265, 127
        %v6272 = vpop.permute.xlu0 %6271
        %6273 = vrot.lane.b32.xlu0 %v6268, 127
        %v6274 = vpop.permute.xlu0 %6273
        %v6275 = vsel %vm902, %v6270, %v6272
        %v6276 = vsel %vm902, %v6272, %v6274
        %v6279 = vadd.f32 %v6133, %v6275
        %v6280 = vadd.f32 %v6134, %v6276
        %s6281 = sld [smem:[#allocation12 + $0x1d]]
        %v6282 = vstv %s6281
        %v6283 = vmul.f32 %v6135, %v6282
        %v6284 = vmul.f32 %v6136, %v6282
        %v6285 = vmul.f32 %v6137, %v6282
        %v6286 = vmul.f32 %v6138, %v6282
        %v6287 = vmul.f32 %v6139, %v6282
        %v6288 = vmul.f32 %v6140, %v6282
        %v6295 = vrot.slane %v6283, 6
        %v6296 = vrot.slane %v6286, 6
        %v6297 = vsel %vm5694, %v6295, %v6296
        %v6298 = vrot.slane %v6284, 6
        %v6299 = vrot.slane %v6287, 6
        %v6300 = vsel %vm5694, %v6298, %v6299
        %v6301 = vrot.slane %v6285, 6
        %v6302 = vrot.slane %v6288, 6
        %v6303 = vsel %vm5694, %v6301, %v6302
        %6304 = vrot.lane.b32.xlu0 %v6297, 126
        %v6305 = vpop.permute.xlu0 %6304
        %6306 = vrot.lane.b32.xlu0 %v6300, 126
        %v6307 = vpop.permute.xlu0 %6306
        %6308 = vrot.lane.b32.xlu0 %v6303, 126
        %v6309 = vpop.permute.xlu0 %6308
        %v6310 = vsel %vm978, %v6305, %v6307
        %v6311 = vsel %vm978, %v6307, %v6309
        %v6314 = vadd.f32 %v6174, %v6310
        %v6315 = vadd.f32 %v6175, %v6311
        %s6316 = sld [smem:[#allocation12 + $0x4a]]
        %v6317 = vstv %s6316
        %v6318 = vmul.f32 %v6135, %v6317
        %v6319 = vmul.f32 %v6136, %v6317
        %v6320 = vmul.f32 %v6137, %v6317
        %v6321 = vmul.f32 %v6138, %v6317
        %v6322 = vmul.f32 %v6139, %v6317
        %v6323 = vmul.f32 %v6140, %v6317
        %v6330 = vrot.slane %v6318, 6
        %v6331 = vrot.slane %v6321, 6
        %v6332 = vsel %vm5694, %v6330, %v6331
        %v6333 = vrot.slane %v6319, 6
        %v6334 = vrot.slane %v6322, 6
        %v6335 = vsel %vm5694, %v6333, %v6334
        %v6336 = vrot.slane %v6320, 6
        %v6337 = vrot.slane %v6323, 6
        %v6338 = vsel %vm5694, %v6336, %v6337
        %6339 = vrot.lane.b32.xlu0 %v6332, 126
        %v6340 = vpop.permute.xlu0 %6339
        %6341 = vrot.lane.b32.xlu0 %v6335, 126
        %v6342 = vpop.permute.xlu0 %6341
        %6343 = vrot.lane.b32.xlu0 %v6338, 126
        %v6344 = vpop.permute.xlu0 %6343
        %v6345 = vsel %vm978, %v6340, %v6342
        %v6346 = vsel %vm978, %v6342, %v6344
        %v6349 = vadd.f32 %v6209, %v6345
        %v6350 = vadd.f32 %v6210, %v6346
        %s6351 = sld [smem:[#allocation12 + $0x77]]
        %v6352 = vstv %s6351
        %v6353 = vmul.f32 %v6135, %v6352
        %v6354 = vmul.f32 %v6136, %v6352
        %v6355 = vmul.f32 %v6137, %v6352
        %v6356 = vmul.f32 %v6138, %v6352
        %v6357 = vmul.f32 %v6139, %v6352
        %v6358 = vmul.f32 %v6140, %v6352
        %v6365 = vrot.slane %v6353, 6
        %v6366 = vrot.slane %v6356, 6
        %v6367 = vsel %vm5694, %v6365, %v6366
        %v6368 = vrot.slane %v6354, 6
        %v6369 = vrot.slane %v6357, 6
        %v6370 = vsel %vm5694, %v6368, %v6369
        %v6371 = vrot.slane %v6355, 6
        %v6372 = vrot.slane %v6358, 6
        %v6373 = vsel %vm5694, %v6371, %v6372
        %6374 = vrot.lane.b32.xlu0 %v6367, 126
        %v6375 = vpop.permute.xlu0 %6374
        %6376 = vrot.lane.b32.xlu0 %v6370, 126
        %v6377 = vpop.permute.xlu0 %6376
        %6378 = vrot.lane.b32.xlu0 %v6373, 126
        %v6379 = vpop.permute.xlu0 %6378
        %v6380 = vsel %vm978, %v6375, %v6377
        %v6381 = vsel %vm978, %v6377, %v6379
        %v6384 = vadd.f32 %v6244, %v6380
        %v6385 = vadd.f32 %v6245, %v6381
        %s6386 = sld [smem:[#allocation12 + $0xa4]]
        %v6387 = vstv %s6386
        %v6388 = vmul.f32 %v6135, %v6387
        %v6389 = vmul.f32 %v6136, %v6387
        %v6390 = vmul.f32 %v6137, %v6387
        %v6391 = vmul.f32 %v6138, %v6387
        %v6392 = vmul.f32 %v6139, %v6387
        %v6393 = vmul.f32 %v6140, %v6387
        %v6400 = vrot.slane %v6388, 6
        %v6401 = vrot.slane %v6391, 6
        %v6402 = vsel %vm5694, %v6400, %v6401
        %v6403 = vrot.slane %v6389, 6
        %v6404 = vrot.slane %v6392, 6
        %v6405 = vsel %vm5694, %v6403, %v6404
        %v6406 = vrot.slane %v6390, 6
        %v6407 = vrot.slane %v6393, 6
        %v6408 = vsel %vm5694, %v6406, %v6407
        %6409 = vrot.lane.b32.xlu0 %v6402, 126
        %v6410 = vpop.permute.xlu0 %6409
        %6411 = vrot.lane.b32.xlu0 %v6405, 126
        %v6412 = vpop.permute.xlu0 %6411
        %6413 = vrot.lane.b32.xlu0 %v6408, 126
        %v6414 = vpop.permute.xlu0 %6413
        %v6415 = vsel %vm978, %v6410, %v6412
        %v6416 = vsel %vm978, %v6412, %v6414
        %v6419 = vadd.f32 %v6279, %v6415
        %v6420 = vadd.f32 %v6280, %v6416
        %v6421 = vld [vmem:[#allocation4 + $0x48] sm:$0x80]
        %v6422 = vld [vmem:[#allocation4 + $0x50] sm:$0x80]
        %v6423 = vld [vmem:[#allocation4 + $0x60] sm:$0x7f]
        %v6424 = vld [vmem:[#allocation4 + $0x68] sm:$0x7f]
        %s6425 = sld [smem:[#allocation12 + $0x1e]]
        %v6426 = vstv %s6425
        %v6427 = vmul.f32 %v6421, %v6426
        %v6428 = vmul.f32 %v6422, %v6426
        %v6429 = vmul.f32 %v6423, %v6426
        %v6430 = vmul.f32 %v6424, %v6426
        %vm6435 = vcmask 1040384
        %v6436 = vrot.slane %v6427, 7
        %v6437 = vrot.slane %v6429, 7
        %v6438 = vsel %vm6435, %v6436, %v6437
        %v6439 = vrot.slane %v6428, 7
        %v6440 = vrot.slane %v6430, 7
        %v6441 = vsel %vm6435, %v6439, %v6440
        %v6444 = vadd.f32 %v6314, %v6438
        %v6445 = vadd.f32 %v6315, %v6441
        %s6446 = sld [smem:[#allocation12 + $0x4b]]
        %v6447 = vstv %s6446
        %v6448 = vmul.f32 %v6421, %v6447
        %v6449 = vmul.f32 %v6422, %v6447
        %v6450 = vmul.f32 %v6423, %v6447
        %v6451 = vmul.f32 %v6424, %v6447
        %v6456 = vrot.slane %v6448, 7
        %v6457 = vrot.slane %v6450, 7
        %v6458 = vsel %vm6435, %v6456, %v6457
        %v6459 = vrot.slane %v6449, 7
        %v6460 = vrot.slane %v6451, 7
        %v6461 = vsel %vm6435, %v6459, %v6460
        %v6464 = vadd.f32 %v6349, %v6458
        %v6465 = vadd.f32 %v6350, %v6461
        %s6466 = sld [smem:[#allocation12 + $0x78]]
        %v6467 = vstv %s6466
        %v6468 = vmul.f32 %v6421, %v6467
        %v6469 = vmul.f32 %v6422, %v6467
        %v6470 = vmul.f32 %v6423, %v6467
        %v6471 = vmul.f32 %v6424, %v6467
        %v6476 = vrot.slane %v6468, 7
        %v6477 = vrot.slane %v6470, 7
        %v6478 = vsel %vm6435, %v6476, %v6477
        %v6479 = vrot.slane %v6469, 7
        %v6480 = vrot.slane %v6471, 7
        %v6481 = vsel %vm6435, %v6479, %v6480
        %v6484 = vadd.f32 %v6384, %v6478
        %v6485 = vadd.f32 %v6385, %v6481
        %s6486 = sld [smem:[#allocation12 + $0xa5]]
        %v6487 = vstv %s6486
        %v6488 = vmul.f32 %v6421, %v6487
        %v6489 = vmul.f32 %v6422, %v6487
        %v6490 = vmul.f32 %v6423, %v6487
        %v6491 = vmul.f32 %v6424, %v6487
        %v6496 = vrot.slane %v6488, 7
        %v6497 = vrot.slane %v6490, 7
        %v6498 = vsel %vm6435, %v6496, %v6497
        %v6499 = vrot.slane %v6489, 7
        %v6500 = vrot.slane %v6491, 7
        %v6501 = vsel %vm6435, %v6499, %v6500
        %v6504 = vadd.f32 %v6419, %v6498
        %v6505 = vadd.f32 %v6420, %v6501
        %v6506 = vld [vmem:[#allocation4 + $0x48] sm:$0x80]
        %v6507 = vld [vmem:[#allocation4 + $0x50] sm:$0x80]
        %v6508 = vld [vmem:[#allocation4 + $0x58] sm:$0x80]
        %v6509 = vld [vmem:[#allocation4 + $0x60] sm:$0x7f]
        %v6510 = vld [vmem:[#allocation4 + $0x68] sm:$0x7f]
        %v6511 = vld [vmem:[#allocation4 + $0x70] sm:$0x7f]
        %s6512 = sld [smem:[#allocation12 + $0x1f]]
        %v6513 = vstv %s6512
        %v6514 = vmul.f32 %v6506, %v6513
        %v6515 = vmul.f32 %v6507, %v6513
        %v6516 = vmul.f32 %v6508, %v6513
        %v6517 = vmul.f32 %v6509, %v6513
        %v6518 = vmul.f32 %v6510, %v6513
        %v6519 = vmul.f32 %v6511, %v6513
        %v6526 = vrot.slane %v6514, 7
        %v6527 = vrot.slane %v6517, 7
        %v6528 = vsel %vm6435, %v6526, %v6527
        %v6529 = vrot.slane %v6515, 7
        %v6530 = vrot.slane %v6518, 7
        %v6531 = vsel %vm6435, %v6529, %v6530
        %v6532 = vrot.slane %v6516, 7
        %v6533 = vrot.slane %v6519, 7
        %v6534 = vsel %vm6435, %v6532, %v6533
        %6535 = vrot.lane.b32.xlu0 %v6528, 127
        %v6536 = vpop.permute.xlu0 %6535
        %6537 = vrot.lane.b32.xlu0 %v6531, 127
        %v6538 = vpop.permute.xlu0 %6537
        %6539 = vrot.lane.b32.xlu0 %v6534, 127
        %v6540 = vpop.permute.xlu0 %6539
        %v6541 = vsel %vm902, %v6536, %v6538
        %v6542 = vsel %vm902, %v6538, %v6540
        %v6545 = vadd.f32 %v6444, %v6541
        %v6546 = vadd.f32 %v6445, %v6542
        %s6547 = sld [smem:[#allocation12 + $0x4c]]
        %v6548 = vstv %s6547
        %v6549 = vmul.f32 %v6506, %v6548
        %v6550 = vmul.f32 %v6507, %v6548
        %v6551 = vmul.f32 %v6508, %v6548
        %v6552 = vmul.f32 %v6509, %v6548
        %v6553 = vmul.f32 %v6510, %v6548
        %v6554 = vmul.f32 %v6511, %v6548
        %v6561 = vrot.slane %v6549, 7
        %v6562 = vrot.slane %v6552, 7
        %v6563 = vsel %vm6435, %v6561, %v6562
        %v6564 = vrot.slane %v6550, 7
        %v6565 = vrot.slane %v6553, 7
        %v6566 = vsel %vm6435, %v6564, %v6565
        %v6567 = vrot.slane %v6551, 7
        %v6568 = vrot.slane %v6554, 7
        %v6569 = vsel %vm6435, %v6567, %v6568
        %6570 = vrot.lane.b32.xlu0 %v6563, 127
        %v6571 = vpop.permute.xlu0 %6570
        %6572 = vrot.lane.b32.xlu0 %v6566, 127
        %v6573 = vpop.permute.xlu0 %6572
        %6574 = vrot.lane.b32.xlu0 %v6569, 127
        %v6575 = vpop.permute.xlu0 %6574
        %v6576 = vsel %vm902, %v6571, %v6573
        %v6577 = vsel %vm902, %v6573, %v6575
        %v6580 = vadd.f32 %v6464, %v6576
        %v6581 = vadd.f32 %v6465, %v6577
        %s6582 = sld [smem:[#allocation12 + $0x79]]
        %v6583 = vstv %s6582
        %v6584 = vmul.f32 %v6506, %v6583
        %v6585 = vmul.f32 %v6507, %v6583
        %v6586 = vmul.f32 %v6508, %v6583
        %v6587 = vmul.f32 %v6509, %v6583
        %v6588 = vmul.f32 %v6510, %v6583
        %v6589 = vmul.f32 %v6511, %v6583
        %v6596 = vrot.slane %v6584, 7
        %v6597 = vrot.slane %v6587, 7
        %v6598 = vsel %vm6435, %v6596, %v6597
        %v6599 = vrot.slane %v6585, 7
        %v6600 = vrot.slane %v6588, 7
        %v6601 = vsel %vm6435, %v6599, %v6600
        %v6602 = vrot.slane %v6586, 7
        %v6603 = vrot.slane %v6589, 7
        %v6604 = vsel %vm6435, %v6602, %v6603
        %6605 = vrot.lane.b32.xlu0 %v6598, 127
        %v6606 = vpop.permute.xlu0 %6605
        %6607 = vrot.lane.b32.xlu0 %v6601, 127
        %v6608 = vpop.permute.xlu0 %6607
        %6609 = vrot.lane.b32.xlu0 %v6604, 127
        %v6610 = vpop.permute.xlu0 %6609
        %v6611 = vsel %vm902, %v6606, %v6608
        %v6612 = vsel %vm902, %v6608, %v6610
        %v6615 = vadd.f32 %v6484, %v6611
        %v6616 = vadd.f32 %v6485, %v6612
        %s6617 = sld [smem:[#allocation12 + $0xa6]]
        %v6618 = vstv %s6617
        %v6619 = vmul.f32 %v6506, %v6618
        %v6620 = vmul.f32 %v6507, %v6618
        %v6621 = vmul.f32 %v6508, %v6618
        %v6622 = vmul.f32 %v6509, %v6618
        %v6623 = vmul.f32 %v6510, %v6618
        %v6624 = vmul.f32 %v6511, %v6618
        %v6631 = vrot.slane %v6619, 7
        %v6632 = vrot.slane %v6622, 7
        %v6633 = vsel %vm6435, %v6631, %v6632
        %v6634 = vrot.slane %v6620, 7
        %v6635 = vrot.slane %v6623, 7
        %v6636 = vsel %vm6435, %v6634, %v6635
        %v6637 = vrot.slane %v6621, 7
        %v6638 = vrot.slane %v6624, 7
        %v6639 = vsel %vm6435, %v6637, %v6638
        %6640 = vrot.lane.b32.xlu0 %v6633, 127
        %v6641 = vpop.permute.xlu0 %6640
        %6642 = vrot.lane.b32.xlu0 %v6636, 127
        %v6643 = vpop.permute.xlu0 %6642
        %6644 = vrot.lane.b32.xlu0 %v6639, 127
        %v6645 = vpop.permute.xlu0 %6644
        %v6646 = vsel %vm902, %v6641, %v6643
        %v6647 = vsel %vm902, %v6643, %v6645
        %v6650 = vadd.f32 %v6504, %v6646
        %v6651 = vadd.f32 %v6505, %v6647
        %s6652 = sld [smem:[#allocation12 + $0x20]]
        %v6653 = vstv %s6652
        %v6654 = vmul.f32 %v6506, %v6653
        %v6655 = vmul.f32 %v6507, %v6653
        %v6656 = vmul.f32 %v6508, %v6653
        %v6657 = vmul.f32 %v6509, %v6653
        %v6658 = vmul.f32 %v6510, %v6653
        %v6659 = vmul.f32 %v6511, %v6653
        %v6666 = vrot.slane %v6654, 7
        %v6667 = vrot.slane %v6657, 7
        %v6668 = vsel %vm6435, %v6666, %v6667
        %v6669 = vrot.slane %v6655, 7
        %v6670 = vrot.slane %v6658, 7
        %v6671 = vsel %vm6435, %v6669, %v6670
        %v6672 = vrot.slane %v6656, 7
        %v6673 = vrot.slane %v6659, 7
        %v6674 = vsel %vm6435, %v6672, %v6673
        %6675 = vrot.lane.b32.xlu0 %v6668, 126
        %v6676 = vpop.permute.xlu0 %6675
        %6677 = vrot.lane.b32.xlu0 %v6671, 126
        %v6678 = vpop.permute.xlu0 %6677
        %6679 = vrot.lane.b32.xlu0 %v6674, 126
        %v6680 = vpop.permute.xlu0 %6679
        %v6681 = vsel %vm978, %v6676, %v6678
        %v6682 = vsel %vm978, %v6678, %v6680
        %v6685 = vadd.f32 %v6545, %v6681
        %v6686 = vadd.f32 %v6546, %v6682
        %s6687 = sld [smem:[#allocation12 + $0x4d]]
        %v6688 = vstv %s6687
        %v6689 = vmul.f32 %v6506, %v6688
        %v6690 = vmul.f32 %v6507, %v6688
        %v6691 = vmul.f32 %v6508, %v6688
        %v6692 = vmul.f32 %v6509, %v6688
        %v6693 = vmul.f32 %v6510, %v6688
        %v6694 = vmul.f32 %v6511, %v6688
        %v6701 = vrot.slane %v6689, 7
        %v6702 = vrot.slane %v6692, 7
        %v6703 = vsel %vm6435, %v6701, %v6702
        %v6704 = vrot.slane %v6690, 7
        %v6705 = vrot.slane %v6693, 7
        %v6706 = vsel %vm6435, %v6704, %v6705
        %v6707 = vrot.slane %v6691, 7
        %v6708 = vrot.slane %v6694, 7
        %v6709 = vsel %vm6435, %v6707, %v6708
        %6710 = vrot.lane.b32.xlu0 %v6703, 126
        %v6711 = vpop.permute.xlu0 %6710
        %6712 = vrot.lane.b32.xlu0 %v6706, 126
        %v6713 = vpop.permute.xlu0 %6712
        %6714 = vrot.lane.b32.xlu0 %v6709, 126
        %v6715 = vpop.permute.xlu0 %6714
        %v6716 = vsel %vm978, %v6711, %v6713
        %v6717 = vsel %vm978, %v6713, %v6715
        %v6720 = vadd.f32 %v6580, %v6716
        %v6721 = vadd.f32 %v6581, %v6717
        %s6722 = sld [smem:[#allocation12 + $0x7a]]
        %v6723 = vstv %s6722
        %v6724 = vmul.f32 %v6506, %v6723
        %v6725 = vmul.f32 %v6507, %v6723
        %v6726 = vmul.f32 %v6508, %v6723
        %v6727 = vmul.f32 %v6509, %v6723
        %v6728 = vmul.f32 %v6510, %v6723
        %v6729 = vmul.f32 %v6511, %v6723
        %v6736 = vrot.slane %v6724, 7
        %v6737 = vrot.slane %v6727, 7
        %v6738 = vsel %vm6435, %v6736, %v6737
        %v6739 = vrot.slane %v6725, 7
        %v6740 = vrot.slane %v6728, 7
        %v6741 = vsel %vm6435, %v6739, %v6740
        %v6742 = vrot.slane %v6726, 7
        %v6743 = vrot.slane %v6729, 7
        %v6744 = vsel %vm6435, %v6742, %v6743
        %6745 = vrot.lane.b32.xlu0 %v6738, 126
        %v6746 = vpop.permute.xlu0 %6745
        %6747 = vrot.lane.b32.xlu0 %v6741, 126
        %v6748 = vpop.permute.xlu0 %6747
        %6749 = vrot.lane.b32.xlu0 %v6744, 126
        %v6750 = vpop.permute.xlu0 %6749
        %v6751 = vsel %vm978, %v6746, %v6748
        %v6752 = vsel %vm978, %v6748, %v6750
        %v6755 = vadd.f32 %v6615, %v6751
        %v6756 = vadd.f32 %v6616, %v6752
        %s6757 = sld [smem:[#allocation12 + $0xa7]]
        %v6758 = vstv %s6757
        %v6759 = vmul.f32 %v6506, %v6758
        %v6760 = vmul.f32 %v6507, %v6758
        %v6761 = vmul.f32 %v6508, %v6758
        %v6762 = vmul.f32 %v6509, %v6758
        %v6763 = vmul.f32 %v6510, %v6758
        %v6764 = vmul.f32 %v6511, %v6758
        %v6771 = vrot.slane %v6759, 7
        %v6772 = vrot.slane %v6762, 7
        %v6773 = vsel %vm6435, %v6771, %v6772
        %v6774 = vrot.slane %v6760, 7
        %v6775 = vrot.slane %v6763, 7
        %v6776 = vsel %vm6435, %v6774, %v6775
        %v6777 = vrot.slane %v6761, 7
        %v6778 = vrot.slane %v6764, 7
        %v6779 = vsel %vm6435, %v6777, %v6778
        %6780 = vrot.lane.b32.xlu0 %v6773, 126
        %v6781 = vpop.permute.xlu0 %6780
        %6782 = vrot.lane.b32.xlu0 %v6776, 126
        %v6783 = vpop.permute.xlu0 %6782
        %6784 = vrot.lane.b32.xlu0 %v6779, 126
        %v6785 = vpop.permute.xlu0 %6784
        %v6786 = vsel %vm978, %v6781, %v6783
        %v6787 = vsel %vm978, %v6783, %v6785
        %v6790 = vadd.f32 %v6650, %v6786
        %v6791 = vadd.f32 %v6651, %v6787
        %v6792 = vld [vmem:[#allocation4 + $0x60] sm:$0xff]
        %v6793 = vld [vmem:[#allocation4 + $0x68] sm:$0xff]
        %s6794 = sld [smem:[#allocation12 + $0x21]]
        %v6795 = vstv %s6794
        %v6796 = vmul.f32 %v6792, %v6795
        %v6797 = vmul.f32 %v6793, %v6795
        %v6798 = vadd.f32 %v6685, %v6796
        %v6799 = vadd.f32 %v6686, %v6797
        %s6800 = sld [smem:[#allocation12 + $0x4e]]
        %v6801 = vstv %s6800
        %v6802 = vmul.f32 %v6792, %v6801
        %v6803 = vmul.f32 %v6793, %v6801
        %v6804 = vadd.f32 %v6720, %v6802
        %v6805 = vadd.f32 %v6721, %v6803
        %s6806 = sld [smem:[#allocation12 + $0x7b]]
        %v6807 = vstv %s6806
        %v6808 = vmul.f32 %v6792, %v6807
        %v6809 = vmul.f32 %v6793, %v6807
        %v6810 = vadd.f32 %v6755, %v6808
        %v6811 = vadd.f32 %v6756, %v6809
        %s6812 = sld [smem:[#allocation12 + $0xa8]]
        %v6813 = vstv %s6812
        %v6814 = vmul.f32 %v6792, %v6813
        %v6815 = vmul.f32 %v6793, %v6813
        %v6816 = vadd.f32 %v6790, %v6814
        %v6817 = vadd.f32 %v6791, %v6815
        %v6818 = vld [vmem:[#allocation4 + $0x60] sm:$0xff]
        %v6819 = vld [vmem:[#allocation4 + $0x68] sm:$0xff]
        %v6820 = vld [vmem:[#allocation4 + $0x70] sm:$0xff]
        %s6821 = sld [smem:[#allocation12 + $0x22]]
        %v6822 = vstv %s6821
        %v6823 = vmul.f32 %v6818, %v6822
        %v6824 = vmul.f32 %v6819, %v6822
        %v6825 = vmul.f32 %v6820, %v6822
        %6829 = vrot.lane.b32.xlu0 %v6823, 127
        %v6830 = vpop.permute.xlu0 %6829
        %6831 = vrot.lane.b32.xlu0 %v6824, 127
        %v6832 = vpop.permute.xlu0 %6831
        %6833 = vrot.lane.b32.xlu0 %v6825, 127
        %v6834 = vpop.permute.xlu0 %6833
        %v6835 = vsel %vm902, %v6830, %v6832
        %v6836 = vsel %vm902, %v6832, %v6834
        %v6839 = vadd.f32 %v6798, %v6835
        %v6840 = vadd.f32 %v6799, %v6836
        %s6841 = sld [smem:[#allocation12 + $0x4f]]
        %v6842 = vstv %s6841
        %v6843 = vmul.f32 %v6818, %v6842
        %v6844 = vmul.f32 %v6819, %v6842
        %v6845 = vmul.f32 %v6820, %v6842
        %6849 = vrot.lane.b32.xlu0 %v6843, 127
        %v6850 = vpop.permute.xlu0 %6849
        %6851 = vrot.lane.b32.xlu0 %v6844, 127
        %v6852 = vpop.permute.xlu0 %6851
        %6853 = vrot.lane.b32.xlu0 %v6845, 127
        %v6854 = vpop.permute.xlu0 %6853
        %v6855 = vsel %vm902, %v6850, %v6852
        %v6856 = vsel %vm902, %v6852, %v6854
        %v6859 = vadd.f32 %v6804, %v6855
        %v6860 = vadd.f32 %v6805, %v6856
        %s6861 = sld [smem:[#allocation12 + $0x7c]]
        %v6862 = vstv %s6861
        %v6863 = vmul.f32 %v6818, %v6862
        %v6864 = vmul.f32 %v6819, %v6862
        %v6865 = vmul.f32 %v6820, %v6862
        %6869 = vrot.lane.b32.xlu0 %v6863, 127
        %v6870 = vpop.permute.xlu0 %6869
        %6871 = vrot.lane.b32.xlu0 %v6864, 127
        %v6872 = vpop.permute.xlu0 %6871
        %6873 = vrot.lane.b32.xlu0 %v6865, 127
        %v6874 = vpop.permute.xlu0 %6873
        %v6875 = vsel %vm902, %v6870, %v6872
        %v6876 = vsel %vm902, %v6872, %v6874
        %v6879 = vadd.f32 %v6810, %v6875
        %v6880 = vadd.f32 %v6811, %v6876
        %s6881 = sld [smem:[#allocation12 + $0xa9]]
        %v6882 = vstv %s6881
        %v6883 = vmul.f32 %v6818, %v6882
        %v6884 = vmul.f32 %v6819, %v6882
        %v6885 = vmul.f32 %v6820, %v6882
        %6889 = vrot.lane.b32.xlu0 %v6883, 127
        %v6890 = vpop.permute.xlu0 %6889
        %6891 = vrot.lane.b32.xlu0 %v6884, 127
        %v6892 = vpop.permute.xlu0 %6891
        %6893 = vrot.lane.b32.xlu0 %v6885, 127
        %v6894 = vpop.permute.xlu0 %6893
        %v6895 = vsel %vm902, %v6890, %v6892
        %v6896 = vsel %vm902, %v6892, %v6894
        %v6899 = vadd.f32 %v6816, %v6895
        %v6900 = vadd.f32 %v6817, %v6896
        %s6901 = sld [smem:[#allocation12 + $0x23]]
        %v6902 = vstv %s6901
        %v6903 = vmul.f32 %v6818, %v6902
        %v6904 = vmul.f32 %v6819, %v6902
        %v6905 = vmul.f32 %v6820, %v6902
        %6909 = vrot.lane.b32.xlu0 %v6903, 126
        %v6910 = vpop.permute.xlu0 %6909
        %6911 = vrot.lane.b32.xlu0 %v6904, 126
        %v6912 = vpop.permute.xlu0 %6911
        %6913 = vrot.lane.b32.xlu0 %v6905, 126
        %v6914 = vpop.permute.xlu0 %6913
        %v6915 = vsel %vm978, %v6910, %v6912
        %v6916 = vsel %vm978, %v6912, %v6914
        %v6919 = vadd.f32 %v6839, %v6915
        %v6920 = vadd.f32 %v6840, %v6916
        %s6921 = sld [smem:[#allocation12 + $0x50]]
        %v6922 = vstv %s6921
        %v6923 = vmul.f32 %v6818, %v6922
        %v6924 = vmul.f32 %v6819, %v6922
        %v6925 = vmul.f32 %v6820, %v6922
        %6929 = vrot.lane.b32.xlu0 %v6923, 126
        %v6930 = vpop.permute.xlu0 %6929
        %6931 = vrot.lane.b32.xlu0 %v6924, 126
        %v6932 = vpop.permute.xlu0 %6931
        %6933 = vrot.lane.b32.xlu0 %v6925, 126
        %v6934 = vpop.permute.xlu0 %6933
        %v6935 = vsel %vm978, %v6930, %v6932
        %v6936 = vsel %vm978, %v6932, %v6934
        %v6939 = vadd.f32 %v6859, %v6935
        %v6940 = vadd.f32 %v6860, %v6936
        %s6941 = sld [smem:[#allocation12 + $0x7d]]
        %v6942 = vstv %s6941
        %v6943 = vmul.f32 %v6818, %v6942
        %v6944 = vmul.f32 %v6819, %v6942
        %v6945 = vmul.f32 %v6820, %v6942
        %6949 = vrot.lane.b32.xlu0 %v6943, 126
        %v6950 = vpop.permute.xlu0 %6949
        %6951 = vrot.lane.b32.xlu0 %v6944, 126
        %v6952 = vpop.permute.xlu0 %6951
        %6953 = vrot.lane.b32.xlu0 %v6945, 126
        %v6954 = vpop.permute.xlu0 %6953
        %v6955 = vsel %vm978, %v6950, %v6952
        %v6956 = vsel %vm978, %v6952, %v6954
        %v6959 = vadd.f32 %v6879, %v6955
        %v6960 = vadd.f32 %v6880, %v6956
        %s6961 = sld [smem:[#allocation12 + $0xaa]]
        %v6962 = vstv %s6961
        %v6963 = vmul.f32 %v6818, %v6962
        %v6964 = vmul.f32 %v6819, %v6962
        %v6965 = vmul.f32 %v6820, %v6962
        %6969 = vrot.lane.b32.xlu0 %v6963, 126
        %v6970 = vpop.permute.xlu0 %6969
        %6971 = vrot.lane.b32.xlu0 %v6964, 126
        %v6972 = vpop.permute.xlu0 %6971
        %6973 = vrot.lane.b32.xlu0 %v6965, 126
        %v6974 = vpop.permute.xlu0 %6973
        %v6975 = vsel %vm978, %v6970, %v6972
        %v6976 = vsel %vm978, %v6972, %v6974
        %v6979 = vadd.f32 %v6899, %v6975
        %v6980 = vadd.f32 %v6900, %v6976
        %v6981 = vld [vmem:[#allocation4 + $0x78] sm:$0xff]
        %v6982 = vld [vmem:[#allocation4 + $0x80] sm:$0xff]
        %s6983 = sld [smem:[#allocation12 + $0x24]]
        %v6984 = vstv %s6983
        %v6985 = vmul.f32 %v6981, %v6984
        %v6986 = vmul.f32 %v6982, %v6984
        %v6987 = vadd.f32 %v6919, %v6985
        %v6988 = vadd.f32 %v6920, %v6986
        %s6989 = sld [smem:[#allocation12 + $0x51]]
        %v6990 = vstv %s6989
        %v6991 = vmul.f32 %v6981, %v6990
        %v6992 = vmul.f32 %v6982, %v6990
        %v6993 = vadd.f32 %v6939, %v6991
        %v6994 = vadd.f32 %v6940, %v6992
        %s6995 = sld [smem:[#allocation12 + $0x7e]]
        %v6996 = vstv %s6995
        %v6997 = vmul.f32 %v6981, %v6996
        %v6998 = vmul.f32 %v6982, %v6996
        %v6999 = vadd.f32 %v6959, %v6997
        %v7000 = vadd.f32 %v6960, %v6998
        %s7001 = sld [smem:[#allocation12 + $0xab]]
        %v7002 = vstv %s7001
        %v7003 = vmul.f32 %v6981, %v7002
        %v7004 = vmul.f32 %v6982, %v7002
        %v7005 = vadd.f32 %v6979, %v7003
        %v7006 = vadd.f32 %v6980, %v7004
        %v7007 = vld [vmem:[#allocation4 + $0x78] sm:$0xff]
        %v7008 = vld [vmem:[#allocation4 + $0x80] sm:$0xff]
        %v7009 = vld [vmem:[#allocation4 + $0x88] sm:$0xff]
        %s7010 = sld [smem:[#allocation12 + $0x25]]
        %v7011 = vstv %s7010
        %v7012 = vmul.f32 %v7007, %v7011
        %v7013 = vmul.f32 %v7008, %v7011
        %v7014 = vmul.f32 %v7009, %v7011
        %7018 = vrot.lane.b32.xlu0 %v7012, 127
        %v7019 = vpop.permute.xlu0 %7018
        %7020 = vrot.lane.b32.xlu0 %v7013, 127
        %v7021 = vpop.permute.xlu0 %7020
        %7022 = vrot.lane.b32.xlu0 %v7014, 127
        %v7023 = vpop.permute.xlu0 %7022
        %v7024 = vsel %vm902, %v7019, %v7021
        %v7025 = vsel %vm902, %v7021, %v7023
        %v7028 = vadd.f32 %v6987, %v7024
        %v7029 = vadd.f32 %v6988, %v7025
        %s7030 = sld [smem:[#allocation12 + $0x52]]
        %v7031 = vstv %s7030
        %v7032 = vmul.f32 %v7007, %v7031
        %v7033 = vmul.f32 %v7008, %v7031
        %v7034 = vmul.f32 %v7009, %v7031
        %7038 = vrot.lane.b32.xlu0 %v7032, 127
        %v7039 = vpop.permute.xlu0 %7038
        %7040 = vrot.lane.b32.xlu0 %v7033, 127
        %v7041 = vpop.permute.xlu0 %7040
        %7042 = vrot.lane.b32.xlu0 %v7034, 127
        %v7043 = vpop.permute.xlu0 %7042
        %v7044 = vsel %vm902, %v7039, %v7041
        %v7045 = vsel %vm902, %v7041, %v7043
        %v7048 = vadd.f32 %v6993, %v7044
        %v7049 = vadd.f32 %v6994, %v7045
        %s7050 = sld [smem:[#allocation12 + $0x7f]]
        %v7051 = vstv %s7050
        %v7052 = vmul.f32 %v7007, %v7051
        %v7053 = vmul.f32 %v7008, %v7051
        %v7054 = vmul.f32 %v7009, %v7051
        %7058 = vrot.lane.b32.xlu0 %v7052, 127
        %v7059 = vpop.permute.xlu0 %7058
        %7060 = vrot.lane.b32.xlu0 %v7053, 127
        %v7061 = vpop.permute.xlu0 %7060
        %7062 = vrot.lane.b32.xlu0 %v7054, 127
        %v7063 = vpop.permute.xlu0 %7062
        %v7064 = vsel %vm902, %v7059, %v7061
        %v7065 = vsel %vm902, %v7061, %v7063
        %v7068 = vadd.f32 %v6999, %v7064
        %v7069 = vadd.f32 %v7000, %v7065
        %s7070 = sld [smem:[#allocation12 + $0xac]]
        %v7071 = vstv %s7070
        %v7072 = vmul.f32 %v7007, %v7071
        %v7073 = vmul.f32 %v7008, %v7071
        %v7074 = vmul.f32 %v7009, %v7071
        %7078 = vrot.lane.b32.xlu0 %v7072, 127
        %v7079 = vpop.permute.xlu0 %7078
        %7080 = vrot.lane.b32.xlu0 %v7073, 127
        %v7081 = vpop.permute.xlu0 %7080
        %7082 = vrot.lane.b32.xlu0 %v7074, 127
        %v7083 = vpop.permute.xlu0 %7082
        %v7084 = vsel %vm902, %v7079, %v7081
        %v7085 = vsel %vm902, %v7081, %v7083
        %v7088 = vadd.f32 %v7005, %v7084
        %v7089 = vadd.f32 %v7006, %v7085
        %s7090 = sld [smem:[#allocation12 + $0x26]]
        %v7091 = vstv %s7090
        %v7092 = vmul.f32 %v7007, %v7091
        %v7093 = vmul.f32 %v7008, %v7091
        %v7094 = vmul.f32 %v7009, %v7091
        %7098 = vrot.lane.b32.xlu0 %v7092, 126
        %v7099 = vpop.permute.xlu0 %7098
        %7100 = vrot.lane.b32.xlu0 %v7093, 126
        %v7101 = vpop.permute.xlu0 %7100
        %7102 = vrot.lane.b32.xlu0 %v7094, 126
        %v7103 = vpop.permute.xlu0 %7102
        %v7104 = vsel %vm978, %v7099, %v7101
        %v7105 = vsel %vm978, %v7101, %v7103
        %v7108 = vadd.f32 %v7028, %v7104
        %v7109 = vadd.f32 %v7029, %v7105
        %s7110 = sld [smem:[#allocation12 + $0x53]]
        %v7111 = vstv %s7110
        %v7112 = vmul.f32 %v7007, %v7111
        %v7113 = vmul.f32 %v7008, %v7111
        %v7114 = vmul.f32 %v7009, %v7111
        %7118 = vrot.lane.b32.xlu0 %v7112, 126
        %v7119 = vpop.permute.xlu0 %7118
        %7120 = vrot.lane.b32.xlu0 %v7113, 126
        %v7121 = vpop.permute.xlu0 %7120
        %7122 = vrot.lane.b32.xlu0 %v7114, 126
        %v7123 = vpop.permute.xlu0 %7122
        %v7124 = vsel %vm978, %v7119, %v7121
        %v7125 = vsel %vm978, %v7121, %v7123
        %v7128 = vadd.f32 %v7048, %v7124
        %v7129 = vadd.f32 %v7049, %v7125
        %s7130 = sld [smem:[#allocation12 + $0x80]]
        %v7131 = vstv %s7130
        %v7132 = vmul.f32 %v7007, %v7131
        %v7133 = vmul.f32 %v7008, %v7131
        %v7134 = vmul.f32 %v7009, %v7131
        %7138 = vrot.lane.b32.xlu0 %v7132, 126
        %v7139 = vpop.permute.xlu0 %7138
        %7140 = vrot.lane.b32.xlu0 %v7133, 126
        %v7141 = vpop.permute.xlu0 %7140
        %7142 = vrot.lane.b32.xlu0 %v7134, 126
        %v7143 = vpop.permute.xlu0 %7142
        %v7144 = vsel %vm978, %v7139, %v7141
        %v7145 = vsel %vm978, %v7141, %v7143
        %v7148 = vadd.f32 %v7068, %v7144
        %v7149 = vadd.f32 %v7069, %v7145
        %s7150 = sld [smem:[#allocation12 + $0xad]]
        %v7151 = vstv %s7150
        %v7152 = vmul.f32 %v7007, %v7151
        %v7153 = vmul.f32 %v7008, %v7151
        %v7154 = vmul.f32 %v7009, %v7151
        %7158 = vrot.lane.b32.xlu0 %v7152, 126
        %v7159 = vpop.permute.xlu0 %7158
        %7160 = vrot.lane.b32.xlu0 %v7153, 126
        %v7161 = vpop.permute.xlu0 %7160
        %7162 = vrot.lane.b32.xlu0 %v7154, 126
        %v7163 = vpop.permute.xlu0 %7162
        %v7164 = vsel %vm978, %v7159, %v7161
        %v7165 = vsel %vm978, %v7161, %v7163
        %v7168 = vadd.f32 %v7088, %v7164
        %v7169 = vadd.f32 %v7089, %v7165
        %v7170 = vld [vmem:[#allocation4 + $0x78] sm:$0xfe]
        %v7171 = vld [vmem:[#allocation4 + $0x80] sm:$0xfe]
        %v7172 = vld [vmem:[#allocation4 + $0x90] sm:$0x1]
        %v7173 = vld [vmem:[#allocation4 + $0x98] sm:$0x1]
        %s7174 = sld [smem:[#allocation12 + $0x27]]
        %v7175 = vstv %s7174
        %v7176 = vmul.f32 %v7170, %v7175
        %v7177 = vmul.f32 %v7171, %v7175
        %v7178 = vmul.f32 %v7172, %v7175
        %v7179 = vmul.f32 %v7173, %v7175
        %v7184 = vrot.slane %v7176, 1
        %v7185 = vrot.slane %v7178, 1
        %v7186 = vsel %vm3099, %v7184, %v7185
        %v7187 = vrot.slane %v7177, 1
        %v7188 = vrot.slane %v7179, 1
        %v7189 = vsel %vm3099, %v7187, %v7188
        %v7192 = vadd.f32 %v7108, %v7186
        %v7193 = vadd.f32 %v7109, %v7189
        %s7194 = sld [smem:[#allocation12 + $0x54]]
        %v7195 = vstv %s7194
        %v7196 = vmul.f32 %v7170, %v7195
        %v7197 = vmul.f32 %v7171, %v7195
        %v7198 = vmul.f32 %v7172, %v7195
        %v7199 = vmul.f32 %v7173, %v7195
        %v7204 = vrot.slane %v7196, 1
        %v7205 = vrot.slane %v7198, 1
        %v7206 = vsel %vm3099, %v7204, %v7205
        %v7207 = vrot.slane %v7197, 1
        %v7208 = vrot.slane %v7199, 1
        %v7209 = vsel %vm3099, %v7207, %v7208
        %v7212 = vadd.f32 %v7128, %v7206
        %v7213 = vadd.f32 %v7129, %v7209
        %s7214 = sld [smem:[#allocation12 + $0x81]]
        %v7215 = vstv %s7214
        %v7216 = vmul.f32 %v7170, %v7215
        %v7217 = vmul.f32 %v7171, %v7215
        %v7218 = vmul.f32 %v7172, %v7215
        %v7219 = vmul.f32 %v7173, %v7215
        %v7224 = vrot.slane %v7216, 1
        %v7225 = vrot.slane %v7218, 1
        %v7226 = vsel %vm3099, %v7224, %v7225
        %v7227 = vrot.slane %v7217, 1
        %v7228 = vrot.slane %v7219, 1
        %v7229 = vsel %vm3099, %v7227, %v7228
        %v7232 = vadd.f32 %v7148, %v7226
        %v7233 = vadd.f32 %v7149, %v7229
        %s7234 = sld [smem:[#allocation12 + $0xae]]
        %v7235 = vstv %s7234
        %v7236 = vmul.f32 %v7170, %v7235
        %v7237 = vmul.f32 %v7171, %v7235
        %v7238 = vmul.f32 %v7172, %v7235
        %v7239 = vmul.f32 %v7173, %v7235
        %v7244 = vrot.slane %v7236, 1
        %v7245 = vrot.slane %v7238, 1
        %v7246 = vsel %vm3099, %v7244, %v7245
        %v7247 = vrot.slane %v7237, 1
        %v7248 = vrot.slane %v7239, 1
        %v7249 = vsel %vm3099, %v7247, %v7248
        %v7252 = vadd.f32 %v7168, %v7246
        %v7253 = vadd.f32 %v7169, %v7249
        %v7254 = vld [vmem:[#allocation4 + $0x78] sm:$0xfe]
        %v7255 = vld [vmem:[#allocation4 + $0x80] sm:$0xfe]
        %v7256 = vld [vmem:[#allocation4 + $0x88] sm:$0xfe]
        %v7257 = vld [vmem:[#allocation4 + $0x90] sm:$0x1]
        %v7258 = vld [vmem:[#allocation4 + $0x98] sm:$0x1]
        %v7259 = vld [vmem:[#allocation4 + $0xa0] sm:$0x1]
        %s7260 = sld [smem:[#allocation12 + $0x28]]
        %v7261 = vstv %s7260
        %v7262 = vmul.f32 %v7254, %v7261
        %v7263 = vmul.f32 %v7255, %v7261
        %v7264 = vmul.f32 %v7256, %v7261
        %v7265 = vmul.f32 %v7257, %v7261
        %v7266 = vmul.f32 %v7258, %v7261
        %v7267 = vmul.f32 %v7259, %v7261
        %v7274 = vrot.slane %v7262, 1
        %v7275 = vrot.slane %v7265, 1
        %v7276 = vsel %vm3099, %v7274, %v7275
        %v7277 = vrot.slane %v7263, 1
        %v7278 = vrot.slane %v7266, 1
        %v7279 = vsel %vm3099, %v7277, %v7278
        %v7280 = vrot.slane %v7264, 1
        %v7281 = vrot.slane %v7267, 1
        %v7282 = vsel %vm3099, %v7280, %v7281
        %7283 = vrot.lane.b32.xlu0 %v7276, 127
        %v7284 = vpop.permute.xlu0 %7283
        %7285 = vrot.lane.b32.xlu0 %v7279, 127
        %v7286 = vpop.permute.xlu0 %7285
        %7287 = vrot.lane.b32.xlu0 %v7282, 127
        %v7288 = vpop.permute.xlu0 %7287
        %v7289 = vsel %vm902, %v7284, %v7286
        %v7290 = vsel %vm902, %v7286, %v7288
        %v7293 = vadd.f32 %v7192, %v7289
        %v7294 = vadd.f32 %v7193, %v7290
        %s7295 = sld [smem:[#allocation12 + $0x55]]
        %v7296 = vstv %s7295
        %v7297 = vmul.f32 %v7254, %v7296
        %v7298 = vmul.f32 %v7255, %v7296
        %v7299 = vmul.f32 %v7256, %v7296
        %v7300 = vmul.f32 %v7257, %v7296
        %v7301 = vmul.f32 %v7258, %v7296
        %v7302 = vmul.f32 %v7259, %v7296
        %v7309 = vrot.slane %v7297, 1
        %v7310 = vrot.slane %v7300, 1
        %v7311 = vsel %vm3099, %v7309, %v7310
        %v7312 = vrot.slane %v7298, 1
        %v7313 = vrot.slane %v7301, 1
        %v7314 = vsel %vm3099, %v7312, %v7313
        %v7315 = vrot.slane %v7299, 1
        %v7316 = vrot.slane %v7302, 1
        %v7317 = vsel %vm3099, %v7315, %v7316
        %7318 = vrot.lane.b32.xlu0 %v7311, 127
        %v7319 = vpop.permute.xlu0 %7318
        %7320 = vrot.lane.b32.xlu0 %v7314, 127
        %v7321 = vpop.permute.xlu0 %7320
        %7322 = vrot.lane.b32.xlu0 %v7317, 127
        %v7323 = vpop.permute.xlu0 %7322
        %v7324 = vsel %vm902, %v7319, %v7321
        %v7325 = vsel %vm902, %v7321, %v7323
        %v7328 = vadd.f32 %v7212, %v7324
        %v7329 = vadd.f32 %v7213, %v7325
        %s7330 = sld [smem:[#allocation12 + $0x82]]
        %v7331 = vstv %s7330
        %v7332 = vmul.f32 %v7254, %v7331
        %v7333 = vmul.f32 %v7255, %v7331
        %v7334 = vmul.f32 %v7256, %v7331
        %v7335 = vmul.f32 %v7257, %v7331
        %v7336 = vmul.f32 %v7258, %v7331
        %v7337 = vmul.f32 %v7259, %v7331
        %v7344 = vrot.slane %v7332, 1
        %v7345 = vrot.slane %v7335, 1
        %v7346 = vsel %vm3099, %v7344, %v7345
        %v7347 = vrot.slane %v7333, 1
        %v7348 = vrot.slane %v7336, 1
        %v7349 = vsel %vm3099, %v7347, %v7348
        %v7350 = vrot.slane %v7334, 1
        %v7351 = vrot.slane %v7337, 1
        %v7352 = vsel %vm3099, %v7350, %v7351
        %7353 = vrot.lane.b32.xlu0 %v7346, 127
        %v7354 = vpop.permute.xlu0 %7353
        %7355 = vrot.lane.b32.xlu0 %v7349, 127
        %v7356 = vpop.permute.xlu0 %7355
        %7357 = vrot.lane.b32.xlu0 %v7352, 127
        %v7358 = vpop.permute.xlu0 %7357
        %v7359 = vsel %vm902, %v7354, %v7356
        %v7360 = vsel %vm902, %v7356, %v7358
        %v7363 = vadd.f32 %v7232, %v7359
        %v7364 = vadd.f32 %v7233, %v7360
        %s7365 = sld [smem:[#allocation12 + $0xaf]]
        %v7366 = vstv %s7365
        %v7367 = vmul.f32 %v7254, %v7366
        %v7368 = vmul.f32 %v7255, %v7366
        %v7369 = vmul.f32 %v7256, %v7366
        %v7370 = vmul.f32 %v7257, %v7366
        %v7371 = vmul.f32 %v7258, %v7366
        %v7372 = vmul.f32 %v7259, %v7366
        %v7379 = vrot.slane %v7367, 1
        %v7380 = vrot.slane %v7370, 1
        %v7381 = vsel %vm3099, %v7379, %v7380
        %v7382 = vrot.slane %v7368, 1
        %v7383 = vrot.slane %v7371, 1
        %v7384 = vsel %vm3099, %v7382, %v7383
        %v7385 = vrot.slane %v7369, 1
        %v7386 = vrot.slane %v7372, 1
        %v7387 = vsel %vm3099, %v7385, %v7386
        %7388 = vrot.lane.b32.xlu0 %v7381, 127
        %v7389 = vpop.permute.xlu0 %7388
        %7390 = vrot.lane.b32.xlu0 %v7384, 127
        %v7391 = vpop.permute.xlu0 %7390
        %7392 = vrot.lane.b32.xlu0 %v7387, 127
        %v7393 = vpop.permute.xlu0 %7392
        %v7394 = vsel %vm902, %v7389, %v7391
        %v7395 = vsel %vm902, %v7391, %v7393
        %v7398 = vadd.f32 %v7252, %v7394
        %v7399 = vadd.f32 %v7253, %v7395
        %s7400 = sld [smem:[#allocation12 + $0x29]]
        %v7401 = vstv %s7400
        %v7402 = vmul.f32 %v7254, %v7401
        %v7403 = vmul.f32 %v7255, %v7401
        %v7404 = vmul.f32 %v7256, %v7401
        %v7405 = vmul.f32 %v7257, %v7401
        %v7406 = vmul.f32 %v7258, %v7401
        %v7407 = vmul.f32 %v7259, %v7401
        %v7414 = vrot.slane %v7402, 1
        %v7415 = vrot.slane %v7405, 1
        %v7416 = vsel %vm3099, %v7414, %v7415
        %v7417 = vrot.slane %v7403, 1
        %v7418 = vrot.slane %v7406, 1
        %v7419 = vsel %vm3099, %v7417, %v7418
        %v7420 = vrot.slane %v7404, 1
        %v7421 = vrot.slane %v7407, 1
        %v7422 = vsel %vm3099, %v7420, %v7421
        %7423 = vrot.lane.b32.xlu0 %v7416, 126
        %v7424 = vpop.permute.xlu0 %7423
        %7425 = vrot.lane.b32.xlu0 %v7419, 126
        %v7426 = vpop.permute.xlu0 %7425
        %7427 = vrot.lane.b32.xlu0 %v7422, 126
        %v7428 = vpop.permute.xlu0 %7427
        %v7429 = vsel %vm978, %v7424, %v7426
        %v7430 = vsel %vm978, %v7426, %v7428
        %v7433 = vadd.f32 %v7293, %v7429
        %v7434 = vadd.f32 %v7294, %v7430
        %s7435 = sld [smem:[#allocation12 + $0x56]]
        %v7436 = vstv %s7435
        %v7437 = vmul.f32 %v7254, %v7436
        %v7438 = vmul.f32 %v7255, %v7436
        %v7439 = vmul.f32 %v7256, %v7436
        %v7440 = vmul.f32 %v7257, %v7436
        %v7441 = vmul.f32 %v7258, %v7436
        %v7442 = vmul.f32 %v7259, %v7436
        %v7449 = vrot.slane %v7437, 1
        %v7450 = vrot.slane %v7440, 1
        %v7451 = vsel %vm3099, %v7449, %v7450
        %v7452 = vrot.slane %v7438, 1
        %v7453 = vrot.slane %v7441, 1
        %v7454 = vsel %vm3099, %v7452, %v7453
        %v7455 = vrot.slane %v7439, 1
        %v7456 = vrot.slane %v7442, 1
        %v7457 = vsel %vm3099, %v7455, %v7456
        %7458 = vrot.lane.b32.xlu0 %v7451, 126
        %v7459 = vpop.permute.xlu0 %7458
        %7460 = vrot.lane.b32.xlu0 %v7454, 126
        %v7461 = vpop.permute.xlu0 %7460
        %7462 = vrot.lane.b32.xlu0 %v7457, 126
        %v7463 = vpop.permute.xlu0 %7462
        %v7464 = vsel %vm978, %v7459, %v7461
        %v7465 = vsel %vm978, %v7461, %v7463
        %v7468 = vadd.f32 %v7328, %v7464
        %v7469 = vadd.f32 %v7329, %v7465
        %s7470 = sld [smem:[#allocation12 + $0x83]]
        %v7471 = vstv %s7470
        %v7472 = vmul.f32 %v7254, %v7471
        %v7473 = vmul.f32 %v7255, %v7471
        %v7474 = vmul.f32 %v7256, %v7471
        %v7475 = vmul.f32 %v7257, %v7471
        %v7476 = vmul.f32 %v7258, %v7471
        %v7477 = vmul.f32 %v7259, %v7471
        %v7484 = vrot.slane %v7472, 1
        %v7485 = vrot.slane %v7475, 1
        %v7486 = vsel %vm3099, %v7484, %v7485
        %v7487 = vrot.slane %v7473, 1
        %v7488 = vrot.slane %v7476, 1
        %v7489 = vsel %vm3099, %v7487, %v7488
        %v7490 = vrot.slane %v7474, 1
        %v7491 = vrot.slane %v7477, 1
        %v7492 = vsel %vm3099, %v7490, %v7491
        %7493 = vrot.lane.b32.xlu0 %v7486, 126
        %v7494 = vpop.permute.xlu0 %7493
        %7495 = vrot.lane.b32.xlu0 %v7489, 126
        %v7496 = vpop.permute.xlu0 %7495
        %7497 = vrot.lane.b32.xlu0 %v7492, 126
        %v7498 = vpop.permute.xlu0 %7497
        %v7499 = vsel %vm978, %v7494, %v7496
        %v7500 = vsel %vm978, %v7496, %v7498
        %v7503 = vadd.f32 %v7363, %v7499
        %v7504 = vadd.f32 %v7364, %v7500
        %s7505 = sld [smem:[#allocation12 + $0xb0]]
        %v7506 = vstv %s7505
        %v7507 = vmul.f32 %v7254, %v7506
        %v7508 = vmul.f32 %v7255, %v7506
        %v7509 = vmul.f32 %v7256, %v7506
        %v7510 = vmul.f32 %v7257, %v7506
        %v7511 = vmul.f32 %v7258, %v7506
        %v7512 = vmul.f32 %v7259, %v7506
        %v7519 = vrot.slane %v7507, 1
        %v7520 = vrot.slane %v7510, 1
        %v7521 = vsel %vm3099, %v7519, %v7520
        %v7522 = vrot.slane %v7508, 1
        %v7523 = vrot.slane %v7511, 1
        %v7524 = vsel %vm3099, %v7522, %v7523
        %v7525 = vrot.slane %v7509, 1
        %v7526 = vrot.slane %v7512, 1
        %v7527 = vsel %vm3099, %v7525, %v7526
        %7528 = vrot.lane.b32.xlu0 %v7521, 126
        %v7529 = vpop.permute.xlu0 %7528
        %7530 = vrot.lane.b32.xlu0 %v7524, 126
        %v7531 = vpop.permute.xlu0 %7530
        %7532 = vrot.lane.b32.xlu0 %v7527, 126
        %v7533 = vpop.permute.xlu0 %7532
        %v7534 = vsel %vm978, %v7529, %v7531
        %v7535 = vsel %vm978, %v7531, %v7533
        %v7538 = vadd.f32 %v7398, %v7534
        %v7539 = vadd.f32 %v7399, %v7535
        %v7540 = vld [vmem:[#allocation4 + $0x78] sm:$0xfc]
        %v7541 = vld [vmem:[#allocation4 + $0x80] sm:$0xfc]
        %v7542 = vld [vmem:[#allocation4 + $0x90] sm:$0x3]
        %v7543 = vld [vmem:[#allocation4 + $0x98] sm:$0x3]
        %s7544 = sld [smem:[#allocation12 + $0x2a]]
        %v7545 = vstv %s7544
        %v7546 = vmul.f32 %v7540, %v7545
        %v7547 = vmul.f32 %v7541, %v7545
        %v7548 = vmul.f32 %v7542, %v7545
        %v7549 = vmul.f32 %v7543, %v7545
        %v7554 = vrot.slane %v7546, 2
        %v7555 = vrot.slane %v7548, 2
        %v7556 = vsel %vm3470, %v7554, %v7555
        %v7557 = vrot.slane %v7547, 2
        %v7558 = vrot.slane %v7549, 2
        %v7559 = vsel %vm3470, %v7557, %v7558
        %v7562 = vadd.f32 %v7433, %v7556
        %v7563 = vadd.f32 %v7434, %v7559
        %s7564 = sld [smem:[#allocation12 + $0x57]]
        %v7565 = vstv %s7564
        %v7566 = vmul.f32 %v7540, %v7565
        %v7567 = vmul.f32 %v7541, %v7565
        %v7568 = vmul.f32 %v7542, %v7565
        %v7569 = vmul.f32 %v7543, %v7565
        %v7574 = vrot.slane %v7566, 2
        %v7575 = vrot.slane %v7568, 2
        %v7576 = vsel %vm3470, %v7574, %v7575
        %v7577 = vrot.slane %v7567, 2
        %v7578 = vrot.slane %v7569, 2
        %v7579 = vsel %vm3470, %v7577, %v7578
        %v7582 = vadd.f32 %v7468, %v7576
        %v7583 = vadd.f32 %v7469, %v7579
        %s7584 = sld [smem:[#allocation12 + $0x84]]
        %v7585 = vstv %s7584
        %v7586 = vmul.f32 %v7540, %v7585
        %v7587 = vmul.f32 %v7541, %v7585
        %v7588 = vmul.f32 %v7542, %v7585
        %v7589 = vmul.f32 %v7543, %v7585
        %v7594 = vrot.slane %v7586, 2
        %v7595 = vrot.slane %v7588, 2
        %v7596 = vsel %vm3470, %v7594, %v7595
        %v7597 = vrot.slane %v7587, 2
        %v7598 = vrot.slane %v7589, 2
        %v7599 = vsel %vm3470, %v7597, %v7598
        %v7602 = vadd.f32 %v7503, %v7596
        %v7603 = vadd.f32 %v7504, %v7599
        %s7604 = sld [smem:[#allocation12 + $0xb1]]
        %v7605 = vstv %s7604
        %v7606 = vmul.f32 %v7540, %v7605
        %v7607 = vmul.f32 %v7541, %v7605
        %v7608 = vmul.f32 %v7542, %v7605
        %v7609 = vmul.f32 %v7543, %v7605
        %v7614 = vrot.slane %v7606, 2
        %v7615 = vrot.slane %v7608, 2
        %v7616 = vsel %vm3470, %v7614, %v7615
        %v7617 = vrot.slane %v7607, 2
        %v7618 = vrot.slane %v7609, 2
        %v7619 = vsel %vm3470, %v7617, %v7618
        %v7622 = vadd.f32 %v7538, %v7616
        %v7623 = vadd.f32 %v7539, %v7619
        %v7624 = vld [vmem:[#allocation4 + $0x78] sm:$0xfc]
        %v7625 = vld [vmem:[#allocation4 + $0x80] sm:$0xfc]
        %v7626 = vld [vmem:[#allocation4 + $0x88] sm:$0xfc]
        %v7627 = vld [vmem:[#allocation4 + $0x90] sm:$0x3]
        %v7628 = vld [vmem:[#allocation4 + $0x98] sm:$0x3]
        %v7629 = vld [vmem:[#allocation4 + $0xa0] sm:$0x3]
        %s7630 = sld [smem:[#allocation12 + $0x2b]]
        %v7631 = vstv %s7630
        %v7632 = vmul.f32 %v7624, %v7631
        %v7633 = vmul.f32 %v7625, %v7631
        %v7634 = vmul.f32 %v7626, %v7631
        %v7635 = vmul.f32 %v7627, %v7631
        %v7636 = vmul.f32 %v7628, %v7631
        %v7637 = vmul.f32 %v7629, %v7631
        %v7644 = vrot.slane %v7632, 2
        %v7645 = vrot.slane %v7635, 2
        %v7646 = vsel %vm3470, %v7644, %v7645
        %v7647 = vrot.slane %v7633, 2
        %v7648 = vrot.slane %v7636, 2
        %v7649 = vsel %vm3470, %v7647, %v7648
        %v7650 = vrot.slane %v7634, 2
        %v7651 = vrot.slane %v7637, 2
        %v7652 = vsel %vm3470, %v7650, %v7651
        %7653 = vrot.lane.b32.xlu0 %v7646, 127
        %v7654 = vpop.permute.xlu0 %7653
        %7655 = vrot.lane.b32.xlu0 %v7649, 127
        %v7656 = vpop.permute.xlu0 %7655
        %7657 = vrot.lane.b32.xlu0 %v7652, 127
        %v7658 = vpop.permute.xlu0 %7657
        %v7659 = vsel %vm902, %v7654, %v7656
        %v7660 = vsel %vm902, %v7656, %v7658
        %v7663 = vadd.f32 %v7562, %v7659
        %v7664 = vadd.f32 %v7563, %v7660
        %s7665 = sld [smem:[#allocation12 + $0x58]]
        %v7666 = vstv %s7665
        %v7667 = vmul.f32 %v7624, %v7666
        %v7668 = vmul.f32 %v7625, %v7666
        %v7669 = vmul.f32 %v7626, %v7666
        %v7670 = vmul.f32 %v7627, %v7666
        %v7671 = vmul.f32 %v7628, %v7666
        %v7672 = vmul.f32 %v7629, %v7666
        %v7679 = vrot.slane %v7667, 2
        %v7680 = vrot.slane %v7670, 2
        %v7681 = vsel %vm3470, %v7679, %v7680
        %v7682 = vrot.slane %v7668, 2
        %v7683 = vrot.slane %v7671, 2
        %v7684 = vsel %vm3470, %v7682, %v7683
        %v7685 = vrot.slane %v7669, 2
        %v7686 = vrot.slane %v7672, 2
        %v7687 = vsel %vm3470, %v7685, %v7686
        %7688 = vrot.lane.b32.xlu0 %v7681, 127
        %v7689 = vpop.permute.xlu0 %7688
        %7690 = vrot.lane.b32.xlu0 %v7684, 127
        %v7691 = vpop.permute.xlu0 %7690
        %7692 = vrot.lane.b32.xlu0 %v7687, 127
        %v7693 = vpop.permute.xlu0 %7692
        %v7694 = vsel %vm902, %v7689, %v7691
        %v7695 = vsel %vm902, %v7691, %v7693
        %v7698 = vadd.f32 %v7582, %v7694
        %v7699 = vadd.f32 %v7583, %v7695
        %s7700 = sld [smem:[#allocation12 + $0x85]]
        %v7701 = vstv %s7700
        %v7702 = vmul.f32 %v7624, %v7701
        %v7703 = vmul.f32 %v7625, %v7701
        %v7704 = vmul.f32 %v7626, %v7701
        %v7705 = vmul.f32 %v7627, %v7701
        %v7706 = vmul.f32 %v7628, %v7701
        %v7707 = vmul.f32 %v7629, %v7701
        %v7714 = vrot.slane %v7702, 2
        %v7715 = vrot.slane %v7705, 2
        %v7716 = vsel %vm3470, %v7714, %v7715
        %v7717 = vrot.slane %v7703, 2
        %v7718 = vrot.slane %v7706, 2
        %v7719 = vsel %vm3470, %v7717, %v7718
        %v7720 = vrot.slane %v7704, 2
        %v7721 = vrot.slane %v7707, 2
        %v7722 = vsel %vm3470, %v7720, %v7721
        %7723 = vrot.lane.b32.xlu0 %v7716, 127
        %v7724 = vpop.permute.xlu0 %7723
        %7725 = vrot.lane.b32.xlu0 %v7719, 127
        %v7726 = vpop.permute.xlu0 %7725
        %7727 = vrot.lane.b32.xlu0 %v7722, 127
        %v7728 = vpop.permute.xlu0 %7727
        %v7729 = vsel %vm902, %v7724, %v7726
        %v7730 = vsel %vm902, %v7726, %v7728
        %v7733 = vadd.f32 %v7602, %v7729
        %v7734 = vadd.f32 %v7603, %v7730
        %s7735 = sld [smem:[#allocation12 + $0xb2]]
        %v7736 = vstv %s7735
        %v7737 = vmul.f32 %v7624, %v7736
        %v7738 = vmul.f32 %v7625, %v7736
        %v7739 = vmul.f32 %v7626, %v7736
        %v7740 = vmul.f32 %v7627, %v7736
        %v7741 = vmul.f32 %v7628, %v7736
        %v7742 = vmul.f32 %v7629, %v7736
        %v7749 = vrot.slane %v7737, 2
        %v7750 = vrot.slane %v7740, 2
        %v7751 = vsel %vm3470, %v7749, %v7750
        %v7752 = vrot.slane %v7738, 2
        %v7753 = vrot.slane %v7741, 2
        %v7754 = vsel %vm3470, %v7752, %v7753
        %v7755 = vrot.slane %v7739, 2
        %v7756 = vrot.slane %v7742, 2
        %v7757 = vsel %vm3470, %v7755, %v7756
        %7758 = vrot.lane.b32.xlu0 %v7751, 127
        %v7759 = vpop.permute.xlu0 %7758
        %7760 = vrot.lane.b32.xlu0 %v7754, 127
        %v7761 = vpop.permute.xlu0 %7760
        %7762 = vrot.lane.b32.xlu0 %v7757, 127
        %v7763 = vpop.permute.xlu0 %7762
        %v7764 = vsel %vm902, %v7759, %v7761
        %v7765 = vsel %vm902, %v7761, %v7763
        %v7768 = vadd.f32 %v7622, %v7764
        %v7769 = vadd.f32 %v7623, %v7765
        %s7770 = sld [smem:[#allocation12 + $0x2c]]
        %v7771 = vstv %s7770
        %v7772 = vmul.f32 %v7624, %v7771
        %v7773 = vmul.f32 %v7625, %v7771
        %v7774 = vmul.f32 %v7626, %v7771
        %v7775 = vmul.f32 %v7627, %v7771
        %v7776 = vmul.f32 %v7628, %v7771
        %v7777 = vmul.f32 %v7629, %v7771
        %v7784 = vrot.slane %v7772, 2
        %v7785 = vrot.slane %v7775, 2
        %v7786 = vsel %vm3470, %v7784, %v7785
        %v7787 = vrot.slane %v7773, 2
        %v7788 = vrot.slane %v7776, 2
        %v7789 = vsel %vm3470, %v7787, %v7788
        %v7790 = vrot.slane %v7774, 2
        %v7791 = vrot.slane %v7777, 2
        %v7792 = vsel %vm3470, %v7790, %v7791
        %7793 = vrot.lane.b32.xlu0 %v7786, 126
        %v7794 = vpop.permute.xlu0 %7793
        %7795 = vrot.lane.b32.xlu0 %v7789, 126
        %v7796 = vpop.permute.xlu0 %7795
        %7797 = vrot.lane.b32.xlu0 %v7792, 126
        %v7798 = vpop.permute.xlu0 %7797
        %v7799 = vsel %vm978, %v7794, %v7796
        %v7800 = vsel %vm978, %v7796, %v7798
        %v7803 = vadd.f32 %v7663, %v7799
        %v7804 = vadd.f32 %v7664, %v7800
        %s7805 = sld [smem:[#allocation12 + $0x59]]
        %v7806 = vstv %s7805
        %v7807 = vmul.f32 %v7624, %v7806
        %v7808 = vmul.f32 %v7625, %v7806
        %v7809 = vmul.f32 %v7626, %v7806
        %v7810 = vmul.f32 %v7627, %v7806
        %v7811 = vmul.f32 %v7628, %v7806
        %v7812 = vmul.f32 %v7629, %v7806
        %v7819 = vrot.slane %v7807, 2
        %v7820 = vrot.slane %v7810, 2
        %v7821 = vsel %vm3470, %v7819, %v7820
        %v7822 = vrot.slane %v7808, 2
        %v7823 = vrot.slane %v7811, 2
        %v7824 = vsel %vm3470, %v7822, %v7823
        %v7825 = vrot.slane %v7809, 2
        %v7826 = vrot.slane %v7812, 2
        %v7827 = vsel %vm3470, %v7825, %v7826
        %7828 = vrot.lane.b32.xlu0 %v7821, 126
        %v7829 = vpop.permute.xlu0 %7828
        %7830 = vrot.lane.b32.xlu0 %v7824, 126
        %v7831 = vpop.permute.xlu0 %7830
        %7832 = vrot.lane.b32.xlu0 %v7827, 126
        %v7833 = vpop.permute.xlu0 %7832
        %v7834 = vsel %vm978, %v7829, %v7831
        %v7835 = vsel %vm978, %v7831, %v7833
        %v7838 = vadd.f32 %v7698, %v7834
        %v7839 = vadd.f32 %v7699, %v7835
        %s7840 = sld [smem:[#allocation12 + $0x86]]
        %v7841 = vstv %s7840
        %v7842 = vmul.f32 %v7624, %v7841
        %v7843 = vmul.f32 %v7625, %v7841
        %v7844 = vmul.f32 %v7626, %v7841
        %v7845 = vmul.f32 %v7627, %v7841
        %v7846 = vmul.f32 %v7628, %v7841
        %v7847 = vmul.f32 %v7629, %v7841
        %v7854 = vrot.slane %v7842, 2
        %v7855 = vrot.slane %v7845, 2
        %v7856 = vsel %vm3470, %v7854, %v7855
        %v7857 = vrot.slane %v7843, 2
        %v7858 = vrot.slane %v7846, 2
        %v7859 = vsel %vm3470, %v7857, %v7858
        %v7860 = vrot.slane %v7844, 2
        %v7861 = vrot.slane %v7847, 2
        %v7862 = vsel %vm3470, %v7860, %v7861
        %7863 = vrot.lane.b32.xlu0 %v7856, 126
        %v7864 = vpop.permute.xlu0 %7863
        %7865 = vrot.lane.b32.xlu0 %v7859, 126
        %v7866 = vpop.permute.xlu0 %7865
        %7867 = vrot.lane.b32.xlu0 %v7862, 126
        %v7868 = vpop.permute.xlu0 %7867
        %v7869 = vsel %vm978, %v7864, %v7866
        %v7870 = vsel %vm978, %v7866, %v7868
        %v7873 = vadd.f32 %v7733, %v7869
        %v7874 = vadd.f32 %v7734, %v7870
        %s7875 = sld [smem:[#allocation12 + $0xb3]]
        %v7876 = vstv %s7875
        %v7877 = vmul.f32 %v7624, %v7876
        %v7878 = vmul.f32 %v7625, %v7876
        %v7879 = vmul.f32 %v7626, %v7876
        %v7880 = vmul.f32 %v7627, %v7876
        %v7881 = vmul.f32 %v7628, %v7876
        %v7882 = vmul.f32 %v7629, %v7876
        %v7889 = vrot.slane %v7877, 2
        %v7890 = vrot.slane %v7880, 2
        %v7891 = vsel %vm3470, %v7889, %v7890
        %v7892 = vrot.slane %v7878, 2
        %v7893 = vrot.slane %v7881, 2
        %v7894 = vsel %vm3470, %v7892, %v7893
        %v7895 = vrot.slane %v7879, 2
        %v7896 = vrot.slane %v7882, 2
        %v7897 = vsel %vm3470, %v7895, %v7896
        %7898 = vrot.lane.b32.xlu0 %v7891, 126
        %v7899 = vpop.permute.xlu0 %7898
        %7900 = vrot.lane.b32.xlu0 %v7894, 126
        %v7901 = vpop.permute.xlu0 %7900
        %7902 = vrot.lane.b32.xlu0 %v7897, 126
        %v7903 = vpop.permute.xlu0 %7902
        %v7904 = vsel %vm978, %v7899, %v7901
        %v7905 = vsel %vm978, %v7901, %v7903
        %v7908 = vadd.f32 %v7768, %v7904
        %v7909 = vadd.f32 %v7769, %v7905
        %7910 = vst [vmem:[%s274] sm:$0xff] %v7803
        %7911 = vst [vmem:[%s274 + $0x8] sm:$0xff] %v7804
        %s7912 = scalar_lea.vmem %s274, 16 [#allocation14]
        %7913 = vst [vmem:[%s7912] sm:$0xff] %v7838
        %7914 = vst [vmem:[%s7912 + $0x8] sm:$0xff] %v7839
        %s7915 = scalar_lea.vmem %s274, 32 [#allocation14]
        %7916 = vst [vmem:[%s7915] sm:$0xff] %v7873
        %7917 = vst [vmem:[%s7915 + $0x8] sm:$0xff] %v7874
        %s7918 = scalar_lea.vmem %s274, 48 [#allocation14]
        %7919 = vst [vmem:[%s7918] sm:$0xff] %v7908
        %7920 = vst [vmem:[%s7918 + $0x8] sm:$0xff] %v7909
        %s7921 = sand.u32 %s141, 1
        %s7922 = scalar_lea.sflag [#allocation7], %s7921
        %s7923 = sand.u32 %s141, 1
        %s7924 = smul.addr %s7923, 64
        %s7925 = scalar_lea.vmem [#allocation14], %s7924
        // Predicated region
        $region57: #{functional_model_forward.1} parent=39 // pred_check
          %p7926 = pneg %p151
        $region58: #{functional_model_forward.1} parent=39 // pred_check_branch
          %7928 = sbr.rel (%p7926) target = $region60
        $region59: #{functional_model_forward.1} parent=39 // pred_region
          %s7930 = ssub.s32 1024, 1024
          %7931 = vsyncadd %s7922, %s7930
          %s7932 = smul.addr %s23, 8
          %s7933 = smul.addr %s7932, 128
          %s7934 = scalar_lea.hbm %s5, %s7933
          %s7935 = sshll.u32 %s7925, 4
          %s7936 = int_to_ptr.vmem [resolvable:$true] %s7935
          %7941 = dma.vmem_to_hbm [thread:$0]  %s7936, 1024, %s7934, %s7922, 256, 256, 16
        $region60: #{functional_model_forward.1} parent=39 // pred_fallthru
          _
      $region40: #{functional_model_forward.1} parent=5 // pred_fallthru
        _
      %p7942 = scmp.le.s32.totalorder 2, %s18
      // Predicated region
      $region61: #{functional_model_forward.1} parent=5 // pred_check
        %p7943 = pneg %p7942
      $region62: #{functional_model_forward.1} parent=5 // pred_check_branch
        %7945 = sbr.rel (%p7943) target = $region64
      $region63: #{functional_model_forward.1} parent=5 // pred_region
        %s7946 = ssub.s32 %s18, 2
        // Predicated region
        $region65: #{functional_model_forward.1} parent=63 // pred_check
          %p7947 = pneg %p157
        $region66: #{functional_model_forward.1} parent=63 // pred_check_branch
          %7949 = sbr.rel (%p7947) target = $region68
        $region67: #{functional_model_forward.1} parent=63 // pred_region
          %s7950 = sand.u32 %s142, 1
          %s7951 = scalar_lea.sflag [#allocation7], %s7950
          %s7952 = sand.u32 %s142, 1
          %s7953 = smul.addr %s7952, 64
          %s7954 = scalar_lea.vmem [#allocation14], %s7953
          %7955 = dma.done %s7951, 1024
        $region68: #{functional_model_forward.1} parent=63 // pred_fallthru
          _
      $region64: #{functional_model_forward.1} parent=5 // pred_fallthru
        _
    $region6: #{functional_model_forward.1} parent=1 // loop_footer
      %s22 = sadd.s32 1, %s18
    $region7: #{functional_model_forward.1} parent=1 // loop_footer_branch
      %17 = sbr.rel target = $region3
    $region8: #{functional_model_forward.1} parent=1 // loop_exit
      _
    %7956 = vsyncpa [#allocation6], 1
    %s7957 = scalar_lea.sflag [#allocation6], 1
    %7958 = vsyncpa %s7957, 1
    %7959 = vsyncpa [#allocation10], 1
    %7960 = vsyncpa [#allocation7], 1
    %s7961 = scalar_lea.sflag [#allocation7], 1
    %7962 = vsyncpa %s7961, 1
    %7963 = vsyncpa [#allocation8], 1
    %s7964 = scalar_lea.sflag [#allocation8], 1
    %7965 = vsyncpa %s7964, 1
    %7966 = vsyncpa [#allocation13], 1

</llo_original>
